<compile_context>
chip_gen: v7x
topology: tpu7x:2x2x1
jax: 0.10.0
libtpu: 0.0.40
codegen_flags: <defaults>
</compile_context>

<pallas_src>
import jax
import jax.numpy as jnp
from jax.experimental import pallas as pl
from jax.experimental.pallas import tpu as pltpu

H_DIM = 1000   # hidden width of PYMedium
H_PAD = 1024   # hidden width padded to a lane-dense multiple of 128


def _round_up(n, m):
    return n + (-n) % m


# ----------------------------- Pallas kernel --------------------------------
def _fused_mlp_kernel(x_ref, w1_ref, b1_ref, w2_ref, b2_ref, w3_ref, b3_ref,
                      o_ref):
    """relu(relu(relu(x@w1+b1)@w2+b2)@w3+b3); activations never leave the chip."""
    h = jnp.dot(x_ref[...].astype(jnp.bfloat16), w1_ref[...],
                preferred_element_type=jnp.float32)
    h = jnp.maximum(h + b1_ref[...], 0.0)

    h = jnp.dot(h.astype(jnp.bfloat16), w2_ref[...],
                preferred_element_type=jnp.float32)
    h = jnp.maximum(h + b2_ref[...], 0.0)

    h = jnp.dot(h.astype(jnp.bfloat16), w3_ref[...],
                preferred_element_type=jnp.float32)
    o_ref[...] = jnp.maximum(h + b3_ref[...], 0.0).astype(o_ref.dtype)


def _fused_mlp(x, w1, b1, w2, b2, w3, b3):
    """Single gridless pallas_call: every operand is one whole-array VMEM block."""
    Mp, _ = x.shape
    vmem_spec = pl.BlockSpec(memory_space=pltpu.MemorySpace.VMEM)
    return pl.pallas_call(
        _fused_mlp_kernel,
        out_shape=jax.ShapeDtypeStruct((Mp, H_PAD), jnp.float32),
        in_specs=[vmem_spec] * 7,
        out_specs=vmem_spec,
        compiler_params=pltpu.CompilerParams(
            # Peak residency is ~4.5 MiB (bf16 weights + f32 biases/activations),
            # comfortably under the default scoped limit on v5e/v6e/v7x.
            vmem_limit_bytes=32 << 20,
        ),
    )(x, w1, b1, w2, b2, w3, b3)


# ----------------------------- Params ----------------------------------------
def init_params(key, dim_y, dtype=jnp.float32):
    """nn.Linear-style init; weights stored (in_features, out_features)."""
    dims = [dim_y, H_DIM, H_DIM, H_DIM]
    params = []
    for li in range(3):
        fan_in, fan_out = dims[li], dims[li + 1]
        key, kw, kb = jax.random.split(key, 3)
        bound = 1.0 / jnp.sqrt(jnp.asarray(fan_in, dtype))
        w = jax.random.uniform(kw, (fan_in, fan_out), dtype, -bound, bound)
        b = jax.random.uniform(kb, (fan_out,), dtype, -bound, bound)
        params.append((w, b))
    return params


def prepare_params(params, dim_y):
    """Zero-pad to lane-dense shapes and cast weights to bf16, ONCE (outside jit).

    Padded hidden columns produce relu(0 + 0) = 0 and the matching padded input
    rows of the next layer's weights are zero, so the padding is numerically
    inert.  Biases stay f32.
    """
    k0_pad = _round_up(dim_y, 128)
    in_pads = [k0_pad, H_PAD, H_PAD]
    padded = []
    for (w, b), kp in zip(params, in_pads):
        k, n = w.shape
        wp = jnp.pad(w, ((0, kp - k), (0, H_PAD - n))).astype(jnp.bfloat16)
        bp = jnp.pad(b.reshape(1, n), ((0, 0), (0, H_PAD - n)))  # f32
        padded.append((wp, bp))
    return padded


# ----------------------------- Forward ----------------------------------------
@jax.jit
def pymedium_forward(padded_params, y):
    """y: (batch, dim_y) -> (batch, H_DIM); relu(linear) x3 in one fused kernel."""
    (w1, b1), (w2, b2), (w3, b3) = padded_params
    M, K = y.shape
    Mp = _round_up(M, 8)
    Kp = w1.shape[0]
    x = jnp.pad(y, ((0, Mp - M), (0, Kp - K)))
    out = _fused_mlp(x, w1, b1, w2, b2, w3, b3)
    return out[:M, :H_DIM]


def pymedium_reference(params, y):
    for w, b in params:
        y = jnp.maximum(y @ w + b, 0.0)
    return y


# ---------------------------------- main -------------------------------------
if __name__ == "__main__":
    key = jax.random.PRNGKey(0)
    dim_y = 32    # small input feature dim
    batch = 8     # small batch

    kparam, kx = jax.random.split(key)
    params = init_params(kparam, dim_y)
    padded_params = prepare_params(params, dim_y)   # one-time pad + bf16 cast
    y = jax.random.normal(kx, (batch, dim_y), jnp.float32)

    out = pymedium_forward(padded_params, y)
    out = jax.block_until_ready(out)

    ref = pymedium_reference(params, y)
    assert out.shape == (batch, H_DIM), out.shape
    # bf16 weight storage + bf16 MXU inputs (f32 accumulation) over K~1000-term
    # dots -> ~1e-2-level error; 2e-2 tolerance per perf review.
    err = float(jnp.max(jnp.abs(out - ref)))
    assert jnp.allclose(out, ref, atol=2e-2, rtol=2e-2), f"mismatch, max abs err {err}"

    print("KERNEL_OK")
</pallas_src>

<mosaic_0001>
module attributes {stable_mosaic.version = 11 : i64} {
  func.func @_fused_mlp_kernel(%arg0: memref<8x128xf32, #tpu.memory_space<vmem>>, %arg1: memref<128x1024xbf16, #tpu.memory_space<vmem>>, %arg2: memref<1x1024xf32, #tpu.memory_space<vmem>>, %arg3: memref<1024x1024xbf16, #tpu.memory_space<vmem>>, %arg4: memref<1x1024xf32, #tpu.memory_space<vmem>>, %arg5: memref<1024x1024xbf16, #tpu.memory_space<vmem>>, %arg6: memref<1x1024xf32, #tpu.memory_space<vmem>>, %arg7: memref<8x1024xf32, #tpu.memory_space<vmem>>) attributes {dimension_semantics = [], scalar_prefetch = 0 : i64, scratch_operands = 0 : i64, tpu.core_type = #tpu.core_type<tc>} {
    %c0 = arith.constant 0 : index
    %c0_0 = arith.constant 0 : index
    %0 = vector.load %arg0[%c0, %c0_0] : memref<8x128xf32, #tpu.memory_space<vmem>>, vector<8x128xf32>
    %1 = arith.truncf %0 : vector<8x128xf32> to vector<8x128xbf16>
    %c0_1 = arith.constant 0 : index
    %c0_2 = arith.constant 0 : index
    %2 = vector.load %arg1[%c0_1, %c0_2] : memref<128x1024xbf16, #tpu.memory_space<vmem>>, vector<128x1024xbf16>
    %cst = arith.constant dense<0.000000e+00> : vector<8x1024xf32>
    %3 = tpu.matmul %1, %2, %cst {dimension_numbers = #tpu.dot_dimension_numbers<[1], [0], [0], [1], [0, 0, 1, 1], [], []>} : vector<8x128xbf16>, vector<128x1024xbf16>, vector<8x1024xf32> -> vector<8x1024xf32>
    %c0_3 = arith.constant 0 : index
    %c0_4 = arith.constant 0 : index
    %4 = vector.load %arg2[%c0_3, %c0_4] : memref<1x1024xf32, #tpu.memory_space<vmem>>, vector<1x1024xf32>
    %5 = vector.broadcast %4 : vector<1x1024xf32> to vector<8x1024xf32>
    %6 = arith.addf %3, %5 : vector<8x1024xf32>
    %cst_5 = arith.constant 0.000000e+00 : f32
    %7 = vector.broadcast %cst_5 : f32 to vector<8x1024xf32>
    %8 = arith.maximumf %6, %7 : vector<8x1024xf32>
    %9 = arith.truncf %8 : vector<8x1024xf32> to vector<8x1024xbf16>
    %c0_6 = arith.constant 0 : index
    %c0_7 = arith.constant 0 : index
    %10 = vector.load %arg3[%c0_6, %c0_7] : memref<1024x1024xbf16, #tpu.memory_space<vmem>>, vector<1024x1024xbf16>
    %cst_8 = arith.constant dense<0.000000e+00> : vector<8x1024xf32>
    %11 = tpu.matmul %9, %10, %cst_8 {dimension_numbers = #tpu.dot_dimension_numbers<[1], [0], [0], [1], [0, 0, 1, 1], [], []>} : vector<8x1024xbf16>, vector<1024x1024xbf16>, vector<8x1024xf32> -> vector<8x1024xf32>
    %c0_9 = arith.constant 0 : index
    %c0_10 = arith.constant 0 : index
    %12 = vector.load %arg4[%c0_9, %c0_10] : memref<1x1024xf32, #tpu.memory_space<vmem>>, vector<1x1024xf32>
    %13 = vector.broadcast %12 : vector<1x1024xf32> to vector<8x1024xf32>
    %14 = arith.addf %11, %13 : vector<8x1024xf32>
    %cst_11 = arith.constant 0.000000e+00 : f32
    %15 = vector.broadcast %cst_11 : f32 to vector<8x1024xf32>
    %16 = arith.maximumf %14, %15 : vector<8x1024xf32>
    %17 = arith.truncf %16 : vector<8x1024xf32> to vector<8x1024xbf16>
    %c0_12 = arith.constant 0 : index
    %c0_13 = arith.constant 0 : index
    %18 = vector.load %arg5[%c0_12, %c0_13] : memref<1024x1024xbf16, #tpu.memory_space<vmem>>, vector<1024x1024xbf16>
    %cst_14 = arith.constant dense<0.000000e+00> : vector<8x1024xf32>
    %19 = tpu.matmul %17, %18, %cst_14 {dimension_numbers = #tpu.dot_dimension_numbers<[1], [0], [0], [1], [0, 0, 1, 1], [], []>} : vector<8x1024xbf16>, vector<1024x1024xbf16>, vector<8x1024xf32> -> vector<8x1024xf32>
    %c0_15 = arith.constant 0 : index
    %c0_16 = arith.constant 0 : index
    %20 = vector.load %arg6[%c0_15, %c0_16] : memref<1x1024xf32, #tpu.memory_space<vmem>>, vector<1x1024xf32>
    %21 = vector.broadcast %20 : vector<1x1024xf32> to vector<8x1024xf32>
    %22 = arith.addf %19, %21 : vector<8x1024xf32>
    %cst_17 = arith.constant 0.000000e+00 : f32
    %23 = vector.broadcast %cst_17 : f32 to vector<8x1024xf32>
    %24 = arith.maximumf %22, %23 : vector<8x1024xf32>
    %c0_18 = arith.constant 0 : index
    %c0_19 = arith.constant 0 : index
    %25 = vector.load %arg7[%c0_18, %c0_19] : memref<8x1024xf32, #tpu.memory_space<vmem>>, vector<8x1024xf32>
    tpu.vector_store %arg7[%c0_18, %c0_19], %24 {strides = array<i32>} : memref<8x1024xf32, #tpu.memory_space<vmem>>, vector<8x1024xf32>,
    return
  }
}

</mosaic_0001>

<llo_original>
// kernel: pymedium_forward.1
$region0: #{pymedium_forward.1}
  #allocation0 [shape = 'u32[]', space=smem, size = 0x4, offset = 0x4, fixed_abs, tag = 'smem constant byte address 0x4 - core index']
  #allocation1 [shape = 'u32[144,128]{1,0:T(1,128)}', space=vmem, size = 0x12000, scoped, tag = 'internal scratch']
  %s0 = inlined_call_operand.vmem [shape: f32[8,128], index: 0, kind: input, shape index: {}]
  %s1 = inlined_call_operand.hbm [shape: bf16[128,1024], index: 1, kind: input, shape index: {}]
  %s2 = inlined_call_operand.hbm [shape: f32[1,1024], index: 2, kind: input, shape index: {}]
  %s3 = inlined_call_operand.hbm [shape: bf16[1024,1024], index: 3, kind: input, shape index: {}]
  %s4 = inlined_call_operand.hbm [shape: f32[1,1024], index: 4, kind: input, shape index: {}]
  %s5 = inlined_call_operand.hbm [shape: bf16[1024,1024], index: 5, kind: input, shape index: {}]
  %s6 = inlined_call_operand.hbm [shape: f32[1,1024], index: 6, kind: input, shape index: {}]
  %s7 = inlined_call_operand.hbm [shape: f32[8,1024], index: 7, kind: output, shape index: {}]
  %s8 = sld [smem:[#allocation0]]
  $region62: #{pymedium_forward.1} parent=0
    _
  %s10 = ssub.s32 1, %s8
  %s11 = scalar_select 0, %s10, %s8
  $region1: #{pymedium_forward.1} parent=0
    #allocation2 [shape = 'u8[262144]{0}', space=vmem, size = 0x40000, scoped, tag = 'input window, operand 1, single buffered']
    #allocation3 [shape = 's32[1]{0}', space=sflag, size = 0x4, scoped, tag = 'scoped memory for pymedium_forward.1']
    #allocation4 [shape = 's32[1]{0}', space=sflag, size = 0x4, scoped, tag = 'scoped memory for pymedium_forward.1']
    #allocation5 [shape = 'u8[4096]{0}', space=vmem, size = 0x1000, scoped, tag = 'input window, operand 2, single buffered']
    #allocation6 [shape = 's32[1]{0}', space=sflag, size = 0x4, scoped, tag = 'scoped memory for pymedium_forward.1']
    #allocation7 [shape = 'u8[2097152]{0}', space=vmem, size = 0x200000, scoped, tag = 'input window, operand 3, single buffered']
    #allocation8 [shape = 'u8[4096]{0}', space=vmem, size = 0x1000, scoped, tag = 'input window, operand 4, single buffered']
    #allocation9 [shape = 's32[1]{0}', space=sflag, size = 0x4, scoped, tag = 'scoped memory for pymedium_forward.1']
    #allocation10 [shape = 'u8[2097152]{0}', space=vmem, size = 0x200000, scoped, tag = 'input window, operand 5, single buffered']
    #allocation11 [shape = 'u8[4096]{0}', space=vmem, size = 0x1000, scoped, tag = 'input window, operand 6, single buffered']
    #allocation12 [shape = 's32[1]{0}', space=sflag, size = 0x4, scoped, tag = 'scoped memory for pymedium_forward.1']
    #allocation13 [shape = 'u8[32768]{0}', space=vmem, size = 0x8000, scoped, tag = 'output window, operand 0, single buffered']
    %12 = vsyncpa [#allocation3], 0
    %13 = vsyncpa [#allocation6], 0
    %14 = vsyncpa [#allocation9], 0
    %15 = vsyncpa [#allocation12], 0
    %16 = vsyncpa [#allocation4], 0
    // Predicated region
    $region2: #{pymedium_forward.1} parent=1 // pred_check
      _
    $region3: #{pymedium_forward.1} parent=1 // pred_check_branch
      %18 = sbr.rel (0) target = $region5
    $region4: #{pymedium_forward.1} parent=1 // pred_region
      _
    $region5: #{pymedium_forward.1} parent=1 // pred_fallthru
      _
    // Predicated region
    $region6: #{pymedium_forward.1} parent=1 // pred_check
      _
    $region7: #{pymedium_forward.1} parent=1 // pred_check_branch
      %20 = sbr.rel (0) target = $region9
    $region8: #{pymedium_forward.1} parent=1 // pred_region
      %s22 = ssub.s32 8192, 8192
      %23 = vsyncadd [#allocation3], %s22
      %s24 = sshll.u32 [#allocation2], 4
      %s25 = int_to_ptr.vmem [resolvable:$true] %s24
      %30 = dma.hbm_to_vmem [thread:$0]  %s1, 8192, %s25, [#allocation3], 512, 512, 32
    $region9: #{pymedium_forward.1} parent=1 // pred_fallthru
      _
    // Predicated region
    $region10: #{pymedium_forward.1} parent=1 // pred_check
      _
    $region11: #{pymedium_forward.1} parent=1 // pred_check_branch
      %32 = sbr.rel (0) target = $region13
    $region12: #{pymedium_forward.1} parent=1 // pred_region
      %s34 = ssub.s32 128, 128
      %35 = vsyncadd [#allocation6], %s34
      %s37 = sshll.u32 [#allocation5], 4
      %s38 = int_to_ptr.vmem [resolvable:$true] %s37
      %40 = dma.hbm_to_vmem [thread:$0]  %s2, 128, %s38, [#allocation6]
    $region13: #{pymedium_forward.1} parent=1 // pred_fallthru
      _
    // Predicated region
    $region14: #{pymedium_forward.1} parent=1 // pred_check
      _
    $region15: #{pymedium_forward.1} parent=1 // pred_check_branch
      %42 = sbr.rel (0) target = $region17
    $region16: #{pymedium_forward.1} parent=1 // pred_region
      %s44 = ssub.s32 65536, 65536
      %45 = vsyncadd [#allocation6], %s44
      %s46 = sshll.u32 [#allocation7], 4
      %s47 = int_to_ptr.vmem [resolvable:$true] %s46
      %52 = dma.hbm_to_vmem [thread:$0]  %s3, 65536, %s47, [#allocation6], 512, 512, 32
    $region17: #{pymedium_forward.1} parent=1 // pred_fallthru
      _
    // Predicated region
    $region18: #{pymedium_forward.1} parent=1 // pred_check
      _
    $region19: #{pymedium_forward.1} parent=1 // pred_check_branch
      %54 = sbr.rel (0) target = $region21
    $region20: #{pymedium_forward.1} parent=1 // pred_region
      %s56 = ssub.s32 128, 128
      %57 = vsyncadd [#allocation9], %s56
      %s59 = sshll.u32 [#allocation8], 4
      %s60 = int_to_ptr.vmem [resolvable:$true] %s59
      %62 = dma.hbm_to_vmem [thread:$0]  %s4, 128, %s60, [#allocation9]
    $region21: #{pymedium_forward.1} parent=1 // pred_fallthru
      _
    // Predicated region
    $region22: #{pymedium_forward.1} parent=1 // pred_check
      _
    $region23: #{pymedium_forward.1} parent=1 // pred_check_branch
      %64 = sbr.rel (0) target = $region25
    $region24: #{pymedium_forward.1} parent=1 // pred_region
      %s66 = ssub.s32 65536, 65536
      %67 = vsyncadd [#allocation9], %s66
      %s68 = sshll.u32 [#allocation10], 4
      %s69 = int_to_ptr.vmem [resolvable:$true] %s68
      %74 = dma.hbm_to_vmem [thread:$0]  %s5, 65536, %s69, [#allocation9], 512, 512, 32
    $region25: #{pymedium_forward.1} parent=1 // pred_fallthru
      _
    // Predicated region
    $region26: #{pymedium_forward.1} parent=1 // pred_check
      _
    $region27: #{pymedium_forward.1} parent=1 // pred_check_branch
      %76 = sbr.rel (0) target = $region29
    $region28: #{pymedium_forward.1} parent=1 // pred_region
      %s78 = ssub.s32 128, 128
      %79 = vsyncadd [#allocation12], %s78
      %s81 = sshll.u32 [#allocation11], 4
      %s82 = int_to_ptr.vmem [resolvable:$true] %s81
      %84 = dma.hbm_to_vmem [thread:$0]  %s6, 128, %s82, [#allocation12]
    $region29: #{pymedium_forward.1} parent=1 // pred_fallthru
      _
    // Predicated region
    $region30: #{pymedium_forward.1} parent=1 // pred_check
      _
    $region31: #{pymedium_forward.1} parent=1 // pred_check_branch
      %86 = sbr.rel (0) target = $region33
    $region32: #{pymedium_forward.1} parent=1 // pred_region
      %87 = dma.done [#allocation3], 8192
    $region33: #{pymedium_forward.1} parent=1 // pred_fallthru
      _
    // Predicated region
    $region34: #{pymedium_forward.1} parent=1 // pred_check
      _
    $region35: #{pymedium_forward.1} parent=1 // pred_check_branch
      %89 = sbr.rel (0) target = $region37
    $region36: #{pymedium_forward.1} parent=1 // pred_region
      %90 = dma.done [#allocation6], 128
    $region37: #{pymedium_forward.1} parent=1 // pred_fallthru
      _
    // Predicated region
    $region38: #{pymedium_forward.1} parent=1 // pred_check
      _
    $region39: #{pymedium_forward.1} parent=1 // pred_check_branch
      %92 = sbr.rel (0) target = $region41
    $region40: #{pymedium_forward.1} parent=1 // pred_region
      %93 = dma.done [#allocation6], 65536
    $region41: #{pymedium_forward.1} parent=1 // pred_fallthru
      _
    // Predicated region
    $region42: #{pymedium_forward.1} parent=1 // pred_check
      _
    $region43: #{pymedium_forward.1} parent=1 // pred_check_branch
      %95 = sbr.rel (0) target = $region45
    $region44: #{pymedium_forward.1} parent=1 // pred_region
      %96 = dma.done [#allocation9], 128
    $region45: #{pymedium_forward.1} parent=1 // pred_fallthru
      _
    // Predicated region
    $region46: #{pymedium_forward.1} parent=1 // pred_check
      _
    $region47: #{pymedium_forward.1} parent=1 // pred_check_branch
      %98 = sbr.rel (0) target = $region49
    $region48: #{pymedium_forward.1} parent=1 // pred_region
      %99 = dma.done [#allocation9], 65536
    $region49: #{pymedium_forward.1} parent=1 // pred_fallthru
      _
    // Predicated region
    $region50: #{pymedium_forward.1} parent=1 // pred_check
      _
    $region51: #{pymedium_forward.1} parent=1 // pred_check_branch
      %101 = sbr.rel (0) target = $region53
    $region52: #{pymedium_forward.1} parent=1 // pred_region
      %102 = dma.done [#allocation12], 128
    $region53: #{pymedium_forward.1} parent=1 // pred_fallthru
      _
    %v104 = vld [vmem:[%s0] sm:$0xff]
    %v105 = vpack.c.bf16 %v104, %v104
    %v106 = vld [vmem:[#allocation2] sm:$0xff]
    %v107 = vld [vmem:[#allocation2 + $0x8] sm:$0xff]
    %v108 = vld [vmem:[#allocation2 + $0x10] sm:$0xff]
    %v109 = vld [vmem:[#allocation2 + $0x18] sm:$0xff]
    %v110 = vld [vmem:[#allocation2 + $0x20] sm:$0xff]
    %v111 = vld [vmem:[#allocation2 + $0x28] sm:$0xff]
    %v112 = vld [vmem:[#allocation2 + $0x30] sm:$0xff]
    %v113 = vld [vmem:[#allocation2 + $0x38] sm:$0xff]
    %v114 = vld [vmem:[#allocation2 + $0x40] sm:$0xff]
    %v115 = vld [vmem:[#allocation2 + $0x48] sm:$0xff]
    %v116 = vld [vmem:[#allocation2 + $0x50] sm:$0xff]
    %v117 = vld [vmem:[#allocation2 + $0x58] sm:$0xff]
    %v118 = vld [vmem:[#allocation2 + $0x60] sm:$0xff]
    %v119 = vld [vmem:[#allocation2 + $0x68] sm:$0xff]
    %v120 = vld [vmem:[#allocation2 + $0x70] sm:$0xff]
    %v121 = vld [vmem:[#allocation2 + $0x78] sm:$0xff]
    %v122 = vld [vmem:[#allocation2 + $0x80] sm:$0xff]
    %v123 = vld [vmem:[#allocation2 + $0x88] sm:$0xff]
    %v124 = vld [vmem:[#allocation2 + $0x90] sm:$0xff]
    %v125 = vld [vmem:[#allocation2 + $0x98] sm:$0xff]
    %v126 = vld [vmem:[#allocation2 + $0xa0] sm:$0xff]
    %v127 = vld [vmem:[#allocation2 + $0xa8] sm:$0xff]
    %v128 = vld [vmem:[#allocation2 + $0xb0] sm:$0xff]
    %v129 = vld [vmem:[#allocation2 + $0xb8] sm:$0xff]
    %v130 = vld [vmem:[#allocation2 + $0xc0] sm:$0xff]
    %v131 = vld [vmem:[#allocation2 + $0xc8] sm:$0xff]
    %v132 = vld [vmem:[#allocation2 + $0xd0] sm:$0xff]
    %v133 = vld [vmem:[#allocation2 + $0xd8] sm:$0xff]
    %v134 = vld [vmem:[#allocation2 + $0xe0] sm:$0xff]
    %v135 = vld [vmem:[#allocation2 + $0xe8] sm:$0xff]
    %v136 = vld [vmem:[#allocation2 + $0xf0] sm:$0xff]
    %v137 = vld [vmem:[#allocation2 + $0xf8] sm:$0xff]
    %v138 = vld [vmem:[#allocation2 + $0x100] sm:$0xff]
    %v139 = vld [vmem:[#allocation2 + $0x108] sm:$0xff]
    %v140 = vld [vmem:[#allocation2 + $0x110] sm:$0xff]
    %v141 = vld [vmem:[#allocation2 + $0x118] sm:$0xff]
    %v142 = vld [vmem:[#allocation2 + $0x120] sm:$0xff]
    %v143 = vld [vmem:[#allocation2 + $0x128] sm:$0xff]
    %v144 = vld [vmem:[#allocation2 + $0x130] sm:$0xff]
    %v145 = vld [vmem:[#allocation2 + $0x138] sm:$0xff]
    %v146 = vld [vmem:[#allocation2 + $0x140] sm:$0xff]
    %v147 = vld [vmem:[#allocation2 + $0x148] sm:$0xff]
    %v148 = vld [vmem:[#allocation2 + $0x150] sm:$0xff]
    %v149 = vld [vmem:[#allocation2 + $0x158] sm:$0xff]
    %v150 = vld [vmem:[#allocation2 + $0x160] sm:$0xff]
    %v151 = vld [vmem:[#allocation2 + $0x168] sm:$0xff]
    %v152 = vld [vmem:[#allocation2 + $0x170] sm:$0xff]
    %v153 = vld [vmem:[#allocation2 + $0x178] sm:$0xff]
    %v154 = vld [vmem:[#allocation2 + $0x180] sm:$0xff]
    %v155 = vld [vmem:[#allocation2 + $0x188] sm:$0xff]
    %v156 = vld [vmem:[#allocation2 + $0x190] sm:$0xff]
    %v157 = vld [vmem:[#allocation2 + $0x198] sm:$0xff]
    %v158 = vld [vmem:[#allocation2 + $0x1a0] sm:$0xff]
    %v159 = vld [vmem:[#allocation2 + $0x1a8] sm:$0xff]
    %v160 = vld [vmem:[#allocation2 + $0x1b0] sm:$0xff]
    %v161 = vld [vmem:[#allocation2 + $0x1b8] sm:$0xff]
    %v162 = vld [vmem:[#allocation2 + $0x1c0] sm:$0xff]
    %v163 = vld [vmem:[#allocation2 + $0x1c8] sm:$0xff]
    %v164 = vld [vmem:[#allocation2 + $0x1d0] sm:$0xff]
    %v165 = vld [vmem:[#allocation2 + $0x1d8] sm:$0xff]
    %v166 = vld [vmem:[#allocation2 + $0x1e0] sm:$0xff]
    %v167 = vld [vmem:[#allocation2 + $0x1e8] sm:$0xff]
    %v168 = vld [vmem:[#allocation2 + $0x1f0] sm:$0xff]
    %v169 = vld [vmem:[#allocation2 + $0x1f8] sm:$0xff]
    %v170 = vld [vmem:[#allocation5] sm:$0xff]
    %v172 = vlaneseq
    %v173 = vshrl.u32 %v172, 7
    %v174 = vsub.s32 0, %v173
    %v175 = vrot.slane %v170, %v174
    %v176 = vlaneseq
    %v177 = vshrl.u32 %v176, 7
    %v178 = vsub.s32 1, %v177
    %v179 = vrot.slane %v170, %v178
    %v180 = vlaneseq
    %v181 = vshrl.u32 %v180, 7
    %v182 = vsub.s32 2, %v181
    %v183 = vrot.slane %v170, %v182
    %v184 = vlaneseq
    %v185 = vshrl.u32 %v184, 7
    %v186 = vsub.s32 3, %v185
    %v187 = vrot.slane %v170, %v186
    %v188 = vlaneseq
    %v189 = vshrl.u32 %v188, 7
    %v190 = vsub.s32 4, %v189
    %v191 = vrot.slane %v170, %v190
    %v192 = vlaneseq
    %v193 = vshrl.u32 %v192, 7
    %v194 = vsub.s32 5, %v193
    %v195 = vrot.slane %v170, %v194
    %v196 = vlaneseq
    %v197 = vshrl.u32 %v196, 7
    %v198 = vsub.s32 6, %v197
    %v199 = vrot.slane %v170, %v198
    %v200 = vlaneseq
    %v201 = vshrl.u32 %v200, 7
    %v202 = vsub.s32 7, %v201
    %v203 = vrot.slane %v170, %v202
    %v276 = vunpack.c.l.b16 %v106
    %v277 = vunpack.c.h.b16 %v106
    %v278 = vunpack.c.l.b16 %v107
    %v279 = vunpack.c.h.b16 %v107
    %v280 = vunpack.c.l.b16 %v108
    %v281 = vunpack.c.h.b16 %v108
    %v282 = vunpack.c.l.b16 %v109
    %v283 = vunpack.c.h.b16 %v109
    %v284 = vunpack.c.l.b16 %v110
    %v285 = vunpack.c.h.b16 %v110
    %v286 = vunpack.c.l.b16 %v111
    %v287 = vunpack.c.h.b16 %v111
    %v288 = vunpack.c.l.b16 %v112
    %v289 = vunpack.c.h.b16 %v112
    %v290 = vunpack.c.l.b16 %v113
    %v291 = vunpack.c.h.b16 %v113
    %v292 = vunpack.c.l.b16 %v114
    %v293 = vunpack.c.h.b16 %v114
    %v294 = vunpack.c.l.b16 %v115
    %v295 = vunpack.c.h.b16 %v115
    %v296 = vunpack.c.l.b16 %v116
    %v297 = vunpack.c.h.b16 %v116
    %v298 = vunpack.c.l.b16 %v117
    %v299 = vunpack.c.h.b16 %v117
    %v300 = vunpack.c.l.b16 %v118
    %v301 = vunpack.c.h.b16 %v118
    %v302 = vunpack.c.l.b16 %v119
    %v303 = vunpack.c.h.b16 %v119
    %v304 = vunpack.c.l.b16 %v120
    %v305 = vunpack.c.h.b16 %v120
    %v306 = vunpack.c.l.b16 %v121
    %v307 = vunpack.c.h.b16 %v121
    %v308 = vunpack.c.l.b16 %v122
    %v309 = vunpack.c.h.b16 %v122
    %v310 = vunpack.c.l.b16 %v123
    %v311 = vunpack.c.h.b16 %v123
    %v312 = vunpack.c.l.b16 %v124
    %v313 = vunpack.c.h.b16 %v124
    %v314 = vunpack.c.l.b16 %v125
    %v315 = vunpack.c.h.b16 %v125
    %v316 = vunpack.c.l.b16 %v126
    %v317 = vunpack.c.h.b16 %v126
    %v318 = vunpack.c.l.b16 %v127
    %v319 = vunpack.c.h.b16 %v127
    %v320 = vunpack.c.l.b16 %v128
    %v321 = vunpack.c.h.b16 %v128
    %v322 = vunpack.c.l.b16 %v129
    %v323 = vunpack.c.h.b16 %v129
    %v324 = vunpack.c.l.b16 %v130
    %v325 = vunpack.c.h.b16 %v130
    %v326 = vunpack.c.l.b16 %v131
    %v327 = vunpack.c.h.b16 %v131
    %v328 = vunpack.c.l.b16 %v132
    %v329 = vunpack.c.h.b16 %v132
    %v330 = vunpack.c.l.b16 %v133
    %v331 = vunpack.c.h.b16 %v133
    %v332 = vunpack.c.l.b16 %v134
    %v333 = vunpack.c.h.b16 %v134
    %v334 = vunpack.c.l.b16 %v135
    %v335 = vunpack.c.h.b16 %v135
    %v336 = vunpack.c.l.b16 %v136
    %v337 = vunpack.c.h.b16 %v136
    %v338 = vunpack.c.l.b16 %v137
    %v339 = vunpack.c.h.b16 %v137
    %v340 = vunpack.c.l.b16 %v138
    %v341 = vunpack.c.h.b16 %v138
    %v342 = vunpack.c.l.b16 %v139
    %v343 = vunpack.c.h.b16 %v139
    %v344 = vunpack.c.l.b16 %v140
    %v345 = vunpack.c.h.b16 %v140
    %v346 = vunpack.c.l.b16 %v141
    %v347 = vunpack.c.h.b16 %v141
    %v348 = vunpack.c.l.b16 %v142
    %v349 = vunpack.c.h.b16 %v142
    %v350 = vunpack.c.l.b16 %v143
    %v351 = vunpack.c.h.b16 %v143
    %v352 = vunpack.c.l.b16 %v144
    %v353 = vunpack.c.h.b16 %v144
    %v354 = vunpack.c.l.b16 %v145
    %v355 = vunpack.c.h.b16 %v145
    %v356 = vunpack.c.l.b16 %v146
    %v357 = vunpack.c.h.b16 %v146
    %v358 = vunpack.c.l.b16 %v147
    %v359 = vunpack.c.h.b16 %v147
    %v360 = vunpack.c.l.b16 %v148
    %v361 = vunpack.c.h.b16 %v148
    %v362 = vunpack.c.l.b16 %v149
    %v363 = vunpack.c.h.b16 %v149
    %v364 = vunpack.c.l.b16 %v150
    %v365 = vunpack.c.h.b16 %v150
    %v366 = vunpack.c.l.b16 %v151
    %v367 = vunpack.c.h.b16 %v151
    %v368 = vunpack.c.l.b16 %v152
    %v369 = vunpack.c.h.b16 %v152
    %v370 = vunpack.c.l.b16 %v153
    %v371 = vunpack.c.h.b16 %v153
    %v372 = vunpack.c.l.b16 %v154
    %v373 = vunpack.c.h.b16 %v154
    %v374 = vunpack.c.l.b16 %v155
    %v375 = vunpack.c.h.b16 %v155
    %v376 = vunpack.c.l.b16 %v156
    %v377 = vunpack.c.h.b16 %v156
    %v378 = vunpack.c.l.b16 %v157
    %v379 = vunpack.c.h.b16 %v157
    %v380 = vunpack.c.l.b16 %v158
    %v381 = vunpack.c.h.b16 %v158
    %v382 = vunpack.c.l.b16 %v159
    %v383 = vunpack.c.h.b16 %v159
    %v384 = vunpack.c.l.b16 %v160
    %v385 = vunpack.c.h.b16 %v160
    %v386 = vunpack.c.l.b16 %v161
    %v387 = vunpack.c.h.b16 %v161
    %v388 = vunpack.c.l.b16 %v162
    %v389 = vunpack.c.h.b16 %v162
    %v390 = vunpack.c.l.b16 %v163
    %v391 = vunpack.c.h.b16 %v163
    %v392 = vunpack.c.l.b16 %v164
    %v393 = vunpack.c.h.b16 %v164
    %v394 = vunpack.c.l.b16 %v165
    %v395 = vunpack.c.h.b16 %v165
    %v396 = vunpack.c.l.b16 %v166
    %v397 = vunpack.c.h.b16 %v166
    %v398 = vunpack.c.l.b16 %v167
    %v399 = vunpack.c.h.b16 %v167
    %v400 = vunpack.c.l.b16 %v168
    %v401 = vunpack.c.h.b16 %v168
    %v402 = vunpack.c.l.b16 %v169
    %v403 = vunpack.c.h.b16 %v169
    %v404 = vpack.c.b16 %v284, %v276
    %v405 = vpack.c.b16 %v285, %v277
    %v406 = vpack.c.b16 %v286, %v278
    %v407 = vpack.c.b16 %v287, %v279
    %v408 = vpack.c.b16 %v288, %v280
    %v409 = vpack.c.b16 %v289, %v281
    %v410 = vpack.c.b16 %v290, %v282
    %v411 = vpack.c.b16 %v291, %v283
    %v412 = vpack.c.b16 %v300, %v292
    %v413 = vpack.c.b16 %v301, %v293
    %v414 = vpack.c.b16 %v302, %v294
    %v415 = vpack.c.b16 %v303, %v295
    %v416 = vpack.c.b16 %v304, %v296
    %v417 = vpack.c.b16 %v305, %v297
    %v418 = vpack.c.b16 %v306, %v298
    %v419 = vpack.c.b16 %v307, %v299
    %v420 = vpack.c.b16 %v316, %v308
    %v421 = vpack.c.b16 %v317, %v309
    %v422 = vpack.c.b16 %v318, %v310
    %v423 = vpack.c.b16 %v319, %v311
    %v424 = vpack.c.b16 %v320, %v312
    %v425 = vpack.c.b16 %v321, %v313
    %v426 = vpack.c.b16 %v322, %v314
    %v427 = vpack.c.b16 %v323, %v315
    %v428 = vpack.c.b16 %v332, %v324
    %v429 = vpack.c.b16 %v333, %v325
    %v430 = vpack.c.b16 %v334, %v326
    %v431 = vpack.c.b16 %v335, %v327
    %v432 = vpack.c.b16 %v336, %v328
    %v433 = vpack.c.b16 %v337, %v329
    %v434 = vpack.c.b16 %v338, %v330
    %v435 = vpack.c.b16 %v339, %v331
    %v436 = vpack.c.b16 %v348, %v340
    %v437 = vpack.c.b16 %v349, %v341
    %v438 = vpack.c.b16 %v350, %v342
    %v439 = vpack.c.b16 %v351, %v343
    %v440 = vpack.c.b16 %v352, %v344
    %v441 = vpack.c.b16 %v353, %v345
    %v442 = vpack.c.b16 %v354, %v346
    %v443 = vpack.c.b16 %v355, %v347
    %v444 = vpack.c.b16 %v364, %v356
    %v445 = vpack.c.b16 %v365, %v357
    %v446 = vpack.c.b16 %v366, %v358
    %v447 = vpack.c.b16 %v367, %v359
    %v448 = vpack.c.b16 %v368, %v360
    %v449 = vpack.c.b16 %v369, %v361
    %v450 = vpack.c.b16 %v370, %v362
    %v451 = vpack.c.b16 %v371, %v363
    %v452 = vpack.c.b16 %v380, %v372
    %v453 = vpack.c.b16 %v381, %v373
    %v454 = vpack.c.b16 %v382, %v374
    %v455 = vpack.c.b16 %v383, %v375
    %v456 = vpack.c.b16 %v384, %v376
    %v457 = vpack.c.b16 %v385, %v377
    %v458 = vpack.c.b16 %v386, %v378
    %v459 = vpack.c.b16 %v387, %v379
    %v460 = vpack.c.b16 %v396, %v388
    %v461 = vpack.c.b16 %v397, %v389
    %v462 = vpack.c.b16 %v398, %v390
    %v463 = vpack.c.b16 %v399, %v391
    %v464 = vpack.c.b16 %v400, %v392
    %v465 = vpack.c.b16 %v401, %v393
    %v466 = vpack.c.b16 %v402, %v394
    %v467 = vpack.c.b16 %v403, %v395
    %532 = vmatprep.subr.bf16.mxu0 %v405
    %533 = vmatpush1.bf16.msra.mxu0 %v404
    %534 = vmatprep.subr.bf16.mxu0 %v413
    %535 = vmatpush1.bf16.msra.mxu0 %v412
    %536 = vmatprep.subr.bf16.mxu0 %v421
    %537 = vmatpush1.bf16.msra.mxu0 %v420
    %538 = vmatprep.subr.bf16.mxu0 %v429
    %539 = vmatpush1.bf16.msra.mxu0 %v428
    %540 = vmatprep.subr.bf16.mxu0 %v437
    %541 = vmatpush1.bf16.msra.mxu0 %v436
    %542 = vmatprep.subr.bf16.mxu0 %v445
    %543 = vmatpush1.bf16.msra.mxu0 %v444
    %544 = vmatprep.subr.bf16.mxu0 %v453
    %545 = vmatpush1.bf16.msra.mxu0 %v452
    %546 = vmatprep.subr.bf16.mxu0 %v461
    %547 = vmatpush1.bf16.msra.mxu0 %v460
    %548 = vmatprep.subr.bf16.mxu0 0
    %549 = vmatpush1.bf16.msra.mxu0 0
    %550 = vmatprep.subr.bf16.mxu0 0
    %551 = vmatpush1.bf16.msra.mxu0 0
    %552 = vmatprep.subr.bf16.mxu0 0
    %553 = vmatpush1.bf16.msra.mxu0 0
    %554 = vmatprep.subr.bf16.mxu0 0
    %555 = vmatpush1.bf16.msra.mxu0 0
    %556 = vmatprep.subr.bf16.mxu0 0
    %557 = vmatpush1.bf16.msra.mxu0 0
    %558 = vmatprep.subr.bf16.mxu0 0
    %559 = vmatpush1.bf16.msra.mxu0 0
    %560 = vmatprep.subr.bf16.mxu0 0
    %561 = vmatpush1.bf16.msra.mxu0 0
    %562 = vmatprep.subr.bf16.mxu0 0
    %563 = vmatpush1.bf16.msra.mxu0 0
    %564 = vmatprep.mubr.bf16.mxu0 0
    %565 = vmatmul.mubr.bf16.gmra.mrb[0].mxu0 %v105
    %v566 = vpop.f32.mrb[0].mxu0
    %v567 = vadd.f32 %v175, %v566
    %v568 = vpop.f32.mrb[0].mxu0
    %v569 = vadd.f32 %v179, %v568
    %v570 = vpop.f32.mrb[0].mxu0
    %v571 = vpop.f32.mrb[0].mxu0
    %572 = vdwg.mxu0
    %573 = vmatprep.subr.bf16.mxu0 %v407
    %574 = vmatpush1.bf16.msra.mxu0 %v406
    %575 = vmatprep.subr.bf16.mxu0 %v415
    %576 = vmatpush1.bf16.msra.mxu0 %v414
    %577 = vmatprep.subr.bf16.mxu0 %v423
    %578 = vmatpush1.bf16.msra.mxu0 %v422
    %579 = vmatprep.subr.bf16.mxu0 %v431
    %580 = vmatpush1.bf16.msra.mxu0 %v430
    %581 = vmatprep.subr.bf16.mxu0 %v439
    %582 = vmatpush1.bf16.msra.mxu0 %v438
    %583 = vmatprep.subr.bf16.mxu0 %v447
    %584 = vmatpush1.bf16.msra.mxu0 %v446
    %585 = vmatprep.subr.bf16.mxu0 %v455
    %586 = vmatpush1.bf16.msra.mxu0 %v454
    %587 = vmatprep.subr.bf16.mxu0 %v463
    %588 = vmatpush1.bf16.msra.mxu0 %v462
    %589 = vmatprep.subr.bf16.mxu0 0
    %590 = vmatpush1.bf16.msra.mxu0 0
    %591 = vmatprep.subr.bf16.mxu0 0
    %592 = vmatpush1.bf16.msra.mxu0 0
    %593 = vmatprep.subr.bf16.mxu0 0
    %594 = vmatpush1.bf16.msra.mxu0 0
    %595 = vmatprep.subr.bf16.mxu0 0
    %596 = vmatpush1.bf16.msra.mxu0 0
    %597 = vmatprep.subr.bf16.mxu0 0
    %598 = vmatpush1.bf16.msra.mxu0 0
    %599 = vmatprep.subr.bf16.mxu0 0
    %600 = vmatpush1.bf16.msra.mxu0 0
    %601 = vmatprep.subr.bf16.mxu0 0
    %602 = vmatpush1.bf16.msra.mxu0 0
    %603 = vmatprep.subr.bf16.mxu0 0
    %604 = vmatpush1.bf16.msra.mxu0 0
    %605 = vmatprep.mubr.bf16.mxu0 0
    %606 = vmatmul.mubr.bf16.gmra.mrb[0].mxu0 %v105
    %v607 = vpop.f32.mrb[0].mxu0
    %v608 = vadd.f32 %v183, %v607
    %v609 = vpop.f32.mrb[0].mxu0
    %v610 = vadd.f32 %v187, %v609
    %v611 = vpop.f32.mrb[0].mxu0
    %v612 = vpop.f32.mrb[0].mxu0
    %613 = vdwg.mxu0
    %614 = vmatprep.subr.bf16.mxu0 %v409
    %615 = vmatpush1.bf16.msra.mxu0 %v408
    %616 = vmatprep.subr.bf16.mxu0 %v417
    %617 = vmatpush1.bf16.msra.mxu0 %v416
    %618 = vmatprep.subr.bf16.mxu0 %v425
    %619 = vmatpush1.bf16.msra.mxu0 %v424
    %620 = vmatprep.subr.bf16.mxu0 %v433
    %621 = vmatpush1.bf16.msra.mxu0 %v432
    %622 = vmatprep.subr.bf16.mxu0 %v441
    %623 = vmatpush1.bf16.msra.mxu0 %v440
    %624 = vmatprep.subr.bf16.mxu0 %v449
    %625 = vmatpush1.bf16.msra.mxu0 %v448
    %626 = vmatprep.subr.bf16.mxu0 %v457
    %627 = vmatpush1.bf16.msra.mxu0 %v456
    %628 = vmatprep.subr.bf16.mxu0 %v465
    %629 = vmatpush1.bf16.msra.mxu0 %v464
    %630 = vmatprep.subr.bf16.mxu0 0
    %631 = vmatpush1.bf16.msra.mxu0 0
    %632 = vmatprep.subr.bf16.mxu0 0
    %633 = vmatpush1.bf16.msra.mxu0 0
    %634 = vmatprep.subr.bf16.mxu0 0
    %635 = vmatpush1.bf16.msra.mxu0 0
    %636 = vmatprep.subr.bf16.mxu0 0
    %637 = vmatpush1.bf16.msra.mxu0 0
    %638 = vmatprep.subr.bf16.mxu0 0
    %639 = vmatpush1.bf16.msra.mxu0 0
    %640 = vmatprep.subr.bf16.mxu0 0
    %641 = vmatpush1.bf16.msra.mxu0 0
    %642 = vmatprep.subr.bf16.mxu0 0
    %643 = vmatpush1.bf16.msra.mxu0 0
    %644 = vmatprep.subr.bf16.mxu0 0
    %645 = vmatpush1.bf16.msra.mxu0 0
    %646 = vmatprep.mubr.bf16.mxu0 0
    %647 = vmatmul.mubr.bf16.gmra.mrb[0].mxu0 %v105
    %v648 = vpop.f32.mrb[0].mxu0
    %v649 = vadd.f32 %v191, %v648
    %v650 = vpop.f32.mrb[0].mxu0
    %v651 = vadd.f32 %v195, %v650
    %v652 = vpop.f32.mrb[0].mxu0
    %v653 = vpop.f32.mrb[0].mxu0
    %654 = vdwg.mxu0
    %655 = vmatprep.subr.bf16.mxu0 %v411
    %656 = vmatpush1.bf16.msra.mxu0 %v410
    %657 = vmatprep.subr.bf16.mxu0 %v419
    %658 = vmatpush1.bf16.msra.mxu0 %v418
    %659 = vmatprep.subr.bf16.mxu0 %v427
    %660 = vmatpush1.bf16.msra.mxu0 %v426
    %661 = vmatprep.subr.bf16.mxu0 %v435
    %662 = vmatpush1.bf16.msra.mxu0 %v434
    %663 = vmatprep.subr.bf16.mxu0 %v443
    %664 = vmatpush1.bf16.msra.mxu0 %v442
    %665 = vmatprep.subr.bf16.mxu0 %v451
    %666 = vmatpush1.bf16.msra.mxu0 %v450
    %667 = vmatprep.subr.bf16.mxu0 %v459
    %668 = vmatpush1.bf16.msra.mxu0 %v458
    %669 = vmatprep.subr.bf16.mxu0 %v467
    %670 = vmatpush1.bf16.msra.mxu0 %v466
    %671 = vmatprep.subr.bf16.mxu0 0
    %672 = vmatpush1.bf16.msra.mxu0 0
    %673 = vmatprep.subr.bf16.mxu0 0
    %674 = vmatpush1.bf16.msra.mxu0 0
    %675 = vmatprep.subr.bf16.mxu0 0
    %676 = vmatpush1.bf16.msra.mxu0 0
    %677 = vmatprep.subr.bf16.mxu0 0
    %678 = vmatpush1.bf16.msra.mxu0 0
    %679 = vmatprep.subr.bf16.mxu0 0
    %680 = vmatpush1.bf16.msra.mxu0 0
    %681 = vmatprep.subr.bf16.mxu0 0
    %682 = vmatpush1.bf16.msra.mxu0 0
    %683 = vmatprep.subr.bf16.mxu0 0
    %684 = vmatpush1.bf16.msra.mxu0 0
    %685 = vmatprep.subr.bf16.mxu0 0
    %686 = vmatpush1.bf16.msra.mxu0 0
    %687 = vmatprep.mubr.bf16.mxu0 0
    %688 = vmatmul.mubr.bf16.gmra.mrb[0].mxu0 %v105
    %v689 = vpop.f32.mrb[0].mxu0
    %v690 = vadd.f32 %v199, %v689
    %v691 = vpop.f32.mrb[0].mxu0
    %v692 = vadd.f32 %v203, %v691
    %v693 = vpop.f32.mrb[0].mxu0
    %v694 = vpop.f32.mrb[0].mxu0
    %695 = vdwg.mxu0
    %v696 = vmax.f32 %v567, 0.0
    %v697 = vmax.f32 %v569, 0.0
    %v698 = vmax.f32 %v608, 0.0
    %v699 = vmax.f32 %v610, 0.0
    %v700 = vmax.f32 %v649, 0.0
    %v701 = vmax.f32 %v651, 0.0
    %v702 = vmax.f32 %v690, 0.0
    %v703 = vmax.f32 %v692, 0.0
    %v704 = vpack.c.bf16 %v696, %v696
    %v705 = vpack.c.bf16 %v697, %v697
    %v706 = vpack.c.bf16 %v698, %v698
    %v707 = vpack.c.bf16 %v699, %v699
    %v708 = vpack.c.bf16 %v700, %v700
    %v709 = vpack.c.bf16 %v701, %v701
    %v710 = vpack.c.bf16 %v702, %v702
    %v711 = vpack.c.bf16 %v703, %v703
    %v712 = vld [vmem:[#allocation7] sm:$0xff]
    %v713 = vld [vmem:[#allocation7 + $0x8] sm:$0xff]
    %v714 = vld [vmem:[#allocation7 + $0x10] sm:$0xff]
    %v715 = vld [vmem:[#allocation7 + $0x18] sm:$0xff]
    %v716 = vld [vmem:[#allocation7 + $0x20] sm:$0xff]
    %v717 = vld [vmem:[#allocation7 + $0x28] sm:$0xff]
    %v718 = vld [vmem:[#allocation7 + $0x30] sm:$0xff]
    %v719 = vld [vmem:[#allocation7 + $0x38] sm:$0xff]
    %v720 = vld [vmem:[#allocation7 + $0x40] sm:$0xff]
    %v721 = vld [vmem:[#allocation7 + $0x48] sm:$0xff]
    %v722 = vld [vmem:[#allocation7 + $0x50] sm:$0xff]
    %v723 = vld [vmem:[#allocation7 + $0x58] sm:$0xff]
    %v724 = vld [vmem:[#allocation7 + $0x60] sm:$0xff]
    %v725 = vld [vmem:[#allocation7 + $0x68] sm:$0xff]
    %v726 = vld [vmem:[#allocation7 + $0x70] sm:$0xff]
    %v727 = vld [vmem:[#allocation7 + $0x78] sm:$0xff]
    %v728 = vld [vmem:[#allocation7 + $0x80] sm:$0xff]
    %v729 = vld [vmem:[#allocation7 + $0x88] sm:$0xff]
    %v730 = vld [vmem:[#allocation7 + $0x90] sm:$0xff]
    %v731 = vld [vmem:[#allocation7 + $0x98] sm:$0xff]
    %v732 = vld [vmem:[#allocation7 + $0xa0] sm:$0xff]
    %v733 = vld [vmem:[#allocation7 + $0xa8] sm:$0xff]
    %v734 = vld [vmem:[#allocation7 + $0xb0] sm:$0xff]
    %v735 = vld [vmem:[#allocation7 + $0xb8] sm:$0xff]
    %v736 = vld [vmem:[#allocation7 + $0xc0] sm:$0xff]
    %v737 = vld [vmem:[#allocation7 + $0xc8] sm:$0xff]
    %v738 = vld [vmem:[#allocation7 + $0xd0] sm:$0xff]
    %v739 = vld [vmem:[#allocation7 + $0xd8] sm:$0xff]
    %v740 = vld [vmem:[#allocation7 + $0xe0] sm:$0xff]
    %v741 = vld [vmem:[#allocation7 + $0xe8] sm:$0xff]
    %v742 = vld [vmem:[#allocation7 + $0xf0] sm:$0xff]
    %v743 = vld [vmem:[#allocation7 + $0xf8] sm:$0xff]
    %v744 = vld [vmem:[#allocation7 + $0x100] sm:$0xff]
    %v745 = vld [vmem:[#allocation7 + $0x108] sm:$0xff]
    %v746 = vld [vmem:[#allocation7 + $0x110] sm:$0xff]
    %v747 = vld [vmem:[#allocation7 + $0x118] sm:$0xff]
    %v748 = vld [vmem:[#allocation7 + $0x120] sm:$0xff]
    %v749 = vld [vmem:[#allocation7 + $0x128] sm:$0xff]
    %v750 = vld [vmem:[#allocation7 + $0x130] sm:$0xff]
    %v751 = vld [vmem:[#allocation7 + $0x138] sm:$0xff]
    %v752 = vld [vmem:[#allocation7 + $0x140] sm:$0xff]
    %v753 = vld [vmem:[#allocation7 + $0x148] sm:$0xff]
    %v754 = vld [vmem:[#allocation7 + $0x150] sm:$0xff]
    %v755 = vld [vmem:[#allocation7 + $0x158] sm:$0xff]
    %v756 = vld [vmem:[#allocation7 + $0x160] sm:$0xff]
    %v757 = vld [vmem:[#allocation7 + $0x168] sm:$0xff]
    %v758 = vld [vmem:[#allocation7 + $0x170] sm:$0xff]
    %v759 = vld [vmem:[#allocation7 + $0x178] sm:$0xff]
    %v760 = vld [vmem:[#allocation7 + $0x180] sm:$0xff]
    %v761 = vld [vmem:[#allocation7 + $0x188] sm:$0xff]
    %v762 = vld [vmem:[#allocation7 + $0x190] sm:$0xff]
    %v763 = vld [vmem:[#allocation7 + $0x198] sm:$0xff]
    %v764 = vld [vmem:[#allocation7 + $0x1a0] sm:$0xff]
    %v765 = vld [vmem:[#allocation7 + $0x1a8] sm:$0xff]
    %v766 = vld [vmem:[#allocation7 + $0x1b0] sm:$0xff]
    %v767 = vld [vmem:[#allocation7 + $0x1b8] sm:$0xff]
    %v768 = vld [vmem:[#allocation7 + $0x1c0] sm:$0xff]
    %v769 = vld [vmem:[#allocation7 + $0x1c8] sm:$0xff]
    %v770 = vld [vmem:[#allocation7 + $0x1d0] sm:$0xff]
    %v771 = vld [vmem:[#allocation7 + $0x1d8] sm:$0xff]
    %v772 = vld [vmem:[#allocation7 + $0x1e0] sm:$0xff]
    %v773 = vld [vmem:[#allocation7 + $0x1e8] sm:$0xff]
    %v774 = vld [vmem:[#allocation7 + $0x1f0] sm:$0xff]
    %v775 = vld [vmem:[#allocation7 + $0x1f8] sm:$0xff]
    %v776 = vld [vmem:[#allocation7 + $0x200] sm:$0xff]
    %v777 = vld [vmem:[#allocation7 + $0x208] sm:$0xff]
    %v778 = vld [vmem:[#allocation7 + $0x210] sm:$0xff]
    %v779 = vld [vmem:[#allocation7 + $0x218] sm:$0xff]
    %v780 = vld [vmem:[#allocation7 + $0x220] sm:$0xff]
    %v781 = vld [vmem:[#allocation7 + $0x228] sm:$0xff]
    %v782 = vld [vmem:[#allocation7 + $0x230] sm:$0xff]
    %v783 = vld [vmem:[#allocation7 + $0x238] sm:$0xff]
    %v784 = vld [vmem:[#allocation7 + $0x240] sm:$0xff]
    %v785 = vld [vmem:[#allocation7 + $0x248] sm:$0xff]
    %v786 = vld [vmem:[#allocation7 + $0x250] sm:$0xff]
    %v787 = vld [vmem:[#allocation7 + $0x258] sm:$0xff]
    %v788 = vld [vmem:[#allocation7 + $0x260] sm:$0xff]
    %v789 = vld [vmem:[#allocation7 + $0x268] sm:$0xff]
    %v790 = vld [vmem:[#allocation7 + $0x270] sm:$0xff]
    %v791 = vld [vmem:[#allocation7 + $0x278] sm:$0xff]
    %v792 = vld [vmem:[#allocation7 + $0x280] sm:$0xff]
    %v793 = vld [vmem:[#allocation7 + $0x288] sm:$0xff]
    %v794 = vld [vmem:[#allocation7 + $0x290] sm:$0xff]
    %v795 = vld [vmem:[#allocation7 + $0x298] sm:$0xff]
    %v796 = vld [vmem:[#allocation7 + $0x2a0] sm:$0xff]
    %v797 = vld [vmem:[#allocation7 + $0x2a8] sm:$0xff]
    %v798 = vld [vmem:[#allocation7 + $0x2b0] sm:$0xff]
    %v799 = vld [vmem:[#allocation7 + $0x2b8] sm:$0xff]
    %v800 = vld [vmem:[#allocation7 + $0x2c0] sm:$0xff]
    %v801 = vld [vmem:[#allocation7 + $0x2c8] sm:$0xff]
    %v802 = vld [vmem:[#allocation7 + $0x2d0] sm:$0xff]
    %v803 = vld [vmem:[#allocation7 + $0x2d8] sm:$0xff]
    %v804 = vld [vmem:[#allocation7 + $0x2e0] sm:$0xff]
    %v805 = vld [vmem:[#allocation7 + $0x2e8] sm:$0xff]
    %v806 = vld [vmem:[#allocation7 + $0x2f0] sm:$0xff]
    %v807 = vld [vmem:[#allocation7 + $0x2f8] sm:$0xff]
    %v808 = vld [vmem:[#allocation7 + $0x300] sm:$0xff]
    %v809 = vld [vmem:[#allocation7 + $0x308] sm:$0xff]
    %v810 = vld [vmem:[#allocation7 + $0x310] sm:$0xff]
    %v811 = vld [vmem:[#allocation7 + $0x318] sm:$0xff]
    %v812 = vld [vmem:[#allocation7 + $0x320] sm:$0xff]
    %v813 = vld [vmem:[#allocation7 + $0x328] sm:$0xff]
    %v814 = vld [vmem:[#allocation7 + $0x330] sm:$0xff]
    %v815 = vld [vmem:[#allocation7 + $0x338] sm:$0xff]
    %v816 = vld [vmem:[#allocation7 + $0x340] sm:$0xff]
    %v817 = vld [vmem:[#allocation7 + $0x348] sm:$0xff]
    %v818 = vld [vmem:[#allocation7 + $0x350] sm:$0xff]
    %v819 = vld [vmem:[#allocation7 + $0x358] sm:$0xff]
    %v820 = vld [vmem:[#allocation7 + $0x360] sm:$0xff]
    %v821 = vld [vmem:[#allocation7 + $0x368] sm:$0xff]
    %v822 = vld [vmem:[#allocation7 + $0x370] sm:$0xff]
    %v823 = vld [vmem:[#allocation7 + $0x378] sm:$0xff]
    %v824 = vld [vmem:[#allocation7 + $0x380] sm:$0xff]
    %v825 = vld [vmem:[#allocation7 + $0x388] sm:$0xff]
    %v826 = vld [vmem:[#allocation7 + $0x390] sm:$0xff]
    %v827 = vld [vmem:[#allocation7 + $0x398] sm:$0xff]
    %v828 = vld [vmem:[#allocation7 + $0x3a0] sm:$0xff]
    %v829 = vld [vmem:[#allocation7 + $0x3a8] sm:$0xff]
    %v830 = vld [vmem:[#allocation7 + $0x3b0] sm:$0xff]
    %v831 = vld [vmem:[#allocation7 + $0x3b8] sm:$0xff]
    %v832 = vld [vmem:[#allocation7 + $0x3c0] sm:$0xff]
    %v833 = vld [vmem:[#allocation7 + $0x3c8] sm:$0xff]
    %v834 = vld [vmem:[#allocation7 + $0x3d0] sm:$0xff]
    %v835 = vld [vmem:[#allocation7 + $0x3d8] sm:$0xff]
    %v836 = vld [vmem:[#allocation7 + $0x3e0] sm:$0xff]
    %v837 = vld [vmem:[#allocation7 + $0x3e8] sm:$0xff]
    %v838 = vld [vmem:[#allocation7 + $0x3f0] sm:$0xff]
    %v839 = vld [vmem:[#allocation7 + $0x3f8] sm:$0xff]
    %v840 = vld [vmem:[#allocation7 + $0x400] sm:$0xff]
    %v841 = vld [vmem:[#allocation7 + $0x408] sm:$0xff]
    %v842 = vld [vmem:[#allocation7 + $0x410] sm:$0xff]
    %v843 = vld [vmem:[#allocation7 + $0x418] sm:$0xff]
    %v844 = vld [vmem:[#allocation7 + $0x420] sm:$0xff]
    %v845 = vld [vmem:[#allocation7 + $0x428] sm:$0xff]
    %v846 = vld [vmem:[#allocation7 + $0x430] sm:$0xff]
    %v847 = vld [vmem:[#allocation7 + $0x438] sm:$0xff]
    %v848 = vld [vmem:[#allocation7 + $0x440] sm:$0xff]
    %v849 = vld [vmem:[#allocation7 + $0x448] sm:$0xff]
    %v850 = vld [vmem:[#allocation7 + $0x450] sm:$0xff]
    %v851 = vld [vmem:[#allocation7 + $0x458] sm:$0xff]
    %v852 = vld [vmem:[#allocation7 + $0x460] sm:$0xff]
    %v853 = vld [vmem:[#allocation7 + $0x468] sm:$0xff]
    %v854 = vld [vmem:[#allocation7 + $0x470] sm:$0xff]
    %v855 = vld [vmem:[#allocation7 + $0x478] sm:$0xff]
    %v856 = vld [vmem:[#allocation7 + $0x480] sm:$0xff]
    %v857 = vld [vmem:[#allocation7 + $0x488] sm:$0xff]
    %v858 = vld [vmem:[#allocation7 + $0x490] sm:$0xff]
    %v859 = vld [vmem:[#allocation7 + $0x498] sm:$0xff]
    %v860 = vld [vmem:[#allocation7 + $0x4a0] sm:$0xff]
    %v861 = vld [vmem:[#allocation7 + $0x4a8] sm:$0xff]
    %v862 = vld [vmem:[#allocation7 + $0x4b0] sm:$0xff]
    %v863 = vld [vmem:[#allocation7 + $0x4b8] sm:$0xff]
    %v864 = vld [vmem:[#allocation7 + $0x4c0] sm:$0xff]
    %v865 = vld [vmem:[#allocation7 + $0x4c8] sm:$0xff]
    %v866 = vld [vmem:[#allocation7 + $0x4d0] sm:$0xff]
    %v867 = vld [vmem:[#allocation7 + $0x4d8] sm:$0xff]
    %v868 = vld [vmem:[#allocation7 + $0x4e0] sm:$0xff]
    %v869 = vld [vmem:[#allocation7 + $0x4e8] sm:$0xff]
    %v870 = vld [vmem:[#allocation7 + $0x4f0] sm:$0xff]
    %v871 = vld [vmem:[#allocation7 + $0x4f8] sm:$0xff]
    %v872 = vld [vmem:[#allocation7 + $0x500] sm:$0xff]
    %v873 = vld [vmem:[#allocation7 + $0x508] sm:$0xff]
    %v874 = vld [vmem:[#allocation7 + $0x510] sm:$0xff]
    %v875 = vld [vmem:[#allocation7 + $0x518] sm:$0xff]
    %v876 = vld [vmem:[#allocation7 + $0x520] sm:$0xff]
    %v877 = vld [vmem:[#allocation7 + $0x528] sm:$0xff]
    %v878 = vld [vmem:[#allocation7 + $0x530] sm:$0xff]
    %v879 = vld [vmem:[#allocation7 + $0x538] sm:$0xff]
    %v880 = vld [vmem:[#allocation7 + $0x540] sm:$0xff]
    %v881 = vld [vmem:[#allocation7 + $0x548] sm:$0xff]
    %v882 = vld [vmem:[#allocation7 + $0x550] sm:$0xff]
    %v883 = vld [vmem:[#allocation7 + $0x558] sm:$0xff]
    %v884 = vld [vmem:[#allocation7 + $0x560] sm:$0xff]
    %v885 = vld [vmem:[#allocation7 + $0x568] sm:$0xff]
    %v886 = vld [vmem:[#allocation7 + $0x570] sm:$0xff]
    %v887 = vld [vmem:[#allocation7 + $0x578] sm:$0xff]
    %v888 = vld [vmem:[#allocation7 + $0x580] sm:$0xff]
    %v889 = vld [vmem:[#allocation7 + $0x588] sm:$0xff]
    %v890 = vld [vmem:[#allocation7 + $0x590] sm:$0xff]
    %v891 = vld [vmem:[#allocation7 + $0x598] sm:$0xff]
    %v892 = vld [vmem:[#allocation7 + $0x5a0] sm:$0xff]
    %v893 = vld [vmem:[#allocation7 + $0x5a8] sm:$0xff]
    %v894 = vld [vmem:[#allocation7 + $0x5b0] sm:$0xff]
    %v895 = vld [vmem:[#allocation7 + $0x5b8] sm:$0xff]
    %v896 = vld [vmem:[#allocation7 + $0x5c0] sm:$0xff]
    %v897 = vld [vmem:[#allocation7 + $0x5c8] sm:$0xff]
    %v898 = vld [vmem:[#allocation7 + $0x5d0] sm:$0xff]
    %v899 = vld [vmem:[#allocation7 + $0x5d8] sm:$0xff]
    %v900 = vld [vmem:[#allocation7 + $0x5e0] sm:$0xff]
    %v901 = vld [vmem:[#allocation7 + $0x5e8] sm:$0xff]
    %v902 = vld [vmem:[#allocation7 + $0x5f0] sm:$0xff]
    %v903 = vld [vmem:[#allocation7 + $0x5f8] sm:$0xff]
    %v904 = vld [vmem:[#allocation7 + $0x600] sm:$0xff]
    %v905 = vld [vmem:[#allocation7 + $0x608] sm:$0xff]
    %v906 = vld [vmem:[#allocation7 + $0x610] sm:$0xff]
    %v907 = vld [vmem:[#allocation7 + $0x618] sm:$0xff]
    %v908 = vld [vmem:[#allocation7 + $0x620] sm:$0xff]
    %v909 = vld [vmem:[#allocation7 + $0x628] sm:$0xff]
    %v910 = vld [vmem:[#allocation7 + $0x630] sm:$0xff]
    %v911 = vld [vmem:[#allocation7 + $0x638] sm:$0xff]
    %v912 = vld [vmem:[#allocation7 + $0x640] sm:$0xff]
    %v913 = vld [vmem:[#allocation7 + $0x648] sm:$0xff]
    %v914 = vld [vmem:[#allocation7 + $0x650] sm:$0xff]
    %v915 = vld [vmem:[#allocation7 + $0x658] sm:$0xff]
    %v916 = vld [vmem:[#allocation7 + $0x660] sm:$0xff]
    %v917 = vld [vmem:[#allocation7 + $0x668] sm:$0xff]
    %v918 = vld [vmem:[#allocation7 + $0x670] sm:$0xff]
    %v919 = vld [vmem:[#allocation7 + $0x678] sm:$0xff]
    %v920 = vld [vmem:[#allocation7 + $0x680] sm:$0xff]
    %v921 = vld [vmem:[#allocation7 + $0x688] sm:$0xff]
    %v922 = vld [vmem:[#allocation7 + $0x690] sm:$0xff]
    %v923 = vld [vmem:[#allocation7 + $0x698] sm:$0xff]
    %v924 = vld [vmem:[#allocation7 + $0x6a0] sm:$0xff]
    %v925 = vld [vmem:[#allocation7 + $0x6a8] sm:$0xff]
    %v926 = vld [vmem:[#allocation7 + $0x6b0] sm:$0xff]
    %v927 = vld [vmem:[#allocation7 + $0x6b8] sm:$0xff]
    %v928 = vld [vmem:[#allocation7 + $0x6c0] sm:$0xff]
    %v929 = vld [vmem:[#allocation7 + $0x6c8] sm:$0xff]
    %v930 = vld [vmem:[#allocation7 + $0x6d0] sm:$0xff]
    %v931 = vld [vmem:[#allocation7 + $0x6d8] sm:$0xff]
    %v932 = vld [vmem:[#allocation7 + $0x6e0] sm:$0xff]
    %v933 = vld [vmem:[#allocation7 + $0x6e8] sm:$0xff]
    %v934 = vld [vmem:[#allocation7 + $0x6f0] sm:$0xff]
    %v935 = vld [vmem:[#allocation7 + $0x6f8] sm:$0xff]
    %v936 = vld [vmem:[#allocation7 + $0x700] sm:$0xff]
    %v937 = vld [vmem:[#allocation7 + $0x708] sm:$0xff]
    %v938 = vld [vmem:[#allocation7 + $0x710] sm:$0xff]
    %v939 = vld [vmem:[#allocation7 + $0x718] sm:$0xff]
    %v940 = vld [vmem:[#allocation7 + $0x720] sm:$0xff]
    %v941 = vld [vmem:[#allocation7 + $0x728] sm:$0xff]
    %v942 = vld [vmem:[#allocation7 + $0x730] sm:$0xff]
    %v943 = vld [vmem:[#allocation7 + $0x738] sm:$0xff]
    %v944 = vld [vmem:[#allocation7 + $0x740] sm:$0xff]
    %v945 = vld [vmem:[#allocation7 + $0x748] sm:$0xff]
    %v946 = vld [vmem:[#allocation7 + $0x750] sm:$0xff]
    %v947 = vld [vmem:[#allocation7 + $0x758] sm:$0xff]
    %v948 = vld [vmem:[#allocation7 + $0x760] sm:$0xff]
    %v949 = vld [vmem:[#allocation7 + $0x768] sm:$0xff]
    %v950 = vld [vmem:[#allocation7 + $0x770] sm:$0xff]
    %v951 = vld [vmem:[#allocation7 + $0x778] sm:$0xff]
    %v952 = vld [vmem:[#allocation7 + $0x780] sm:$0xff]
    %v953 = vld [vmem:[#allocation7 + $0x788] sm:$0xff]
    %v954 = vld [vmem:[#allocation7 + $0x790] sm:$0xff]
    %v955 = vld [vmem:[#allocation7 + $0x798] sm:$0xff]
    %v956 = vld [vmem:[#allocation7 + $0x7a0] sm:$0xff]
    %v957 = vld [vmem:[#allocation7 + $0x7a8] sm:$0xff]
    %v958 = vld [vmem:[#allocation7 + $0x7b0] sm:$0xff]
    %v959 = vld [vmem:[#allocation7 + $0x7b8] sm:$0xff]
    %v960 = vld [vmem:[#allocation7 + $0x7c0] sm:$0xff]
    %v961 = vld [vmem:[#allocation7 + $0x7c8] sm:$0xff]
    %v962 = vld [vmem:[#allocation7 + $0x7d0] sm:$0xff]
    %v963 = vld [vmem:[#allocation7 + $0x7d8] sm:$0xff]
    %v964 = vld [vmem:[#allocation7 + $0x7e0] sm:$0xff]
    %v965 = vld [vmem:[#allocation7 + $0x7e8] sm:$0xff]
    %v966 = vld [vmem:[#allocation7 + $0x7f0] sm:$0xff]
    %v967 = vld [vmem:[#allocation7 + $0x7f8] sm:$0xff]
    %v968 = vld [vmem:[#allocation7 + $0x800] sm:$0xff]
    %v969 = vld [vmem:[#allocation7 + $0x808] sm:$0xff]
    %v970 = vld [vmem:[#allocation7 + $0x810] sm:$0xff]
    %v971 = vld [vmem:[#allocation7 + $0x818] sm:$0xff]
    %v972 = vld [vmem:[#allocation7 + $0x820] sm:$0xff]
    %v973 = vld [vmem:[#allocation7 + $0x828] sm:$0xff]
    %v974 = vld [vmem:[#allocation7 + $0x830] sm:$0xff]
    %v975 = vld [vmem:[#allocation7 + $0x838] sm:$0xff]
    %v976 = vld [vmem:[#allocation7 + $0x840] sm:$0xff]
    %v977 = vld [vmem:[#allocation7 + $0x848] sm:$0xff]
    %v978 = vld [vmem:[#allocation7 + $0x850] sm:$0xff]
    %v979 = vld [vmem:[#allocation7 + $0x858] sm:$0xff]
    %v980 = vld [vmem:[#allocation7 + $0x860] sm:$0xff]
    %v981 = vld [vmem:[#allocation7 + $0x868] sm:$0xff]
    %v982 = vld [vmem:[#allocation7 + $0x870] sm:$0xff]
    %v983 = vld [vmem:[#allocation7 + $0x878] sm:$0xff]
    %v984 = vld [vmem:[#allocation7 + $0x880] sm:$0xff]
    %v985 = vld [vmem:[#allocation7 + $0x888] sm:$0xff]
    %v986 = vld [vmem:[#allocation7 + $0x890] sm:$0xff]
    %v987 = vld [vmem:[#allocation7 + $0x898] sm:$0xff]
    %v988 = vld [vmem:[#allocation7 + $0x8a0] sm:$0xff]
    %v989 = vld [vmem:[#allocation7 + $0x8a8] sm:$0xff]
    %v990 = vld [vmem:[#allocation7 + $0x8b0] sm:$0xff]
    %v991 = vld [vmem:[#allocation7 + $0x8b8] sm:$0xff]
    %v992 = vld [vmem:[#allocation7 + $0x8c0] sm:$0xff]
    %v993 = vld [vmem:[#allocation7 + $0x8c8] sm:$0xff]
    %v994 = vld [vmem:[#allocation7 + $0x8d0] sm:$0xff]
    %v995 = vld [vmem:[#allocation7 + $0x8d8] sm:$0xff]
    %v996 = vld [vmem:[#allocation7 + $0x8e0] sm:$0xff]
    %v997 = vld [vmem:[#allocation7 + $0x8e8] sm:$0xff]
    %v998 = vld [vmem:[#allocation7 + $0x8f0] sm:$0xff]
    %v999 = vld [vmem:[#allocation7 + $0x8f8] sm:$0xff]
    %v1000 = vld [vmem:[#allocation7 + $0x900] sm:$0xff]
    %v1001 = vld [vmem:[#allocation7 + $0x908] sm:$0xff]
    %v1002 = vld [vmem:[#allocation7 + $0x910] sm:$0xff]
    %v1003 = vld [vmem:[#allocation7 + $0x918] sm:$0xff]
    %v1004 = vld [vmem:[#allocation7 + $0x920] sm:$0xff]
    %v1005 = vld [vmem:[#allocation7 + $0x928] sm:$0xff]
    %v1006 = vld [vmem:[#allocation7 + $0x930] sm:$0xff]
    %v1007 = vld [vmem:[#allocation7 + $0x938] sm:$0xff]
    %v1008 = vld [vmem:[#allocation7 + $0x940] sm:$0xff]
    %v1009 = vld [vmem:[#allocation7 + $0x948] sm:$0xff]
    %v1010 = vld [vmem:[#allocation7 + $0x950] sm:$0xff]
    %v1011 = vld [vmem:[#allocation7 + $0x958] sm:$0xff]
    %v1012 = vld [vmem:[#allocation7 + $0x960] sm:$0xff]
    %v1013 = vld [vmem:[#allocation7 + $0x968] sm:$0xff]
    %v1014 = vld [vmem:[#allocation7 + $0x970] sm:$0xff]
    %v1015 = vld [vmem:[#allocation7 + $0x978] sm:$0xff]
    %v1016 = vld [vmem:[#allocation7 + $0x980] sm:$0xff]
    %v1017 = vld [vmem:[#allocation7 + $0x988] sm:$0xff]
    %v1018 = vld [vmem:[#allocation7 + $0x990] sm:$0xff]
    %v1019 = vld [vmem:[#allocation7 + $0x998] sm:$0xff]
    %v1020 = vld [vmem:[#allocation7 + $0x9a0] sm:$0xff]
    %v1021 = vld [vmem:[#allocation7 + $0x9a8] sm:$0xff]
    %v1022 = vld [vmem:[#allocation7 + $0x9b0] sm:$0xff]
    %v1023 = vld [vmem:[#allocation7 + $0x9b8] sm:$0xff]
    %v1024 = vld [vmem:[#allocation7 + $0x9c0] sm:$0xff]
    %v1025 = vld [vmem:[#allocation7 + $0x9c8] sm:$0xff]
    %v1026 = vld [vmem:[#allocation7 + $0x9d0] sm:$0xff]
    %v1027 = vld [vmem:[#allocation7 + $0x9d8] sm:$0xff]
    %v1028 = vld [vmem:[#allocation7 + $0x9e0] sm:$0xff]
    %v1029 = vld [vmem:[#allocation7 + $0x9e8] sm:$0xff]
    %v1030 = vld [vmem:[#allocation7 + $0x9f0] sm:$0xff]
    %v1031 = vld [vmem:[#allocation7 + $0x9f8] sm:$0xff]
    %v1032 = vld [vmem:[#allocation7 + $0xa00] sm:$0xff]
    %v1033 = vld [vmem:[#allocation7 + $0xa08] sm:$0xff]
    %v1034 = vld [vmem:[#allocation7 + $0xa10] sm:$0xff]
    %v1035 = vld [vmem:[#allocation7 + $0xa18] sm:$0xff]
    %v1036 = vld [vmem:[#allocation7 + $0xa20] sm:$0xff]
    %v1037 = vld [vmem:[#allocation7 + $0xa28] sm:$0xff]
    %v1038 = vld [vmem:[#allocation7 + $0xa30] sm:$0xff]
    %v1039 = vld [vmem:[#allocation7 + $0xa38] sm:$0xff]
    %v1040 = vld [vmem:[#allocation7 + $0xa40] sm:$0xff]
    %v1041 = vld [vmem:[#allocation7 + $0xa48] sm:$0xff]
    %v1042 = vld [vmem:[#allocation7 + $0xa50] sm:$0xff]
    %v1043 = vld [vmem:[#allocation7 + $0xa58] sm:$0xff]
    %v1044 = vld [vmem:[#allocation7 + $0xa60] sm:$0xff]
    %v1045 = vld [vmem:[#allocation7 + $0xa68] sm:$0xff]
    %v1046 = vld [vmem:[#allocation7 + $0xa70] sm:$0xff]
    %v1047 = vld [vmem:[#allocation7 + $0xa78] sm:$0xff]
    %v1048 = vld [vmem:[#allocation7 + $0xa80] sm:$0xff]
    %v1049 = vld [vmem:[#allocation7 + $0xa88] sm:$0xff]
    %v1050 = vld [vmem:[#allocation7 + $0xa90] sm:$0xff]
    %v1051 = vld [vmem:[#allocation7 + $0xa98] sm:$0xff]
    %v1052 = vld [vmem:[#allocation7 + $0xaa0] sm:$0xff]
    %v1053 = vld [vmem:[#allocation7 + $0xaa8] sm:$0xff]
    %v1054 = vld [vmem:[#allocation7 + $0xab0] sm:$0xff]
    %v1055 = vld [vmem:[#allocation7 + $0xab8] sm:$0xff]
    %v1056 = vld [vmem:[#allocation7 + $0xac0] sm:$0xff]
    %v1057 = vld [vmem:[#allocation7 + $0xac8] sm:$0xff]
    %v1058 = vld [vmem:[#allocation7 + $0xad0] sm:$0xff]
    %v1059 = vld [vmem:[#allocation7 + $0xad8] sm:$0xff]
    %v1060 = vld [vmem:[#allocation7 + $0xae0] sm:$0xff]
    %v1061 = vld [vmem:[#allocation7 + $0xae8] sm:$0xff]
    %v1062 = vld [vmem:[#allocation7 + $0xaf0] sm:$0xff]
    %v1063 = vld [vmem:[#allocation7 + $0xaf8] sm:$0xff]
    %v1064 = vld [vmem:[#allocation7 + $0xb00] sm:$0xff]
    %v1065 = vld [vmem:[#allocation7 + $0xb08] sm:$0xff]
    %v1066 = vld [vmem:[#allocation7 + $0xb10] sm:$0xff]
    %v1067 = vld [vmem:[#allocation7 + $0xb18] sm:$0xff]
    %v1068 = vld [vmem:[#allocation7 + $0xb20] sm:$0xff]
    %v1069 = vld [vmem:[#allocation7 + $0xb28] sm:$0xff]
    %v1070 = vld [vmem:[#allocation7 + $0xb30] sm:$0xff]
    %v1071 = vld [vmem:[#allocation7 + $0xb38] sm:$0xff]
    %v1072 = vld [vmem:[#allocation7 + $0xb40] sm:$0xff]
    %v1073 = vld [vmem:[#allocation7 + $0xb48] sm:$0xff]
    %v1074 = vld [vmem:[#allocation7 + $0xb50] sm:$0xff]
    %v1075 = vld [vmem:[#allocation7 + $0xb58] sm:$0xff]
    %v1076 = vld [vmem:[#allocation7 + $0xb60] sm:$0xff]
    %v1077 = vld [vmem:[#allocation7 + $0xb68] sm:$0xff]
    %v1078 = vld [vmem:[#allocation7 + $0xb70] sm:$0xff]
    %v1079 = vld [vmem:[#allocation7 + $0xb78] sm:$0xff]
    %v1080 = vld [vmem:[#allocation7 + $0xb80] sm:$0xff]
    %v1081 = vld [vmem:[#allocation7 + $0xb88] sm:$0xff]
    %v1082 = vld [vmem:[#allocation7 + $0xb90] sm:$0xff]
    %v1083 = vld [vmem:[#allocation7 + $0xb98] sm:$0xff]
    %v1084 = vld [vmem:[#allocation7 + $0xba0] sm:$0xff]
    %v1085 = vld [vmem:[#allocation7 + $0xba8] sm:$0xff]
    %v1086 = vld [vmem:[#allocation7 + $0xbb0] sm:$0xff]
    %v1087 = vld [vmem:[#allocation7 + $0xbb8] sm:$0xff]
    %v1088 = vld [vmem:[#allocation7 + $0xbc0] sm:$0xff]
    %v1089 = vld [vmem:[#allocation7 + $0xbc8] sm:$0xff]
    %v1090 = vld [vmem:[#allocation7 + $0xbd0] sm:$0xff]
    %v1091 = vld [vmem:[#allocation7 + $0xbd8] sm:$0xff]
    %v1092 = vld [vmem:[#allocation7 + $0xbe0] sm:$0xff]
    %v1093 = vld [vmem:[#allocation7 + $0xbe8] sm:$0xff]
    %v1094 = vld [vmem:[#allocation7 + $0xbf0] sm:$0xff]
    %v1095 = vld [vmem:[#allocation7 + $0xbf8] sm:$0xff]
    %v1096 = vld [vmem:[#allocation7 + $0xc00] sm:$0xff]
    %v1097 = vld [vmem:[#allocation7 + $0xc08] sm:$0xff]
    %v1098 = vld [vmem:[#allocation7 + $0xc10] sm:$0xff]
    %v1099 = vld [vmem:[#allocation7 + $0xc18] sm:$0xff]
    %v1100 = vld [vmem:[#allocation7 + $0xc20] sm:$0xff]
    %v1101 = vld [vmem:[#allocation7 + $0xc28] sm:$0xff]
    %v1102 = vld [vmem:[#allocation7 + $0xc30] sm:$0xff]
    %v1103 = vld [vmem:[#allocation7 + $0xc38] sm:$0xff]
    %v1104 = vld [vmem:[#allocation7 + $0xc40] sm:$0xff]
    %v1105 = vld [vmem:[#allocation7 + $0xc48] sm:$0xff]
    %v1106 = vld [vmem:[#allocation7 + $0xc50] sm:$0xff]
    %v1107 = vld [vmem:[#allocation7 + $0xc58] sm:$0xff]
    %v1108 = vld [vmem:[#allocation7 + $0xc60] sm:$0xff]
    %v1109 = vld [vmem:[#allocation7 + $0xc68] sm:$0xff]
    %v1110 = vld [vmem:[#allocation7 + $0xc70] sm:$0xff]
    %v1111 = vld [vmem:[#allocation7 + $0xc78] sm:$0xff]
    %v1112 = vld [vmem:[#allocation7 + $0xc80] sm:$0xff]
    %v1113 = vld [vmem:[#allocation7 + $0xc88] sm:$0xff]
    %v1114 = vld [vmem:[#allocation7 + $0xc90] sm:$0xff]
    %v1115 = vld [vmem:[#allocation7 + $0xc98] sm:$0xff]
    %v1116 = vld [vmem:[#allocation7 + $0xca0] sm:$0xff]
    %v1117 = vld [vmem:[#allocation7 + $0xca8] sm:$0xff]
    %v1118 = vld [vmem:[#allocation7 + $0xcb0] sm:$0xff]
    %v1119 = vld [vmem:[#allocation7 + $0xcb8] sm:$0xff]
    %v1120 = vld [vmem:[#allocation7 + $0xcc0] sm:$0xff]
    %v1121 = vld [vmem:[#allocation7 + $0xcc8] sm:$0xff]
    %v1122 = vld [vmem:[#allocation7 + $0xcd0] sm:$0xff]
    %v1123 = vld [vmem:[#allocation7 + $0xcd8] sm:$0xff]
    %v1124 = vld [vmem:[#allocation7 + $0xce0] sm:$0xff]
    %v1125 = vld [vmem:[#allocation7 + $0xce8] sm:$0xff]
    %v1126 = vld [vmem:[#allocation7 + $0xcf0] sm:$0xff]
    %v1127 = vld [vmem:[#allocation7 + $0xcf8] sm:$0xff]
    %v1128 = vld [vmem:[#allocation7 + $0xd00] sm:$0xff]
    %v1129 = vld [vmem:[#allocation7 + $0xd08] sm:$0xff]
    %v1130 = vld [vmem:[#allocation7 + $0xd10] sm:$0xff]
    %v1131 = vld [vmem:[#allocation7 + $0xd18] sm:$0xff]
    %v1132 = vld [vmem:[#allocation7 + $0xd20] sm:$0xff]
    %v1133 = vld [vmem:[#allocation7 + $0xd28] sm:$0xff]
    %v1134 = vld [vmem:[#allocation7 + $0xd30] sm:$0xff]
    %v1135 = vld [vmem:[#allocation7 + $0xd38] sm:$0xff]
    %v1136 = vld [vmem:[#allocation7 + $0xd40] sm:$0xff]
    %v1137 = vld [vmem:[#allocation7 + $0xd48] sm:$0xff]
    %v1138 = vld [vmem:[#allocation7 + $0xd50] sm:$0xff]
    %v1139 = vld [vmem:[#allocation7 + $0xd58] sm:$0xff]
    %v1140 = vld [vmem:[#allocation7 + $0xd60] sm:$0xff]
    %v1141 = vld [vmem:[#allocation7 + $0xd68] sm:$0xff]
    %v1142 = vld [vmem:[#allocation7 + $0xd70] sm:$0xff]
    %v1143 = vld [vmem:[#allocation7 + $0xd78] sm:$0xff]
    %v1144 = vld [vmem:[#allocation7 + $0xd80] sm:$0xff]
    %v1145 = vld [vmem:[#allocation7 + $0xd88] sm:$0xff]
    %v1146 = vld [vmem:[#allocation7 + $0xd90] sm:$0xff]
    %v1147 = vld [vmem:[#allocation7 + $0xd98] sm:$0xff]
    %v1148 = vld [vmem:[#allocation7 + $0xda0] sm:$0xff]
    %v1149 = vld [vmem:[#allocation7 + $0xda8] sm:$0xff]
    %v1150 = vld [vmem:[#allocation7 + $0xdb0] sm:$0xff]
    %v1151 = vld [vmem:[#allocation7 + $0xdb8] sm:$0xff]
    %v1152 = vld [vmem:[#allocation7 + $0xdc0] sm:$0xff]
    %v1153 = vld [vmem:[#allocation7 + $0xdc8] sm:$0xff]
    %v1154 = vld [vmem:[#allocation7 + $0xdd0] sm:$0xff]
    %v1155 = vld [vmem:[#allocation7 + $0xdd8] sm:$0xff]
    %v1156 = vld [vmem:[#allocation7 + $0xde0] sm:$0xff]
    %v1157 = vld [vmem:[#allocation7 + $0xde8] sm:$0xff]
    %v1158 = vld [vmem:[#allocation7 + $0xdf0] sm:$0xff]
    %v1159 = vld [vmem:[#allocation7 + $0xdf8] sm:$0xff]
    %v1160 = vld [vmem:[#allocation7 + $0xe00] sm:$0xff]
    %v1161 = vld [vmem:[#allocation7 + $0xe08] sm:$0xff]
    %v1162 = vld [vmem:[#allocation7 + $0xe10] sm:$0xff]
    %v1163 = vld [vmem:[#allocation7 + $0xe18] sm:$0xff]
    %v1164 = vld [vmem:[#allocation7 + $0xe20] sm:$0xff]
    %v1165 = vld [vmem:[#allocation7 + $0xe28] sm:$0xff]
    %v1166 = vld [vmem:[#allocation7 + $0xe30] sm:$0xff]
    %v1167 = vld [vmem:[#allocation7 + $0xe38] sm:$0xff]
    %v1168 = vld [vmem:[#allocation7 + $0xe40] sm:$0xff]
    %v1169 = vld [vmem:[#allocation7 + $0xe48] sm:$0xff]
    %v1170 = vld [vmem:[#allocation7 + $0xe50] sm:$0xff]
    %v1171 = vld [vmem:[#allocation7 + $0xe58] sm:$0xff]
    %v1172 = vld [vmem:[#allocation7 + $0xe60] sm:$0xff]
    %v1173 = vld [vmem:[#allocation7 + $0xe68] sm:$0xff]
    %v1174 = vld [vmem:[#allocation7 + $0xe70] sm:$0xff]
    %v1175 = vld [vmem:[#allocation7 + $0xe78] sm:$0xff]
    %v1176 = vld [vmem:[#allocation7 + $0xe80] sm:$0xff]
    %v1177 = vld [vmem:[#allocation7 + $0xe88] sm:$0xff]
    %v1178 = vld [vmem:[#allocation7 + $0xe90] sm:$0xff]
    %v1179 = vld [vmem:[#allocation7 + $0xe98] sm:$0xff]
    %v1180 = vld [vmem:[#allocation7 + $0xea0] sm:$0xff]
    %v1181 = vld [vmem:[#allocation7 + $0xea8] sm:$0xff]
    %v1182 = vld [vmem:[#allocation7 + $0xeb0] sm:$0xff]
    %v1183 = vld [vmem:[#allocation7 + $0xeb8] sm:$0xff]
    %v1184 = vld [vmem:[#allocation7 + $0xec0] sm:$0xff]
    %v1185 = vld [vmem:[#allocation7 + $0xec8] sm:$0xff]
    %v1186 = vld [vmem:[#allocation7 + $0xed0] sm:$0xff]
    %v1187 = vld [vmem:[#allocation7 + $0xed8] sm:$0xff]
    %v1188 = vld [vmem:[#allocation7 + $0xee0] sm:$0xff]
    %v1189 = vld [vmem:[#allocation7 + $0xee8] sm:$0xff]
    %v1190 = vld [vmem:[#allocation7 + $0xef0] sm:$0xff]
    %v1191 = vld [vmem:[#allocation7 + $0xef8] sm:$0xff]
    %v1192 = vld [vmem:[#allocation7 + $0xf00] sm:$0xff]
    %v1193 = vld [vmem:[#allocation7 + $0xf08] sm:$0xff]
    %v1194 = vld [vmem:[#allocation7 + $0xf10] sm:$0xff]
    %v1195 = vld [vmem:[#allocation7 + $0xf18] sm:$0xff]
    %v1196 = vld [vmem:[#allocation7 + $0xf20] sm:$0xff]
    %v1197 = vld [vmem:[#allocation7 + $0xf28] sm:$0xff]
    %v1198 = vld [vmem:[#allocation7 + $0xf30] sm:$0xff]
    %v1199 = vld [vmem:[#allocation7 + $0xf38] sm:$0xff]
    %v1200 = vld [vmem:[#allocation7 + $0xf40] sm:$0xff]
    %v1201 = vld [vmem:[#allocation7 + $0xf48] sm:$0xff]
    %v1202 = vld [vmem:[#allocation7 + $0xf50] sm:$0xff]
    %v1203 = vld [vmem:[#allocation7 + $0xf58] sm:$0xff]
    %v1204 = vld [vmem:[#allocation7 + $0xf60] sm:$0xff]
    %v1205 = vld [vmem:[#allocation7 + $0xf68] sm:$0xff]
    %v1206 = vld [vmem:[#allocation7 + $0xf70] sm:$0xff]
    %v1207 = vld [vmem:[#allocation7 + $0xf78] sm:$0xff]
    %v1208 = vld [vmem:[#allocation7 + $0xf80] sm:$0xff]
    %v1209 = vld [vmem:[#allocation7 + $0xf88] sm:$0xff]
    %v1210 = vld [vmem:[#allocation7 + $0xf90] sm:$0xff]
    %v1211 = vld [vmem:[#allocation7 + $0xf98] sm:$0xff]
    %v1212 = vld [vmem:[#allocation7 + $0xfa0] sm:$0xff]
    %v1213 = vld [vmem:[#allocation7 + $0xfa8] sm:$0xff]
    %v1214 = vld [vmem:[#allocation7 + $0xfb0] sm:$0xff]
    %v1215 = vld [vmem:[#allocation7 + $0xfb8] sm:$0xff]
    %v1216 = vld [vmem:[#allocation7 + $0xfc0] sm:$0xff]
    %v1217 = vld [vmem:[#allocation7 + $0xfc8] sm:$0xff]
    %v1218 = vld [vmem:[#allocation7 + $0xfd0] sm:$0xff]
    %v1219 = vld [vmem:[#allocation7 + $0xfd8] sm:$0xff]
    %v1220 = vld [vmem:[#allocation7 + $0xfe0] sm:$0xff]
    %v1221 = vld [vmem:[#allocation7 + $0xfe8] sm:$0xff]
    %v1222 = vld [vmem:[#allocation7 + $0xff0] sm:$0xff]
    %v1223 = vld [vmem:[#allocation7 + $0xff8] sm:$0xff]
    %v1224 = vld [vmem:[#allocation8] sm:$0xff]
    %v1226 = vlaneseq
    %v1227 = vshrl.u32 %v1226, 7
    %v1228 = vsub.s32 0, %v1227
    %v1229 = vrot.slane %v1224, %v1228
    %v1230 = vlaneseq
    %v1231 = vshrl.u32 %v1230, 7
    %v1232 = vsub.s32 1, %v1231
    %v1233 = vrot.slane %v1224, %v1232
    %v1234 = vlaneseq
    %v1235 = vshrl.u32 %v1234, 7
    %v1236 = vsub.s32 2, %v1235
    %v1237 = vrot.slane %v1224, %v1236
    %v1238 = vlaneseq
    %v1239 = vshrl.u32 %v1238, 7
    %v1240 = vsub.s32 3, %v1239
    %v1241 = vrot.slane %v1224, %v1240
    %v1242 = vlaneseq
    %v1243 = vshrl.u32 %v1242, 7
    %v1244 = vsub.s32 4, %v1243
    %v1245 = vrot.slane %v1224, %v1244
    %v1246 = vlaneseq
    %v1247 = vshrl.u32 %v1246, 7
    %v1248 = vsub.s32 5, %v1247
    %v1249 = vrot.slane %v1224, %v1248
    %v1250 = vlaneseq
    %v1251 = vshrl.u32 %v1250, 7
    %v1252 = vsub.s32 6, %v1251
    %v1253 = vrot.slane %v1224, %v1252
    %v1254 = vlaneseq
    %v1255 = vshrl.u32 %v1254, 7
    %v1256 = vsub.s32 7, %v1255
    %v1257 = vrot.slane %v1224, %v1256
    %v1778 = vunpack.c.l.b16 %v712
    %v1779 = vunpack.c.h.b16 %v712
    %v1780 = vunpack.c.l.b16 %v713
    %v1781 = vunpack.c.h.b16 %v713
    %v1782 = vunpack.c.l.b16 %v714
    %v1783 = vunpack.c.h.b16 %v714
    %v1784 = vunpack.c.l.b16 %v715
    %v1785 = vunpack.c.h.b16 %v715
    %v1786 = vunpack.c.l.b16 %v716
    %v1787 = vunpack.c.h.b16 %v716
    %v1788 = vunpack.c.l.b16 %v717
    %v1789 = vunpack.c.h.b16 %v717
    %v1790 = vunpack.c.l.b16 %v718
    %v1791 = vunpack.c.h.b16 %v718
    %v1792 = vunpack.c.l.b16 %v719
    %v1793 = vunpack.c.h.b16 %v719
    %v1794 = vunpack.c.l.b16 %v720
    %v1795 = vunpack.c.h.b16 %v720
    %v1796 = vunpack.c.l.b16 %v721
    %v1797 = vunpack.c.h.b16 %v721
    %v1798 = vunpack.c.l.b16 %v722
    %v1799 = vunpack.c.h.b16 %v722
    %v1800 = vunpack.c.l.b16 %v723
    %v1801 = vunpack.c.h.b16 %v723
    %v1802 = vunpack.c.l.b16 %v724
    %v1803 = vunpack.c.h.b16 %v724
    %v1804 = vunpack.c.l.b16 %v725
    %v1805 = vunpack.c.h.b16 %v725
    %v1806 = vunpack.c.l.b16 %v726
    %v1807 = vunpack.c.h.b16 %v726
    %v1808 = vunpack.c.l.b16 %v727
    %v1809 = vunpack.c.h.b16 %v727
    %v1810 = vunpack.c.l.b16 %v728
    %v1811 = vunpack.c.h.b16 %v728
    %v1812 = vunpack.c.l.b16 %v729
    %v1813 = vunpack.c.h.b16 %v729
    %v1814 = vunpack.c.l.b16 %v730
    %v1815 = vunpack.c.h.b16 %v730
    %v1816 = vunpack.c.l.b16 %v731
    %v1817 = vunpack.c.h.b16 %v731
    %v1818 = vunpack.c.l.b16 %v732
    %v1819 = vunpack.c.h.b16 %v732
    %v1820 = vunpack.c.l.b16 %v733
    %v1821 = vunpack.c.h.b16 %v733
    %v1822 = vunpack.c.l.b16 %v734
    %v1823 = vunpack.c.h.b16 %v734
    %v1824 = vunpack.c.l.b16 %v735
    %v1825 = vunpack.c.h.b16 %v735
    %v1826 = vunpack.c.l.b16 %v736
    %v1827 = vunpack.c.h.b16 %v736
    %v1828 = vunpack.c.l.b16 %v737
    %v1829 = vunpack.c.h.b16 %v737
    %v1830 = vunpack.c.l.b16 %v738
    %v1831 = vunpack.c.h.b16 %v738
    %v1832 = vunpack.c.l.b16 %v739
    %v1833 = vunpack.c.h.b16 %v739
    %v1834 = vunpack.c.l.b16 %v740
    %v1835 = vunpack.c.h.b16 %v740
    %v1836 = vunpack.c.l.b16 %v741
    %v1837 = vunpack.c.h.b16 %v741
    %v1838 = vunpack.c.l.b16 %v742
    %v1839 = vunpack.c.h.b16 %v742
    %v1840 = vunpack.c.l.b16 %v743
    %v1841 = vunpack.c.h.b16 %v743
    %v1842 = vunpack.c.l.b16 %v744
    %v1843 = vunpack.c.h.b16 %v744
    %v1844 = vunpack.c.l.b16 %v745
    %v1845 = vunpack.c.h.b16 %v745
    %v1846 = vunpack.c.l.b16 %v746
    %v1847 = vunpack.c.h.b16 %v746
    %v1848 = vunpack.c.l.b16 %v747
    %v1849 = vunpack.c.h.b16 %v747
    %v1850 = vunpack.c.l.b16 %v748
    %v1851 = vunpack.c.h.b16 %v748
    %v1852 = vunpack.c.l.b16 %v749
    %v1853 = vunpack.c.h.b16 %v749
    %v1854 = vunpack.c.l.b16 %v750
    %v1855 = vunpack.c.h.b16 %v750
    %v1856 = vunpack.c.l.b16 %v751
    %v1857 = vunpack.c.h.b16 %v751
    %v1858 = vunpack.c.l.b16 %v752
    %v1859 = vunpack.c.h.b16 %v752
    %v1860 = vunpack.c.l.b16 %v753
    %v1861 = vunpack.c.h.b16 %v753
    %v1862 = vunpack.c.l.b16 %v754
    %v1863 = vunpack.c.h.b16 %v754
    %v1864 = vunpack.c.l.b16 %v755
    %v1865 = vunpack.c.h.b16 %v755
    %v1866 = vunpack.c.l.b16 %v756
    %v1867 = vunpack.c.h.b16 %v756
    %v1868 = vunpack.c.l.b16 %v757
    %v1869 = vunpack.c.h.b16 %v757
    %v1870 = vunpack.c.l.b16 %v758
    %v1871 = vunpack.c.h.b16 %v758
    %v1872 = vunpack.c.l.b16 %v759
    %v1873 = vunpack.c.h.b16 %v759
    %v1874 = vunpack.c.l.b16 %v760
    %v1875 = vunpack.c.h.b16 %v760
    %v1876 = vunpack.c.l.b16 %v761
    %v1877 = vunpack.c.h.b16 %v761
    %v1878 = vunpack.c.l.b16 %v762
    %v1879 = vunpack.c.h.b16 %v762
    %v1880 = vunpack.c.l.b16 %v763
    %v1881 = vunpack.c.h.b16 %v763
    %v1882 = vunpack.c.l.b16 %v764
    %v1883 = vunpack.c.h.b16 %v764
    %v1884 = vunpack.c.l.b16 %v765
    %v1885 = vunpack.c.h.b16 %v765
    %v1886 = vunpack.c.l.b16 %v766
    %v1887 = vunpack.c.h.b16 %v766
    %v1888 = vunpack.c.l.b16 %v767
    %v1889 = vunpack.c.h.b16 %v767
    %v1890 = vunpack.c.l.b16 %v768
    %v1891 = vunpack.c.h.b16 %v768
    %v1892 = vunpack.c.l.b16 %v769
    %v1893 = vunpack.c.h.b16 %v769
    %v1894 = vunpack.c.l.b16 %v770
    %v1895 = vunpack.c.h.b16 %v770
    %v1896 = vunpack.c.l.b16 %v771
    %v1897 = vunpack.c.h.b16 %v771
    %v1898 = vunpack.c.l.b16 %v772
    %v1899 = vunpack.c.h.b16 %v772
    %v1900 = vunpack.c.l.b16 %v773
    %v1901 = vunpack.c.h.b16 %v773
    %v1902 = vunpack.c.l.b16 %v774
    %v1903 = vunpack.c.h.b16 %v774
    %v1904 = vunpack.c.l.b16 %v775
    %v1905 = vunpack.c.h.b16 %v775
    %v1906 = vunpack.c.l.b16 %v776
    %v1907 = vunpack.c.h.b16 %v776
    %v1908 = vunpack.c.l.b16 %v777
    %v1909 = vunpack.c.h.b16 %v777
    %v1910 = vunpack.c.l.b16 %v778
    %v1911 = vunpack.c.h.b16 %v778
    %v1912 = vunpack.c.l.b16 %v779
    %v1913 = vunpack.c.h.b16 %v779
    %v1914 = vunpack.c.l.b16 %v780
    %v1915 = vunpack.c.h.b16 %v780
    %v1916 = vunpack.c.l.b16 %v781
    %v1917 = vunpack.c.h.b16 %v781
    %v1918 = vunpack.c.l.b16 %v782
    %v1919 = vunpack.c.h.b16 %v782
    %v1920 = vunpack.c.l.b16 %v783
    %v1921 = vunpack.c.h.b16 %v783
    %v1922 = vunpack.c.l.b16 %v784
    %v1923 = vunpack.c.h.b16 %v784
    %v1924 = vunpack.c.l.b16 %v785
    %v1925 = vunpack.c.h.b16 %v785
    %v1926 = vunpack.c.l.b16 %v786
    %v1927 = vunpack.c.h.b16 %v786
    %v1928 = vunpack.c.l.b16 %v787
    %v1929 = vunpack.c.h.b16 %v787
    %v1930 = vunpack.c.l.b16 %v788
    %v1931 = vunpack.c.h.b16 %v788
    %v1932 = vunpack.c.l.b16 %v789
    %v1933 = vunpack.c.h.b16 %v789
    %v1934 = vunpack.c.l.b16 %v790
    %v1935 = vunpack.c.h.b16 %v790
    %v1936 = vunpack.c.l.b16 %v791
    %v1937 = vunpack.c.h.b16 %v791
    %v1938 = vunpack.c.l.b16 %v792
    %v1939 = vunpack.c.h.b16 %v792
    %v1940 = vunpack.c.l.b16 %v793
    %v1941 = vunpack.c.h.b16 %v793
    %v1942 = vunpack.c.l.b16 %v794
    %v1943 = vunpack.c.h.b16 %v794
    %v1944 = vunpack.c.l.b16 %v795
    %v1945 = vunpack.c.h.b16 %v795
    %v1946 = vunpack.c.l.b16 %v796
    %v1947 = vunpack.c.h.b16 %v796
    %v1948 = vunpack.c.l.b16 %v797
    %v1949 = vunpack.c.h.b16 %v797
    %v1950 = vunpack.c.l.b16 %v798
    %v1951 = vunpack.c.h.b16 %v798
    %v1952 = vunpack.c.l.b16 %v799
    %v1953 = vunpack.c.h.b16 %v799
    %v1954 = vunpack.c.l.b16 %v800
    %v1955 = vunpack.c.h.b16 %v800
    %v1956 = vunpack.c.l.b16 %v801
    %v1957 = vunpack.c.h.b16 %v801
    %v1958 = vunpack.c.l.b16 %v802
    %v1959 = vunpack.c.h.b16 %v802
    %v1960 = vunpack.c.l.b16 %v803
    %v1961 = vunpack.c.h.b16 %v803
    %v1962 = vunpack.c.l.b16 %v804
    %v1963 = vunpack.c.h.b16 %v804
    %v1964 = vunpack.c.l.b16 %v805
    %v1965 = vunpack.c.h.b16 %v805
    %v1966 = vunpack.c.l.b16 %v806
    %v1967 = vunpack.c.h.b16 %v806
    %v1968 = vunpack.c.l.b16 %v807
    %v1969 = vunpack.c.h.b16 %v807
    %v1970 = vunpack.c.l.b16 %v808
    %v1971 = vunpack.c.h.b16 %v808
    %v1972 = vunpack.c.l.b16 %v809
    %v1973 = vunpack.c.h.b16 %v809
    %v1974 = vunpack.c.l.b16 %v810
    %v1975 = vunpack.c.h.b16 %v810
    %v1976 = vunpack.c.l.b16 %v811
    %v1977 = vunpack.c.h.b16 %v811
    %v1978 = vunpack.c.l.b16 %v812
    %v1979 = vunpack.c.h.b16 %v812
    %v1980 = vunpack.c.l.b16 %v813
    %v1981 = vunpack.c.h.b16 %v813
    %v1982 = vunpack.c.l.b16 %v814
    %v1983 = vunpack.c.h.b16 %v814
    %v1984 = vunpack.c.l.b16 %v815
    %v1985 = vunpack.c.h.b16 %v815
    %v1986 = vunpack.c.l.b16 %v816
    %v1987 = vunpack.c.h.b16 %v816
    %v1988 = vunpack.c.l.b16 %v817
    %v1989 = vunpack.c.h.b16 %v817
    %v1990 = vunpack.c.l.b16 %v818
    %v1991 = vunpack.c.h.b16 %v818
    %v1992 = vunpack.c.l.b16 %v819
    %v1993 = vunpack.c.h.b16 %v819
    %v1994 = vunpack.c.l.b16 %v820
    %v1995 = vunpack.c.h.b16 %v820
    %v1996 = vunpack.c.l.b16 %v821
    %v1997 = vunpack.c.h.b16 %v821
    %v1998 = vunpack.c.l.b16 %v822
    %v1999 = vunpack.c.h.b16 %v822
    %v2000 = vunpack.c.l.b16 %v823
    %v2001 = vunpack.c.h.b16 %v823
    %v2002 = vunpack.c.l.b16 %v824
    %v2003 = vunpack.c.h.b16 %v824
    %v2004 = vunpack.c.l.b16 %v825
    %v2005 = vunpack.c.h.b16 %v825
    %v2006 = vunpack.c.l.b16 %v826
    %v2007 = vunpack.c.h.b16 %v826
    %v2008 = vunpack.c.l.b16 %v827
    %v2009 = vunpack.c.h.b16 %v827
    %v2010 = vunpack.c.l.b16 %v828
    %v2011 = vunpack.c.h.b16 %v828
    %v2012 = vunpack.c.l.b16 %v829
    %v2013 = vunpack.c.h.b16 %v829
    %v2014 = vunpack.c.l.b16 %v830
    %v2015 = vunpack.c.h.b16 %v830
    %v2016 = vunpack.c.l.b16 %v831
    %v2017 = vunpack.c.h.b16 %v831
    %v2018 = vunpack.c.l.b16 %v832
    %v2019 = vunpack.c.h.b16 %v832
    %v2020 = vunpack.c.l.b16 %v833
    %v2021 = vunpack.c.h.b16 %v833
    %v2022 = vunpack.c.l.b16 %v834
    %v2023 = vunpack.c.h.b16 %v834
    %v2024 = vunpack.c.l.b16 %v835
    %v2025 = vunpack.c.h.b16 %v835
    %v2026 = vunpack.c.l.b16 %v836
    %v2027 = vunpack.c.h.b16 %v836
    %v2028 = vunpack.c.l.b16 %v837
    %v2029 = vunpack.c.h.b16 %v837
    %v2030 = vunpack.c.l.b16 %v838
    %v2031 = vunpack.c.h.b16 %v838
    %v2032 = vunpack.c.l.b16 %v839
    %v2033 = vunpack.c.h.b16 %v839
    %v2034 = vunpack.c.l.b16 %v840
    %v2035 = vunpack.c.h.b16 %v840
    %v2036 = vunpack.c.l.b16 %v841
    %v2037 = vunpack.c.h.b16 %v841
    %v2038 = vunpack.c.l.b16 %v842
    %v2039 = vunpack.c.h.b16 %v842
    %v2040 = vunpack.c.l.b16 %v843
    %v2041 = vunpack.c.h.b16 %v843
    %v2042 = vunpack.c.l.b16 %v844
    %v2043 = vunpack.c.h.b16 %v844
    %v2044 = vunpack.c.l.b16 %v845
    %v2045 = vunpack.c.h.b16 %v845
    %v2046 = vunpack.c.l.b16 %v846
    %v2047 = vunpack.c.h.b16 %v846
    %v2048 = vunpack.c.l.b16 %v847
    %v2049 = vunpack.c.h.b16 %v847
    %v2050 = vunpack.c.l.b16 %v848
    %v2051 = vunpack.c.h.b16 %v848
    %v2052 = vunpack.c.l.b16 %v849
    %v2053 = vunpack.c.h.b16 %v849
    %v2054 = vunpack.c.l.b16 %v850
    %v2055 = vunpack.c.h.b16 %v850
    %v2056 = vunpack.c.l.b16 %v851
    %v2057 = vunpack.c.h.b16 %v851
    %v2058 = vunpack.c.l.b16 %v852
    %v2059 = vunpack.c.h.b16 %v852
    %v2060 = vunpack.c.l.b16 %v853
    %v2061 = vunpack.c.h.b16 %v853
    %v2062 = vunpack.c.l.b16 %v854
    %v2063 = vunpack.c.h.b16 %v854
    %v2064 = vunpack.c.l.b16 %v855
    %v2065 = vunpack.c.h.b16 %v855
    %v2066 = vunpack.c.l.b16 %v856
    %v2067 = vunpack.c.h.b16 %v856
    %v2068 = vunpack.c.l.b16 %v857
    %v2069 = vunpack.c.h.b16 %v857
    %v2070 = vunpack.c.l.b16 %v858
    %v2071 = vunpack.c.h.b16 %v858
    %v2072 = vunpack.c.l.b16 %v859
    %v2073 = vunpack.c.h.b16 %v859
    %v2074 = vunpack.c.l.b16 %v860
    %v2075 = vunpack.c.h.b16 %v860
    %v2076 = vunpack.c.l.b16 %v861
    %v2077 = vunpack.c.h.b16 %v861
    %v2078 = vunpack.c.l.b16 %v862
    %v2079 = vunpack.c.h.b16 %v862
    %v2080 = vunpack.c.l.b16 %v863
    %v2081 = vunpack.c.h.b16 %v863
    %v2082 = vunpack.c.l.b16 %v864
    %v2083 = vunpack.c.h.b16 %v864
    %v2084 = vunpack.c.l.b16 %v865
    %v2085 = vunpack.c.h.b16 %v865
    %v2086 = vunpack.c.l.b16 %v866
    %v2087 = vunpack.c.h.b16 %v866
    %v2088 = vunpack.c.l.b16 %v867
    %v2089 = vunpack.c.h.b16 %v867
    %v2090 = vunpack.c.l.b16 %v868
    %v2091 = vunpack.c.h.b16 %v868
    %v2092 = vunpack.c.l.b16 %v869
    %v2093 = vunpack.c.h.b16 %v869
    %v2094 = vunpack.c.l.b16 %v870
    %v2095 = vunpack.c.h.b16 %v870
    %v2096 = vunpack.c.l.b16 %v871
    %v2097 = vunpack.c.h.b16 %v871
    %v2098 = vunpack.c.l.b16 %v872
    %v2099 = vunpack.c.h.b16 %v872
    %v2100 = vunpack.c.l.b16 %v873
    %v2101 = vunpack.c.h.b16 %v873
    %v2102 = vunpack.c.l.b16 %v874
    %v2103 = vunpack.c.h.b16 %v874
    %v2104 = vunpack.c.l.b16 %v875
    %v2105 = vunpack.c.h.b16 %v875
    %v2106 = vunpack.c.l.b16 %v876
    %v2107 = vunpack.c.h.b16 %v876
    %v2108 = vunpack.c.l.b16 %v877
    %v2109 = vunpack.c.h.b16 %v877
    %v2110 = vunpack.c.l.b16 %v878
    %v2111 = vunpack.c.h.b16 %v878
    %v2112 = vunpack.c.l.b16 %v879
    %v2113 = vunpack.c.h.b16 %v879
    %v2114 = vunpack.c.l.b16 %v880
    %v2115 = vunpack.c.h.b16 %v880
    %v2116 = vunpack.c.l.b16 %v881
    %v2117 = vunpack.c.h.b16 %v881
    %v2118 = vunpack.c.l.b16 %v882
    %v2119 = vunpack.c.h.b16 %v882
    %v2120 = vunpack.c.l.b16 %v883
    %v2121 = vunpack.c.h.b16 %v883
    %v2122 = vunpack.c.l.b16 %v884
    %v2123 = vunpack.c.h.b16 %v884
    %v2124 = vunpack.c.l.b16 %v885
    %v2125 = vunpack.c.h.b16 %v885
    %v2126 = vunpack.c.l.b16 %v886
    %v2127 = vunpack.c.h.b16 %v886
    %v2128 = vunpack.c.l.b16 %v887
    %v2129 = vunpack.c.h.b16 %v887
    %v2130 = vunpack.c.l.b16 %v888
    %v2131 = vunpack.c.h.b16 %v888
    %v2132 = vunpack.c.l.b16 %v889
    %v2133 = vunpack.c.h.b16 %v889
    %v2134 = vunpack.c.l.b16 %v890
    %v2135 = vunpack.c.h.b16 %v890
    %v2136 = vunpack.c.l.b16 %v891
    %v2137 = vunpack.c.h.b16 %v891
    %v2138 = vunpack.c.l.b16 %v892
    %v2139 = vunpack.c.h.b16 %v892
    %v2140 = vunpack.c.l.b16 %v893
    %v2141 = vunpack.c.h.b16 %v893
    %v2142 = vunpack.c.l.b16 %v894
    %v2143 = vunpack.c.h.b16 %v894
    %v2144 = vunpack.c.l.b16 %v895
    %v2145 = vunpack.c.h.b16 %v895
    %v2146 = vunpack.c.l.b16 %v896
    %v2147 = vunpack.c.h.b16 %v896
    %v2148 = vunpack.c.l.b16 %v897
    %v2149 = vunpack.c.h.b16 %v897
    %v2150 = vunpack.c.l.b16 %v898
    %v2151 = vunpack.c.h.b16 %v898
    %v2152 = vunpack.c.l.b16 %v899
    %v2153 = vunpack.c.h.b16 %v899
    %v2154 = vunpack.c.l.b16 %v900
    %v2155 = vunpack.c.h.b16 %v900
    %v2156 = vunpack.c.l.b16 %v901
    %v2157 = vunpack.c.h.b16 %v901
    %v2158 = vunpack.c.l.b16 %v902
    %v2159 = vunpack.c.h.b16 %v902
    %v2160 = vunpack.c.l.b16 %v903
    %v2161 = vunpack.c.h.b16 %v903
    %v2162 = vunpack.c.l.b16 %v904
    %v2163 = vunpack.c.h.b16 %v904
    %v2164 = vunpack.c.l.b16 %v905
    %v2165 = vunpack.c.h.b16 %v905
    %v2166 = vunpack.c.l.b16 %v906
    %v2167 = vunpack.c.h.b16 %v906
    %v2168 = vunpack.c.l.b16 %v907
    %v2169 = vunpack.c.h.b16 %v907
    %v2170 = vunpack.c.l.b16 %v908
    %v2171 = vunpack.c.h.b16 %v908
    %v2172 = vunpack.c.l.b16 %v909
    %v2173 = vunpack.c.h.b16 %v909
    %v2174 = vunpack.c.l.b16 %v910
    %v2175 = vunpack.c.h.b16 %v910
    %v2176 = vunpack.c.l.b16 %v911
    %v2177 = vunpack.c.h.b16 %v911
    %v2178 = vunpack.c.l.b16 %v912
    %v2179 = vunpack.c.h.b16 %v912
    %v2180 = vunpack.c.l.b16 %v913
    %v2181 = vunpack.c.h.b16 %v913
    %v2182 = vunpack.c.l.b16 %v914
    %v2183 = vunpack.c.h.b16 %v914
    %v2184 = vunpack.c.l.b16 %v915
    %v2185 = vunpack.c.h.b16 %v915
    %v2186 = vunpack.c.l.b16 %v916
    %v2187 = vunpack.c.h.b16 %v916
    %v2188 = vunpack.c.l.b16 %v917
    %v2189 = vunpack.c.h.b16 %v917
    %v2190 = vunpack.c.l.b16 %v918
    %v2191 = vunpack.c.h.b16 %v918
    %v2192 = vunpack.c.l.b16 %v919
    %v2193 = vunpack.c.h.b16 %v919
    %v2194 = vunpack.c.l.b16 %v920
    %v2195 = vunpack.c.h.b16 %v920
    %v2196 = vunpack.c.l.b16 %v921
    %v2197 = vunpack.c.h.b16 %v921
    %v2198 = vunpack.c.l.b16 %v922
    %v2199 = vunpack.c.h.b16 %v922
    %v2200 = vunpack.c.l.b16 %v923
    %v2201 = vunpack.c.h.b16 %v923
    %v2202 = vunpack.c.l.b16 %v924
    %v2203 = vunpack.c.h.b16 %v924
    %v2204 = vunpack.c.l.b16 %v925
    %v2205 = vunpack.c.h.b16 %v925
    %v2206 = vunpack.c.l.b16 %v926
    %v2207 = vunpack.c.h.b16 %v926
    %v2208 = vunpack.c.l.b16 %v927
    %v2209 = vunpack.c.h.b16 %v927
    %v2210 = vunpack.c.l.b16 %v928
    %v2211 = vunpack.c.h.b16 %v928
    %v2212 = vunpack.c.l.b16 %v929
    %v2213 = vunpack.c.h.b16 %v929
    %v2214 = vunpack.c.l.b16 %v930
    %v2215 = vunpack.c.h.b16 %v930
    %v2216 = vunpack.c.l.b16 %v931
    %v2217 = vunpack.c.h.b16 %v931
    %v2218 = vunpack.c.l.b16 %v932
    %v2219 = vunpack.c.h.b16 %v932
    %v2220 = vunpack.c.l.b16 %v933
    %v2221 = vunpack.c.h.b16 %v933
    %v2222 = vunpack.c.l.b16 %v934
    %v2223 = vunpack.c.h.b16 %v934
    %v2224 = vunpack.c.l.b16 %v935
    %v2225 = vunpack.c.h.b16 %v935
    %v2226 = vunpack.c.l.b16 %v936
    %v2227 = vunpack.c.h.b16 %v936
    %v2228 = vunpack.c.l.b16 %v937
    %v2229 = vunpack.c.h.b16 %v937
    %v2230 = vunpack.c.l.b16 %v938
    %v2231 = vunpack.c.h.b16 %v938
    %v2232 = vunpack.c.l.b16 %v939
    %v2233 = vunpack.c.h.b16 %v939
    %v2234 = vunpack.c.l.b16 %v940
    %v2235 = vunpack.c.h.b16 %v940
    %v2236 = vunpack.c.l.b16 %v941
    %v2237 = vunpack.c.h.b16 %v941
    %v2238 = vunpack.c.l.b16 %v942
    %v2239 = vunpack.c.h.b16 %v942
    %v2240 = vunpack.c.l.b16 %v943
    %v2241 = vunpack.c.h.b16 %v943
    %v2242 = vunpack.c.l.b16 %v944
    %v2243 = vunpack.c.h.b16 %v944
    %v2244 = vunpack.c.l.b16 %v945
    %v2245 = vunpack.c.h.b16 %v945
    %v2246 = vunpack.c.l.b16 %v946
    %v2247 = vunpack.c.h.b16 %v946
    %v2248 = vunpack.c.l.b16 %v947
    %v2249 = vunpack.c.h.b16 %v947
    %v2250 = vunpack.c.l.b16 %v948
    %v2251 = vunpack.c.h.b16 %v948
    %v2252 = vunpack.c.l.b16 %v949
    %v2253 = vunpack.c.h.b16 %v949
    %v2254 = vunpack.c.l.b16 %v950
    %v2255 = vunpack.c.h.b16 %v950
    %v2256 = vunpack.c.l.b16 %v951
    %v2257 = vunpack.c.h.b16 %v951
    %v2258 = vunpack.c.l.b16 %v952
    %v2259 = vunpack.c.h.b16 %v952
    %v2260 = vunpack.c.l.b16 %v953
    %v2261 = vunpack.c.h.b16 %v953
    %v2262 = vunpack.c.l.b16 %v954
    %v2263 = vunpack.c.h.b16 %v954
    %v2264 = vunpack.c.l.b16 %v955
    %v2265 = vunpack.c.h.b16 %v955
    %v2266 = vunpack.c.l.b16 %v956
    %v2267 = vunpack.c.h.b16 %v956
    %v2268 = vunpack.c.l.b16 %v957
    %v2269 = vunpack.c.h.b16 %v957
    %v2270 = vunpack.c.l.b16 %v958
    %v2271 = vunpack.c.h.b16 %v958
    %v2272 = vunpack.c.l.b16 %v959
    %v2273 = vunpack.c.h.b16 %v959
    %v2274 = vunpack.c.l.b16 %v960
    %v2275 = vunpack.c.h.b16 %v960
    %v2276 = vunpack.c.l.b16 %v961
    %v2277 = vunpack.c.h.b16 %v961
    %v2278 = vunpack.c.l.b16 %v962
    %v2279 = vunpack.c.h.b16 %v962
    %v2280 = vunpack.c.l.b16 %v963
    %v2281 = vunpack.c.h.b16 %v963
    %v2282 = vunpack.c.l.b16 %v964
    %v2283 = vunpack.c.h.b16 %v964
    %v2284 = vunpack.c.l.b16 %v965
    %v2285 = vunpack.c.h.b16 %v965
    %v2286 = vunpack.c.l.b16 %v966
    %v2287 = vunpack.c.h.b16 %v966
    %v2288 = vunpack.c.l.b16 %v967
    %v2289 = vunpack.c.h.b16 %v967
    %v2290 = vunpack.c.l.b16 %v968
    %v2291 = vunpack.c.h.b16 %v968
    %v2292 = vunpack.c.l.b16 %v969
    %v2293 = vunpack.c.h.b16 %v969
    %v2294 = vunpack.c.l.b16 %v970
    %v2295 = vunpack.c.h.b16 %v970
    %v2296 = vunpack.c.l.b16 %v971
    %v2297 = vunpack.c.h.b16 %v971
    %v2298 = vunpack.c.l.b16 %v972
    %v2299 = vunpack.c.h.b16 %v972
    %v2300 = vunpack.c.l.b16 %v973
    %v2301 = vunpack.c.h.b16 %v973
    %v2302 = vunpack.c.l.b16 %v974
    %v2303 = vunpack.c.h.b16 %v974
    %v2304 = vunpack.c.l.b16 %v975
    %v2305 = vunpack.c.h.b16 %v975
    %v2306 = vunpack.c.l.b16 %v976
    %v2307 = vunpack.c.h.b16 %v976
    %v2308 = vunpack.c.l.b16 %v977
    %v2309 = vunpack.c.h.b16 %v977
    %v2310 = vunpack.c.l.b16 %v978
    %v2311 = vunpack.c.h.b16 %v978
    %v2312 = vunpack.c.l.b16 %v979
    %v2313 = vunpack.c.h.b16 %v979
    %v2314 = vunpack.c.l.b16 %v980
    %v2315 = vunpack.c.h.b16 %v980
    %v2316 = vunpack.c.l.b16 %v981
    %v2317 = vunpack.c.h.b16 %v981
    %v2318 = vunpack.c.l.b16 %v982
    %v2319 = vunpack.c.h.b16 %v982
    %v2320 = vunpack.c.l.b16 %v983
    %v2321 = vunpack.c.h.b16 %v983
    %v2322 = vunpack.c.l.b16 %v984
    %v2323 = vunpack.c.h.b16 %v984
    %v2324 = vunpack.c.l.b16 %v985
    %v2325 = vunpack.c.h.b16 %v985
    %v2326 = vunpack.c.l.b16 %v986
    %v2327 = vunpack.c.h.b16 %v986
    %v2328 = vunpack.c.l.b16 %v987
    %v2329 = vunpack.c.h.b16 %v987
    %v2330 = vunpack.c.l.b16 %v988
    %v2331 = vunpack.c.h.b16 %v988
    %v2332 = vunpack.c.l.b16 %v989
    %v2333 = vunpack.c.h.b16 %v989
    %v2334 = vunpack.c.l.b16 %v990
    %v2335 = vunpack.c.h.b16 %v990
    %v2336 = vunpack.c.l.b16 %v991
    %v2337 = vunpack.c.h.b16 %v991
    %v2338 = vunpack.c.l.b16 %v992
    %v2339 = vunpack.c.h.b16 %v992
    %v2340 = vunpack.c.l.b16 %v993
    %v2341 = vunpack.c.h.b16 %v993
    %v2342 = vunpack.c.l.b16 %v994
    %v2343 = vunpack.c.h.b16 %v994
    %v2344 = vunpack.c.l.b16 %v995
    %v2345 = vunpack.c.h.b16 %v995
    %v2346 = vunpack.c.l.b16 %v996
    %v2347 = vunpack.c.h.b16 %v996
    %v2348 = vunpack.c.l.b16 %v997
    %v2349 = vunpack.c.h.b16 %v997
    %v2350 = vunpack.c.l.b16 %v998
    %v2351 = vunpack.c.h.b16 %v998
    %v2352 = vunpack.c.l.b16 %v999
    %v2353 = vunpack.c.h.b16 %v999
    %v2354 = vunpack.c.l.b16 %v1000
    %v2355 = vunpack.c.h.b16 %v1000
    %v2356 = vunpack.c.l.b16 %v1001
    %v2357 = vunpack.c.h.b16 %v1001
    %v2358 = vunpack.c.l.b16 %v1002
    %v2359 = vunpack.c.h.b16 %v1002
    %v2360 = vunpack.c.l.b16 %v1003
    %v2361 = vunpack.c.h.b16 %v1003
    %v2362 = vunpack.c.l.b16 %v1004
    %v2363 = vunpack.c.h.b16 %v1004
    %v2364 = vunpack.c.l.b16 %v1005
    %v2365 = vunpack.c.h.b16 %v1005
    %v2366 = vunpack.c.l.b16 %v1006
    %v2367 = vunpack.c.h.b16 %v1006
    %v2368 = vunpack.c.l.b16 %v1007
    %v2369 = vunpack.c.h.b16 %v1007
    %v2370 = vunpack.c.l.b16 %v1008
    %v2371 = vunpack.c.h.b16 %v1008
    %v2372 = vunpack.c.l.b16 %v1009
    %v2373 = vunpack.c.h.b16 %v1009
    %v2374 = vunpack.c.l.b16 %v1010
    %v2375 = vunpack.c.h.b16 %v1010
    %v2376 = vunpack.c.l.b16 %v1011
    %v2377 = vunpack.c.h.b16 %v1011
    %v2378 = vunpack.c.l.b16 %v1012
    %v2379 = vunpack.c.h.b16 %v1012
    %v2380 = vunpack.c.l.b16 %v1013
    %v2381 = vunpack.c.h.b16 %v1013
    %v2382 = vunpack.c.l.b16 %v1014
    %v2383 = vunpack.c.h.b16 %v1014
    %v2384 = vunpack.c.l.b16 %v1015
    %v2385 = vunpack.c.h.b16 %v1015
    %v2386 = vunpack.c.l.b16 %v1016
    %v2387 = vunpack.c.h.b16 %v1016
    %v2388 = vunpack.c.l.b16 %v1017
    %v2389 = vunpack.c.h.b16 %v1017
    %v2390 = vunpack.c.l.b16 %v1018
    %v2391 = vunpack.c.h.b16 %v1018
    %v2392 = vunpack.c.l.b16 %v1019
    %v2393 = vunpack.c.h.b16 %v1019
    %v2394 = vunpack.c.l.b16 %v1020
    %v2395 = vunpack.c.h.b16 %v1020
    %v2396 = vunpack.c.l.b16 %v1021
    %v2397 = vunpack.c.h.b16 %v1021
    %v2398 = vunpack.c.l.b16 %v1022
    %v2399 = vunpack.c.h.b16 %v1022
    %v2400 = vunpack.c.l.b16 %v1023
    %v2401 = vunpack.c.h.b16 %v1023
    %v2402 = vunpack.c.l.b16 %v1024
    %v2403 = vunpack.c.h.b16 %v1024
    %v2404 = vunpack.c.l.b16 %v1025
    %v2405 = vunpack.c.h.b16 %v1025
    %v2406 = vunpack.c.l.b16 %v1026
    %v2407 = vunpack.c.h.b16 %v1026
    %v2408 = vunpack.c.l.b16 %v1027
    %v2409 = vunpack.c.h.b16 %v1027
    %v2410 = vunpack.c.l.b16 %v1028
    %v2411 = vunpack.c.h.b16 %v1028
    %v2412 = vunpack.c.l.b16 %v1029
    %v2413 = vunpack.c.h.b16 %v1029
    %v2414 = vunpack.c.l.b16 %v1030
    %v2415 = vunpack.c.h.b16 %v1030
    %v2416 = vunpack.c.l.b16 %v1031
    %v2417 = vunpack.c.h.b16 %v1031
    %v2418 = vunpack.c.l.b16 %v1032
    %v2419 = vunpack.c.h.b16 %v1032
    %v2420 = vunpack.c.l.b16 %v1033
    %v2421 = vunpack.c.h.b16 %v1033
    %v2422 = vunpack.c.l.b16 %v1034
    %v2423 = vunpack.c.h.b16 %v1034
    %v2424 = vunpack.c.l.b16 %v1035
    %v2425 = vunpack.c.h.b16 %v1035
    %v2426 = vunpack.c.l.b16 %v1036
    %v2427 = vunpack.c.h.b16 %v1036
    %v2428 = vunpack.c.l.b16 %v1037
    %v2429 = vunpack.c.h.b16 %v1037
    %v2430 = vunpack.c.l.b16 %v1038
    %v2431 = vunpack.c.h.b16 %v1038
    %v2432 = vunpack.c.l.b16 %v1039
    %v2433 = vunpack.c.h.b16 %v1039
    %v2434 = vunpack.c.l.b16 %v1040
    %v2435 = vunpack.c.h.b16 %v1040
    %v2436 = vunpack.c.l.b16 %v1041
    %v2437 = vunpack.c.h.b16 %v1041
    %v2438 = vunpack.c.l.b16 %v1042
    %v2439 = vunpack.c.h.b16 %v1042
    %v2440 = vunpack.c.l.b16 %v1043
    %v2441 = vunpack.c.h.b16 %v1043
    %v2442 = vunpack.c.l.b16 %v1044
    %v2443 = vunpack.c.h.b16 %v1044
    %v2444 = vunpack.c.l.b16 %v1045
    %v2445 = vunpack.c.h.b16 %v1045
    %v2446 = vunpack.c.l.b16 %v1046
    %v2447 = vunpack.c.h.b16 %v1046
    %v2448 = vunpack.c.l.b16 %v1047
    %v2449 = vunpack.c.h.b16 %v1047
    %v2450 = vunpack.c.l.b16 %v1048
    %v2451 = vunpack.c.h.b16 %v1048
    %v2452 = vunpack.c.l.b16 %v1049
    %v2453 = vunpack.c.h.b16 %v1049
    %v2454 = vunpack.c.l.b16 %v1050
    %v2455 = vunpack.c.h.b16 %v1050
    %v2456 = vunpack.c.l.b16 %v1051
    %v2457 = vunpack.c.h.b16 %v1051
    %v2458 = vunpack.c.l.b16 %v1052
    %v2459 = vunpack.c.h.b16 %v1052
    %v2460 = vunpack.c.l.b16 %v1053
    %v2461 = vunpack.c.h.b16 %v1053
    %v2462 = vunpack.c.l.b16 %v1054
    %v2463 = vunpack.c.h.b16 %v1054
    %v2464 = vunpack.c.l.b16 %v1055
    %v2465 = vunpack.c.h.b16 %v1055
    %v2466 = vunpack.c.l.b16 %v1056
    %v2467 = vunpack.c.h.b16 %v1056
    %v2468 = vunpack.c.l.b16 %v1057
    %v2469 = vunpack.c.h.b16 %v1057
    %v2470 = vunpack.c.l.b16 %v1058
    %v2471 = vunpack.c.h.b16 %v1058
    %v2472 = vunpack.c.l.b16 %v1059
    %v2473 = vunpack.c.h.b16 %v1059
    %v2474 = vunpack.c.l.b16 %v1060
    %v2475 = vunpack.c.h.b16 %v1060
    %v2476 = vunpack.c.l.b16 %v1061
    %v2477 = vunpack.c.h.b16 %v1061
    %v2478 = vunpack.c.l.b16 %v1062
    %v2479 = vunpack.c.h.b16 %v1062
    %v2480 = vunpack.c.l.b16 %v1063
    %v2481 = vunpack.c.h.b16 %v1063
    %v2482 = vunpack.c.l.b16 %v1064
    %v2483 = vunpack.c.h.b16 %v1064
    %v2484 = vunpack.c.l.b16 %v1065
    %v2485 = vunpack.c.h.b16 %v1065
    %v2486 = vunpack.c.l.b16 %v1066
    %v2487 = vunpack.c.h.b16 %v1066
    %v2488 = vunpack.c.l.b16 %v1067
    %v2489 = vunpack.c.h.b16 %v1067
    %v2490 = vunpack.c.l.b16 %v1068
    %v2491 = vunpack.c.h.b16 %v1068
    %v2492 = vunpack.c.l.b16 %v1069
    %v2493 = vunpack.c.h.b16 %v1069
    %v2494 = vunpack.c.l.b16 %v1070
    %v2495 = vunpack.c.h.b16 %v1070
    %v2496 = vunpack.c.l.b16 %v1071
    %v2497 = vunpack.c.h.b16 %v1071
    %v2498 = vunpack.c.l.b16 %v1072
    %v2499 = vunpack.c.h.b16 %v1072
    %v2500 = vunpack.c.l.b16 %v1073
    %v2501 = vunpack.c.h.b16 %v1073
    %v2502 = vunpack.c.l.b16 %v1074
    %v2503 = vunpack.c.h.b16 %v1074
    %v2504 = vunpack.c.l.b16 %v1075
    %v2505 = vunpack.c.h.b16 %v1075
    %v2506 = vunpack.c.l.b16 %v1076
    %v2507 = vunpack.c.h.b16 %v1076
    %v2508 = vunpack.c.l.b16 %v1077
    %v2509 = vunpack.c.h.b16 %v1077
    %v2510 = vunpack.c.l.b16 %v1078
    %v2511 = vunpack.c.h.b16 %v1078
    %v2512 = vunpack.c.l.b16 %v1079
    %v2513 = vunpack.c.h.b16 %v1079
    %v2514 = vunpack.c.l.b16 %v1080
    %v2515 = vunpack.c.h.b16 %v1080
    %v2516 = vunpack.c.l.b16 %v1081
    %v2517 = vunpack.c.h.b16 %v1081
    %v2518 = vunpack.c.l.b16 %v1082
    %v2519 = vunpack.c.h.b16 %v1082
    %v2520 = vunpack.c.l.b16 %v1083
    %v2521 = vunpack.c.h.b16 %v1083
    %v2522 = vunpack.c.l.b16 %v1084
    %v2523 = vunpack.c.h.b16 %v1084
    %v2524 = vunpack.c.l.b16 %v1085
    %v2525 = vunpack.c.h.b16 %v1085
    %v2526 = vunpack.c.l.b16 %v1086
    %v2527 = vunpack.c.h.b16 %v1086
    %v2528 = vunpack.c.l.b16 %v1087
    %v2529 = vunpack.c.h.b16 %v1087
    %v2530 = vunpack.c.l.b16 %v1088
    %v2531 = vunpack.c.h.b16 %v1088
    %v2532 = vunpack.c.l.b16 %v1089
    %v2533 = vunpack.c.h.b16 %v1089
    %v2534 = vunpack.c.l.b16 %v1090
    %v2535 = vunpack.c.h.b16 %v1090
    %v2536 = vunpack.c.l.b16 %v1091
    %v2537 = vunpack.c.h.b16 %v1091
    %v2538 = vunpack.c.l.b16 %v1092
    %v2539 = vunpack.c.h.b16 %v1092
    %v2540 = vunpack.c.l.b16 %v1093
    %v2541 = vunpack.c.h.b16 %v1093
    %v2542 = vunpack.c.l.b16 %v1094
    %v2543 = vunpack.c.h.b16 %v1094
    %v2544 = vunpack.c.l.b16 %v1095
    %v2545 = vunpack.c.h.b16 %v1095
    %v2546 = vunpack.c.l.b16 %v1096
    %v2547 = vunpack.c.h.b16 %v1096
    %v2548 = vunpack.c.l.b16 %v1097
    %v2549 = vunpack.c.h.b16 %v1097
    %v2550 = vunpack.c.l.b16 %v1098
    %v2551 = vunpack.c.h.b16 %v1098
    %v2552 = vunpack.c.l.b16 %v1099
    %v2553 = vunpack.c.h.b16 %v1099
    %v2554 = vunpack.c.l.b16 %v1100
    %v2555 = vunpack.c.h.b16 %v1100
    %v2556 = vunpack.c.l.b16 %v1101
    %v2557 = vunpack.c.h.b16 %v1101
    %v2558 = vunpack.c.l.b16 %v1102
    %v2559 = vunpack.c.h.b16 %v1102
    %v2560 = vunpack.c.l.b16 %v1103
    %v2561 = vunpack.c.h.b16 %v1103
    %v2562 = vunpack.c.l.b16 %v1104
    %v2563 = vunpack.c.h.b16 %v1104
    %v2564 = vunpack.c.l.b16 %v1105
    %v2565 = vunpack.c.h.b16 %v1105
    %v2566 = vunpack.c.l.b16 %v1106
    %v2567 = vunpack.c.h.b16 %v1106
    %v2568 = vunpack.c.l.b16 %v1107
    %v2569 = vunpack.c.h.b16 %v1107
    %v2570 = vunpack.c.l.b16 %v1108
    %v2571 = vunpack.c.h.b16 %v1108
    %v2572 = vunpack.c.l.b16 %v1109
    %v2573 = vunpack.c.h.b16 %v1109
    %v2574 = vunpack.c.l.b16 %v1110
    %v2575 = vunpack.c.h.b16 %v1110
    %v2576 = vunpack.c.l.b16 %v1111
    %v2577 = vunpack.c.h.b16 %v1111
    %v2578 = vunpack.c.l.b16 %v1112
    %v2579 = vunpack.c.h.b16 %v1112
    %v2580 = vunpack.c.l.b16 %v1113
    %v2581 = vunpack.c.h.b16 %v1113
    %v2582 = vunpack.c.l.b16 %v1114
    %v2583 = vunpack.c.h.b16 %v1114
    %v2584 = vunpack.c.l.b16 %v1115
    %v2585 = vunpack.c.h.b16 %v1115
    %v2586 = vunpack.c.l.b16 %v1116
    %v2587 = vunpack.c.h.b16 %v1116
    %v2588 = vunpack.c.l.b16 %v1117
    %v2589 = vunpack.c.h.b16 %v1117
    %v2590 = vunpack.c.l.b16 %v1118
    %v2591 = vunpack.c.h.b16 %v1118
    %v2592 = vunpack.c.l.b16 %v1119
    %v2593 = vunpack.c.h.b16 %v1119
    %v2594 = vunpack.c.l.b16 %v1120
    %v2595 = vunpack.c.h.b16 %v1120
    %v2596 = vunpack.c.l.b16 %v1121
    %v2597 = vunpack.c.h.b16 %v1121
    %v2598 = vunpack.c.l.b16 %v1122
    %v2599 = vunpack.c.h.b16 %v1122
    %v2600 = vunpack.c.l.b16 %v1123
    %v2601 = vunpack.c.h.b16 %v1123
    %v2602 = vunpack.c.l.b16 %v1124
    %v2603 = vunpack.c.h.b16 %v1124
    %v2604 = vunpack.c.l.b16 %v1125
    %v2605 = vunpack.c.h.b16 %v1125
    %v2606 = vunpack.c.l.b16 %v1126
    %v2607 = vunpack.c.h.b16 %v1126
    %v2608 = vunpack.c.l.b16 %v1127
    %v2609 = vunpack.c.h.b16 %v1127
    %v2610 = vunpack.c.l.b16 %v1128
    %v2611 = vunpack.c.h.b16 %v1128
    %v2612 = vunpack.c.l.b16 %v1129
    %v2613 = vunpack.c.h.b16 %v1129
    %v2614 = vunpack.c.l.b16 %v1130
    %v2615 = vunpack.c.h.b16 %v1130
    %v2616 = vunpack.c.l.b16 %v1131
    %v2617 = vunpack.c.h.b16 %v1131
    %v2618 = vunpack.c.l.b16 %v1132
    %v2619 = vunpack.c.h.b16 %v1132
    %v2620 = vunpack.c.l.b16 %v1133
    %v2621 = vunpack.c.h.b16 %v1133
    %v2622 = vunpack.c.l.b16 %v1134
    %v2623 = vunpack.c.h.b16 %v1134
    %v2624 = vunpack.c.l.b16 %v1135
    %v2625 = vunpack.c.h.b16 %v1135
    %v2626 = vunpack.c.l.b16 %v1136
    %v2627 = vunpack.c.h.b16 %v1136
    %v2628 = vunpack.c.l.b16 %v1137
    %v2629 = vunpack.c.h.b16 %v1137
    %v2630 = vunpack.c.l.b16 %v1138
    %v2631 = vunpack.c.h.b16 %v1138
    %v2632 = vunpack.c.l.b16 %v1139
    %v2633 = vunpack.c.h.b16 %v1139
    %v2634 = vunpack.c.l.b16 %v1140
    %v2635 = vunpack.c.h.b16 %v1140
    %v2636 = vunpack.c.l.b16 %v1141
    %v2637 = vunpack.c.h.b16 %v1141
    %v2638 = vunpack.c.l.b16 %v1142
    %v2639 = vunpack.c.h.b16 %v1142
    %v2640 = vunpack.c.l.b16 %v1143
    %v2641 = vunpack.c.h.b16 %v1143
    %v2642 = vunpack.c.l.b16 %v1144
    %v2643 = vunpack.c.h.b16 %v1144
    %v2644 = vunpack.c.l.b16 %v1145
    %v2645 = vunpack.c.h.b16 %v1145
    %v2646 = vunpack.c.l.b16 %v1146
    %v2647 = vunpack.c.h.b16 %v1146
    %v2648 = vunpack.c.l.b16 %v1147
    %v2649 = vunpack.c.h.b16 %v1147
    %v2650 = vunpack.c.l.b16 %v1148
    %v2651 = vunpack.c.h.b16 %v1148
    %v2652 = vunpack.c.l.b16 %v1149
    %v2653 = vunpack.c.h.b16 %v1149
    %v2654 = vunpack.c.l.b16 %v1150
    %v2655 = vunpack.c.h.b16 %v1150
    %v2656 = vunpack.c.l.b16 %v1151
    %v2657 = vunpack.c.h.b16 %v1151
    %v2658 = vunpack.c.l.b16 %v1152
    %v2659 = vunpack.c.h.b16 %v1152
    %v2660 = vunpack.c.l.b16 %v1153
    %v2661 = vunpack.c.h.b16 %v1153
    %v2662 = vunpack.c.l.b16 %v1154
    %v2663 = vunpack.c.h.b16 %v1154
    %v2664 = vunpack.c.l.b16 %v1155
    %v2665 = vunpack.c.h.b16 %v1155
    %v2666 = vunpack.c.l.b16 %v1156
    %v2667 = vunpack.c.h.b16 %v1156
    %v2668 = vunpack.c.l.b16 %v1157
    %v2669 = vunpack.c.h.b16 %v1157
    %v2670 = vunpack.c.l.b16 %v1158
    %v2671 = vunpack.c.h.b16 %v1158
    %v2672 = vunpack.c.l.b16 %v1159
    %v2673 = vunpack.c.h.b16 %v1159
    %v2674 = vunpack.c.l.b16 %v1160
    %v2675 = vunpack.c.h.b16 %v1160
    %v2676 = vunpack.c.l.b16 %v1161
    %v2677 = vunpack.c.h.b16 %v1161
    %v2678 = vunpack.c.l.b16 %v1162
    %v2679 = vunpack.c.h.b16 %v1162
    %v2680 = vunpack.c.l.b16 %v1163
    %v2681 = vunpack.c.h.b16 %v1163
    %v2682 = vunpack.c.l.b16 %v1164
    %v2683 = vunpack.c.h.b16 %v1164
    %v2684 = vunpack.c.l.b16 %v1165
    %v2685 = vunpack.c.h.b16 %v1165
    %v2686 = vunpack.c.l.b16 %v1166
    %v2687 = vunpack.c.h.b16 %v1166
    %v2688 = vunpack.c.l.b16 %v1167
    %v2689 = vunpack.c.h.b16 %v1167
    %v2690 = vunpack.c.l.b16 %v1168
    %v2691 = vunpack.c.h.b16 %v1168
    %v2692 = vunpack.c.l.b16 %v1169
    %v2693 = vunpack.c.h.b16 %v1169
    %v2694 = vunpack.c.l.b16 %v1170
    %v2695 = vunpack.c.h.b16 %v1170
    %v2696 = vunpack.c.l.b16 %v1171
    %v2697 = vunpack.c.h.b16 %v1171
    %v2698 = vunpack.c.l.b16 %v1172
    %v2699 = vunpack.c.h.b16 %v1172
    %v2700 = vunpack.c.l.b16 %v1173
    %v2701 = vunpack.c.h.b16 %v1173
    %v2702 = vunpack.c.l.b16 %v1174
    %v2703 = vunpack.c.h.b16 %v1174
    %v2704 = vunpack.c.l.b16 %v1175
    %v2705 = vunpack.c.h.b16 %v1175
    %v2706 = vunpack.c.l.b16 %v1176
    %v2707 = vunpack.c.h.b16 %v1176
    %v2708 = vunpack.c.l.b16 %v1177
    %v2709 = vunpack.c.h.b16 %v1177
    %v2710 = vunpack.c.l.b16 %v1178
    %v2711 = vunpack.c.h.b16 %v1178
    %v2712 = vunpack.c.l.b16 %v1179
    %v2713 = vunpack.c.h.b16 %v1179
    %v2714 = vunpack.c.l.b16 %v1180
    %v2715 = vunpack.c.h.b16 %v1180
    %v2716 = vunpack.c.l.b16 %v1181
    %v2717 = vunpack.c.h.b16 %v1181
    %v2718 = vunpack.c.l.b16 %v1182
    %v2719 = vunpack.c.h.b16 %v1182
    %v2720 = vunpack.c.l.b16 %v1183
    %v2721 = vunpack.c.h.b16 %v1183
    %v2722 = vunpack.c.l.b16 %v1184
    %v2723 = vunpack.c.h.b16 %v1184
    %v2724 = vunpack.c.l.b16 %v1185
    %v2725 = vunpack.c.h.b16 %v1185
    %v2726 = vunpack.c.l.b16 %v1186
    %v2727 = vunpack.c.h.b16 %v1186
    %v2728 = vunpack.c.l.b16 %v1187
    %v2729 = vunpack.c.h.b16 %v1187
    %v2730 = vunpack.c.l.b16 %v1188
    %v2731 = vunpack.c.h.b16 %v1188
    %v2732 = vunpack.c.l.b16 %v1189
    %v2733 = vunpack.c.h.b16 %v1189
    %v2734 = vunpack.c.l.b16 %v1190
    %v2735 = vunpack.c.h.b16 %v1190
    %v2736 = vunpack.c.l.b16 %v1191
    %v2737 = vunpack.c.h.b16 %v1191
    %v2738 = vunpack.c.l.b16 %v1192
    %v2739 = vunpack.c.h.b16 %v1192
    %v2740 = vunpack.c.l.b16 %v1193
    %v2741 = vunpack.c.h.b16 %v1193
    %v2742 = vunpack.c.l.b16 %v1194
    %v2743 = vunpack.c.h.b16 %v1194
    %v2744 = vunpack.c.l.b16 %v1195
    %v2745 = vunpack.c.h.b16 %v1195
    %v2746 = vunpack.c.l.b16 %v1196
    %v2747 = vunpack.c.h.b16 %v1196
    %v2748 = vunpack.c.l.b16 %v1197
    %v2749 = vunpack.c.h.b16 %v1197
    %v2750 = vunpack.c.l.b16 %v1198
    %v2751 = vunpack.c.h.b16 %v1198
    %v2752 = vunpack.c.l.b16 %v1199
    %v2753 = vunpack.c.h.b16 %v1199
    %v2754 = vunpack.c.l.b16 %v1200
    %v2755 = vunpack.c.h.b16 %v1200
    %v2756 = vunpack.c.l.b16 %v1201
    %v2757 = vunpack.c.h.b16 %v1201
    %v2758 = vunpack.c.l.b16 %v1202
    %v2759 = vunpack.c.h.b16 %v1202
    %v2760 = vunpack.c.l.b16 %v1203
    %v2761 = vunpack.c.h.b16 %v1203
    %v2762 = vunpack.c.l.b16 %v1204
    %v2763 = vunpack.c.h.b16 %v1204
    %v2764 = vunpack.c.l.b16 %v1205
    %v2765 = vunpack.c.h.b16 %v1205
    %v2766 = vunpack.c.l.b16 %v1206
    %v2767 = vunpack.c.h.b16 %v1206
    %v2768 = vunpack.c.l.b16 %v1207
    %v2769 = vunpack.c.h.b16 %v1207
    %v2770 = vunpack.c.l.b16 %v1208
    %v2771 = vunpack.c.h.b16 %v1208
    %v2772 = vunpack.c.l.b16 %v1209
    %v2773 = vunpack.c.h.b16 %v1209
    %v2774 = vunpack.c.l.b16 %v1210
    %v2775 = vunpack.c.h.b16 %v1210
    %v2776 = vunpack.c.l.b16 %v1211
    %v2777 = vunpack.c.h.b16 %v1211
    %v2778 = vunpack.c.l.b16 %v1212
    %v2779 = vunpack.c.h.b16 %v1212
    %v2780 = vunpack.c.l.b16 %v1213
    %v2781 = vunpack.c.h.b16 %v1213
    %v2782 = vunpack.c.l.b16 %v1214
    %v2783 = vunpack.c.h.b16 %v1214
    %v2784 = vunpack.c.l.b16 %v1215
    %v2785 = vunpack.c.h.b16 %v1215
    %v2786 = vunpack.c.l.b16 %v1216
    %v2787 = vunpack.c.h.b16 %v1216
    %v2788 = vunpack.c.l.b16 %v1217
    %v2789 = vunpack.c.h.b16 %v1217
    %v2790 = vunpack.c.l.b16 %v1218
    %v2791 = vunpack.c.h.b16 %v1218
    %v2792 = vunpack.c.l.b16 %v1219
    %v2793 = vunpack.c.h.b16 %v1219
    %v2794 = vunpack.c.l.b16 %v1220
    %v2795 = vunpack.c.h.b16 %v1220
    %v2796 = vunpack.c.l.b16 %v1221
    %v2797 = vunpack.c.h.b16 %v1221
    %v2798 = vunpack.c.l.b16 %v1222
    %v2799 = vunpack.c.h.b16 %v1222
    %v2800 = vunpack.c.l.b16 %v1223
    %v2801 = vunpack.c.h.b16 %v1223
    %v2802 = vpack.c.b16 %v1786, %v1778
    %v2803 = vpack.c.b16 %v1787, %v1779
    %v2804 = vpack.c.b16 %v1788, %v1780
    %v2805 = vpack.c.b16 %v1789, %v1781
    %v2806 = vpack.c.b16 %v1790, %v1782
    %v2807 = vpack.c.b16 %v1791, %v1783
    %v2808 = vpack.c.b16 %v1792, %v1784
    %v2809 = vpack.c.b16 %v1793, %v1785
    %v2810 = vpack.c.b16 %v1802, %v1794
    %v2811 = vpack.c.b16 %v1803, %v1795
    %v2812 = vpack.c.b16 %v1804, %v1796
    %v2813 = vpack.c.b16 %v1805, %v1797
    %v2814 = vpack.c.b16 %v1806, %v1798
    %v2815 = vpack.c.b16 %v1807, %v1799
    %v2816 = vpack.c.b16 %v1808, %v1800
    %v2817 = vpack.c.b16 %v1809, %v1801
    %v2818 = vpack.c.b16 %v1818, %v1810
    %v2819 = vpack.c.b16 %v1819, %v1811
    %v2820 = vpack.c.b16 %v1820, %v1812
    %v2821 = vpack.c.b16 %v1821, %v1813
    %v2822 = vpack.c.b16 %v1822, %v1814
    %v2823 = vpack.c.b16 %v1823, %v1815
    %v2824 = vpack.c.b16 %v1824, %v1816
    %v2825 = vpack.c.b16 %v1825, %v1817
    %v2826 = vpack.c.b16 %v1834, %v1826
    %v2827 = vpack.c.b16 %v1835, %v1827
    %v2828 = vpack.c.b16 %v1836, %v1828
    %v2829 = vpack.c.b16 %v1837, %v1829
    %v2830 = vpack.c.b16 %v1838, %v1830
    %v2831 = vpack.c.b16 %v1839, %v1831
    %v2832 = vpack.c.b16 %v1840, %v1832
    %v2833 = vpack.c.b16 %v1841, %v1833
    %v2834 = vpack.c.b16 %v1850, %v1842
    %v2835 = vpack.c.b16 %v1851, %v1843
    %v2836 = vpack.c.b16 %v1852, %v1844
    %v2837 = vpack.c.b16 %v1853, %v1845
    %v2838 = vpack.c.b16 %v1854, %v1846
    %v2839 = vpack.c.b16 %v1855, %v1847
    %v2840 = vpack.c.b16 %v1856, %v1848
    %v2841 = vpack.c.b16 %v1857, %v1849
    %v2842 = vpack.c.b16 %v1866, %v1858
    %v2843 = vpack.c.b16 %v1867, %v1859
    %v2844 = vpack.c.b16 %v1868, %v1860
    %v2845 = vpack.c.b16 %v1869, %v1861
    %v2846 = vpack.c.b16 %v1870, %v1862
    %v2847 = vpack.c.b16 %v1871, %v1863
    %v2848 = vpack.c.b16 %v1872, %v1864
    %v2849 = vpack.c.b16 %v1873, %v1865
    %v2850 = vpack.c.b16 %v1882, %v1874
    %v2851 = vpack.c.b16 %v1883, %v1875
    %v2852 = vpack.c.b16 %v1884, %v1876
    %v2853 = vpack.c.b16 %v1885, %v1877
    %v2854 = vpack.c.b16 %v1886, %v1878
    %v2855 = vpack.c.b16 %v1887, %v1879
    %v2856 = vpack.c.b16 %v1888, %v1880
    %v2857 = vpack.c.b16 %v1889, %v1881
    %v2858 = vpack.c.b16 %v1898, %v1890
    %v2859 = vpack.c.b16 %v1899, %v1891
    %v2860 = vpack.c.b16 %v1900, %v1892
    %v2861 = vpack.c.b16 %v1901, %v1893
    %v2862 = vpack.c.b16 %v1902, %v1894
    %v2863 = vpack.c.b16 %v1903, %v1895
    %v2864 = vpack.c.b16 %v1904, %v1896
    %v2865 = vpack.c.b16 %v1905, %v1897
    %v2866 = vpack.c.b16 %v1914, %v1906
    %v2867 = vpack.c.b16 %v1915, %v1907
    %v2868 = vpack.c.b16 %v1916, %v1908
    %v2869 = vpack.c.b16 %v1917, %v1909
    %v2870 = vpack.c.b16 %v1918, %v1910
    %v2871 = vpack.c.b16 %v1919, %v1911
    %v2872 = vpack.c.b16 %v1920, %v1912
    %v2873 = vpack.c.b16 %v1921, %v1913
    %v2874 = vpack.c.b16 %v1930, %v1922
    %v2875 = vpack.c.b16 %v1931, %v1923
    %v2876 = vpack.c.b16 %v1932, %v1924
    %v2877 = vpack.c.b16 %v1933, %v1925
    %v2878 = vpack.c.b16 %v1934, %v1926
    %v2879 = vpack.c.b16 %v1935, %v1927
    %v2880 = vpack.c.b16 %v1936, %v1928
    %v2881 = vpack.c.b16 %v1937, %v1929
    %v2882 = vpack.c.b16 %v1946, %v1938
    %v2883 = vpack.c.b16 %v1947, %v1939
    %v2884 = vpack.c.b16 %v1948, %v1940
    %v2885 = vpack.c.b16 %v1949, %v1941
    %v2886 = vpack.c.b16 %v1950, %v1942
    %v2887 = vpack.c.b16 %v1951, %v1943
    %v2888 = vpack.c.b16 %v1952, %v1944
    %v2889 = vpack.c.b16 %v1953, %v1945
    %v2890 = vpack.c.b16 %v1962, %v1954
    %v2891 = vpack.c.b16 %v1963, %v1955
    %v2892 = vpack.c.b16 %v1964, %v1956
    %v2893 = vpack.c.b16 %v1965, %v1957
    %v2894 = vpack.c.b16 %v1966, %v1958
    %v2895 = vpack.c.b16 %v1967, %v1959
    %v2896 = vpack.c.b16 %v1968, %v1960
    %v2897 = vpack.c.b16 %v1969, %v1961
    %v2898 = vpack.c.b16 %v1978, %v1970
    %v2899 = vpack.c.b16 %v1979, %v1971
    %v2900 = vpack.c.b16 %v1980, %v1972
    %v2901 = vpack.c.b16 %v1981, %v1973
    %v2902 = vpack.c.b16 %v1982, %v1974
    %v2903 = vpack.c.b16 %v1983, %v1975
    %v2904 = vpack.c.b16 %v1984, %v1976
    %v2905 = vpack.c.b16 %v1985, %v1977
    %v2906 = vpack.c.b16 %v1994, %v1986
    %v2907 = vpack.c.b16 %v1995, %v1987
    %v2908 = vpack.c.b16 %v1996, %v1988
    %v2909 = vpack.c.b16 %v1997, %v1989
    %v2910 = vpack.c.b16 %v1998, %v1990
    %v2911 = vpack.c.b16 %v1999, %v1991
    %v2912 = vpack.c.b16 %v2000, %v1992
    %v2913 = vpack.c.b16 %v2001, %v1993
    %v2914 = vpack.c.b16 %v2010, %v2002
    %v2915 = vpack.c.b16 %v2011, %v2003
    %v2916 = vpack.c.b16 %v2012, %v2004
    %v2917 = vpack.c.b16 %v2013, %v2005
    %v2918 = vpack.c.b16 %v2014, %v2006
    %v2919 = vpack.c.b16 %v2015, %v2007
    %v2920 = vpack.c.b16 %v2016, %v2008
    %v2921 = vpack.c.b16 %v2017, %v2009
    %v2922 = vpack.c.b16 %v2026, %v2018
    %v2923 = vpack.c.b16 %v2027, %v2019
    %v2924 = vpack.c.b16 %v2028, %v2020
    %v2925 = vpack.c.b16 %v2029, %v2021
    %v2926 = vpack.c.b16 %v2030, %v2022
    %v2927 = vpack.c.b16 %v2031, %v2023
    %v2928 = vpack.c.b16 %v2032, %v2024
    %v2929 = vpack.c.b16 %v2033, %v2025
    %v2930 = vpack.c.b16 %v2042, %v2034
    %v2931 = vpack.c.b16 %v2043, %v2035
    %v2932 = vpack.c.b16 %v2044, %v2036
    %v2933 = vpack.c.b16 %v2045, %v2037
    %v2934 = vpack.c.b16 %v2046, %v2038
    %v2935 = vpack.c.b16 %v2047, %v2039
    %v2936 = vpack.c.b16 %v2048, %v2040
    %v2937 = vpack.c.b16 %v2049, %v2041
    %v2938 = vpack.c.b16 %v2058, %v2050
    %v2939 = vpack.c.b16 %v2059, %v2051
    %v2940 = vpack.c.b16 %v2060, %v2052
    %v2941 = vpack.c.b16 %v2061, %v2053
    %v2942 = vpack.c.b16 %v2062, %v2054
    %v2943 = vpack.c.b16 %v2063, %v2055
    %v2944 = vpack.c.b16 %v2064, %v2056
    %v2945 = vpack.c.b16 %v2065, %v2057
    %v2946 = vpack.c.b16 %v2074, %v2066
    %v2947 = vpack.c.b16 %v2075, %v2067
    %v2948 = vpack.c.b16 %v2076, %v2068
    %v2949 = vpack.c.b16 %v2077, %v2069
    %v2950 = vpack.c.b16 %v2078, %v2070
    %v2951 = vpack.c.b16 %v2079, %v2071
    %v2952 = vpack.c.b16 %v2080, %v2072
    %v2953 = vpack.c.b16 %v2081, %v2073
    %v2954 = vpack.c.b16 %v2090, %v2082
    %v2955 = vpack.c.b16 %v2091, %v2083
    %v2956 = vpack.c.b16 %v2092, %v2084
    %v2957 = vpack.c.b16 %v2093, %v2085
    %v2958 = vpack.c.b16 %v2094, %v2086
    %v2959 = vpack.c.b16 %v2095, %v2087
    %v2960 = vpack.c.b16 %v2096, %v2088
    %v2961 = vpack.c.b16 %v2097, %v2089
    %v2962 = vpack.c.b16 %v2106, %v2098
    %v2963 = vpack.c.b16 %v2107, %v2099
    %v2964 = vpack.c.b16 %v2108, %v2100
    %v2965 = vpack.c.b16 %v2109, %v2101
    %v2966 = vpack.c.b16 %v2110, %v2102
    %v2967 = vpack.c.b16 %v2111, %v2103
    %v2968 = vpack.c.b16 %v2112, %v2104
    %v2969 = vpack.c.b16 %v2113, %v2105
    %v2970 = vpack.c.b16 %v2122, %v2114
    %v2971 = vpack.c.b16 %v2123, %v2115
    %v2972 = vpack.c.b16 %v2124, %v2116
    %v2973 = vpack.c.b16 %v2125, %v2117
    %v2974 = vpack.c.b16 %v2126, %v2118
    %v2975 = vpack.c.b16 %v2127, %v2119
    %v2976 = vpack.c.b16 %v2128, %v2120
    %v2977 = vpack.c.b16 %v2129, %v2121
    %v2978 = vpack.c.b16 %v2138, %v2130
    %v2979 = vpack.c.b16 %v2139, %v2131
    %v2980 = vpack.c.b16 %v2140, %v2132
    %v2981 = vpack.c.b16 %v2141, %v2133
    %v2982 = vpack.c.b16 %v2142, %v2134
    %v2983 = vpack.c.b16 %v2143, %v2135
    %v2984 = vpack.c.b16 %v2144, %v2136
    %v2985 = vpack.c.b16 %v2145, %v2137
    %v2986 = vpack.c.b16 %v2154, %v2146
    %v2987 = vpack.c.b16 %v2155, %v2147
    %v2988 = vpack.c.b16 %v2156, %v2148
    %v2989 = vpack.c.b16 %v2157, %v2149
    %v2990 = vpack.c.b16 %v2158, %v2150
    %v2991 = vpack.c.b16 %v2159, %v2151
    %v2992 = vpack.c.b16 %v2160, %v2152
    %v2993 = vpack.c.b16 %v2161, %v2153
    %v2994 = vpack.c.b16 %v2170, %v2162
    %v2995 = vpack.c.b16 %v2171, %v2163
    %v2996 = vpack.c.b16 %v2172, %v2164
    %v2997 = vpack.c.b16 %v2173, %v2165
    %v2998 = vpack.c.b16 %v2174, %v2166
    %v2999 = vpack.c.b16 %v2175, %v2167
    %v3000 = vpack.c.b16 %v2176, %v2168
    %v3001 = vpack.c.b16 %v2177, %v2169
    %v3002 = vpack.c.b16 %v2186, %v2178
    %v3003 = vpack.c.b16 %v2187, %v2179
    %v3004 = vpack.c.b16 %v2188, %v2180
    %v3005 = vpack.c.b16 %v2189, %v2181
    %v3006 = vpack.c.b16 %v2190, %v2182
    %v3007 = vpack.c.b16 %v2191, %v2183
    %v3008 = vpack.c.b16 %v2192, %v2184
    %v3009 = vpack.c.b16 %v2193, %v2185
    %v3010 = vpack.c.b16 %v2202, %v2194
    %v3011 = vpack.c.b16 %v2203, %v2195
    %v3012 = vpack.c.b16 %v2204, %v2196
    %v3013 = vpack.c.b16 %v2205, %v2197
    %v3014 = vpack.c.b16 %v2206, %v2198
    %v3015 = vpack.c.b16 %v2207, %v2199
    %v3016 = vpack.c.b16 %v2208, %v2200
    %v3017 = vpack.c.b16 %v2209, %v2201
    %v3018 = vpack.c.b16 %v2218, %v2210
    %v3019 = vpack.c.b16 %v2219, %v2211
    %v3020 = vpack.c.b16 %v2220, %v2212
    %v3021 = vpack.c.b16 %v2221, %v2213
    %v3022 = vpack.c.b16 %v2222, %v2214
    %v3023 = vpack.c.b16 %v2223, %v2215
    %v3024 = vpack.c.b16 %v2224, %v2216
    %v3025 = vpack.c.b16 %v2225, %v2217
    %v3026 = vpack.c.b16 %v2234, %v2226
    %v3027 = vpack.c.b16 %v2235, %v2227
    %v3028 = vpack.c.b16 %v2236, %v2228
    %v3029 = vpack.c.b16 %v2237, %v2229
    %v3030 = vpack.c.b16 %v2238, %v2230
    %v3031 = vpack.c.b16 %v2239, %v2231
    %v3032 = vpack.c.b16 %v2240, %v2232
    %v3033 = vpack.c.b16 %v2241, %v2233
    %v3034 = vpack.c.b16 %v2250, %v2242
    %v3035 = vpack.c.b16 %v2251, %v2243
    %v3036 = vpack.c.b16 %v2252, %v2244
    %v3037 = vpack.c.b16 %v2253, %v2245
    %v3038 = vpack.c.b16 %v2254, %v2246
    %v3039 = vpack.c.b16 %v2255, %v2247
    %v3040 = vpack.c.b16 %v2256, %v2248
    %v3041 = vpack.c.b16 %v2257, %v2249
    %v3042 = vpack.c.b16 %v2266, %v2258
    %v3043 = vpack.c.b16 %v2267, %v2259
    %v3044 = vpack.c.b16 %v2268, %v2260
    %v3045 = vpack.c.b16 %v2269, %v2261
    %v3046 = vpack.c.b16 %v2270, %v2262
    %v3047 = vpack.c.b16 %v2271, %v2263
    %v3048 = vpack.c.b16 %v2272, %v2264
    %v3049 = vpack.c.b16 %v2273, %v2265
    %v3050 = vpack.c.b16 %v2282, %v2274
    %v3051 = vpack.c.b16 %v2283, %v2275
    %v3052 = vpack.c.b16 %v2284, %v2276
    %v3053 = vpack.c.b16 %v2285, %v2277
    %v3054 = vpack.c.b16 %v2286, %v2278
    %v3055 = vpack.c.b16 %v2287, %v2279
    %v3056 = vpack.c.b16 %v2288, %v2280
    %v3057 = vpack.c.b16 %v2289, %v2281
    %v3058 = vpack.c.b16 %v2298, %v2290
    %v3059 = vpack.c.b16 %v2299, %v2291
    %v3060 = vpack.c.b16 %v2300, %v2292
    %v3061 = vpack.c.b16 %v2301, %v2293
    %v3062 = vpack.c.b16 %v2302, %v2294
    %v3063 = vpack.c.b16 %v2303, %v2295
    %v3064 = vpack.c.b16 %v2304, %v2296
    %v3065 = vpack.c.b16 %v2305, %v2297
    %v3066 = vpack.c.b16 %v2314, %v2306
    %v3067 = vpack.c.b16 %v2315, %v2307
    %v3068 = vpack.c.b16 %v2316, %v2308
    %v3069 = vpack.c.b16 %v2317, %v2309
    %v3070 = vpack.c.b16 %v2318, %v2310
    %v3071 = vpack.c.b16 %v2319, %v2311
    %v3072 = vpack.c.b16 %v2320, %v2312
    %v3073 = vpack.c.b16 %v2321, %v2313
    %v3074 = vpack.c.b16 %v2330, %v2322
    %v3075 = vpack.c.b16 %v2331, %v2323
    %v3076 = vpack.c.b16 %v2332, %v2324
    %v3077 = vpack.c.b16 %v2333, %v2325
    %v3078 = vpack.c.b16 %v2334, %v2326
    %v3079 = vpack.c.b16 %v2335, %v2327
    %v3080 = vpack.c.b16 %v2336, %v2328
    %v3081 = vpack.c.b16 %v2337, %v2329
    %v3082 = vpack.c.b16 %v2346, %v2338
    %v3083 = vpack.c.b16 %v2347, %v2339
    %v3084 = vpack.c.b16 %v2348, %v2340
    %v3085 = vpack.c.b16 %v2349, %v2341
    %v3086 = vpack.c.b16 %v2350, %v2342
    %v3087 = vpack.c.b16 %v2351, %v2343
    %v3088 = vpack.c.b16 %v2352, %v2344
    %v3089 = vpack.c.b16 %v2353, %v2345
    %v3090 = vpack.c.b16 %v2362, %v2354
    %v3091 = vpack.c.b16 %v2363, %v2355
    %v3092 = vpack.c.b16 %v2364, %v2356
    %v3093 = vpack.c.b16 %v2365, %v2357
    %v3094 = vpack.c.b16 %v2366, %v2358
    %v3095 = vpack.c.b16 %v2367, %v2359
    %v3096 = vpack.c.b16 %v2368, %v2360
    %v3097 = vpack.c.b16 %v2369, %v2361
    %v3098 = vpack.c.b16 %v2378, %v2370
    %v3099 = vpack.c.b16 %v2379, %v2371
    %v3100 = vpack.c.b16 %v2380, %v2372
    %v3101 = vpack.c.b16 %v2381, %v2373
    %v3102 = vpack.c.b16 %v2382, %v2374
    %v3103 = vpack.c.b16 %v2383, %v2375
    %v3104 = vpack.c.b16 %v2384, %v2376
    %v3105 = vpack.c.b16 %v2385, %v2377
    %v3106 = vpack.c.b16 %v2394, %v2386
    %v3107 = vpack.c.b16 %v2395, %v2387
    %v3108 = vpack.c.b16 %v2396, %v2388
    %v3109 = vpack.c.b16 %v2397, %v2389
    %v3110 = vpack.c.b16 %v2398, %v2390
    %v3111 = vpack.c.b16 %v2399, %v2391
    %v3112 = vpack.c.b16 %v2400, %v2392
    %v3113 = vpack.c.b16 %v2401, %v2393
    %v3114 = vpack.c.b16 %v2410, %v2402
    %v3115 = vpack.c.b16 %v2411, %v2403
    %v3116 = vpack.c.b16 %v2412, %v2404
    %v3117 = vpack.c.b16 %v2413, %v2405
    %v3118 = vpack.c.b16 %v2414, %v2406
    %v3119 = vpack.c.b16 %v2415, %v2407
    %v3120 = vpack.c.b16 %v2416, %v2408
    %v3121 = vpack.c.b16 %v2417, %v2409
    %v3122 = vpack.c.b16 %v2426, %v2418
    %v3123 = vpack.c.b16 %v2427, %v2419
    %v3124 = vpack.c.b16 %v2428, %v2420
    %v3125 = vpack.c.b16 %v2429, %v2421
    %v3126 = vpack.c.b16 %v2430, %v2422
    %v3127 = vpack.c.b16 %v2431, %v2423
    %v3128 = vpack.c.b16 %v2432, %v2424
    %v3129 = vpack.c.b16 %v2433, %v2425
    %v3130 = vpack.c.b16 %v2442, %v2434
    %v3131 = vpack.c.b16 %v2443, %v2435
    %v3132 = vpack.c.b16 %v2444, %v2436
    %v3133 = vpack.c.b16 %v2445, %v2437
    %v3134 = vpack.c.b16 %v2446, %v2438
    %v3135 = vpack.c.b16 %v2447, %v2439
    %v3136 = vpack.c.b16 %v2448, %v2440
    %v3137 = vpack.c.b16 %v2449, %v2441
    %v3138 = vpack.c.b16 %v2458, %v2450
    %v3139 = vpack.c.b16 %v2459, %v2451
    %v3140 = vpack.c.b16 %v2460, %v2452
    %v3141 = vpack.c.b16 %v2461, %v2453
    %v3142 = vpack.c.b16 %v2462, %v2454
    %v3143 = vpack.c.b16 %v2463, %v2455
    %v3144 = vpack.c.b16 %v2464, %v2456
    %v3145 = vpack.c.b16 %v2465, %v2457
    %v3146 = vpack.c.b16 %v2474, %v2466
    %v3147 = vpack.c.b16 %v2475, %v2467
    %v3148 = vpack.c.b16 %v2476, %v2468
    %v3149 = vpack.c.b16 %v2477, %v2469
    %v3150 = vpack.c.b16 %v2478, %v2470
    %v3151 = vpack.c.b16 %v2479, %v2471
    %v3152 = vpack.c.b16 %v2480, %v2472
    %v3153 = vpack.c.b16 %v2481, %v2473
    %v3154 = vpack.c.b16 %v2490, %v2482
    %v3155 = vpack.c.b16 %v2491, %v2483
    %v3156 = vpack.c.b16 %v2492, %v2484
    %v3157 = vpack.c.b16 %v2493, %v2485
    %v3158 = vpack.c.b16 %v2494, %v2486
    %v3159 = vpack.c.b16 %v2495, %v2487
    %v3160 = vpack.c.b16 %v2496, %v2488
    %v3161 = vpack.c.b16 %v2497, %v2489
    %v3162 = vpack.c.b16 %v2506, %v2498
    %v3163 = vpack.c.b16 %v2507, %v2499
    %v3164 = vpack.c.b16 %v2508, %v2500
    %v3165 = vpack.c.b16 %v2509, %v2501
    %v3166 = vpack.c.b16 %v2510, %v2502
    %v3167 = vpack.c.b16 %v2511, %v2503
    %v3168 = vpack.c.b16 %v2512, %v2504
    %v3169 = vpack.c.b16 %v2513, %v2505
    %v3170 = vpack.c.b16 %v2522, %v2514
    %v3171 = vpack.c.b16 %v2523, %v2515
    %v3172 = vpack.c.b16 %v2524, %v2516
    %v3173 = vpack.c.b16 %v2525, %v2517
    %v3174 = vpack.c.b16 %v2526, %v2518
    %v3175 = vpack.c.b16 %v2527, %v2519
    %v3176 = vpack.c.b16 %v2528, %v2520
    %v3177 = vpack.c.b16 %v2529, %v2521
    %v3178 = vpack.c.b16 %v2538, %v2530
    %v3179 = vpack.c.b16 %v2539, %v2531
    %v3180 = vpack.c.b16 %v2540, %v2532
    %v3181 = vpack.c.b16 %v2541, %v2533
    %v3182 = vpack.c.b16 %v2542, %v2534
    %v3183 = vpack.c.b16 %v2543, %v2535
    %v3184 = vpack.c.b16 %v2544, %v2536
    %v3185 = vpack.c.b16 %v2545, %v2537
    %v3186 = vpack.c.b16 %v2554, %v2546
    %v3187 = vpack.c.b16 %v2555, %v2547
    %v3188 = vpack.c.b16 %v2556, %v2548
    %v3189 = vpack.c.b16 %v2557, %v2549
    %v3190 = vpack.c.b16 %v2558, %v2550
    %v3191 = vpack.c.b16 %v2559, %v2551
    %v3192 = vpack.c.b16 %v2560, %v2552
    %v3193 = vpack.c.b16 %v2561, %v2553
    %v3194 = vpack.c.b16 %v2570, %v2562
    %v3195 = vpack.c.b16 %v2571, %v2563
    %v3196 = vpack.c.b16 %v2572, %v2564
    %v3197 = vpack.c.b16 %v2573, %v2565
    %v3198 = vpack.c.b16 %v2574, %v2566
    %v3199 = vpack.c.b16 %v2575, %v2567
    %v3200 = vpack.c.b16 %v2576, %v2568
    %v3201 = vpack.c.b16 %v2577, %v2569
    %v3202 = vpack.c.b16 %v2586, %v2578
    %v3203 = vpack.c.b16 %v2587, %v2579
    %v3204 = vpack.c.b16 %v2588, %v2580
    %v3205 = vpack.c.b16 %v2589, %v2581
    %v3206 = vpack.c.b16 %v2590, %v2582
    %v3207 = vpack.c.b16 %v2591, %v2583
    %v3208 = vpack.c.b16 %v2592, %v2584
    %v3209 = vpack.c.b16 %v2593, %v2585
    %v3210 = vpack.c.b16 %v2602, %v2594
    %v3211 = vpack.c.b16 %v2603, %v2595
    %v3212 = vpack.c.b16 %v2604, %v2596
    %v3213 = vpack.c.b16 %v2605, %v2597
    %v3214 = vpack.c.b16 %v2606, %v2598
    %v3215 = vpack.c.b16 %v2607, %v2599
    %v3216 = vpack.c.b16 %v2608, %v2600
    %v3217 = vpack.c.b16 %v2609, %v2601
    %v3218 = vpack.c.b16 %v2618, %v2610
    %v3219 = vpack.c.b16 %v2619, %v2611
    %v3220 = vpack.c.b16 %v2620, %v2612
    %v3221 = vpack.c.b16 %v2621, %v2613
    %v3222 = vpack.c.b16 %v2622, %v2614
    %v3223 = vpack.c.b16 %v2623, %v2615
    %v3224 = vpack.c.b16 %v2624, %v2616
    %v3225 = vpack.c.b16 %v2625, %v2617
    %v3226 = vpack.c.b16 %v2634, %v2626
    %v3227 = vpack.c.b16 %v2635, %v2627
    %v3228 = vpack.c.b16 %v2636, %v2628
    %v3229 = vpack.c.b16 %v2637, %v2629
    %v3230 = vpack.c.b16 %v2638, %v2630
    %v3231 = vpack.c.b16 %v2639, %v2631
    %v3232 = vpack.c.b16 %v2640, %v2632
    %v3233 = vpack.c.b16 %v2641, %v2633
    %v3234 = vpack.c.b16 %v2650, %v2642
    %v3235 = vpack.c.b16 %v2651, %v2643
    %v3236 = vpack.c.b16 %v2652, %v2644
    %v3237 = vpack.c.b16 %v2653, %v2645
    %v3238 = vpack.c.b16 %v2654, %v2646
    %v3239 = vpack.c.b16 %v2655, %v2647
    %v3240 = vpack.c.b16 %v2656, %v2648
    %v3241 = vpack.c.b16 %v2657, %v2649
    %v3242 = vpack.c.b16 %v2666, %v2658
    %v3243 = vpack.c.b16 %v2667, %v2659
    %v3244 = vpack.c.b16 %v2668, %v2660
    %v3245 = vpack.c.b16 %v2669, %v2661
    %v3246 = vpack.c.b16 %v2670, %v2662
    %v3247 = vpack.c.b16 %v2671, %v2663
    %v3248 = vpack.c.b16 %v2672, %v2664
    %v3249 = vpack.c.b16 %v2673, %v2665
    %v3250 = vpack.c.b16 %v2682, %v2674
    %v3251 = vpack.c.b16 %v2683, %v2675
    %v3252 = vpack.c.b16 %v2684, %v2676
    %v3253 = vpack.c.b16 %v2685, %v2677
    %v3254 = vpack.c.b16 %v2686, %v2678
    %v3255 = vpack.c.b16 %v2687, %v2679
    %v3256 = vpack.c.b16 %v2688, %v2680
    %v3257 = vpack.c.b16 %v2689, %v2681
    %v3258 = vpack.c.b16 %v2698, %v2690
    %v3259 = vpack.c.b16 %v2699, %v2691
    %v3260 = vpack.c.b16 %v2700, %v2692
    %v3261 = vpack.c.b16 %v2701, %v2693
    %v3262 = vpack.c.b16 %v2702, %v2694
    %v3263 = vpack.c.b16 %v2703, %v2695
    %v3264 = vpack.c.b16 %v2704, %v2696
    %v3265 = vpack.c.b16 %v2705, %v2697
    %v3266 = vpack.c.b16 %v2714, %v2706
    %v3267 = vpack.c.b16 %v2715, %v2707
    %v3268 = vpack.c.b16 %v2716, %v2708
    %v3269 = vpack.c.b16 %v2717, %v2709
    %v3270 = vpack.c.b16 %v2718, %v2710
    %v3271 = vpack.c.b16 %v2719, %v2711
    %v3272 = vpack.c.b16 %v2720, %v2712
    %v3273 = vpack.c.b16 %v2721, %v2713
    %v3274 = vpack.c.b16 %v2730, %v2722
    %v3275 = vpack.c.b16 %v2731, %v2723
    %v3276 = vpack.c.b16 %v2732, %v2724
    %v3277 = vpack.c.b16 %v2733, %v2725
    %v3278 = vpack.c.b16 %v2734, %v2726
    %v3279 = vpack.c.b16 %v2735, %v2727
    %v3280 = vpack.c.b16 %v2736, %v2728
    %v3281 = vpack.c.b16 %v2737, %v2729
    %v3282 = vpack.c.b16 %v2746, %v2738
    %v3283 = vpack.c.b16 %v2747, %v2739
    %v3284 = vpack.c.b16 %v2748, %v2740
    %v3285 = vpack.c.b16 %v2749, %v2741
    %v3286 = vpack.c.b16 %v2750, %v2742
    %v3287 = vpack.c.b16 %v2751, %v2743
    %v3288 = vpack.c.b16 %v2752, %v2744
    %v3289 = vpack.c.b16 %v2753, %v2745
    %v3290 = vpack.c.b16 %v2762, %v2754
    %v3291 = vpack.c.b16 %v2763, %v2755
    %v3292 = vpack.c.b16 %v2764, %v2756
    %v3293 = vpack.c.b16 %v2765, %v2757
    %v3294 = vpack.c.b16 %v2766, %v2758
    %v3295 = vpack.c.b16 %v2767, %v2759
    %v3296 = vpack.c.b16 %v2768, %v2760
    %v3297 = vpack.c.b16 %v2769, %v2761
    %v3298 = vpack.c.b16 %v2778, %v2770
    %v3299 = vpack.c.b16 %v2779, %v2771
    %v3300 = vpack.c.b16 %v2780, %v2772
    %v3301 = vpack.c.b16 %v2781, %v2773
    %v3302 = vpack.c.b16 %v2782, %v2774
    %v3303 = vpack.c.b16 %v2783, %v2775
    %v3304 = vpack.c.b16 %v2784, %v2776
    %v3305 = vpack.c.b16 %v2785, %v2777
    %v3306 = vpack.c.b16 %v2794, %v2786
    %v3307 = vpack.c.b16 %v2795, %v2787
    %v3308 = vpack.c.b16 %v2796, %v2788
    %v3309 = vpack.c.b16 %v2797, %v2789
    %v3310 = vpack.c.b16 %v2798, %v2790
    %v3311 = vpack.c.b16 %v2799, %v2791
    %v3312 = vpack.c.b16 %v2800, %v2792
    %v3313 = vpack.c.b16 %v2801, %v2793
    %3826 = vmatprep.subr.bf16.mxu0 %v2803
    %3827 = vmatpush1.bf16.msra.mxu0 %v2802
    %3828 = vmatprep.subr.bf16.mxu0 %v2811
    %3829 = vmatpush1.bf16.msra.mxu0 %v2810
    %3830 = vmatprep.subr.bf16.mxu0 %v2819
    %3831 = vmatpush1.bf16.msra.mxu0 %v2818
    %3832 = vmatprep.subr.bf16.mxu0 %v2827
    %3833 = vmatpush1.bf16.msra.mxu0 %v2826
    %3834 = vmatprep.subr.bf16.mxu0 %v2835
    %3835 = vmatpush1.bf16.msra.mxu0 %v2834
    %3836 = vmatprep.subr.bf16.mxu0 %v2843
    %3837 = vmatpush1.bf16.msra.mxu0 %v2842
    %3838 = vmatprep.subr.bf16.mxu0 %v2851
    %3839 = vmatpush1.bf16.msra.mxu0 %v2850
    %3840 = vmatprep.subr.bf16.mxu0 %v2859
    %3841 = vmatpush1.bf16.msra.mxu0 %v2858
    %3842 = vmatprep.subr.bf16.mxu0 %v2867
    %3843 = vmatpush1.bf16.msra.mxu0 %v2866
    %3844 = vmatprep.subr.bf16.mxu0 %v2875
    %3845 = vmatpush1.bf16.msra.mxu0 %v2874
    %3846 = vmatprep.subr.bf16.mxu0 %v2883
    %3847 = vmatpush1.bf16.msra.mxu0 %v2882
    %3848 = vmatprep.subr.bf16.mxu0 %v2891
    %3849 = vmatpush1.bf16.msra.mxu0 %v2890
    %3850 = vmatprep.subr.bf16.mxu0 %v2899
    %3851 = vmatpush1.bf16.msra.mxu0 %v2898
    %3852 = vmatprep.subr.bf16.mxu0 %v2907
    %3853 = vmatpush1.bf16.msra.mxu0 %v2906
    %3854 = vmatprep.subr.bf16.mxu0 %v2915
    %3855 = vmatpush1.bf16.msra.mxu0 %v2914
    %3856 = vmatprep.subr.bf16.mxu0 %v2923
    %3857 = vmatpush1.bf16.msra.mxu0 %v2922
    %3858 = vmatprep.mubr.bf16.mxu0 %v705
    %3859 = vmatmul.mubr.bf16.gmra.mrb[0].mxu0 %v704
    %v3860 = vpop.f32.mrb[0].mxu0
    %v3861 = vadd.f32 %v1229, %v3860
    %v3862 = vpop.f32.mrb[0].mxu0
    %v3863 = vadd.f32 %v1233, %v3862
    %v3864 = vpop.f32.mrb[0].mxu0
    %v3865 = vpop.f32.mrb[0].mxu0
    %3866 = vdwg.mxu0
    %3867 = vmatprep.subr.bf16.mxu0 %v2931
    %3868 = vmatpush1.bf16.msra.mxu0 %v2930
    %3869 = vmatprep.subr.bf16.mxu0 %v2939
    %3870 = vmatpush1.bf16.msra.mxu0 %v2938
    %3871 = vmatprep.subr.bf16.mxu0 %v2947
    %3872 = vmatpush1.bf16.msra.mxu0 %v2946
    %3873 = vmatprep.subr.bf16.mxu0 %v2955
    %3874 = vmatpush1.bf16.msra.mxu0 %v2954
    %3875 = vmatprep.subr.bf16.mxu0 %v2963
    %3876 = vmatpush1.bf16.msra.mxu0 %v2962
    %3877 = vmatprep.subr.bf16.mxu0 %v2971
    %3878 = vmatpush1.bf16.msra.mxu0 %v2970
    %3879 = vmatprep.subr.bf16.mxu0 %v2979
    %3880 = vmatpush1.bf16.msra.mxu0 %v2978
    %3881 = vmatprep.subr.bf16.mxu0 %v2987
    %3882 = vmatpush1.bf16.msra.mxu0 %v2986
    %3883 = vmatprep.subr.bf16.mxu0 %v2995
    %3884 = vmatpush1.bf16.msra.mxu0 %v2994
    %3885 = vmatprep.subr.bf16.mxu0 %v3003
    %3886 = vmatpush1.bf16.msra.mxu0 %v3002
    %3887 = vmatprep.subr.bf16.mxu0 %v3011
    %3888 = vmatpush1.bf16.msra.mxu0 %v3010
    %3889 = vmatprep.subr.bf16.mxu0 %v3019
    %3890 = vmatpush1.bf16.msra.mxu0 %v3018
    %3891 = vmatprep.subr.bf16.mxu0 %v3027
    %3892 = vmatpush1.bf16.msra.mxu0 %v3026
    %3893 = vmatprep.subr.bf16.mxu0 %v3035
    %3894 = vmatpush1.bf16.msra.mxu0 %v3034
    %3895 = vmatprep.subr.bf16.mxu0 %v3043
    %3896 = vmatpush1.bf16.msra.mxu0 %v3042
    %3897 = vmatprep.subr.bf16.mxu0 %v3051
    %3898 = vmatpush1.bf16.msra.mxu0 %v3050
    %3899 = vmatprep.mubr.bf16.mxu0 %v707
    %3900 = vmatmul.mubr.bf16.gmra.mrb[0].mxu0 %v706
    %v3901 = vpop.f32.mrb[0].mxu0
    %v3902 = vadd.f32 %v3861, %v3901
    %v3903 = vpop.f32.mrb[0].mxu0
    %v3904 = vadd.f32 %v3863, %v3903
    %v3905 = vpop.f32.mrb[0].mxu0
    %v3906 = vpop.f32.mrb[0].mxu0
    %3907 = vdwg.mxu0
    %3908 = vmatprep.subr.bf16.mxu0 %v3059
    %3909 = vmatpush1.bf16.msra.mxu0 %v3058
    %3910 = vmatprep.subr.bf16.mxu0 %v3067
    %3911 = vmatpush1.bf16.msra.mxu0 %v3066
    %3912 = vmatprep.subr.bf16.mxu0 %v3075
    %3913 = vmatpush1.bf16.msra.mxu0 %v3074
    %3914 = vmatprep.subr.bf16.mxu0 %v3083
    %3915 = vmatpush1.bf16.msra.mxu0 %v3082
    %3916 = vmatprep.subr.bf16.mxu0 %v3091
    %3917 = vmatpush1.bf16.msra.mxu0 %v3090
    %3918 = vmatprep.subr.bf16.mxu0 %v3099
    %3919 = vmatpush1.bf16.msra.mxu0 %v3098
    %3920 = vmatprep.subr.bf16.mxu0 %v3107
    %3921 = vmatpush1.bf16.msra.mxu0 %v3106
    %3922 = vmatprep.subr.bf16.mxu0 %v3115
    %3923 = vmatpush1.bf16.msra.mxu0 %v3114
    %3924 = vmatprep.subr.bf16.mxu0 %v3123
    %3925 = vmatpush1.bf16.msra.mxu0 %v3122
    %3926 = vmatprep.subr.bf16.mxu0 %v3131
    %3927 = vmatpush1.bf16.msra.mxu0 %v3130
    %3928 = vmatprep.subr.bf16.mxu0 %v3139
    %3929 = vmatpush1.bf16.msra.mxu0 %v3138
    %3930 = vmatprep.subr.bf16.mxu0 %v3147
    %3931 = vmatpush1.bf16.msra.mxu0 %v3146
    %3932 = vmatprep.subr.bf16.mxu0 %v3155
    %3933 = vmatpush1.bf16.msra.mxu0 %v3154
    %3934 = vmatprep.subr.bf16.mxu0 %v3163
    %3935 = vmatpush1.bf16.msra.mxu0 %v3162
    %3936 = vmatprep.subr.bf16.mxu0 %v3171
    %3937 = vmatpush1.bf16.msra.mxu0 %v3170
    %3938 = vmatprep.subr.bf16.mxu0 %v3179
    %3939 = vmatpush1.bf16.msra.mxu0 %v3178
    %3940 = vmatprep.mubr.bf16.mxu0 %v709
    %3941 = vmatmul.mubr.bf16.gmra.mrb[0].mxu0 %v708
    %v3942 = vpop.f32.mrb[0].mxu0
    %v3943 = vadd.f32 %v3902, %v3942
    %v3944 = vpop.f32.mrb[0].mxu0
    %v3945 = vadd.f32 %v3904, %v3944
    %v3946 = vpop.f32.mrb[0].mxu0
    %v3947 = vpop.f32.mrb[0].mxu0
    %3948 = vdwg.mxu0
    %3949 = vmatprep.subr.bf16.mxu0 %v3187
    %3950 = vmatpush1.bf16.msra.mxu0 %v3186
    %3951 = vmatprep.subr.bf16.mxu0 %v3195
    %3952 = vmatpush1.bf16.msra.mxu0 %v3194
    %3953 = vmatprep.subr.bf16.mxu0 %v3203
    %3954 = vmatpush1.bf16.msra.mxu0 %v3202
    %3955 = vmatprep.subr.bf16.mxu0 %v3211
    %3956 = vmatpush1.bf16.msra.mxu0 %v3210
    %3957 = vmatprep.subr.bf16.mxu0 %v3219
    %3958 = vmatpush1.bf16.msra.mxu0 %v3218
    %3959 = vmatprep.subr.bf16.mxu0 %v3227
    %3960 = vmatpush1.bf16.msra.mxu0 %v3226
    %3961 = vmatprep.subr.bf16.mxu0 %v3235
    %3962 = vmatpush1.bf16.msra.mxu0 %v3234
    %3963 = vmatprep.subr.bf16.mxu0 %v3243
    %3964 = vmatpush1.bf16.msra.mxu0 %v3242
    %3965 = vmatprep.subr.bf16.mxu0 %v3251
    %3966 = vmatpush1.bf16.msra.mxu0 %v3250
    %3967 = vmatprep.subr.bf16.mxu0 %v3259
    %3968 = vmatpush1.bf16.msra.mxu0 %v3258
    %3969 = vmatprep.subr.bf16.mxu0 %v3267
    %3970 = vmatpush1.bf16.msra.mxu0 %v3266
    %3971 = vmatprep.subr.bf16.mxu0 %v3275
    %3972 = vmatpush1.bf16.msra.mxu0 %v3274
    %3973 = vmatprep.subr.bf16.mxu0 %v3283
    %3974 = vmatpush1.bf16.msra.mxu0 %v3282
    %3975 = vmatprep.subr.bf16.mxu0 %v3291
    %3976 = vmatpush1.bf16.msra.mxu0 %v3290
    %3977 = vmatprep.subr.bf16.mxu0 %v3299
    %3978 = vmatpush1.bf16.msra.mxu0 %v3298
    %3979 = vmatprep.subr.bf16.mxu0 %v3307
    %3980 = vmatpush1.bf16.msra.mxu0 %v3306
    %3981 = vmatprep.mubr.bf16.mxu0 %v711
    %3982 = vmatmul.mubr.bf16.gmra.mrb[0].mxu0 %v710
    %v3983 = vpop.f32.mrb[0].mxu0
    %v3984 = vadd.f32 %v3943, %v3983
    %v3985 = vpop.f32.mrb[0].mxu0
    %v3986 = vadd.f32 %v3945, %v3985
    %v3987 = vpop.f32.mrb[0].mxu0
    %v3988 = vpop.f32.mrb[0].mxu0
    %3989 = vdwg.mxu0
    %3990 = vmatprep.subr.bf16.mxu0 %v2805
    %3991 = vmatpush1.bf16.msra.mxu0 %v2804
    %3992 = vmatprep.subr.bf16.mxu0 %v2813
    %3993 = vmatpush1.bf16.msra.mxu0 %v2812
    %3994 = vmatprep.subr.bf16.mxu0 %v2821
    %3995 = vmatpush1.bf16.msra.mxu0 %v2820
    %3996 = vmatprep.subr.bf16.mxu0 %v2829
    %3997 = vmatpush1.bf16.msra.mxu0 %v2828
    %3998 = vmatprep.subr.bf16.mxu0 %v2837
    %3999 = vmatpush1.bf16.msra.mxu0 %v2836
    %4000 = vmatprep.subr.bf16.mxu0 %v2845
    %4001 = vmatpush1.bf16.msra.mxu0 %v2844
    %4002 = vmatprep.subr.bf16.mxu0 %v2853
    %4003 = vmatpush1.bf16.msra.mxu0 %v2852
    %4004 = vmatprep.subr.bf16.mxu0 %v2861
    %4005 = vmatpush1.bf16.msra.mxu0 %v2860
    %4006 = vmatprep.subr.bf16.mxu0 %v2869
    %4007 = vmatpush1.bf16.msra.mxu0 %v2868
    %4008 = vmatprep.subr.bf16.mxu0 %v2877
    %4009 = vmatpush1.bf16.msra.mxu0 %v2876
    %4010 = vmatprep.subr.bf16.mxu0 %v2885
    %4011 = vmatpush1.bf16.msra.mxu0 %v2884
    %4012 = vmatprep.subr.bf16.mxu0 %v2893
    %4013 = vmatpush1.bf16.msra.mxu0 %v2892
    %4014 = vmatprep.subr.bf16.mxu0 %v2901
    %4015 = vmatpush1.bf16.msra.mxu0 %v2900
    %4016 = vmatprep.subr.bf16.mxu0 %v2909
    %4017 = vmatpush1.bf16.msra.mxu0 %v2908
    %4018 = vmatprep.subr.bf16.mxu0 %v2917
    %4019 = vmatpush1.bf16.msra.mxu0 %v2916
    %4020 = vmatprep.subr.bf16.mxu0 %v2925
    %4021 = vmatpush1.bf16.msra.mxu0 %v2924
    %4022 = vmatprep.mubr.bf16.mxu0 %v705
    %4023 = vmatmul.mubr.bf16.gmra.mrb[0].mxu0 %v704
    %v4024 = vpop.f32.mrb[0].mxu0
    %v4025 = vadd.f32 %v1237, %v4024
    %v4026 = vpop.f32.mrb[0].mxu0
    %v4027 = vadd.f32 %v1241, %v4026
    %v4028 = vpop.f32.mrb[0].mxu0
    %v4029 = vpop.f32.mrb[0].mxu0
    %4030 = vdwg.mxu0
    %4031 = vmatprep.subr.bf16.mxu0 %v2933
    %4032 = vmatpush1.bf16.msra.mxu0 %v2932
    %4033 = vmatprep.subr.bf16.mxu0 %v2941
    %4034 = vmatpush1.bf16.msra.mxu0 %v2940
    %4035 = vmatprep.subr.bf16.mxu0 %v2949
    %4036 = vmatpush1.bf16.msra.mxu0 %v2948
    %4037 = vmatprep.subr.bf16.mxu0 %v2957
    %4038 = vmatpush1.bf16.msra.mxu0 %v2956
    %4039 = vmatprep.subr.bf16.mxu0 %v2965
    %4040 = vmatpush1.bf16.msra.mxu0 %v2964
    %4041 = vmatprep.subr.bf16.mxu0 %v2973
    %4042 = vmatpush1.bf16.msra.mxu0 %v2972
    %4043 = vmatprep.subr.bf16.mxu0 %v2981
    %4044 = vmatpush1.bf16.msra.mxu0 %v2980
    %4045 = vmatprep.subr.bf16.mxu0 %v2989
    %4046 = vmatpush1.bf16.msra.mxu0 %v2988
    %4047 = vmatprep.subr.bf16.mxu0 %v2997
    %4048 = vmatpush1.bf16.msra.mxu0 %v2996
    %4049 = vmatprep.subr.bf16.mxu0 %v3005
    %4050 = vmatpush1.bf16.msra.mxu0 %v3004
    %4051 = vmatprep.subr.bf16.mxu0 %v3013
    %4052 = vmatpush1.bf16.msra.mxu0 %v3012
    %4053 = vmatprep.subr.bf16.mxu0 %v3021
    %4054 = vmatpush1.bf16.msra.mxu0 %v3020
    %4055 = vmatprep.subr.bf16.mxu0 %v3029
    %4056 = vmatpush1.bf16.msra.mxu0 %v3028
    %4057 = vmatprep.subr.bf16.mxu0 %v3037
    %4058 = vmatpush1.bf16.msra.mxu0 %v3036
    %4059 = vmatprep.subr.bf16.mxu0 %v3045
    %4060 = vmatpush1.bf16.msra.mxu0 %v3044
    %4061 = vmatprep.subr.bf16.mxu0 %v3053
    %4062 = vmatpush1.bf16.msra.mxu0 %v3052
    %4063 = vmatprep.mubr.bf16.mxu0 %v707
    %4064 = vmatmul.mubr.bf16.gmra.mrb[0].mxu0 %v706
    %v4065 = vpop.f32.mrb[0].mxu0
    %v4066 = vadd.f32 %v4025, %v4065
    %v4067 = vpop.f32.mrb[0].mxu0
    %v4068 = vadd.f32 %v4027, %v4067
    %v4069 = vpop.f32.mrb[0].mxu0
    %v4070 = vpop.f32.mrb[0].mxu0
    %4071 = vdwg.mxu0
    %4072 = vmatprep.subr.bf16.mxu0 %v3061
    %4073 = vmatpush1.bf16.msra.mxu0 %v3060
    %4074 = vmatprep.subr.bf16.mxu0 %v3069
    %4075 = vmatpush1.bf16.msra.mxu0 %v3068
    %4076 = vmatprep.subr.bf16.mxu0 %v3077
    %4077 = vmatpush1.bf16.msra.mxu0 %v3076
    %4078 = vmatprep.subr.bf16.mxu0 %v3085
    %4079 = vmatpush1.bf16.msra.mxu0 %v3084
    %4080 = vmatprep.subr.bf16.mxu0 %v3093
    %4081 = vmatpush1.bf16.msra.mxu0 %v3092
    %4082 = vmatprep.subr.bf16.mxu0 %v3101
    %4083 = vmatpush1.bf16.msra.mxu0 %v3100
    %4084 = vmatprep.subr.bf16.mxu0 %v3109
    %4085 = vmatpush1.bf16.msra.mxu0 %v3108
    %4086 = vmatprep.subr.bf16.mxu0 %v3117
    %4087 = vmatpush1.bf16.msra.mxu0 %v3116
    %4088 = vmatprep.subr.bf16.mxu0 %v3125
    %4089 = vmatpush1.bf16.msra.mxu0 %v3124
    %4090 = vmatprep.subr.bf16.mxu0 %v3133
    %4091 = vmatpush1.bf16.msra.mxu0 %v3132
    %4092 = vmatprep.subr.bf16.mxu0 %v3141
    %4093 = vmatpush1.bf16.msra.mxu0 %v3140
    %4094 = vmatprep.subr.bf16.mxu0 %v3149
    %4095 = vmatpush1.bf16.msra.mxu0 %v3148
    %4096 = vmatprep.subr.bf16.mxu0 %v3157
    %4097 = vmatpush1.bf16.msra.mxu0 %v3156
    %4098 = vmatprep.subr.bf16.mxu0 %v3165
    %4099 = vmatpush1.bf16.msra.mxu0 %v3164
    %4100 = vmatprep.subr.bf16.mxu0 %v3173
    %4101 = vmatpush1.bf16.msra.mxu0 %v3172
    %4102 = vmatprep.subr.bf16.mxu0 %v3181
    %4103 = vmatpush1.bf16.msra.mxu0 %v3180
    %4104 = vmatprep.mubr.bf16.mxu0 %v709
    %4105 = vmatmul.mubr.bf16.gmra.mrb[0].mxu0 %v708
    %v4106 = vpop.f32.mrb[0].mxu0
    %v4107 = vadd.f32 %v4066, %v4106
    %v4108 = vpop.f32.mrb[0].mxu0
    %v4109 = vadd.f32 %v4068, %v4108
    %v4110 = vpop.f32.mrb[0].mxu0
    %v4111 = vpop.f32.mrb[0].mxu0
    %4112 = vdwg.mxu0
    %4113 = vmatprep.subr.bf16.mxu0 %v3189
    %4114 = vmatpush1.bf16.msra.mxu0 %v3188
    %4115 = vmatprep.subr.bf16.mxu0 %v3197
    %4116 = vmatpush1.bf16.msra.mxu0 %v3196
    %4117 = vmatprep.subr.bf16.mxu0 %v3205
    %4118 = vmatpush1.bf16.msra.mxu0 %v3204
    %4119 = vmatprep.subr.bf16.mxu0 %v3213
    %4120 = vmatpush1.bf16.msra.mxu0 %v3212
    %4121 = vmatprep.subr.bf16.mxu0 %v3221
    %4122 = vmatpush1.bf16.msra.mxu0 %v3220
    %4123 = vmatprep.subr.bf16.mxu0 %v3229
    %4124 = vmatpush1.bf16.msra.mxu0 %v3228
    %4125 = vmatprep.subr.bf16.mxu0 %v3237
    %4126 = vmatpush1.bf16.msra.mxu0 %v3236
    %4127 = vmatprep.subr.bf16.mxu0 %v3245
    %4128 = vmatpush1.bf16.msra.mxu0 %v3244
    %4129 = vmatprep.subr.bf16.mxu0 %v3253
    %4130 = vmatpush1.bf16.msra.mxu0 %v3252
    %4131 = vmatprep.subr.bf16.mxu0 %v3261
    %4132 = vmatpush1.bf16.msra.mxu0 %v3260
    %4133 = vmatprep.subr.bf16.mxu0 %v3269
    %4134 = vmatpush1.bf16.msra.mxu0 %v3268
    %4135 = vmatprep.subr.bf16.mxu0 %v3277
    %4136 = vmatpush1.bf16.msra.mxu0 %v3276
    %4137 = vmatprep.subr.bf16.mxu0 %v3285
    %4138 = vmatpush1.bf16.msra.mxu0 %v3284
    %4139 = vmatprep.subr.bf16.mxu0 %v3293
    %4140 = vmatpush1.bf16.msra.mxu0 %v3292
    %4141 = vmatprep.subr.bf16.mxu0 %v3301
    %4142 = vmatpush1.bf16.msra.mxu0 %v3300
    %4143 = vmatprep.subr.bf16.mxu0 %v3309
    %4144 = vmatpush1.bf16.msra.mxu0 %v3308
    %4145 = vmatprep.mubr.bf16.mxu0 %v711
    %4146 = vmatmul.mubr.bf16.gmra.mrb[0].mxu0 %v710
    %v4147 = vpop.f32.mrb[0].mxu0
    %v4148 = vadd.f32 %v4107, %v4147
    %v4149 = vpop.f32.mrb[0].mxu0
    %v4150 = vadd.f32 %v4109, %v4149
    %v4151 = vpop.f32.mrb[0].mxu0
    %v4152 = vpop.f32.mrb[0].mxu0
    %4153 = vdwg.mxu0
    %4154 = vmatprep.subr.bf16.mxu0 %v2807
    %4155 = vmatpush1.bf16.msra.mxu0 %v2806
    %4156 = vmatprep.subr.bf16.mxu0 %v2815
    %4157 = vmatpush1.bf16.msra.mxu0 %v2814
    %4158 = vmatprep.subr.bf16.mxu0 %v2823
    %4159 = vmatpush1.bf16.msra.mxu0 %v2822
    %4160 = vmatprep.subr.bf16.mxu0 %v2831
    %4161 = vmatpush1.bf16.msra.mxu0 %v2830
    %4162 = vmatprep.subr.bf16.mxu0 %v2839
    %4163 = vmatpush1.bf16.msra.mxu0 %v2838
    %4164 = vmatprep.subr.bf16.mxu0 %v2847
    %4165 = vmatpush1.bf16.msra.mxu0 %v2846
    %4166 = vmatprep.subr.bf16.mxu0 %v2855
    %4167 = vmatpush1.bf16.msra.mxu0 %v2854
    %4168 = vmatprep.subr.bf16.mxu0 %v2863
    %4169 = vmatpush1.bf16.msra.mxu0 %v2862
    %4170 = vmatprep.subr.bf16.mxu0 %v2871
    %4171 = vmatpush1.bf16.msra.mxu0 %v2870
    %4172 = vmatprep.subr.bf16.mxu0 %v2879
    %4173 = vmatpush1.bf16.msra.mxu0 %v2878
    %4174 = vmatprep.subr.bf16.mxu0 %v2887
    %4175 = vmatpush1.bf16.msra.mxu0 %v2886
    %4176 = vmatprep.subr.bf16.mxu0 %v2895
    %4177 = vmatpush1.bf16.msra.mxu0 %v2894
    %4178 = vmatprep.subr.bf16.mxu0 %v2903
    %4179 = vmatpush1.bf16.msra.mxu0 %v2902
    %4180 = vmatprep.subr.bf16.mxu0 %v2911
    %4181 = vmatpush1.bf16.msra.mxu0 %v2910
    %4182 = vmatprep.subr.bf16.mxu0 %v2919
    %4183 = vmatpush1.bf16.msra.mxu0 %v2918
    %4184 = vmatprep.subr.bf16.mxu0 %v2927
    %4185 = vmatpush1.bf16.msra.mxu0 %v2926
    %4186 = vmatprep.mubr.bf16.mxu0 %v705
    %4187 = vmatmul.mubr.bf16.gmra.mrb[0].mxu0 %v704
    %v4188 = vpop.f32.mrb[0].mxu0
    %v4189 = vadd.f32 %v1245, %v4188
    %v4190 = vpop.f32.mrb[0].mxu0
    %v4191 = vadd.f32 %v1249, %v4190
    %v4192 = vpop.f32.mrb[0].mxu0
    %v4193 = vpop.f32.mrb[0].mxu0
    %4194 = vdwg.mxu0
    %4195 = vmatprep.subr.bf16.mxu0 %v2935
    %4196 = vmatpush1.bf16.msra.mxu0 %v2934
    %4197 = vmatprep.subr.bf16.mxu0 %v2943
    %4198 = vmatpush1.bf16.msra.mxu0 %v2942
    %4199 = vmatprep.subr.bf16.mxu0 %v2951
    %4200 = vmatpush1.bf16.msra.mxu0 %v2950
    %4201 = vmatprep.subr.bf16.mxu0 %v2959
    %4202 = vmatpush1.bf16.msra.mxu0 %v2958
    %4203 = vmatprep.subr.bf16.mxu0 %v2967
    %4204 = vmatpush1.bf16.msra.mxu0 %v2966
    %4205 = vmatprep.subr.bf16.mxu0 %v2975
    %4206 = vmatpush1.bf16.msra.mxu0 %v2974
    %4207 = vmatprep.subr.bf16.mxu0 %v2983
    %4208 = vmatpush1.bf16.msra.mxu0 %v2982
    %4209 = vmatprep.subr.bf16.mxu0 %v2991
    %4210 = vmatpush1.bf16.msra.mxu0 %v2990
    %4211 = vmatprep.subr.bf16.mxu0 %v2999
    %4212 = vmatpush1.bf16.msra.mxu0 %v2998
    %4213 = vmatprep.subr.bf16.mxu0 %v3007
    %4214 = vmatpush1.bf16.msra.mxu0 %v3006
    %4215 = vmatprep.subr.bf16.mxu0 %v3015
    %4216 = vmatpush1.bf16.msra.mxu0 %v3014
    %4217 = vmatprep.subr.bf16.mxu0 %v3023
    %4218 = vmatpush1.bf16.msra.mxu0 %v3022
    %4219 = vmatprep.subr.bf16.mxu0 %v3031
    %4220 = vmatpush1.bf16.msra.mxu0 %v3030
    %4221 = vmatprep.subr.bf16.mxu0 %v3039
    %4222 = vmatpush1.bf16.msra.mxu0 %v3038
    %4223 = vmatprep.subr.bf16.mxu0 %v3047
    %4224 = vmatpush1.bf16.msra.mxu0 %v3046
    %4225 = vmatprep.subr.bf16.mxu0 %v3055
    %4226 = vmatpush1.bf16.msra.mxu0 %v3054
    %4227 = vmatprep.mubr.bf16.mxu0 %v707
    %4228 = vmatmul.mubr.bf16.gmra.mrb[0].mxu0 %v706
    %v4229 = vpop.f32.mrb[0].mxu0
    %v4230 = vadd.f32 %v4189, %v4229
    %v4231 = vpop.f32.mrb[0].mxu0
    %v4232 = vadd.f32 %v4191, %v4231
    %v4233 = vpop.f32.mrb[0].mxu0
    %v4234 = vpop.f32.mrb[0].mxu0
    %4235 = vdwg.mxu0
    %4236 = vmatprep.subr.bf16.mxu0 %v3063
    %4237 = vmatpush1.bf16.msra.mxu0 %v3062
    %4238 = vmatprep.subr.bf16.mxu0 %v3071
    %4239 = vmatpush1.bf16.msra.mxu0 %v3070
    %4240 = vmatprep.subr.bf16.mxu0 %v3079
    %4241 = vmatpush1.bf16.msra.mxu0 %v3078
    %4242 = vmatprep.subr.bf16.mxu0 %v3087
    %4243 = vmatpush1.bf16.msra.mxu0 %v3086
    %4244 = vmatprep.subr.bf16.mxu0 %v3095
    %4245 = vmatpush1.bf16.msra.mxu0 %v3094
    %4246 = vmatprep.subr.bf16.mxu0 %v3103
    %4247 = vmatpush1.bf16.msra.mxu0 %v3102
    %4248 = vmatprep.subr.bf16.mxu0 %v3111
    %4249 = vmatpush1.bf16.msra.mxu0 %v3110
    %4250 = vmatprep.subr.bf16.mxu0 %v3119
    %4251 = vmatpush1.bf16.msra.mxu0 %v3118
    %4252 = vmatprep.subr.bf16.mxu0 %v3127
    %4253 = vmatpush1.bf16.msra.mxu0 %v3126
    %4254 = vmatprep.subr.bf16.mxu0 %v3135
    %4255 = vmatpush1.bf16.msra.mxu0 %v3134
    %4256 = vmatprep.subr.bf16.mxu0 %v3143
    %4257 = vmatpush1.bf16.msra.mxu0 %v3142
    %4258 = vmatprep.subr.bf16.mxu0 %v3151
    %4259 = vmatpush1.bf16.msra.mxu0 %v3150
    %4260 = vmatprep.subr.bf16.mxu0 %v3159
    %4261 = vmatpush1.bf16.msra.mxu0 %v3158
    %4262 = vmatprep.subr.bf16.mxu0 %v3167
    %4263 = vmatpush1.bf16.msra.mxu0 %v3166
    %4264 = vmatprep.subr.bf16.mxu0 %v3175
    %4265 = vmatpush1.bf16.msra.mxu0 %v3174
    %4266 = vmatprep.subr.bf16.mxu0 %v3183
    %4267 = vmatpush1.bf16.msra.mxu0 %v3182
    %4268 = vmatprep.mubr.bf16.mxu0 %v709
    %4269 = vmatmul.mubr.bf16.gmra.mrb[0].mxu0 %v708
    %v4270 = vpop.f32.mrb[0].mxu0
    %v4271 = vadd.f32 %v4230, %v4270
    %v4272 = vpop.f32.mrb[0].mxu0
    %v4273 = vadd.f32 %v4232, %v4272
    %v4274 = vpop.f32.mrb[0].mxu0
    %v4275 = vpop.f32.mrb[0].mxu0
    %4276 = vdwg.mxu0
    %4277 = vmatprep.subr.bf16.mxu0 %v3191
    %4278 = vmatpush1.bf16.msra.mxu0 %v3190
    %4279 = vmatprep.subr.bf16.mxu0 %v3199
    %4280 = vmatpush1.bf16.msra.mxu0 %v3198
    %4281 = vmatprep.subr.bf16.mxu0 %v3207
    %4282 = vmatpush1.bf16.msra.mxu0 %v3206
    %4283 = vmatprep.subr.bf16.mxu0 %v3215
    %4284 = vmatpush1.bf16.msra.mxu0 %v3214
    %4285 = vmatprep.subr.bf16.mxu0 %v3223
    %4286 = vmatpush1.bf16.msra.mxu0 %v3222
    %4287 = vmatprep.subr.bf16.mxu0 %v3231
    %4288 = vmatpush1.bf16.msra.mxu0 %v3230
    %4289 = vmatprep.subr.bf16.mxu0 %v3239
    %4290 = vmatpush1.bf16.msra.mxu0 %v3238
    %4291 = vmatprep.subr.bf16.mxu0 %v3247
    %4292 = vmatpush1.bf16.msra.mxu0 %v3246
    %4293 = vmatprep.subr.bf16.mxu0 %v3255
    %4294 = vmatpush1.bf16.msra.mxu0 %v3254
    %4295 = vmatprep.subr.bf16.mxu0 %v3263
    %4296 = vmatpush1.bf16.msra.mxu0 %v3262
    %4297 = vmatprep.subr.bf16.mxu0 %v3271
    %4298 = vmatpush1.bf16.msra.mxu0 %v3270
    %4299 = vmatprep.subr.bf16.mxu0 %v3279
    %4300 = vmatpush1.bf16.msra.mxu0 %v3278
    %4301 = vmatprep.subr.bf16.mxu0 %v3287
    %4302 = vmatpush1.bf16.msra.mxu0 %v3286
    %4303 = vmatprep.subr.bf16.mxu0 %v3295
    %4304 = vmatpush1.bf16.msra.mxu0 %v3294
    %4305 = vmatprep.subr.bf16.mxu0 %v3303
    %4306 = vmatpush1.bf16.msra.mxu0 %v3302
    %4307 = vmatprep.subr.bf16.mxu0 %v3311
    %4308 = vmatpush1.bf16.msra.mxu0 %v3310
    %4309 = vmatprep.mubr.bf16.mxu0 %v711
    %4310 = vmatmul.mubr.bf16.gmra.mrb[0].mxu0 %v710
    %v4311 = vpop.f32.mrb[0].mxu0
    %v4312 = vadd.f32 %v4271, %v4311
    %v4313 = vpop.f32.mrb[0].mxu0
    %v4314 = vadd.f32 %v4273, %v4313
    %v4315 = vpop.f32.mrb[0].mxu0
    %v4316 = vpop.f32.mrb[0].mxu0
    %4317 = vdwg.mxu0
    %4318 = vmatprep.subr.bf16.mxu0 %v2809
    %4319 = vmatpush1.bf16.msra.mxu0 %v2808
    %4320 = vmatprep.subr.bf16.mxu0 %v2817
    %4321 = vmatpush1.bf16.msra.mxu0 %v2816
    %4322 = vmatprep.subr.bf16.mxu0 %v2825
    %4323 = vmatpush1.bf16.msra.mxu0 %v2824
    %4324 = vmatprep.subr.bf16.mxu0 %v2833
    %4325 = vmatpush1.bf16.msra.mxu0 %v2832
    %4326 = vmatprep.subr.bf16.mxu0 %v2841
    %4327 = vmatpush1.bf16.msra.mxu0 %v2840
    %4328 = vmatprep.subr.bf16.mxu0 %v2849
    %4329 = vmatpush1.bf16.msra.mxu0 %v2848
    %4330 = vmatprep.subr.bf16.mxu0 %v2857
    %4331 = vmatpush1.bf16.msra.mxu0 %v2856
    %4332 = vmatprep.subr.bf16.mxu0 %v2865
    %4333 = vmatpush1.bf16.msra.mxu0 %v2864
    %4334 = vmatprep.subr.bf16.mxu0 %v2873
    %4335 = vmatpush1.bf16.msra.mxu0 %v2872
    %4336 = vmatprep.subr.bf16.mxu0 %v2881
    %4337 = vmatpush1.bf16.msra.mxu0 %v2880
    %4338 = vmatprep.subr.bf16.mxu0 %v2889
    %4339 = vmatpush1.bf16.msra.mxu0 %v2888
    %4340 = vmatprep.subr.bf16.mxu0 %v2897
    %4341 = vmatpush1.bf16.msra.mxu0 %v2896
    %4342 = vmatprep.subr.bf16.mxu0 %v2905
    %4343 = vmatpush1.bf16.msra.mxu0 %v2904
    %4344 = vmatprep.subr.bf16.mxu0 %v2913
    %4345 = vmatpush1.bf16.msra.mxu0 %v2912
    %4346 = vmatprep.subr.bf16.mxu0 %v2921
    %4347 = vmatpush1.bf16.msra.mxu0 %v2920
    %4348 = vmatprep.subr.bf16.mxu0 %v2929
    %4349 = vmatpush1.bf16.msra.mxu0 %v2928
    %4350 = vmatprep.mubr.bf16.mxu0 %v705
    %4351 = vmatmul.mubr.bf16.gmra.mrb[0].mxu0 %v704
    %v4352 = vpop.f32.mrb[0].mxu0
    %v4353 = vadd.f32 %v1253, %v4352
    %v4354 = vpop.f32.mrb[0].mxu0
    %v4355 = vadd.f32 %v1257, %v4354
    %v4356 = vpop.f32.mrb[0].mxu0
    %v4357 = vpop.f32.mrb[0].mxu0
    %4358 = vdwg.mxu0
    %4359 = vmatprep.subr.bf16.mxu0 %v2937
    %4360 = vmatpush1.bf16.msra.mxu0 %v2936
    %4361 = vmatprep.subr.bf16.mxu0 %v2945
    %4362 = vmatpush1.bf16.msra.mxu0 %v2944
    %4363 = vmatprep.subr.bf16.mxu0 %v2953
    %4364 = vmatpush1.bf16.msra.mxu0 %v2952
    %4365 = vmatprep.subr.bf16.mxu0 %v2961
    %4366 = vmatpush1.bf16.msra.mxu0 %v2960
    %4367 = vmatprep.subr.bf16.mxu0 %v2969
    %4368 = vmatpush1.bf16.msra.mxu0 %v2968
    %4369 = vmatprep.subr.bf16.mxu0 %v2977
    %4370 = vmatpush1.bf16.msra.mxu0 %v2976
    %4371 = vmatprep.subr.bf16.mxu0 %v2985
    %4372 = vmatpush1.bf16.msra.mxu0 %v2984
    %4373 = vmatprep.subr.bf16.mxu0 %v2993
    %4374 = vmatpush1.bf16.msra.mxu0 %v2992
    %4375 = vmatprep.subr.bf16.mxu0 %v3001
    %4376 = vmatpush1.bf16.msra.mxu0 %v3000
    %4377 = vmatprep.subr.bf16.mxu0 %v3009
    %4378 = vmatpush1.bf16.msra.mxu0 %v3008
    %4379 = vmatprep.subr.bf16.mxu0 %v3017
    %4380 = vmatpush1.bf16.msra.mxu0 %v3016
    %4381 = vmatprep.subr.bf16.mxu0 %v3025
    %4382 = vmatpush1.bf16.msra.mxu0 %v3024
    %4383 = vmatprep.subr.bf16.mxu0 %v3033
    %4384 = vmatpush1.bf16.msra.mxu0 %v3032
    %4385 = vmatprep.subr.bf16.mxu0 %v3041
    %4386 = vmatpush1.bf16.msra.mxu0 %v3040
    %4387 = vmatprep.subr.bf16.mxu0 %v3049
    %4388 = vmatpush1.bf16.msra.mxu0 %v3048
    %4389 = vmatprep.subr.bf16.mxu0 %v3057
    %4390 = vmatpush1.bf16.msra.mxu0 %v3056
    %4391 = vmatprep.mubr.bf16.mxu0 %v707
    %4392 = vmatmul.mubr.bf16.gmra.mrb[0].mxu0 %v706
    %v4393 = vpop.f32.mrb[0].mxu0
    %v4394 = vadd.f32 %v4353, %v4393
    %v4395 = vpop.f32.mrb[0].mxu0
    %v4396 = vadd.f32 %v4355, %v4395
    %v4397 = vpop.f32.mrb[0].mxu0
    %v4398 = vpop.f32.mrb[0].mxu0
    %4399 = vdwg.mxu0
    %4400 = vmatprep.subr.bf16.mxu0 %v3065
    %4401 = vmatpush1.bf16.msra.mxu0 %v3064
    %4402 = vmatprep.subr.bf16.mxu0 %v3073
    %4403 = vmatpush1.bf16.msra.mxu0 %v3072
    %4404 = vmatprep.subr.bf16.mxu0 %v3081
    %4405 = vmatpush1.bf16.msra.mxu0 %v3080
    %4406 = vmatprep.subr.bf16.mxu0 %v3089
    %4407 = vmatpush1.bf16.msra.mxu0 %v3088
    %4408 = vmatprep.subr.bf16.mxu0 %v3097
    %4409 = vmatpush1.bf16.msra.mxu0 %v3096
    %4410 = vmatprep.subr.bf16.mxu0 %v3105
    %4411 = vmatpush1.bf16.msra.mxu0 %v3104
    %4412 = vmatprep.subr.bf16.mxu0 %v3113
    %4413 = vmatpush1.bf16.msra.mxu0 %v3112
    %4414 = vmatprep.subr.bf16.mxu0 %v3121
    %4415 = vmatpush1.bf16.msra.mxu0 %v3120
    %4416 = vmatprep.subr.bf16.mxu0 %v3129
    %4417 = vmatpush1.bf16.msra.mxu0 %v3128
    %4418 = vmatprep.subr.bf16.mxu0 %v3137
    %4419 = vmatpush1.bf16.msra.mxu0 %v3136
    %4420 = vmatprep.subr.bf16.mxu0 %v3145
    %4421 = vmatpush1.bf16.msra.mxu0 %v3144
    %4422 = vmatprep.subr.bf16.mxu0 %v3153
    %4423 = vmatpush1.bf16.msra.mxu0 %v3152
    %4424 = vmatprep.subr.bf16.mxu0 %v3161
    %4425 = vmatpush1.bf16.msra.mxu0 %v3160
    %4426 = vmatprep.subr.bf16.mxu0 %v3169
    %4427 = vmatpush1.bf16.msra.mxu0 %v3168
    %4428 = vmatprep.subr.bf16.mxu0 %v3177
    %4429 = vmatpush1.bf16.msra.mxu0 %v3176
    %4430 = vmatprep.subr.bf16.mxu0 %v3185
    %4431 = vmatpush1.bf16.msra.mxu0 %v3184
    %4432 = vmatprep.mubr.bf16.mxu0 %v709
    %4433 = vmatmul.mubr.bf16.gmra.mrb[0].mxu0 %v708
    %v4434 = vpop.f32.mrb[0].mxu0
    %v4435 = vadd.f32 %v4394, %v4434
    %v4436 = vpop.f32.mrb[0].mxu0
    %v4437 = vadd.f32 %v4396, %v4436
    %v4438 = vpop.f32.mrb[0].mxu0
    %v4439 = vpop.f32.mrb[0].mxu0
    %4440 = vdwg.mxu0
    %4441 = vmatprep.subr.bf16.mxu0 %v3193
    %4442 = vmatpush1.bf16.msra.mxu0 %v3192
    %4443 = vmatprep.subr.bf16.mxu0 %v3201
    %4444 = vmatpush1.bf16.msra.mxu0 %v3200
    %4445 = vmatprep.subr.bf16.mxu0 %v3209
    %4446 = vmatpush1.bf16.msra.mxu0 %v3208
    %4447 = vmatprep.subr.bf16.mxu0 %v3217
    %4448 = vmatpush1.bf16.msra.mxu0 %v3216
    %4449 = vmatprep.subr.bf16.mxu0 %v3225
    %4450 = vmatpush1.bf16.msra.mxu0 %v3224
    %4451 = vmatprep.subr.bf16.mxu0 %v3233
    %4452 = vmatpush1.bf16.msra.mxu0 %v3232
    %4453 = vmatprep.subr.bf16.mxu0 %v3241
    %4454 = vmatpush1.bf16.msra.mxu0 %v3240
    %4455 = vmatprep.subr.bf16.mxu0 %v3249
    %4456 = vmatpush1.bf16.msra.mxu0 %v3248
    %4457 = vmatprep.subr.bf16.mxu0 %v3257
    %4458 = vmatpush1.bf16.msra.mxu0 %v3256
    %4459 = vmatprep.subr.bf16.mxu0 %v3265
    %4460 = vmatpush1.bf16.msra.mxu0 %v3264
    %4461 = vmatprep.subr.bf16.mxu0 %v3273
    %4462 = vmatpush1.bf16.msra.mxu0 %v3272
    %4463 = vmatprep.subr.bf16.mxu0 %v3281
    %4464 = vmatpush1.bf16.msra.mxu0 %v3280
    %4465 = vmatprep.subr.bf16.mxu0 %v3289
    %4466 = vmatpush1.bf16.msra.mxu0 %v3288
    %4467 = vmatprep.subr.bf16.mxu0 %v3297
    %4468 = vmatpush1.bf16.msra.mxu0 %v3296
    %4469 = vmatprep.subr.bf16.mxu0 %v3305
    %4470 = vmatpush1.bf16.msra.mxu0 %v3304
    %4471 = vmatprep.subr.bf16.mxu0 %v3313
    %4472 = vmatpush1.bf16.msra.mxu0 %v3312
    %4473 = vmatprep.mubr.bf16.mxu0 %v711
    %4474 = vmatmul.mubr.bf16.gmra.mrb[0].mxu0 %v710
    %v4475 = vpop.f32.mrb[0].mxu0
    %v4476 = vadd.f32 %v4435, %v4475
    %v4477 = vpop.f32.mrb[0].mxu0
    %v4478 = vadd.f32 %v4437, %v4477
    %v4479 = vpop.f32.mrb[0].mxu0
    %v4480 = vpop.f32.mrb[0].mxu0
    %4481 = vdwg.mxu0
    %v4482 = vmax.f32 %v3984, 0.0
    %v4483 = vmax.f32 %v3986, 0.0
    %v4484 = vmax.f32 %v4148, 0.0
    %v4485 = vmax.f32 %v4150, 0.0
    %v4486 = vmax.f32 %v4312, 0.0
    %v4487 = vmax.f32 %v4314, 0.0
    %v4488 = vmax.f32 %v4476, 0.0
    %v4489 = vmax.f32 %v4478, 0.0
    %v4490 = vpack.c.bf16 %v4482, %v4482
    %v4491 = vpack.c.bf16 %v4483, %v4483
    %v4492 = vpack.c.bf16 %v4484, %v4484
    %v4493 = vpack.c.bf16 %v4485, %v4485
    %v4494 = vpack.c.bf16 %v4486, %v4486
    %v4495 = vpack.c.bf16 %v4487, %v4487
    %v4496 = vpack.c.bf16 %v4488, %v4488
    %v4497 = vpack.c.bf16 %v4489, %v4489
    %v4498 = vld [vmem:[#allocation10] sm:$0xff]
    %v4499 = vld [vmem:[#allocation10 + $0x8] sm:$0xff]
    %v4500 = vld [vmem:[#allocation10 + $0x10] sm:$0xff]
    %v4501 = vld [vmem:[#allocation10 + $0x18] sm:$0xff]
    %v4502 = vld [vmem:[#allocation10 + $0x20] sm:$0xff]
    %v4503 = vld [vmem:[#allocation10 + $0x28] sm:$0xff]
    %v4504 = vld [vmem:[#allocation10 + $0x30] sm:$0xff]
    %v4505 = vld [vmem:[#allocation10 + $0x38] sm:$0xff]
    %v4506 = vld [vmem:[#allocation10 + $0x40] sm:$0xff]
    %v4507 = vld [vmem:[#allocation10 + $0x48] sm:$0xff]
    %v4508 = vld [vmem:[#allocation10 + $0x50] sm:$0xff]
    %v4509 = vld [vmem:[#allocation10 + $0x58] sm:$0xff]
    %v4510 = vld [vmem:[#allocation10 + $0x60] sm:$0xff]
    %v4511 = vld [vmem:[#allocation10 + $0x68] sm:$0xff]
    %v4512 = vld [vmem:[#allocation10 + $0x70] sm:$0xff]
    %v4513 = vld [vmem:[#allocation10 + $0x78] sm:$0xff]
    %v4514 = vld [vmem:[#allocation10 + $0x80] sm:$0xff]
    %v4515 = vld [vmem:[#allocation10 + $0x88] sm:$0xff]
    %v4516 = vld [vmem:[#allocation10 + $0x90] sm:$0xff]
    %v4517 = vld [vmem:[#allocation10 + $0x98] sm:$0xff]
    %v4518 = vld [vmem:[#allocation10 + $0xa0] sm:$0xff]
    %v4519 = vld [vmem:[#allocation10 + $0xa8] sm:$0xff]
    %v4520 = vld [vmem:[#allocation10 + $0xb0] sm:$0xff]
    %v4521 = vld [vmem:[#allocation10 + $0xb8] sm:$0xff]
    %v4522 = vld [vmem:[#allocation10 + $0xc0] sm:$0xff]
    %v4523 = vld [vmem:[#allocation10 + $0xc8] sm:$0xff]
    %v4524 = vld [vmem:[#allocation10 + $0xd0] sm:$0xff]
    %v4525 = vld [vmem:[#allocation10 + $0xd8] sm:$0xff]
    %v4526 = vld [vmem:[#allocation10 + $0xe0] sm:$0xff]
    %v4527 = vld [vmem:[#allocation10 + $0xe8] sm:$0xff]
    %v4528 = vld [vmem:[#allocation10 + $0xf0] sm:$0xff]
    %v4529 = vld [vmem:[#allocation10 + $0xf8] sm:$0xff]
    %v4530 = vld [vmem:[#allocation10 + $0x100] sm:$0xff]
    %v4531 = vld [vmem:[#allocation10 + $0x108] sm:$0xff]
    %v4532 = vld [vmem:[#allocation10 + $0x110] sm:$0xff]
    %v4533 = vld [vmem:[#allocation10 + $0x118] sm:$0xff]
    %v4534 = vld [vmem:[#allocation10 + $0x120] sm:$0xff]
    %v4535 = vld [vmem:[#allocation10 + $0x128] sm:$0xff]
    %v4536 = vld [vmem:[#allocation10 + $0x130] sm:$0xff]
    %v4537 = vld [vmem:[#allocation10 + $0x138] sm:$0xff]
    %v4538 = vld [vmem:[#allocation10 + $0x140] sm:$0xff]
    %v4539 = vld [vmem:[#allocation10 + $0x148] sm:$0xff]
    %v4540 = vld [vmem:[#allocation10 + $0x150] sm:$0xff]
    %v4541 = vld [vmem:[#allocation10 + $0x158] sm:$0xff]
    %v4542 = vld [vmem:[#allocation10 + $0x160] sm:$0xff]
    %v4543 = vld [vmem:[#allocation10 + $0x168] sm:$0xff]
    %v4544 = vld [vmem:[#allocation10 + $0x170] sm:$0xff]
    %v4545 = vld [vmem:[#allocation10 + $0x178] sm:$0xff]
    %v4546 = vld [vmem:[#allocation10 + $0x180] sm:$0xff]
    %v4547 = vld [vmem:[#allocation10 + $0x188] sm:$0xff]
    %v4548 = vld [vmem:[#allocation10 + $0x190] sm:$0xff]
    %v4549 = vld [vmem:[#allocation10 + $0x198] sm:$0xff]
    %v4550 = vld [vmem:[#allocation10 + $0x1a0] sm:$0xff]
    %v4551 = vld [vmem:[#allocation10 + $0x1a8] sm:$0xff]
    %v4552 = vld [vmem:[#allocation10 + $0x1b0] sm:$0xff]
    %v4553 = vld [vmem:[#allocation10 + $0x1b8] sm:$0xff]
    %v4554 = vld [vmem:[#allocation10 + $0x1c0] sm:$0xff]
    %v4555 = vld [vmem:[#allocation10 + $0x1c8] sm:$0xff]
    %v4556 = vld [vmem:[#allocation10 + $0x1d0] sm:$0xff]
    %v4557 = vld [vmem:[#allocation10 + $0x1d8] sm:$0xff]
    %v4558 = vld [vmem:[#allocation10 + $0x1e0] sm:$0xff]
    %v4559 = vld [vmem:[#allocation10 + $0x1e8] sm:$0xff]
    %v4560 = vld [vmem:[#allocation10 + $0x1f0] sm:$0xff]
    %v4561 = vld [vmem:[#allocation10 + $0x1f8] sm:$0xff]
    %v4562 = vld [vmem:[#allocation10 + $0x200] sm:$0xff]
    %v4563 = vld [vmem:[#allocation10 + $0x208] sm:$0xff]
    %v4564 = vld [vmem:[#allocation10 + $0x210] sm:$0xff]
    %v4565 = vld [vmem:[#allocation10 + $0x218] sm:$0xff]
    %v4566 = vld [vmem:[#allocation10 + $0x220] sm:$0xff]
    %v4567 = vld [vmem:[#allocation10 + $0x228] sm:$0xff]
    %v4568 = vld [vmem:[#allocation10 + $0x230] sm:$0xff]
    %v4569 = vld [vmem:[#allocation10 + $0x238] sm:$0xff]
    %v4570 = vld [vmem:[#allocation10 + $0x240] sm:$0xff]
    %v4571 = vld [vmem:[#allocation10 + $0x248] sm:$0xff]
    %v4572 = vld [vmem:[#allocation10 + $0x250] sm:$0xff]
    %v4573 = vld [vmem:[#allocation10 + $0x258] sm:$0xff]
    %v4574 = vld [vmem:[#allocation10 + $0x260] sm:$0xff]
    %v4575 = vld [vmem:[#allocation10 + $0x268] sm:$0xff]
    %v4576 = vld [vmem:[#allocation10 + $0x270] sm:$0xff]
    %v4577 = vld [vmem:[#allocation10 + $0x278] sm:$0xff]
    %v4578 = vld [vmem:[#allocation10 + $0x280] sm:$0xff]
    %v4579 = vld [vmem:[#allocation10 + $0x288] sm:$0xff]
    %v4580 = vld [vmem:[#allocation10 + $0x290] sm:$0xff]
    %v4581 = vld [vmem:[#allocation10 + $0x298] sm:$0xff]
    %v4582 = vld [vmem:[#allocation10 + $0x2a0] sm:$0xff]
    %v4583 = vld [vmem:[#allocation10 + $0x2a8] sm:$0xff]
    %v4584 = vld [vmem:[#allocation10 + $0x2b0] sm:$0xff]
    %v4585 = vld [vmem:[#allocation10 + $0x2b8] sm:$0xff]
    %v4586 = vld [vmem:[#allocation10 + $0x2c0] sm:$0xff]
    %v4587 = vld [vmem:[#allocation10 + $0x2c8] sm:$0xff]
    %v4588 = vld [vmem:[#allocation10 + $0x2d0] sm:$0xff]
    %v4589 = vld [vmem:[#allocation10 + $0x2d8] sm:$0xff]
    %v4590 = vld [vmem:[#allocation10 + $0x2e0] sm:$0xff]
    %v4591 = vld [vmem:[#allocation10 + $0x2e8] sm:$0xff]
    %v4592 = vld [vmem:[#allocation10 + $0x2f0] sm:$0xff]
    %v4593 = vld [vmem:[#allocation10 + $0x2f8] sm:$0xff]
    %v4594 = vld [vmem:[#allocation10 + $0x300] sm:$0xff]
    %v4595 = vld [vmem:[#allocation10 + $0x308] sm:$0xff]
    %v4596 = vld [vmem:[#allocation10 + $0x310] sm:$0xff]
    %v4597 = vld [vmem:[#allocation10 + $0x318] sm:$0xff]
    %v4598 = vld [vmem:[#allocation10 + $0x320] sm:$0xff]
    %v4599 = vld [vmem:[#allocation10 + $0x328] sm:$0xff]
    %v4600 = vld [vmem:[#allocation10 + $0x330] sm:$0xff]
    %v4601 = vld [vmem:[#allocation10 + $0x338] sm:$0xff]
    %v4602 = vld [vmem:[#allocation10 + $0x340] sm:$0xff]
    %v4603 = vld [vmem:[#allocation10 + $0x348] sm:$0xff]
    %v4604 = vld [vmem:[#allocation10 + $0x350] sm:$0xff]
    %v4605 = vld [vmem:[#allocation10 + $0x358] sm:$0xff]
    %v4606 = vld [vmem:[#allocation10 + $0x360] sm:$0xff]
    %v4607 = vld [vmem:[#allocation10 + $0x368] sm:$0xff]
    %v4608 = vld [vmem:[#allocation10 + $0x370] sm:$0xff]
    %v4609 = vld [vmem:[#allocation10 + $0x378] sm:$0xff]
    %v4610 = vld [vmem:[#allocation10 + $0x380] sm:$0xff]
    %v4611 = vld [vmem:[#allocation10 + $0x388] sm:$0xff]
    %v4612 = vld [vmem:[#allocation10 + $0x390] sm:$0xff]
    %v4613 = vld [vmem:[#allocation10 + $0x398] sm:$0xff]
    %v4614 = vld [vmem:[#allocation10 + $0x3a0] sm:$0xff]
    %v4615 = vld [vmem:[#allocation10 + $0x3a8] sm:$0xff]
    %v4616 = vld [vmem:[#allocation10 + $0x3b0] sm:$0xff]
    %v4617 = vld [vmem:[#allocation10 + $0x3b8] sm:$0xff]
    %v4618 = vld [vmem:[#allocation10 + $0x3c0] sm:$0xff]
    %v4619 = vld [vmem:[#allocation10 + $0x3c8] sm:$0xff]
    %v4620 = vld [vmem:[#allocation10 + $0x3d0] sm:$0xff]
    %v4621 = vld [vmem:[#allocation10 + $0x3d8] sm:$0xff]
    %v4622 = vld [vmem:[#allocation10 + $0x3e0] sm:$0xff]
    %v4623 = vld [vmem:[#allocation10 + $0x3e8] sm:$0xff]
    %v4624 = vld [vmem:[#allocation10 + $0x3f0] sm:$0xff]
    %v4625 = vld [vmem:[#allocation10 + $0x3f8] sm:$0xff]
    %v4626 = vld [vmem:[#allocation10 + $0x400] sm:$0xff]
    %v4627 = vld [vmem:[#allocation10 + $0x408] sm:$0xff]
    %v4628 = vld [vmem:[#allocation10 + $0x410] sm:$0xff]
    %v4629 = vld [vmem:[#allocation10 + $0x418] sm:$0xff]
    %v4630 = vld [vmem:[#allocation10 + $0x420] sm:$0xff]
    %v4631 = vld [vmem:[#allocation10 + $0x428] sm:$0xff]
    %v4632 = vld [vmem:[#allocation10 + $0x430] sm:$0xff]
    %v4633 = vld [vmem:[#allocation10 + $0x438] sm:$0xff]
    %v4634 = vld [vmem:[#allocation10 + $0x440] sm:$0xff]
    %v4635 = vld [vmem:[#allocation10 + $0x448] sm:$0xff]
    %v4636 = vld [vmem:[#allocation10 + $0x450] sm:$0xff]
    %v4637 = vld [vmem:[#allocation10 + $0x458] sm:$0xff]
    %v4638 = vld [vmem:[#allocation10 + $0x460] sm:$0xff]
    %v4639 = vld [vmem:[#allocation10 + $0x468] sm:$0xff]
    %v4640 = vld [vmem:[#allocation10 + $0x470] sm:$0xff]
    %v4641 = vld [vmem:[#allocation10 + $0x478] sm:$0xff]
    %v4642 = vld [vmem:[#allocation10 + $0x480] sm:$0xff]
    %v4643 = vld [vmem:[#allocation10 + $0x488] sm:$0xff]
    %v4644 = vld [vmem:[#allocation10 + $0x490] sm:$0xff]
    %v4645 = vld [vmem:[#allocation10 + $0x498] sm:$0xff]
    %v4646 = vld [vmem:[#allocation10 + $0x4a0] sm:$0xff]
    %v4647 = vld [vmem:[#allocation10 + $0x4a8] sm:$0xff]
    %v4648 = vld [vmem:[#allocation10 + $0x4b0] sm:$0xff]
    %v4649 = vld [vmem:[#allocation10 + $0x4b8] sm:$0xff]
    %v4650 = vld [vmem:[#allocation10 + $0x4c0] sm:$0xff]
    %v4651 = vld [vmem:[#allocation10 + $0x4c8] sm:$0xff]
    %v4652 = vld [vmem:[#allocation10 + $0x4d0] sm:$0xff]
    %v4653 = vld [vmem:[#allocation10 + $0x4d8] sm:$0xff]
    %v4654 = vld [vmem:[#allocation10 + $0x4e0] sm:$0xff]
    %v4655 = vld [vmem:[#allocation10 + $0x4e8] sm:$0xff]
    %v4656 = vld [vmem:[#allocation10 + $0x4f0] sm:$0xff]
    %v4657 = vld [vmem:[#allocation10 + $0x4f8] sm:$0xff]
    %v4658 = vld [vmem:[#allocation10 + $0x500] sm:$0xff]
    %v4659 = vld [vmem:[#allocation10 + $0x508] sm:$0xff]
    %v4660 = vld [vmem:[#allocation10 + $0x510] sm:$0xff]
    %v4661 = vld [vmem:[#allocation10 + $0x518] sm:$0xff]
    %v4662 = vld [vmem:[#allocation10 + $0x520] sm:$0xff]
    %v4663 = vld [vmem:[#allocation10 + $0x528] sm:$0xff]
    %v4664 = vld [vmem:[#allocation10 + $0x530] sm:$0xff]
    %v4665 = vld [vmem:[#allocation10 + $0x538] sm:$0xff]
    %v4666 = vld [vmem:[#allocation10 + $0x540] sm:$0xff]
    %v4667 = vld [vmem:[#allocation10 + $0x548] sm:$0xff]
    %v4668 = vld [vmem:[#allocation10 + $0x550] sm:$0xff]
    %v4669 = vld [vmem:[#allocation10 + $0x558] sm:$0xff]
    %v4670 = vld [vmem:[#allocation10 + $0x560] sm:$0xff]
    %v4671 = vld [vmem:[#allocation10 + $0x568] sm:$0xff]
    %v4672 = vld [vmem:[#allocation10 + $0x570] sm:$0xff]
    %v4673 = vld [vmem:[#allocation10 + $0x578] sm:$0xff]
    %v4674 = vld [vmem:[#allocation10 + $0x580] sm:$0xff]
    %v4675 = vld [vmem:[#allocation10 + $0x588] sm:$0xff]
    %v4676 = vld [vmem:[#allocation10 + $0x590] sm:$0xff]
    %v4677 = vld [vmem:[#allocation10 + $0x598] sm:$0xff]
    %v4678 = vld [vmem:[#allocation10 + $0x5a0] sm:$0xff]
    %v4679 = vld [vmem:[#allocation10 + $0x5a8] sm:$0xff]
    %v4680 = vld [vmem:[#allocation10 + $0x5b0] sm:$0xff]
    %v4681 = vld [vmem:[#allocation10 + $0x5b8] sm:$0xff]
    %v4682 = vld [vmem:[#allocation10 + $0x5c0] sm:$0xff]
    %v4683 = vld [vmem:[#allocation10 + $0x5c8] sm:$0xff]
    %v4684 = vld [vmem:[#allocation10 + $0x5d0] sm:$0xff]
    %v4685 = vld [vmem:[#allocation10 + $0x5d8] sm:$0xff]
    %v4686 = vld [vmem:[#allocation10 + $0x5e0] sm:$0xff]
    %v4687 = vld [vmem:[#allocation10 + $0x5e8] sm:$0xff]
    %v4688 = vld [vmem:[#allocation10 + $0x5f0] sm:$0xff]
    %v4689 = vld [vmem:[#allocation10 + $0x5f8] sm:$0xff]
    %v4690 = vld [vmem:[#allocation10 + $0x600] sm:$0xff]
    %v4691 = vld [vmem:[#allocation10 + $0x608] sm:$0xff]
    %v4692 = vld [vmem:[#allocation10 + $0x610] sm:$0xff]
    %v4693 = vld [vmem:[#allocation10 + $0x618] sm:$0xff]
    %v4694 = vld [vmem:[#allocation10 + $0x620] sm:$0xff]
    %v4695 = vld [vmem:[#allocation10 + $0x628] sm:$0xff]
    %v4696 = vld [vmem:[#allocation10 + $0x630] sm:$0xff]
    %v4697 = vld [vmem:[#allocation10 + $0x638] sm:$0xff]
    %v4698 = vld [vmem:[#allocation10 + $0x640] sm:$0xff]
    %v4699 = vld [vmem:[#allocation10 + $0x648] sm:$0xff]
    %v4700 = vld [vmem:[#allocation10 + $0x650] sm:$0xff]
    %v4701 = vld [vmem:[#allocation10 + $0x658] sm:$0xff]
    %v4702 = vld [vmem:[#allocation10 + $0x660] sm:$0xff]
    %v4703 = vld [vmem:[#allocation10 + $0x668] sm:$0xff]
    %v4704 = vld [vmem:[#allocation10 + $0x670] sm:$0xff]
    %v4705 = vld [vmem:[#allocation10 + $0x678] sm:$0xff]
    %v4706 = vld [vmem:[#allocation10 + $0x680] sm:$0xff]
    %v4707 = vld [vmem:[#allocation10 + $0x688] sm:$0xff]
    %v4708 = vld [vmem:[#allocation10 + $0x690] sm:$0xff]
    %v4709 = vld [vmem:[#allocation10 + $0x698] sm:$0xff]
    %v4710 = vld [vmem:[#allocation10 + $0x6a0] sm:$0xff]
    %v4711 = vld [vmem:[#allocation10 + $0x6a8] sm:$0xff]
    %v4712 = vld [vmem:[#allocation10 + $0x6b0] sm:$0xff]
    %v4713 = vld [vmem:[#allocation10 + $0x6b8] sm:$0xff]
    %v4714 = vld [vmem:[#allocation10 + $0x6c0] sm:$0xff]
    %v4715 = vld [vmem:[#allocation10 + $0x6c8] sm:$0xff]
    %v4716 = vld [vmem:[#allocation10 + $0x6d0] sm:$0xff]
    %v4717 = vld [vmem:[#allocation10 + $0x6d8] sm:$0xff]
    %v4718 = vld [vmem:[#allocation10 + $0x6e0] sm:$0xff]
    %v4719 = vld [vmem:[#allocation10 + $0x6e8] sm:$0xff]
    %v4720 = vld [vmem:[#allocation10 + $0x6f0] sm:$0xff]
    %v4721 = vld [vmem:[#allocation10 + $0x6f8] sm:$0xff]
    %v4722 = vld [vmem:[#allocation10 + $0x700] sm:$0xff]
    %v4723 = vld [vmem:[#allocation10 + $0x708] sm:$0xff]
    %v4724 = vld [vmem:[#allocation10 + $0x710] sm:$0xff]
    %v4725 = vld [vmem:[#allocation10 + $0x718] sm:$0xff]
    %v4726 = vld [vmem:[#allocation10 + $0x720] sm:$0xff]
    %v4727 = vld [vmem:[#allocation10 + $0x728] sm:$0xff]
    %v4728 = vld [vmem:[#allocation10 + $0x730] sm:$0xff]
    %v4729 = vld [vmem:[#allocation10 + $0x738] sm:$0xff]
    %v4730 = vld [vmem:[#allocation10 + $0x740] sm:$0xff]
    %v4731 = vld [vmem:[#allocation10 + $0x748] sm:$0xff]
    %v4732 = vld [vmem:[#allocation10 + $0x750] sm:$0xff]
    %v4733 = vld [vmem:[#allocation10 + $0x758] sm:$0xff]
    %v4734 = vld [vmem:[#allocation10 + $0x760] sm:$0xff]
    %v4735 = vld [vmem:[#allocation10 + $0x768] sm:$0xff]
    %v4736 = vld [vmem:[#allocation10 + $0x770] sm:$0xff]
    %v4737 = vld [vmem:[#allocation10 + $0x778] sm:$0xff]
    %v4738 = vld [vmem:[#allocation10 + $0x780] sm:$0xff]
    %v4739 = vld [vmem:[#allocation10 + $0x788] sm:$0xff]
    %v4740 = vld [vmem:[#allocation10 + $0x790] sm:$0xff]
    %v4741 = vld [vmem:[#allocation10 + $0x798] sm:$0xff]
    %v4742 = vld [vmem:[#allocation10 + $0x7a0] sm:$0xff]
    %v4743 = vld [vmem:[#allocation10 + $0x7a8] sm:$0xff]
    %v4744 = vld [vmem:[#allocation10 + $0x7b0] sm:$0xff]
    %v4745 = vld [vmem:[#allocation10 + $0x7b8] sm:$0xff]
    %v4746 = vld [vmem:[#allocation10 + $0x7c0] sm:$0xff]
    %v4747 = vld [vmem:[#allocation10 + $0x7c8] sm:$0xff]
    %v4748 = vld [vmem:[#allocation10 + $0x7d0] sm:$0xff]
    %v4749 = vld [vmem:[#allocation10 + $0x7d8] sm:$0xff]
    %v4750 = vld [vmem:[#allocation10 + $0x7e0] sm:$0xff]
    %v4751 = vld [vmem:[#allocation10 + $0x7e8] sm:$0xff]
    %v4752 = vld [vmem:[#allocation10 + $0x7f0] sm:$0xff]
    %v4753 = vld [vmem:[#allocation10 + $0x7f8] sm:$0xff]
    %v4754 = vld [vmem:[#allocation10 + $0x800] sm:$0xff]
    %v4755 = vld [vmem:[#allocation10 + $0x808] sm:$0xff]
    %v4756 = vld [vmem:[#allocation10 + $0x810] sm:$0xff]
    %v4757 = vld [vmem:[#allocation10 + $0x818] sm:$0xff]
    %v4758 = vld [vmem:[#allocation10 + $0x820] sm:$0xff]
    %v4759 = vld [vmem:[#allocation10 + $0x828] sm:$0xff]
    %v4760 = vld [vmem:[#allocation10 + $0x830] sm:$0xff]
    %v4761 = vld [vmem:[#allocation10 + $0x838] sm:$0xff]
    %v4762 = vld [vmem:[#allocation10 + $0x840] sm:$0xff]
    %v4763 = vld [vmem:[#allocation10 + $0x848] sm:$0xff]
    %v4764 = vld [vmem:[#allocation10 + $0x850] sm:$0xff]
    %v4765 = vld [vmem:[#allocation10 + $0x858] sm:$0xff]
    %v4766 = vld [vmem:[#allocation10 + $0x860] sm:$0xff]
    %v4767 = vld [vmem:[#allocation10 + $0x868] sm:$0xff]
    %v4768 = vld [vmem:[#allocation10 + $0x870] sm:$0xff]
    %v4769 = vld [vmem:[#allocation10 + $0x878] sm:$0xff]
    %v4770 = vld [vmem:[#allocation10 + $0x880] sm:$0xff]
    %v4771 = vld [vmem:[#allocation10 + $0x888] sm:$0xff]
    %v4772 = vld [vmem:[#allocation10 + $0x890] sm:$0xff]
    %v4773 = vld [vmem:[#allocation10 + $0x898] sm:$0xff]
    %v4774 = vld [vmem:[#allocation10 + $0x8a0] sm:$0xff]
    %v4775 = vld [vmem:[#allocation10 + $0x8a8] sm:$0xff]
    %v4776 = vld [vmem:[#allocation10 + $0x8b0] sm:$0xff]
    %v4777 = vld [vmem:[#allocation10 + $0x8b8] sm:$0xff]
    %v4778 = vld [vmem:[#allocation10 + $0x8c0] sm:$0xff]
    %v4779 = vld [vmem:[#allocation10 + $0x8c8] sm:$0xff]
    %v4780 = vld [vmem:[#allocation10 + $0x8d0] sm:$0xff]
    %v4781 = vld [vmem:[#allocation10 + $0x8d8] sm:$0xff]
    %v4782 = vld [vmem:[#allocation10 + $0x8e0] sm:$0xff]
    %v4783 = vld [vmem:[#allocation10 + $0x8e8] sm:$0xff]
    %v4784 = vld [vmem:[#allocation10 + $0x8f0] sm:$0xff]
    %v4785 = vld [vmem:[#allocation10 + $0x8f8] sm:$0xff]
    %v4786 = vld [vmem:[#allocation10 + $0x900] sm:$0xff]
    %v4787 = vld [vmem:[#allocation10 + $0x908] sm:$0xff]
    %v4788 = vld [vmem:[#allocation10 + $0x910] sm:$0xff]
    %v4789 = vld [vmem:[#allocation10 + $0x918] sm:$0xff]
    %v4790 = vld [vmem:[#allocation10 + $0x920] sm:$0xff]
    %v4791 = vld [vmem:[#allocation10 + $0x928] sm:$0xff]
    %v4792 = vld [vmem:[#allocation10 + $0x930] sm:$0xff]
    %v4793 = vld [vmem:[#allocation10 + $0x938] sm:$0xff]
    %v4794 = vld [vmem:[#allocation10 + $0x940] sm:$0xff]
    %v4795 = vld [vmem:[#allocation10 + $0x948] sm:$0xff]
    %v4796 = vld [vmem:[#allocation10 + $0x950] sm:$0xff]
    %v4797 = vld [vmem:[#allocation10 + $0x958] sm:$0xff]
    %v4798 = vld [vmem:[#allocation10 + $0x960] sm:$0xff]
    %v4799 = vld [vmem:[#allocation10 + $0x968] sm:$0xff]
    %v4800 = vld [vmem:[#allocation10 + $0x970] sm:$0xff]
    %v4801 = vld [vmem:[#allocation10 + $0x978] sm:$0xff]
    %v4802 = vld [vmem:[#allocation10 + $0x980] sm:$0xff]
    %v4803 = vld [vmem:[#allocation10 + $0x988] sm:$0xff]
    %v4804 = vld [vmem:[#allocation10 + $0x990] sm:$0xff]
    %v4805 = vld [vmem:[#allocation10 + $0x998] sm:$0xff]
    %v4806 = vld [vmem:[#allocation10 + $0x9a0] sm:$0xff]
    %v4807 = vld [vmem:[#allocation10 + $0x9a8] sm:$0xff]
    %v4808 = vld [vmem:[#allocation10 + $0x9b0] sm:$0xff]
    %v4809 = vld [vmem:[#allocation10 + $0x9b8] sm:$0xff]
    %v4810 = vld [vmem:[#allocation10 + $0x9c0] sm:$0xff]
    %v4811 = vld [vmem:[#allocation10 + $0x9c8] sm:$0xff]
    %v4812 = vld [vmem:[#allocation10 + $0x9d0] sm:$0xff]
    %v4813 = vld [vmem:[#allocation10 + $0x9d8] sm:$0xff]
    %v4814 = vld [vmem:[#allocation10 + $0x9e0] sm:$0xff]
    %v4815 = vld [vmem:[#allocation10 + $0x9e8] sm:$0xff]
    %v4816 = vld [vmem:[#allocation10 + $0x9f0] sm:$0xff]
    %v4817 = vld [vmem:[#allocation10 + $0x9f8] sm:$0xff]
    %v4818 = vld [vmem:[#allocation10 + $0xa00] sm:$0xff]
    %v4819 = vld [vmem:[#allocation10 + $0xa08] sm:$0xff]
    %v4820 = vld [vmem:[#allocation10 + $0xa10] sm:$0xff]
    %v4821 = vld [vmem:[#allocation10 + $0xa18] sm:$0xff]
    %v4822 = vld [vmem:[#allocation10 + $0xa20] sm:$0xff]
    %v4823 = vld [vmem:[#allocation10 + $0xa28] sm:$0xff]
    %v4824 = vld [vmem:[#allocation10 + $0xa30] sm:$0xff]
    %v4825 = vld [vmem:[#allocation10 + $0xa38] sm:$0xff]
    %v4826 = vld [vmem:[#allocation10 + $0xa40] sm:$0xff]
    %v4827 = vld [vmem:[#allocation10 + $0xa48] sm:$0xff]
    %v4828 = vld [vmem:[#allocation10 + $0xa50] sm:$0xff]
    %v4829 = vld [vmem:[#allocation10 + $0xa58] sm:$0xff]
    %v4830 = vld [vmem:[#allocation10 + $0xa60] sm:$0xff]
    %v4831 = vld [vmem:[#allocation10 + $0xa68] sm:$0xff]
    %v4832 = vld [vmem:[#allocation10 + $0xa70] sm:$0xff]
    %v4833 = vld [vmem:[#allocation10 + $0xa78] sm:$0xff]
    %v4834 = vld [vmem:[#allocation10 + $0xa80] sm:$0xff]
    %v4835 = vld [vmem:[#allocation10 + $0xa88] sm:$0xff]
    %v4836 = vld [vmem:[#allocation10 + $0xa90] sm:$0xff]
    %v4837 = vld [vmem:[#allocation10 + $0xa98] sm:$0xff]
    %v4838 = vld [vmem:[#allocation10 + $0xaa0] sm:$0xff]
    %v4839 = vld [vmem:[#allocation10 + $0xaa8] sm:$0xff]
    %v4840 = vld [vmem:[#allocation10 + $0xab0] sm:$0xff]
    %v4841 = vld [vmem:[#allocation10 + $0xab8] sm:$0xff]
    %v4842 = vld [vmem:[#allocation10 + $0xac0] sm:$0xff]
    %v4843 = vld [vmem:[#allocation10 + $0xac8] sm:$0xff]
    %v4844 = vld [vmem:[#allocation10 + $0xad0] sm:$0xff]
    %v4845 = vld [vmem:[#allocation10 + $0xad8] sm:$0xff]
    %v4846 = vld [vmem:[#allocation10 + $0xae0] sm:$0xff]
    %v4847 = vld [vmem:[#allocation10 + $0xae8] sm:$0xff]
    %v4848 = vld [vmem:[#allocation10 + $0xaf0] sm:$0xff]
    %v4849 = vld [vmem:[#allocation10 + $0xaf8] sm:$0xff]
    %v4850 = vld [vmem:[#allocation10 + $0xb00] sm:$0xff]
    %v4851 = vld [vmem:[#allocation10 + $0xb08] sm:$0xff]
    %v4852 = vld [vmem:[#allocation10 + $0xb10] sm:$0xff]
    %v4853 = vld [vmem:[#allocation10 + $0xb18] sm:$0xff]
    %v4854 = vld [vmem:[#allocation10 + $0xb20] sm:$0xff]
    %v4855 = vld [vmem:[#allocation10 + $0xb28] sm:$0xff]
    %v4856 = vld [vmem:[#allocation10 + $0xb30] sm:$0xff]
    %v4857 = vld [vmem:[#allocation10 + $0xb38] sm:$0xff]
    %v4858 = vld [vmem:[#allocation10 + $0xb40] sm:$0xff]
    %v4859 = vld [vmem:[#allocation10 + $0xb48] sm:$0xff]
    %v4860 = vld [vmem:[#allocation10 + $0xb50] sm:$0xff]
    %v4861 = vld [vmem:[#allocation10 + $0xb58] sm:$0xff]
    %v4862 = vld [vmem:[#allocation10 + $0xb60] sm:$0xff]
    %v4863 = vld [vmem:[#allocation10 + $0xb68] sm:$0xff]
    %v4864 = vld [vmem:[#allocation10 + $0xb70] sm:$0xff]
    %v4865 = vld [vmem:[#allocation10 + $0xb78] sm:$0xff]
    %v4866 = vld [vmem:[#allocation10 + $0xb80] sm:$0xff]
    %v4867 = vld [vmem:[#allocation10 + $0xb88] sm:$0xff]
    %v4868 = vld [vmem:[#allocation10 + $0xb90] sm:$0xff]
    %v4869 = vld [vmem:[#allocation10 + $0xb98] sm:$0xff]
    %v4870 = vld [vmem:[#allocation10 + $0xba0] sm:$0xff]
    %v4871 = vld [vmem:[#allocation10 + $0xba8] sm:$0xff]
    %v4872 = vld [vmem:[#allocation10 + $0xbb0] sm:$0xff]
    %v4873 = vld [vmem:[#allocation10 + $0xbb8] sm:$0xff]
    %v4874 = vld [vmem:[#allocation10 + $0xbc0] sm:$0xff]
    %v4875 = vld [vmem:[#allocation10 + $0xbc8] sm:$0xff]
    %v4876 = vld [vmem:[#allocation10 + $0xbd0] sm:$0xff]
    %v4877 = vld [vmem:[#allocation10 + $0xbd8] sm:$0xff]
    %v4878 = vld [vmem:[#allocation10 + $0xbe0] sm:$0xff]
    %v4879 = vld [vmem:[#allocation10 + $0xbe8] sm:$0xff]
    %v4880 = vld [vmem:[#allocation10 + $0xbf0] sm:$0xff]
    %v4881 = vld [vmem:[#allocation10 + $0xbf8] sm:$0xff]
    %v4882 = vld [vmem:[#allocation10 + $0xc00] sm:$0xff]
    %v4883 = vld [vmem:[#allocation10 + $0xc08] sm:$0xff]
    %v4884 = vld [vmem:[#allocation10 + $0xc10] sm:$0xff]
    %v4885 = vld [vmem:[#allocation10 + $0xc18] sm:$0xff]
    %v4886 = vld [vmem:[#allocation10 + $0xc20] sm:$0xff]
    %v4887 = vld [vmem:[#allocation10 + $0xc28] sm:$0xff]
    %v4888 = vld [vmem:[#allocation10 + $0xc30] sm:$0xff]
    %v4889 = vld [vmem:[#allocation10 + $0xc38] sm:$0xff]
    %v4890 = vld [vmem:[#allocation10 + $0xc40] sm:$0xff]
    %v4891 = vld [vmem:[#allocation10 + $0xc48] sm:$0xff]
    %v4892 = vld [vmem:[#allocation10 + $0xc50] sm:$0xff]
    %v4893 = vld [vmem:[#allocation10 + $0xc58] sm:$0xff]
    %v4894 = vld [vmem:[#allocation10 + $0xc60] sm:$0xff]
    %v4895 = vld [vmem:[#allocation10 + $0xc68] sm:$0xff]
    %v4896 = vld [vmem:[#allocation10 + $0xc70] sm:$0xff]
    %v4897 = vld [vmem:[#allocation10 + $0xc78] sm:$0xff]
    %v4898 = vld [vmem:[#allocation10 + $0xc80] sm:$0xff]
    %v4899 = vld [vmem:[#allocation10 + $0xc88] sm:$0xff]
    %v4900 = vld [vmem:[#allocation10 + $0xc90] sm:$0xff]
    %v4901 = vld [vmem:[#allocation10 + $0xc98] sm:$0xff]
    %v4902 = vld [vmem:[#allocation10 + $0xca0] sm:$0xff]
    %v4903 = vld [vmem:[#allocation10 + $0xca8] sm:$0xff]
    %v4904 = vld [vmem:[#allocation10 + $0xcb0] sm:$0xff]
    %v4905 = vld [vmem:[#allocation10 + $0xcb8] sm:$0xff]
    %v4906 = vld [vmem:[#allocation10 + $0xcc0] sm:$0xff]
    %v4907 = vld [vmem:[#allocation10 + $0xcc8] sm:$0xff]
    %v4908 = vld [vmem:[#allocation10 + $0xcd0] sm:$0xff]
    %v4909 = vld [vmem:[#allocation10 + $0xcd8] sm:$0xff]
    %v4910 = vld [vmem:[#allocation10 + $0xce0] sm:$0xff]
    %v4911 = vld [vmem:[#allocation10 + $0xce8] sm:$0xff]
    %v4912 = vld [vmem:[#allocation10 + $0xcf0] sm:$0xff]
    %v4913 = vld [vmem:[#allocation10 + $0xcf8] sm:$0xff]
    %v4914 = vld [vmem:[#allocation10 + $0xd00] sm:$0xff]
    %v4915 = vld [vmem:[#allocation10 + $0xd08] sm:$0xff]
    %v4916 = vld [vmem:[#allocation10 + $0xd10] sm:$0xff]
    %v4917 = vld [vmem:[#allocation10 + $0xd18] sm:$0xff]
    %v4918 = vld [vmem:[#allocation10 + $0xd20] sm:$0xff]
    %v4919 = vld [vmem:[#allocation10 + $0xd28] sm:$0xff]
    %v4920 = vld [vmem:[#allocation10 + $0xd30] sm:$0xff]
    %v4921 = vld [vmem:[#allocation10 + $0xd38] sm:$0xff]
    %v4922 = vld [vmem:[#allocation10 + $0xd40] sm:$0xff]
    %v4923 = vld [vmem:[#allocation10 + $0xd48] sm:$0xff]
    %v4924 = vld [vmem:[#allocation10 + $0xd50] sm:$0xff]
    %v4925 = vld [vmem:[#allocation10 + $0xd58] sm:$0xff]
    %v4926 = vld [vmem:[#allocation10 + $0xd60] sm:$0xff]
    %v4927 = vld [vmem:[#allocation10 + $0xd68] sm:$0xff]
    %v4928 = vld [vmem:[#allocation10 + $0xd70] sm:$0xff]
    %v4929 = vld [vmem:[#allocation10 + $0xd78] sm:$0xff]
    %v4930 = vld [vmem:[#allocation10 + $0xd80] sm:$0xff]
    %v4931 = vld [vmem:[#allocation10 + $0xd88] sm:$0xff]
    %v4932 = vld [vmem:[#allocation10 + $0xd90] sm:$0xff]
    %v4933 = vld [vmem:[#allocation10 + $0xd98] sm:$0xff]
    %v4934 = vld [vmem:[#allocation10 + $0xda0] sm:$0xff]
    %v4935 = vld [vmem:[#allocation10 + $0xda8] sm:$0xff]
    %v4936 = vld [vmem:[#allocation10 + $0xdb0] sm:$0xff]
    %v4937 = vld [vmem:[#allocation10 + $0xdb8] sm:$0xff]
    %v4938 = vld [vmem:[#allocation10 + $0xdc0] sm:$0xff]
    %v4939 = vld [vmem:[#allocation10 + $0xdc8] sm:$0xff]
    %v4940 = vld [vmem:[#allocation10 + $0xdd0] sm:$0xff]
    %v4941 = vld [vmem:[#allocation10 + $0xdd8] sm:$0xff]
    %v4942 = vld [vmem:[#allocation10 + $0xde0] sm:$0xff]
    %v4943 = vld [vmem:[#allocation10 + $0xde8] sm:$0xff]
    %v4944 = vld [vmem:[#allocation10 + $0xdf0] sm:$0xff]
    %v4945 = vld [vmem:[#allocation10 + $0xdf8] sm:$0xff]
    %v4946 = vld [vmem:[#allocation10 + $0xe00] sm:$0xff]
    %v4947 = vld [vmem:[#allocation10 + $0xe08] sm:$0xff]
    %v4948 = vld [vmem:[#allocation10 + $0xe10] sm:$0xff]
    %v4949 = vld [vmem:[#allocation10 + $0xe18] sm:$0xff]
    %v4950 = vld [vmem:[#allocation10 + $0xe20] sm:$0xff]
    %v4951 = vld [vmem:[#allocation10 + $0xe28] sm:$0xff]
    %v4952 = vld [vmem:[#allocation10 + $0xe30] sm:$0xff]
    %v4953 = vld [vmem:[#allocation10 + $0xe38] sm:$0xff]
    %v4954 = vld [vmem:[#allocation10 + $0xe40] sm:$0xff]
    %v4955 = vld [vmem:[#allocation10 + $0xe48] sm:$0xff]
    %v4956 = vld [vmem:[#allocation10 + $0xe50] sm:$0xff]
    %v4957 = vld [vmem:[#allocation10 + $0xe58] sm:$0xff]
    %v4958 = vld [vmem:[#allocation10 + $0xe60] sm:$0xff]
    %v4959 = vld [vmem:[#allocation10 + $0xe68] sm:$0xff]
    %v4960 = vld [vmem:[#allocation10 + $0xe70] sm:$0xff]
    %v4961 = vld [vmem:[#allocation10 + $0xe78] sm:$0xff]
    %v4962 = vld [vmem:[#allocation10 + $0xe80] sm:$0xff]
    %v4963 = vld [vmem:[#allocation10 + $0xe88] sm:$0xff]
    %v4964 = vld [vmem:[#allocation10 + $0xe90] sm:$0xff]
    %v4965 = vld [vmem:[#allocation10 + $0xe98] sm:$0xff]
    %v4966 = vld [vmem:[#allocation10 + $0xea0] sm:$0xff]
    %v4967 = vld [vmem:[#allocation10 + $0xea8] sm:$0xff]
    %v4968 = vld [vmem:[#allocation10 + $0xeb0] sm:$0xff]
    %v4969 = vld [vmem:[#allocation10 + $0xeb8] sm:$0xff]
    %v4970 = vld [vmem:[#allocation10 + $0xec0] sm:$0xff]
    %v4971 = vld [vmem:[#allocation10 + $0xec8] sm:$0xff]
    %v4972 = vld [vmem:[#allocation10 + $0xed0] sm:$0xff]
    %v4973 = vld [vmem:[#allocation10 + $0xed8] sm:$0xff]
    %v4974 = vld [vmem:[#allocation10 + $0xee0] sm:$0xff]
    %v4975 = vld [vmem:[#allocation10 + $0xee8] sm:$0xff]
    %v4976 = vld [vmem:[#allocation10 + $0xef0] sm:$0xff]
    %v4977 = vld [vmem:[#allocation10 + $0xef8] sm:$0xff]
    %v4978 = vld [vmem:[#allocation10 + $0xf00] sm:$0xff]
    %v4979 = vld [vmem:[#allocation10 + $0xf08] sm:$0xff]
    %v4980 = vld [vmem:[#allocation10 + $0xf10] sm:$0xff]
    %v4981 = vld [vmem:[#allocation10 + $0xf18] sm:$0xff]
    %v4982 = vld [vmem:[#allocation10 + $0xf20] sm:$0xff]
    %v4983 = vld [vmem:[#allocation10 + $0xf28] sm:$0xff]
    %v4984 = vld [vmem:[#allocation10 + $0xf30] sm:$0xff]
    %v4985 = vld [vmem:[#allocation10 + $0xf38] sm:$0xff]
    %v4986 = vld [vmem:[#allocation10 + $0xf40] sm:$0xff]
    %v4987 = vld [vmem:[#allocation10 + $0xf48] sm:$0xff]
    %v4988 = vld [vmem:[#allocation10 + $0xf50] sm:$0xff]
    %v4989 = vld [vmem:[#allocation10 + $0xf58] sm:$0xff]
    %v4990 = vld [vmem:[#allocation10 + $0xf60] sm:$0xff]
    %v4991 = vld [vmem:[#allocation10 + $0xf68] sm:$0xff]
    %v4992 = vld [vmem:[#allocation10 + $0xf70] sm:$0xff]
    %v4993 = vld [vmem:[#allocation10 + $0xf78] sm:$0xff]
    %v4994 = vld [vmem:[#allocation10 + $0xf80] sm:$0xff]
    %v4995 = vld [vmem:[#allocation10 + $0xf88] sm:$0xff]
    %v4996 = vld [vmem:[#allocation10 + $0xf90] sm:$0xff]
    %v4997 = vld [vmem:[#allocation10 + $0xf98] sm:$0xff]
    %v4998 = vld [vmem:[#allocation10 + $0xfa0] sm:$0xff]
    %v4999 = vld [vmem:[#allocation10 + $0xfa8] sm:$0xff]
    %v5000 = vld [vmem:[#allocation10 + $0xfb0] sm:$0xff]
    %v5001 = vld [vmem:[#allocation10 + $0xfb8] sm:$0xff]
    %v5002 = vld [vmem:[#allocation10 + $0xfc0] sm:$0xff]
    %v5003 = vld [vmem:[#allocation10 + $0xfc8] sm:$0xff]
    %v5004 = vld [vmem:[#allocation10 + $0xfd0] sm:$0xff]
    %v5005 = vld [vmem:[#allocation10 + $0xfd8] sm:$0xff]
    %v5006 = vld [vmem:[#allocation10 + $0xfe0] sm:$0xff]
    %v5007 = vld [vmem:[#allocation10 + $0xfe8] sm:$0xff]
    %v5008 = vld [vmem:[#allocation10 + $0xff0] sm:$0xff]
    %v5009 = vld [vmem:[#allocation10 + $0xff8] sm:$0xff]
    %v5010 = vld [vmem:[#allocation11] sm:$0xff]
    %v5012 = vlaneseq
    %v5013 = vshrl.u32 %v5012, 7
    %v5014 = vsub.s32 0, %v5013
    %v5015 = vrot.slane %v5010, %v5014
    %v5016 = vlaneseq
    %v5017 = vshrl.u32 %v5016, 7
    %v5018 = vsub.s32 1, %v5017
    %v5019 = vrot.slane %v5010, %v5018
    %v5020 = vlaneseq
    %v5021 = vshrl.u32 %v5020, 7
    %v5022 = vsub.s32 2, %v5021
    %v5023 = vrot.slane %v5010, %v5022
    %v5024 = vlaneseq
    %v5025 = vshrl.u32 %v5024, 7
    %v5026 = vsub.s32 3, %v5025
    %v5027 = vrot.slane %v5010, %v5026
    %v5028 = vlaneseq
    %v5029 = vshrl.u32 %v5028, 7
    %v5030 = vsub.s32 4, %v5029
    %v5031 = vrot.slane %v5010, %v5030
    %v5032 = vlaneseq
    %v5033 = vshrl.u32 %v5032, 7
    %v5034 = vsub.s32 5, %v5033
    %v5035 = vrot.slane %v5010, %v5034
    %v5036 = vlaneseq
    %v5037 = vshrl.u32 %v5036, 7
    %v5038 = vsub.s32 6, %v5037
    %v5039 = vrot.slane %v5010, %v5038
    %v5040 = vlaneseq
    %v5041 = vshrl.u32 %v5040, 7
    %v5042 = vsub.s32 7, %v5041
    %v5043 = vrot.slane %v5010, %v5042
    %v5564 = vunpack.c.l.b16 %v4498
    %v5565 = vunpack.c.h.b16 %v4498
    %v5566 = vunpack.c.l.b16 %v4499
    %v5567 = vunpack.c.h.b16 %v4499
    %v5568 = vunpack.c.l.b16 %v4500
    %v5569 = vunpack.c.h.b16 %v4500
    %v5570 = vunpack.c.l.b16 %v4501
    %v5571 = vunpack.c.h.b16 %v4501
    %v5572 = vunpack.c.l.b16 %v4502
    %v5573 = vunpack.c.h.b16 %v4502
    %v5574 = vunpack.c.l.b16 %v4503
    %v5575 = vunpack.c.h.b16 %v4503
    %v5576 = vunpack.c.l.b16 %v4504
    %v5577 = vunpack.c.h.b16 %v4504
    %v5578 = vunpack.c.l.b16 %v4505
    %v5579 = vunpack.c.h.b16 %v4505
    %v5580 = vunpack.c.l.b16 %v4506
    %v5581 = vunpack.c.h.b16 %v4506
    %v5582 = vunpack.c.l.b16 %v4507
    %v5583 = vunpack.c.h.b16 %v4507
    %v5584 = vunpack.c.l.b16 %v4508
    %v5585 = vunpack.c.h.b16 %v4508
    %v5586 = vunpack.c.l.b16 %v4509
    %v5587 = vunpack.c.h.b16 %v4509
    %v5588 = vunpack.c.l.b16 %v4510
    %v5589 = vunpack.c.h.b16 %v4510
    %v5590 = vunpack.c.l.b16 %v4511
    %v5591 = vunpack.c.h.b16 %v4511
    %v5592 = vunpack.c.l.b16 %v4512
    %v5593 = vunpack.c.h.b16 %v4512
    %v5594 = vunpack.c.l.b16 %v4513
    %v5595 = vunpack.c.h.b16 %v4513
    %v5596 = vunpack.c.l.b16 %v4514
    %v5597 = vunpack.c.h.b16 %v4514
    %v5598 = vunpack.c.l.b16 %v4515
    %v5599 = vunpack.c.h.b16 %v4515
    %v5600 = vunpack.c.l.b16 %v4516
    %v5601 = vunpack.c.h.b16 %v4516
    %v5602 = vunpack.c.l.b16 %v4517
    %v5603 = vunpack.c.h.b16 %v4517
    %v5604 = vunpack.c.l.b16 %v4518
    %v5605 = vunpack.c.h.b16 %v4518
    %v5606 = vunpack.c.l.b16 %v4519
    %v5607 = vunpack.c.h.b16 %v4519
    %v5608 = vunpack.c.l.b16 %v4520
    %v5609 = vunpack.c.h.b16 %v4520
    %v5610 = vunpack.c.l.b16 %v4521
    %v5611 = vunpack.c.h.b16 %v4521
    %v5612 = vunpack.c.l.b16 %v4522
    %v5613 = vunpack.c.h.b16 %v4522
    %v5614 = vunpack.c.l.b16 %v4523
    %v5615 = vunpack.c.h.b16 %v4523
    %v5616 = vunpack.c.l.b16 %v4524
    %v5617 = vunpack.c.h.b16 %v4524
    %v5618 = vunpack.c.l.b16 %v4525
    %v5619 = vunpack.c.h.b16 %v4525
    %v5620 = vunpack.c.l.b16 %v4526
    %v5621 = vunpack.c.h.b16 %v4526
    %v5622 = vunpack.c.l.b16 %v4527
    %v5623 = vunpack.c.h.b16 %v4527
    %v5624 = vunpack.c.l.b16 %v4528
    %v5625 = vunpack.c.h.b16 %v4528
    %v5626 = vunpack.c.l.b16 %v4529
    %v5627 = vunpack.c.h.b16 %v4529
    %v5628 = vunpack.c.l.b16 %v4530
    %v5629 = vunpack.c.h.b16 %v4530
    %v5630 = vunpack.c.l.b16 %v4531
    %v5631 = vunpack.c.h.b16 %v4531
    %v5632 = vunpack.c.l.b16 %v4532
    %v5633 = vunpack.c.h.b16 %v4532
    %v5634 = vunpack.c.l.b16 %v4533
    %v5635 = vunpack.c.h.b16 %v4533
    %v5636 = vunpack.c.l.b16 %v4534
    %v5637 = vunpack.c.h.b16 %v4534
    %v5638 = vunpack.c.l.b16 %v4535
    %v5639 = vunpack.c.h.b16 %v4535
    %v5640 = vunpack.c.l.b16 %v4536
    %v5641 = vunpack.c.h.b16 %v4536
    %v5642 = vunpack.c.l.b16 %v4537
    %v5643 = vunpack.c.h.b16 %v4537
    %v5644 = vunpack.c.l.b16 %v4538
    %v5645 = vunpack.c.h.b16 %v4538
    %v5646 = vunpack.c.l.b16 %v4539
    %v5647 = vunpack.c.h.b16 %v4539
    %v5648 = vunpack.c.l.b16 %v4540
    %v5649 = vunpack.c.h.b16 %v4540
    %v5650 = vunpack.c.l.b16 %v4541
    %v5651 = vunpack.c.h.b16 %v4541
    %v5652 = vunpack.c.l.b16 %v4542
    %v5653 = vunpack.c.h.b16 %v4542
    %v5654 = vunpack.c.l.b16 %v4543
    %v5655 = vunpack.c.h.b16 %v4543
    %v5656 = vunpack.c.l.b16 %v4544
    %v5657 = vunpack.c.h.b16 %v4544
    %v5658 = vunpack.c.l.b16 %v4545
    %v5659 = vunpack.c.h.b16 %v4545
    %v5660 = vunpack.c.l.b16 %v4546
    %v5661 = vunpack.c.h.b16 %v4546
    %v5662 = vunpack.c.l.b16 %v4547
    %v5663 = vunpack.c.h.b16 %v4547
    %v5664 = vunpack.c.l.b16 %v4548
    %v5665 = vunpack.c.h.b16 %v4548
    %v5666 = vunpack.c.l.b16 %v4549
    %v5667 = vunpack.c.h.b16 %v4549
    %v5668 = vunpack.c.l.b16 %v4550
    %v5669 = vunpack.c.h.b16 %v4550
    %v5670 = vunpack.c.l.b16 %v4551
    %v5671 = vunpack.c.h.b16 %v4551
    %v5672 = vunpack.c.l.b16 %v4552
    %v5673 = vunpack.c.h.b16 %v4552
    %v5674 = vunpack.c.l.b16 %v4553
    %v5675 = vunpack.c.h.b16 %v4553
    %v5676 = vunpack.c.l.b16 %v4554
    %v5677 = vunpack.c.h.b16 %v4554
    %v5678 = vunpack.c.l.b16 %v4555
    %v5679 = vunpack.c.h.b16 %v4555
    %v5680 = vunpack.c.l.b16 %v4556
    %v5681 = vunpack.c.h.b16 %v4556
    %v5682 = vunpack.c.l.b16 %v4557
    %v5683 = vunpack.c.h.b16 %v4557
    %v5684 = vunpack.c.l.b16 %v4558
    %v5685 = vunpack.c.h.b16 %v4558
    %v5686 = vunpack.c.l.b16 %v4559
    %v5687 = vunpack.c.h.b16 %v4559
    %v5688 = vunpack.c.l.b16 %v4560
    %v5689 = vunpack.c.h.b16 %v4560
    %v5690 = vunpack.c.l.b16 %v4561
    %v5691 = vunpack.c.h.b16 %v4561
    %v5692 = vunpack.c.l.b16 %v4562
    %v5693 = vunpack.c.h.b16 %v4562
    %v5694 = vunpack.c.l.b16 %v4563
    %v5695 = vunpack.c.h.b16 %v4563
    %v5696 = vunpack.c.l.b16 %v4564
    %v5697 = vunpack.c.h.b16 %v4564
    %v5698 = vunpack.c.l.b16 %v4565
    %v5699 = vunpack.c.h.b16 %v4565
    %v5700 = vunpack.c.l.b16 %v4566
    %v5701 = vunpack.c.h.b16 %v4566
    %v5702 = vunpack.c.l.b16 %v4567
    %v5703 = vunpack.c.h.b16 %v4567
    %v5704 = vunpack.c.l.b16 %v4568
    %v5705 = vunpack.c.h.b16 %v4568
    %v5706 = vunpack.c.l.b16 %v4569
    %v5707 = vunpack.c.h.b16 %v4569
    %v5708 = vunpack.c.l.b16 %v4570
    %v5709 = vunpack.c.h.b16 %v4570
    %v5710 = vunpack.c.l.b16 %v4571
    %v5711 = vunpack.c.h.b16 %v4571
    %v5712 = vunpack.c.l.b16 %v4572
    %v5713 = vunpack.c.h.b16 %v4572
    %v5714 = vunpack.c.l.b16 %v4573
    %v5715 = vunpack.c.h.b16 %v4573
    %v5716 = vunpack.c.l.b16 %v4574
    %v5717 = vunpack.c.h.b16 %v4574
    %v5718 = vunpack.c.l.b16 %v4575
    %v5719 = vunpack.c.h.b16 %v4575
    %v5720 = vunpack.c.l.b16 %v4576
    %v5721 = vunpack.c.h.b16 %v4576
    %v5722 = vunpack.c.l.b16 %v4577
    %v5723 = vunpack.c.h.b16 %v4577
    %v5724 = vunpack.c.l.b16 %v4578
    %v5725 = vunpack.c.h.b16 %v4578
    %v5726 = vunpack.c.l.b16 %v4579
    %v5727 = vunpack.c.h.b16 %v4579
    %v5728 = vunpack.c.l.b16 %v4580
    %v5729 = vunpack.c.h.b16 %v4580
    %v5730 = vunpack.c.l.b16 %v4581
    %v5731 = vunpack.c.h.b16 %v4581
    %v5732 = vunpack.c.l.b16 %v4582
    %v5733 = vunpack.c.h.b16 %v4582
    %v5734 = vunpack.c.l.b16 %v4583
    %v5735 = vunpack.c.h.b16 %v4583
    %v5736 = vunpack.c.l.b16 %v4584
    %v5737 = vunpack.c.h.b16 %v4584
    %v5738 = vunpack.c.l.b16 %v4585
    %v5739 = vunpack.c.h.b16 %v4585
    %v5740 = vunpack.c.l.b16 %v4586
    %v5741 = vunpack.c.h.b16 %v4586
    %v5742 = vunpack.c.l.b16 %v4587
    %v5743 = vunpack.c.h.b16 %v4587
    %v5744 = vunpack.c.l.b16 %v4588
    %v5745 = vunpack.c.h.b16 %v4588
    %v5746 = vunpack.c.l.b16 %v4589
    %v5747 = vunpack.c.h.b16 %v4589
    %v5748 = vunpack.c.l.b16 %v4590
    %v5749 = vunpack.c.h.b16 %v4590
    %v5750 = vunpack.c.l.b16 %v4591
    %v5751 = vunpack.c.h.b16 %v4591
    %v5752 = vunpack.c.l.b16 %v4592
    %v5753 = vunpack.c.h.b16 %v4592
    %v5754 = vunpack.c.l.b16 %v4593
    %v5755 = vunpack.c.h.b16 %v4593
    %v5756 = vunpack.c.l.b16 %v4594
    %v5757 = vunpack.c.h.b16 %v4594
    %v5758 = vunpack.c.l.b16 %v4595
    %v5759 = vunpack.c.h.b16 %v4595
    %v5760 = vunpack.c.l.b16 %v4596
    %v5761 = vunpack.c.h.b16 %v4596
    %v5762 = vunpack.c.l.b16 %v4597
    %v5763 = vunpack.c.h.b16 %v4597
    %v5764 = vunpack.c.l.b16 %v4598
    %v5765 = vunpack.c.h.b16 %v4598
    %v5766 = vunpack.c.l.b16 %v4599
    %v5767 = vunpack.c.h.b16 %v4599
    %v5768 = vunpack.c.l.b16 %v4600
    %v5769 = vunpack.c.h.b16 %v4600
    %v5770 = vunpack.c.l.b16 %v4601
    %v5771 = vunpack.c.h.b16 %v4601
    %v5772 = vunpack.c.l.b16 %v4602
    %v5773 = vunpack.c.h.b16 %v4602
    %v5774 = vunpack.c.l.b16 %v4603
    %v5775 = vunpack.c.h.b16 %v4603
    %v5776 = vunpack.c.l.b16 %v4604
    %v5777 = vunpack.c.h.b16 %v4604
    %v5778 = vunpack.c.l.b16 %v4605
    %v5779 = vunpack.c.h.b16 %v4605
    %v5780 = vunpack.c.l.b16 %v4606
    %v5781 = vunpack.c.h.b16 %v4606
    %v5782 = vunpack.c.l.b16 %v4607
    %v5783 = vunpack.c.h.b16 %v4607
    %v5784 = vunpack.c.l.b16 %v4608
    %v5785 = vunpack.c.h.b16 %v4608
    %v5786 = vunpack.c.l.b16 %v4609
    %v5787 = vunpack.c.h.b16 %v4609
    %v5788 = vunpack.c.l.b16 %v4610
    %v5789 = vunpack.c.h.b16 %v4610
    %v5790 = vunpack.c.l.b16 %v4611
    %v5791 = vunpack.c.h.b16 %v4611
    %v5792 = vunpack.c.l.b16 %v4612
    %v5793 = vunpack.c.h.b16 %v4612
    %v5794 = vunpack.c.l.b16 %v4613
    %v5795 = vunpack.c.h.b16 %v4613
    %v5796 = vunpack.c.l.b16 %v4614
    %v5797 = vunpack.c.h.b16 %v4614
    %v5798 = vunpack.c.l.b16 %v4615
    %v5799 = vunpack.c.h.b16 %v4615
    %v5800 = vunpack.c.l.b16 %v4616
    %v5801 = vunpack.c.h.b16 %v4616
    %v5802 = vunpack.c.l.b16 %v4617
    %v5803 = vunpack.c.h.b16 %v4617
    %v5804 = vunpack.c.l.b16 %v4618
    %v5805 = vunpack.c.h.b16 %v4618
    %v5806 = vunpack.c.l.b16 %v4619
    %v5807 = vunpack.c.h.b16 %v4619
    %v5808 = vunpack.c.l.b16 %v4620
    %v5809 = vunpack.c.h.b16 %v4620
    %v5810 = vunpack.c.l.b16 %v4621
    %v5811 = vunpack.c.h.b16 %v4621
    %v5812 = vunpack.c.l.b16 %v4622
    %v5813 = vunpack.c.h.b16 %v4622
    %v5814 = vunpack.c.l.b16 %v4623
    %v5815 = vunpack.c.h.b16 %v4623
    %v5816 = vunpack.c.l.b16 %v4624
    %v5817 = vunpack.c.h.b16 %v4624
    %v5818 = vunpack.c.l.b16 %v4625
    %v5819 = vunpack.c.h.b16 %v4625
    %v5820 = vunpack.c.l.b16 %v4626
    %v5821 = vunpack.c.h.b16 %v4626
    %v5822 = vunpack.c.l.b16 %v4627
    %v5823 = vunpack.c.h.b16 %v4627
    %v5824 = vunpack.c.l.b16 %v4628
    %v5825 = vunpack.c.h.b16 %v4628
    %v5826 = vunpack.c.l.b16 %v4629
    %v5827 = vunpack.c.h.b16 %v4629
    %v5828 = vunpack.c.l.b16 %v4630
    %v5829 = vunpack.c.h.b16 %v4630
    %v5830 = vunpack.c.l.b16 %v4631
    %v5831 = vunpack.c.h.b16 %v4631
    %v5832 = vunpack.c.l.b16 %v4632
    %v5833 = vunpack.c.h.b16 %v4632
    %v5834 = vunpack.c.l.b16 %v4633
    %v5835 = vunpack.c.h.b16 %v4633
    %v5836 = vunpack.c.l.b16 %v4634
    %v5837 = vunpack.c.h.b16 %v4634
    %v5838 = vunpack.c.l.b16 %v4635
    %v5839 = vunpack.c.h.b16 %v4635
    %v5840 = vunpack.c.l.b16 %v4636
    %v5841 = vunpack.c.h.b16 %v4636
    %v5842 = vunpack.c.l.b16 %v4637
    %v5843 = vunpack.c.h.b16 %v4637
    %v5844 = vunpack.c.l.b16 %v4638
    %v5845 = vunpack.c.h.b16 %v4638
    %v5846 = vunpack.c.l.b16 %v4639
    %v5847 = vunpack.c.h.b16 %v4639
    %v5848 = vunpack.c.l.b16 %v4640
    %v5849 = vunpack.c.h.b16 %v4640
    %v5850 = vunpack.c.l.b16 %v4641
    %v5851 = vunpack.c.h.b16 %v4641
    %v5852 = vunpack.c.l.b16 %v4642
    %v5853 = vunpack.c.h.b16 %v4642
    %v5854 = vunpack.c.l.b16 %v4643
    %v5855 = vunpack.c.h.b16 %v4643
    %v5856 = vunpack.c.l.b16 %v4644
    %v5857 = vunpack.c.h.b16 %v4644
    %v5858 = vunpack.c.l.b16 %v4645
    %v5859 = vunpack.c.h.b16 %v4645
    %v5860 = vunpack.c.l.b16 %v4646
    %v5861 = vunpack.c.h.b16 %v4646
    %v5862 = vunpack.c.l.b16 %v4647
    %v5863 = vunpack.c.h.b16 %v4647
    %v5864 = vunpack.c.l.b16 %v4648
    %v5865 = vunpack.c.h.b16 %v4648
    %v5866 = vunpack.c.l.b16 %v4649
    %v5867 = vunpack.c.h.b16 %v4649
    %v5868 = vunpack.c.l.b16 %v4650
    %v5869 = vunpack.c.h.b16 %v4650
    %v5870 = vunpack.c.l.b16 %v4651
    %v5871 = vunpack.c.h.b16 %v4651
    %v5872 = vunpack.c.l.b16 %v4652
    %v5873 = vunpack.c.h.b16 %v4652
    %v5874 = vunpack.c.l.b16 %v4653
    %v5875 = vunpack.c.h.b16 %v4653
    %v5876 = vunpack.c.l.b16 %v4654
    %v5877 = vunpack.c.h.b16 %v4654
    %v5878 = vunpack.c.l.b16 %v4655
    %v5879 = vunpack.c.h.b16 %v4655
    %v5880 = vunpack.c.l.b16 %v4656
    %v5881 = vunpack.c.h.b16 %v4656
    %v5882 = vunpack.c.l.b16 %v4657
    %v5883 = vunpack.c.h.b16 %v4657
    %v5884 = vunpack.c.l.b16 %v4658
    %v5885 = vunpack.c.h.b16 %v4658
    %v5886 = vunpack.c.l.b16 %v4659
    %v5887 = vunpack.c.h.b16 %v4659
    %v5888 = vunpack.c.l.b16 %v4660
    %v5889 = vunpack.c.h.b16 %v4660
    %v5890 = vunpack.c.l.b16 %v4661
    %v5891 = vunpack.c.h.b16 %v4661
    %v5892 = vunpack.c.l.b16 %v4662
    %v5893 = vunpack.c.h.b16 %v4662
    %v5894 = vunpack.c.l.b16 %v4663
    %v5895 = vunpack.c.h.b16 %v4663
    %v5896 = vunpack.c.l.b16 %v4664
    %v5897 = vunpack.c.h.b16 %v4664
    %v5898 = vunpack.c.l.b16 %v4665
    %v5899 = vunpack.c.h.b16 %v4665
    %v5900 = vunpack.c.l.b16 %v4666
    %v5901 = vunpack.c.h.b16 %v4666
    %v5902 = vunpack.c.l.b16 %v4667
    %v5903 = vunpack.c.h.b16 %v4667
    %v5904 = vunpack.c.l.b16 %v4668
    %v5905 = vunpack.c.h.b16 %v4668
    %v5906 = vunpack.c.l.b16 %v4669
    %v5907 = vunpack.c.h.b16 %v4669
    %v5908 = vunpack.c.l.b16 %v4670
    %v5909 = vunpack.c.h.b16 %v4670
    %v5910 = vunpack.c.l.b16 %v4671
    %v5911 = vunpack.c.h.b16 %v4671
    %v5912 = vunpack.c.l.b16 %v4672
    %v5913 = vunpack.c.h.b16 %v4672
    %v5914 = vunpack.c.l.b16 %v4673
    %v5915 = vunpack.c.h.b16 %v4673
    %v5916 = vunpack.c.l.b16 %v4674
    %v5917 = vunpack.c.h.b16 %v4674
    %v5918 = vunpack.c.l.b16 %v4675
    %v5919 = vunpack.c.h.b16 %v4675
    %v5920 = vunpack.c.l.b16 %v4676
    %v5921 = vunpack.c.h.b16 %v4676
    %v5922 = vunpack.c.l.b16 %v4677
    %v5923 = vunpack.c.h.b16 %v4677
    %v5924 = vunpack.c.l.b16 %v4678
    %v5925 = vunpack.c.h.b16 %v4678
    %v5926 = vunpack.c.l.b16 %v4679
    %v5927 = vunpack.c.h.b16 %v4679
    %v5928 = vunpack.c.l.b16 %v4680
    %v5929 = vunpack.c.h.b16 %v4680
    %v5930 = vunpack.c.l.b16 %v4681
    %v5931 = vunpack.c.h.b16 %v4681
    %v5932 = vunpack.c.l.b16 %v4682
    %v5933 = vunpack.c.h.b16 %v4682
    %v5934 = vunpack.c.l.b16 %v4683
    %v5935 = vunpack.c.h.b16 %v4683
    %v5936 = vunpack.c.l.b16 %v4684
    %v5937 = vunpack.c.h.b16 %v4684
    %v5938 = vunpack.c.l.b16 %v4685
    %v5939 = vunpack.c.h.b16 %v4685
    %v5940 = vunpack.c.l.b16 %v4686
    %v5941 = vunpack.c.h.b16 %v4686
    %v5942 = vunpack.c.l.b16 %v4687
    %v5943 = vunpack.c.h.b16 %v4687
    %v5944 = vunpack.c.l.b16 %v4688
    %v5945 = vunpack.c.h.b16 %v4688
    %v5946 = vunpack.c.l.b16 %v4689
    %v5947 = vunpack.c.h.b16 %v4689
    %v5948 = vunpack.c.l.b16 %v4690
    %v5949 = vunpack.c.h.b16 %v4690
    %v5950 = vunpack.c.l.b16 %v4691
    %v5951 = vunpack.c.h.b16 %v4691
    %v5952 = vunpack.c.l.b16 %v4692
    %v5953 = vunpack.c.h.b16 %v4692
    %v5954 = vunpack.c.l.b16 %v4693
    %v5955 = vunpack.c.h.b16 %v4693
    %v5956 = vunpack.c.l.b16 %v4694
    %v5957 = vunpack.c.h.b16 %v4694
    %v5958 = vunpack.c.l.b16 %v4695
    %v5959 = vunpack.c.h.b16 %v4695
    %v5960 = vunpack.c.l.b16 %v4696
    %v5961 = vunpack.c.h.b16 %v4696
    %v5962 = vunpack.c.l.b16 %v4697
    %v5963 = vunpack.c.h.b16 %v4697
    %v5964 = vunpack.c.l.b16 %v4698
    %v5965 = vunpack.c.h.b16 %v4698
    %v5966 = vunpack.c.l.b16 %v4699
    %v5967 = vunpack.c.h.b16 %v4699
    %v5968 = vunpack.c.l.b16 %v4700
    %v5969 = vunpack.c.h.b16 %v4700
    %v5970 = vunpack.c.l.b16 %v4701
    %v5971 = vunpack.c.h.b16 %v4701
    %v5972 = vunpack.c.l.b16 %v4702
    %v5973 = vunpack.c.h.b16 %v4702
    %v5974 = vunpack.c.l.b16 %v4703
    %v5975 = vunpack.c.h.b16 %v4703
    %v5976 = vunpack.c.l.b16 %v4704
    %v5977 = vunpack.c.h.b16 %v4704
    %v5978 = vunpack.c.l.b16 %v4705
    %v5979 = vunpack.c.h.b16 %v4705
    %v5980 = vunpack.c.l.b16 %v4706
    %v5981 = vunpack.c.h.b16 %v4706
    %v5982 = vunpack.c.l.b16 %v4707
    %v5983 = vunpack.c.h.b16 %v4707
    %v5984 = vunpack.c.l.b16 %v4708
    %v5985 = vunpack.c.h.b16 %v4708
    %v5986 = vunpack.c.l.b16 %v4709
    %v5987 = vunpack.c.h.b16 %v4709
    %v5988 = vunpack.c.l.b16 %v4710
    %v5989 = vunpack.c.h.b16 %v4710
    %v5990 = vunpack.c.l.b16 %v4711
    %v5991 = vunpack.c.h.b16 %v4711
    %v5992 = vunpack.c.l.b16 %v4712
    %v5993 = vunpack.c.h.b16 %v4712
    %v5994 = vunpack.c.l.b16 %v4713
    %v5995 = vunpack.c.h.b16 %v4713
    %v5996 = vunpack.c.l.b16 %v4714
    %v5997 = vunpack.c.h.b16 %v4714
    %v5998 = vunpack.c.l.b16 %v4715
    %v5999 = vunpack.c.h.b16 %v4715
    %v6000 = vunpack.c.l.b16 %v4716
    %v6001 = vunpack.c.h.b16 %v4716
    %v6002 = vunpack.c.l.b16 %v4717
    %v6003 = vunpack.c.h.b16 %v4717
    %v6004 = vunpack.c.l.b16 %v4718
    %v6005 = vunpack.c.h.b16 %v4718
    %v6006 = vunpack.c.l.b16 %v4719
    %v6007 = vunpack.c.h.b16 %v4719
    %v6008 = vunpack.c.l.b16 %v4720
    %v6009 = vunpack.c.h.b16 %v4720
    %v6010 = vunpack.c.l.b16 %v4721
    %v6011 = vunpack.c.h.b16 %v4721
    %v6012 = vunpack.c.l.b16 %v4722
    %v6013 = vunpack.c.h.b16 %v4722
    %v6014 = vunpack.c.l.b16 %v4723
    %v6015 = vunpack.c.h.b16 %v4723
    %v6016 = vunpack.c.l.b16 %v4724
    %v6017 = vunpack.c.h.b16 %v4724
    %v6018 = vunpack.c.l.b16 %v4725
    %v6019 = vunpack.c.h.b16 %v4725
    %v6020 = vunpack.c.l.b16 %v4726
    %v6021 = vunpack.c.h.b16 %v4726
    %v6022 = vunpack.c.l.b16 %v4727
    %v6023 = vunpack.c.h.b16 %v4727
    %v6024 = vunpack.c.l.b16 %v4728
    %v6025 = vunpack.c.h.b16 %v4728
    %v6026 = vunpack.c.l.b16 %v4729
    %v6027 = vunpack.c.h.b16 %v4729
    %v6028 = vunpack.c.l.b16 %v4730
    %v6029 = vunpack.c.h.b16 %v4730
    %v6030 = vunpack.c.l.b16 %v4731
    %v6031 = vunpack.c.h.b16 %v4731
    %v6032 = vunpack.c.l.b16 %v4732
    %v6033 = vunpack.c.h.b16 %v4732
    %v6034 = vunpack.c.l.b16 %v4733
    %v6035 = vunpack.c.h.b16 %v4733
    %v6036 = vunpack.c.l.b16 %v4734
    %v6037 = vunpack.c.h.b16 %v4734
    %v6038 = vunpack.c.l.b16 %v4735
    %v6039 = vunpack.c.h.b16 %v4735
    %v6040 = vunpack.c.l.b16 %v4736
    %v6041 = vunpack.c.h.b16 %v4736
    %v6042 = vunpack.c.l.b16 %v4737
    %v6043 = vunpack.c.h.b16 %v4737
    %v6044 = vunpack.c.l.b16 %v4738
    %v6045 = vunpack.c.h.b16 %v4738
    %v6046 = vunpack.c.l.b16 %v4739
    %v6047 = vunpack.c.h.b16 %v4739
    %v6048 = vunpack.c.l.b16 %v4740
    %v6049 = vunpack.c.h.b16 %v4740
    %v6050 = vunpack.c.l.b16 %v4741
    %v6051 = vunpack.c.h.b16 %v4741
    %v6052 = vunpack.c.l.b16 %v4742
    %v6053 = vunpack.c.h.b16 %v4742
    %v6054 = vunpack.c.l.b16 %v4743
    %v6055 = vunpack.c.h.b16 %v4743
    %v6056 = vunpack.c.l.b16 %v4744
    %v6057 = vunpack.c.h.b16 %v4744
    %v6058 = vunpack.c.l.b16 %v4745
    %v6059 = vunpack.c.h.b16 %v4745
    %v6060 = vunpack.c.l.b16 %v4746
    %v6061 = vunpack.c.h.b16 %v4746
    %v6062 = vunpack.c.l.b16 %v4747
    %v6063 = vunpack.c.h.b16 %v4747
    %v6064 = vunpack.c.l.b16 %v4748
    %v6065 = vunpack.c.h.b16 %v4748
    %v6066 = vunpack.c.l.b16 %v4749
    %v6067 = vunpack.c.h.b16 %v4749
    %v6068 = vunpack.c.l.b16 %v4750
    %v6069 = vunpack.c.h.b16 %v4750
    %v6070 = vunpack.c.l.b16 %v4751
    %v6071 = vunpack.c.h.b16 %v4751
    %v6072 = vunpack.c.l.b16 %v4752
    %v6073 = vunpack.c.h.b16 %v4752
    %v6074 = vunpack.c.l.b16 %v4753
    %v6075 = vunpack.c.h.b16 %v4753
    %v6076 = vunpack.c.l.b16 %v4754
    %v6077 = vunpack.c.h.b16 %v4754
    %v6078 = vunpack.c.l.b16 %v4755
    %v6079 = vunpack.c.h.b16 %v4755
    %v6080 = vunpack.c.l.b16 %v4756
    %v6081 = vunpack.c.h.b16 %v4756
    %v6082 = vunpack.c.l.b16 %v4757
    %v6083 = vunpack.c.h.b16 %v4757
    %v6084 = vunpack.c.l.b16 %v4758
    %v6085 = vunpack.c.h.b16 %v4758
    %v6086 = vunpack.c.l.b16 %v4759
    %v6087 = vunpack.c.h.b16 %v4759
    %v6088 = vunpack.c.l.b16 %v4760
    %v6089 = vunpack.c.h.b16 %v4760
    %v6090 = vunpack.c.l.b16 %v4761
    %v6091 = vunpack.c.h.b16 %v4761
    %v6092 = vunpack.c.l.b16 %v4762
    %v6093 = vunpack.c.h.b16 %v4762
    %v6094 = vunpack.c.l.b16 %v4763
    %v6095 = vunpack.c.h.b16 %v4763
    %v6096 = vunpack.c.l.b16 %v4764
    %v6097 = vunpack.c.h.b16 %v4764
    %v6098 = vunpack.c.l.b16 %v4765
    %v6099 = vunpack.c.h.b16 %v4765
    %v6100 = vunpack.c.l.b16 %v4766
    %v6101 = vunpack.c.h.b16 %v4766
    %v6102 = vunpack.c.l.b16 %v4767
    %v6103 = vunpack.c.h.b16 %v4767
    %v6104 = vunpack.c.l.b16 %v4768
    %v6105 = vunpack.c.h.b16 %v4768
    %v6106 = vunpack.c.l.b16 %v4769
    %v6107 = vunpack.c.h.b16 %v4769
    %v6108 = vunpack.c.l.b16 %v4770
    %v6109 = vunpack.c.h.b16 %v4770
    %v6110 = vunpack.c.l.b16 %v4771
    %v6111 = vunpack.c.h.b16 %v4771
    %v6112 = vunpack.c.l.b16 %v4772
    %v6113 = vunpack.c.h.b16 %v4772
    %v6114 = vunpack.c.l.b16 %v4773
    %v6115 = vunpack.c.h.b16 %v4773
    %v6116 = vunpack.c.l.b16 %v4774
    %v6117 = vunpack.c.h.b16 %v4774
    %v6118 = vunpack.c.l.b16 %v4775
    %v6119 = vunpack.c.h.b16 %v4775
    %v6120 = vunpack.c.l.b16 %v4776
    %v6121 = vunpack.c.h.b16 %v4776
    %v6122 = vunpack.c.l.b16 %v4777
    %v6123 = vunpack.c.h.b16 %v4777
    %v6124 = vunpack.c.l.b16 %v4778
    %v6125 = vunpack.c.h.b16 %v4778
    %v6126 = vunpack.c.l.b16 %v4779
    %v6127 = vunpack.c.h.b16 %v4779
    %v6128 = vunpack.c.l.b16 %v4780
    %v6129 = vunpack.c.h.b16 %v4780
    %v6130 = vunpack.c.l.b16 %v4781
    %v6131 = vunpack.c.h.b16 %v4781
    %v6132 = vunpack.c.l.b16 %v4782
    %v6133 = vunpack.c.h.b16 %v4782
    %v6134 = vunpack.c.l.b16 %v4783
    %v6135 = vunpack.c.h.b16 %v4783
    %v6136 = vunpack.c.l.b16 %v4784
    %v6137 = vunpack.c.h.b16 %v4784
    %v6138 = vunpack.c.l.b16 %v4785
    %v6139 = vunpack.c.h.b16 %v4785
    %v6140 = vunpack.c.l.b16 %v4786
    %v6141 = vunpack.c.h.b16 %v4786
    %v6142 = vunpack.c.l.b16 %v4787
    %v6143 = vunpack.c.h.b16 %v4787
    %v6144 = vunpack.c.l.b16 %v4788
    %v6145 = vunpack.c.h.b16 %v4788
    %v6146 = vunpack.c.l.b16 %v4789
    %v6147 = vunpack.c.h.b16 %v4789
    %v6148 = vunpack.c.l.b16 %v4790
    %v6149 = vunpack.c.h.b16 %v4790
    %v6150 = vunpack.c.l.b16 %v4791
    %v6151 = vunpack.c.h.b16 %v4791
    %v6152 = vunpack.c.l.b16 %v4792
    %v6153 = vunpack.c.h.b16 %v4792
    %v6154 = vunpack.c.l.b16 %v4793
    %v6155 = vunpack.c.h.b16 %v4793
    %v6156 = vunpack.c.l.b16 %v4794
    %v6157 = vunpack.c.h.b16 %v4794
    %v6158 = vunpack.c.l.b16 %v4795
    %v6159 = vunpack.c.h.b16 %v4795
    %v6160 = vunpack.c.l.b16 %v4796
    %v6161 = vunpack.c.h.b16 %v4796
    %v6162 = vunpack.c.l.b16 %v4797
    %v6163 = vunpack.c.h.b16 %v4797
    %v6164 = vunpack.c.l.b16 %v4798
    %v6165 = vunpack.c.h.b16 %v4798
    %v6166 = vunpack.c.l.b16 %v4799
    %v6167 = vunpack.c.h.b16 %v4799
    %v6168 = vunpack.c.l.b16 %v4800
    %v6169 = vunpack.c.h.b16 %v4800
    %v6170 = vunpack.c.l.b16 %v4801
    %v6171 = vunpack.c.h.b16 %v4801
    %v6172 = vunpack.c.l.b16 %v4802
    %v6173 = vunpack.c.h.b16 %v4802
    %v6174 = vunpack.c.l.b16 %v4803
    %v6175 = vunpack.c.h.b16 %v4803
    %v6176 = vunpack.c.l.b16 %v4804
    %v6177 = vunpack.c.h.b16 %v4804
    %v6178 = vunpack.c.l.b16 %v4805
    %v6179 = vunpack.c.h.b16 %v4805
    %v6180 = vunpack.c.l.b16 %v4806
    %v6181 = vunpack.c.h.b16 %v4806
    %v6182 = vunpack.c.l.b16 %v4807
    %v6183 = vunpack.c.h.b16 %v4807
    %v6184 = vunpack.c.l.b16 %v4808
    %v6185 = vunpack.c.h.b16 %v4808
    %v6186 = vunpack.c.l.b16 %v4809
    %v6187 = vunpack.c.h.b16 %v4809
    %v6188 = vunpack.c.l.b16 %v4810
    %v6189 = vunpack.c.h.b16 %v4810
    %v6190 = vunpack.c.l.b16 %v4811
    %v6191 = vunpack.c.h.b16 %v4811
    %v6192 = vunpack.c.l.b16 %v4812
    %v6193 = vunpack.c.h.b16 %v4812
    %v6194 = vunpack.c.l.b16 %v4813
    %v6195 = vunpack.c.h.b16 %v4813
    %v6196 = vunpack.c.l.b16 %v4814
    %v6197 = vunpack.c.h.b16 %v4814
    %v6198 = vunpack.c.l.b16 %v4815
    %v6199 = vunpack.c.h.b16 %v4815
    %v6200 = vunpack.c.l.b16 %v4816
    %v6201 = vunpack.c.h.b16 %v4816
    %v6202 = vunpack.c.l.b16 %v4817
    %v6203 = vunpack.c.h.b16 %v4817
    %v6204 = vunpack.c.l.b16 %v4818
    %v6205 = vunpack.c.h.b16 %v4818
    %v6206 = vunpack.c.l.b16 %v4819
    %v6207 = vunpack.c.h.b16 %v4819
    %v6208 = vunpack.c.l.b16 %v4820
    %v6209 = vunpack.c.h.b16 %v4820
    %v6210 = vunpack.c.l.b16 %v4821
    %v6211 = vunpack.c.h.b16 %v4821
    %v6212 = vunpack.c.l.b16 %v4822
    %v6213 = vunpack.c.h.b16 %v4822
    %v6214 = vunpack.c.l.b16 %v4823
    %v6215 = vunpack.c.h.b16 %v4823
    %v6216 = vunpack.c.l.b16 %v4824
    %v6217 = vunpack.c.h.b16 %v4824
    %v6218 = vunpack.c.l.b16 %v4825
    %v6219 = vunpack.c.h.b16 %v4825
    %v6220 = vunpack.c.l.b16 %v4826
    %v6221 = vunpack.c.h.b16 %v4826
    %v6222 = vunpack.c.l.b16 %v4827
    %v6223 = vunpack.c.h.b16 %v4827
    %v6224 = vunpack.c.l.b16 %v4828
    %v6225 = vunpack.c.h.b16 %v4828
    %v6226 = vunpack.c.l.b16 %v4829
    %v6227 = vunpack.c.h.b16 %v4829
    %v6228 = vunpack.c.l.b16 %v4830
    %v6229 = vunpack.c.h.b16 %v4830
    %v6230 = vunpack.c.l.b16 %v4831
    %v6231 = vunpack.c.h.b16 %v4831
    %v6232 = vunpack.c.l.b16 %v4832
    %v6233 = vunpack.c.h.b16 %v4832
    %v6234 = vunpack.c.l.b16 %v4833
    %v6235 = vunpack.c.h.b16 %v4833
    %v6236 = vunpack.c.l.b16 %v4834
    %v6237 = vunpack.c.h.b16 %v4834
    %v6238 = vunpack.c.l.b16 %v4835
    %v6239 = vunpack.c.h.b16 %v4835
    %v6240 = vunpack.c.l.b16 %v4836
    %v6241 = vunpack.c.h.b16 %v4836
    %v6242 = vunpack.c.l.b16 %v4837
    %v6243 = vunpack.c.h.b16 %v4837
    %v6244 = vunpack.c.l.b16 %v4838
    %v6245 = vunpack.c.h.b16 %v4838
    %v6246 = vunpack.c.l.b16 %v4839
    %v6247 = vunpack.c.h.b16 %v4839
    %v6248 = vunpack.c.l.b16 %v4840
    %v6249 = vunpack.c.h.b16 %v4840
    %v6250 = vunpack.c.l.b16 %v4841
    %v6251 = vunpack.c.h.b16 %v4841
    %v6252 = vunpack.c.l.b16 %v4842
    %v6253 = vunpack.c.h.b16 %v4842
    %v6254 = vunpack.c.l.b16 %v4843
    %v6255 = vunpack.c.h.b16 %v4843
    %v6256 = vunpack.c.l.b16 %v4844
    %v6257 = vunpack.c.h.b16 %v4844
    %v6258 = vunpack.c.l.b16 %v4845
    %v6259 = vunpack.c.h.b16 %v4845
    %v6260 = vunpack.c.l.b16 %v4846
    %v6261 = vunpack.c.h.b16 %v4846
    %v6262 = vunpack.c.l.b16 %v4847
    %v6263 = vunpack.c.h.b16 %v4847
    %v6264 = vunpack.c.l.b16 %v4848
    %v6265 = vunpack.c.h.b16 %v4848
    %v6266 = vunpack.c.l.b16 %v4849
    %v6267 = vunpack.c.h.b16 %v4849
    %v6268 = vunpack.c.l.b16 %v4850
    %v6269 = vunpack.c.h.b16 %v4850
    %v6270 = vunpack.c.l.b16 %v4851
    %v6271 = vunpack.c.h.b16 %v4851
    %v6272 = vunpack.c.l.b16 %v4852
    %v6273 = vunpack.c.h.b16 %v4852
    %v6274 = vunpack.c.l.b16 %v4853
    %v6275 = vunpack.c.h.b16 %v4853
    %v6276 = vunpack.c.l.b16 %v4854
    %v6277 = vunpack.c.h.b16 %v4854
    %v6278 = vunpack.c.l.b16 %v4855
    %v6279 = vunpack.c.h.b16 %v4855
    %v6280 = vunpack.c.l.b16 %v4856
    %v6281 = vunpack.c.h.b16 %v4856
    %v6282 = vunpack.c.l.b16 %v4857
    %v6283 = vunpack.c.h.b16 %v4857
    %v6284 = vunpack.c.l.b16 %v4858
    %v6285 = vunpack.c.h.b16 %v4858
    %v6286 = vunpack.c.l.b16 %v4859
    %v6287 = vunpack.c.h.b16 %v4859
    %v6288 = vunpack.c.l.b16 %v4860
    %v6289 = vunpack.c.h.b16 %v4860
    %v6290 = vunpack.c.l.b16 %v4861
    %v6291 = vunpack.c.h.b16 %v4861
    %v6292 = vunpack.c.l.b16 %v4862
    %v6293 = vunpack.c.h.b16 %v4862
    %v6294 = vunpack.c.l.b16 %v4863
    %v6295 = vunpack.c.h.b16 %v4863
    %v6296 = vunpack.c.l.b16 %v4864
    %v6297 = vunpack.c.h.b16 %v4864
    %v6298 = vunpack.c.l.b16 %v4865
    %v6299 = vunpack.c.h.b16 %v4865
    %v6300 = vunpack.c.l.b16 %v4866
    %v6301 = vunpack.c.h.b16 %v4866
    %v6302 = vunpack.c.l.b16 %v4867
    %v6303 = vunpack.c.h.b16 %v4867
    %v6304 = vunpack.c.l.b16 %v4868
    %v6305 = vunpack.c.h.b16 %v4868
    %v6306 = vunpack.c.l.b16 %v4869
    %v6307 = vunpack.c.h.b16 %v4869
    %v6308 = vunpack.c.l.b16 %v4870
    %v6309 = vunpack.c.h.b16 %v4870
    %v6310 = vunpack.c.l.b16 %v4871
    %v6311 = vunpack.c.h.b16 %v4871
    %v6312 = vunpack.c.l.b16 %v4872
    %v6313 = vunpack.c.h.b16 %v4872
    %v6314 = vunpack.c.l.b16 %v4873
    %v6315 = vunpack.c.h.b16 %v4873
    %v6316 = vunpack.c.l.b16 %v4874
    %v6317 = vunpack.c.h.b16 %v4874
    %v6318 = vunpack.c.l.b16 %v4875
    %v6319 = vunpack.c.h.b16 %v4875
    %v6320 = vunpack.c.l.b16 %v4876
    %v6321 = vunpack.c.h.b16 %v4876
    %v6322 = vunpack.c.l.b16 %v4877
    %v6323 = vunpack.c.h.b16 %v4877
    %v6324 = vunpack.c.l.b16 %v4878
    %v6325 = vunpack.c.h.b16 %v4878
    %v6326 = vunpack.c.l.b16 %v4879
    %v6327 = vunpack.c.h.b16 %v4879
    %v6328 = vunpack.c.l.b16 %v4880
    %v6329 = vunpack.c.h.b16 %v4880
    %v6330 = vunpack.c.l.b16 %v4881
    %v6331 = vunpack.c.h.b16 %v4881
    %v6332 = vunpack.c.l.b16 %v4882
    %v6333 = vunpack.c.h.b16 %v4882
    %v6334 = vunpack.c.l.b16 %v4883
    %v6335 = vunpack.c.h.b16 %v4883
    %v6336 = vunpack.c.l.b16 %v4884
    %v6337 = vunpack.c.h.b16 %v4884
    %v6338 = vunpack.c.l.b16 %v4885
    %v6339 = vunpack.c.h.b16 %v4885
    %v6340 = vunpack.c.l.b16 %v4886
    %v6341 = vunpack.c.h.b16 %v4886
    %v6342 = vunpack.c.l.b16 %v4887
    %v6343 = vunpack.c.h.b16 %v4887
    %v6344 = vunpack.c.l.b16 %v4888
    %v6345 = vunpack.c.h.b16 %v4888
    %v6346 = vunpack.c.l.b16 %v4889
    %v6347 = vunpack.c.h.b16 %v4889
    %v6348 = vunpack.c.l.b16 %v4890
    %v6349 = vunpack.c.h.b16 %v4890
    %v6350 = vunpack.c.l.b16 %v4891
    %v6351 = vunpack.c.h.b16 %v4891
    %v6352 = vunpack.c.l.b16 %v4892
    %v6353 = vunpack.c.h.b16 %v4892
    %v6354 = vunpack.c.l.b16 %v4893
    %v6355 = vunpack.c.h.b16 %v4893
    %v6356 = vunpack.c.l.b16 %v4894
    %v6357 = vunpack.c.h.b16 %v4894
    %v6358 = vunpack.c.l.b16 %v4895
    %v6359 = vunpack.c.h.b16 %v4895
    %v6360 = vunpack.c.l.b16 %v4896
    %v6361 = vunpack.c.h.b16 %v4896
    %v6362 = vunpack.c.l.b16 %v4897
    %v6363 = vunpack.c.h.b16 %v4897
    %v6364 = vunpack.c.l.b16 %v4898
    %v6365 = vunpack.c.h.b16 %v4898
    %v6366 = vunpack.c.l.b16 %v4899
    %v6367 = vunpack.c.h.b16 %v4899
    %v6368 = vunpack.c.l.b16 %v4900
    %v6369 = vunpack.c.h.b16 %v4900
    %v6370 = vunpack.c.l.b16 %v4901
    %v6371 = vunpack.c.h.b16 %v4901
    %v6372 = vunpack.c.l.b16 %v4902
    %v6373 = vunpack.c.h.b16 %v4902
    %v6374 = vunpack.c.l.b16 %v4903
    %v6375 = vunpack.c.h.b16 %v4903
    %v6376 = vunpack.c.l.b16 %v4904
    %v6377 = vunpack.c.h.b16 %v4904
    %v6378 = vunpack.c.l.b16 %v4905
    %v6379 = vunpack.c.h.b16 %v4905
    %v6380 = vunpack.c.l.b16 %v4906
    %v6381 = vunpack.c.h.b16 %v4906
    %v6382 = vunpack.c.l.b16 %v4907
    %v6383 = vunpack.c.h.b16 %v4907
    %v6384 = vunpack.c.l.b16 %v4908
    %v6385 = vunpack.c.h.b16 %v4908
    %v6386 = vunpack.c.l.b16 %v4909
    %v6387 = vunpack.c.h.b16 %v4909
    %v6388 = vunpack.c.l.b16 %v4910
    %v6389 = vunpack.c.h.b16 %v4910
    %v6390 = vunpack.c.l.b16 %v4911
    %v6391 = vunpack.c.h.b16 %v4911
    %v6392 = vunpack.c.l.b16 %v4912
    %v6393 = vunpack.c.h.b16 %v4912
    %v6394 = vunpack.c.l.b16 %v4913
    %v6395 = vunpack.c.h.b16 %v4913
    %v6396 = vunpack.c.l.b16 %v4914
    %v6397 = vunpack.c.h.b16 %v4914
    %v6398 = vunpack.c.l.b16 %v4915
    %v6399 = vunpack.c.h.b16 %v4915
    %v6400 = vunpack.c.l.b16 %v4916
    %v6401 = vunpack.c.h.b16 %v4916
    %v6402 = vunpack.c.l.b16 %v4917
    %v6403 = vunpack.c.h.b16 %v4917
    %v6404 = vunpack.c.l.b16 %v4918
    %v6405 = vunpack.c.h.b16 %v4918
    %v6406 = vunpack.c.l.b16 %v4919
    %v6407 = vunpack.c.h.b16 %v4919
    %v6408 = vunpack.c.l.b16 %v4920
    %v6409 = vunpack.c.h.b16 %v4920
    %v6410 = vunpack.c.l.b16 %v4921
    %v6411 = vunpack.c.h.b16 %v4921
    %v6412 = vunpack.c.l.b16 %v4922
    %v6413 = vunpack.c.h.b16 %v4922
    %v6414 = vunpack.c.l.b16 %v4923
    %v6415 = vunpack.c.h.b16 %v4923
    %v6416 = vunpack.c.l.b16 %v4924
    %v6417 = vunpack.c.h.b16 %v4924
    %v6418 = vunpack.c.l.b16 %v4925
    %v6419 = vunpack.c.h.b16 %v4925
    %v6420 = vunpack.c.l.b16 %v4926
    %v6421 = vunpack.c.h.b16 %v4926
    %v6422 = vunpack.c.l.b16 %v4927
    %v6423 = vunpack.c.h.b16 %v4927
    %v6424 = vunpack.c.l.b16 %v4928
    %v6425 = vunpack.c.h.b16 %v4928
    %v6426 = vunpack.c.l.b16 %v4929
    %v6427 = vunpack.c.h.b16 %v4929
    %v6428 = vunpack.c.l.b16 %v4930
    %v6429 = vunpack.c.h.b16 %v4930
    %v6430 = vunpack.c.l.b16 %v4931
    %v6431 = vunpack.c.h.b16 %v4931
    %v6432 = vunpack.c.l.b16 %v4932
    %v6433 = vunpack.c.h.b16 %v4932
    %v6434 = vunpack.c.l.b16 %v4933
    %v6435 = vunpack.c.h.b16 %v4933
    %v6436 = vunpack.c.l.b16 %v4934
    %v6437 = vunpack.c.h.b16 %v4934
    %v6438 = vunpack.c.l.b16 %v4935
    %v6439 = vunpack.c.h.b16 %v4935
    %v6440 = vunpack.c.l.b16 %v4936
    %v6441 = vunpack.c.h.b16 %v4936
    %v6442 = vunpack.c.l.b16 %v4937
    %v6443 = vunpack.c.h.b16 %v4937
    %v6444 = vunpack.c.l.b16 %v4938
    %v6445 = vunpack.c.h.b16 %v4938
    %v6446 = vunpack.c.l.b16 %v4939
    %v6447 = vunpack.c.h.b16 %v4939
    %v6448 = vunpack.c.l.b16 %v4940
    %v6449 = vunpack.c.h.b16 %v4940
    %v6450 = vunpack.c.l.b16 %v4941
    %v6451 = vunpack.c.h.b16 %v4941
    %v6452 = vunpack.c.l.b16 %v4942
    %v6453 = vunpack.c.h.b16 %v4942
    %v6454 = vunpack.c.l.b16 %v4943
    %v6455 = vunpack.c.h.b16 %v4943
    %v6456 = vunpack.c.l.b16 %v4944
    %v6457 = vunpack.c.h.b16 %v4944
    %v6458 = vunpack.c.l.b16 %v4945
    %v6459 = vunpack.c.h.b16 %v4945
    %v6460 = vunpack.c.l.b16 %v4946
    %v6461 = vunpack.c.h.b16 %v4946
    %v6462 = vunpack.c.l.b16 %v4947
    %v6463 = vunpack.c.h.b16 %v4947
    %v6464 = vunpack.c.l.b16 %v4948
    %v6465 = vunpack.c.h.b16 %v4948
    %v6466 = vunpack.c.l.b16 %v4949
    %v6467 = vunpack.c.h.b16 %v4949
    %v6468 = vunpack.c.l.b16 %v4950
    %v6469 = vunpack.c.h.b16 %v4950
    %v6470 = vunpack.c.l.b16 %v4951
    %v6471 = vunpack.c.h.b16 %v4951
    %v6472 = vunpack.c.l.b16 %v4952
    %v6473 = vunpack.c.h.b16 %v4952
    %v6474 = vunpack.c.l.b16 %v4953
    %v6475 = vunpack.c.h.b16 %v4953
    %v6476 = vunpack.c.l.b16 %v4954
    %v6477 = vunpack.c.h.b16 %v4954
    %v6478 = vunpack.c.l.b16 %v4955
    %v6479 = vunpack.c.h.b16 %v4955
    %v6480 = vunpack.c.l.b16 %v4956
    %v6481 = vunpack.c.h.b16 %v4956
    %v6482 = vunpack.c.l.b16 %v4957
    %v6483 = vunpack.c.h.b16 %v4957
    %v6484 = vunpack.c.l.b16 %v4958
    %v6485 = vunpack.c.h.b16 %v4958
    %v6486 = vunpack.c.l.b16 %v4959
    %v6487 = vunpack.c.h.b16 %v4959
    %v6488 = vunpack.c.l.b16 %v4960
    %v6489 = vunpack.c.h.b16 %v4960
    %v6490 = vunpack.c.l.b16 %v4961
    %v6491 = vunpack.c.h.b16 %v4961
    %v6492 = vunpack.c.l.b16 %v4962
    %v6493 = vunpack.c.h.b16 %v4962
    %v6494 = vunpack.c.l.b16 %v4963
    %v6495 = vunpack.c.h.b16 %v4963
    %v6496 = vunpack.c.l.b16 %v4964
    %v6497 = vunpack.c.h.b16 %v4964
    %v6498 = vunpack.c.l.b16 %v4965
    %v6499 = vunpack.c.h.b16 %v4965
    %v6500 = vunpack.c.l.b16 %v4966
    %v6501 = vunpack.c.h.b16 %v4966
    %v6502 = vunpack.c.l.b16 %v4967
    %v6503 = vunpack.c.h.b16 %v4967
    %v6504 = vunpack.c.l.b16 %v4968
    %v6505 = vunpack.c.h.b16 %v4968
    %v6506 = vunpack.c.l.b16 %v4969
    %v6507 = vunpack.c.h.b16 %v4969
    %v6508 = vunpack.c.l.b16 %v4970
    %v6509 = vunpack.c.h.b16 %v4970
    %v6510 = vunpack.c.l.b16 %v4971
    %v6511 = vunpack.c.h.b16 %v4971
    %v6512 = vunpack.c.l.b16 %v4972
    %v6513 = vunpack.c.h.b16 %v4972
    %v6514 = vunpack.c.l.b16 %v4973
    %v6515 = vunpack.c.h.b16 %v4973
    %v6516 = vunpack.c.l.b16 %v4974
    %v6517 = vunpack.c.h.b16 %v4974
    %v6518 = vunpack.c.l.b16 %v4975
    %v6519 = vunpack.c.h.b16 %v4975
    %v6520 = vunpack.c.l.b16 %v4976
    %v6521 = vunpack.c.h.b16 %v4976
    %v6522 = vunpack.c.l.b16 %v4977
    %v6523 = vunpack.c.h.b16 %v4977
    %v6524 = vunpack.c.l.b16 %v4978
    %v6525 = vunpack.c.h.b16 %v4978
    %v6526 = vunpack.c.l.b16 %v4979
    %v6527 = vunpack.c.h.b16 %v4979
    %v6528 = vunpack.c.l.b16 %v4980
    %v6529 = vunpack.c.h.b16 %v4980
    %v6530 = vunpack.c.l.b16 %v4981
    %v6531 = vunpack.c.h.b16 %v4981
    %v6532 = vunpack.c.l.b16 %v4982
    %v6533 = vunpack.c.h.b16 %v4982
    %v6534 = vunpack.c.l.b16 %v4983
    %v6535 = vunpack.c.h.b16 %v4983
    %v6536 = vunpack.c.l.b16 %v4984
    %v6537 = vunpack.c.h.b16 %v4984
    %v6538 = vunpack.c.l.b16 %v4985
    %v6539 = vunpack.c.h.b16 %v4985
    %v6540 = vunpack.c.l.b16 %v4986
    %v6541 = vunpack.c.h.b16 %v4986
    %v6542 = vunpack.c.l.b16 %v4987
    %v6543 = vunpack.c.h.b16 %v4987
    %v6544 = vunpack.c.l.b16 %v4988
    %v6545 = vunpack.c.h.b16 %v4988
    %v6546 = vunpack.c.l.b16 %v4989
    %v6547 = vunpack.c.h.b16 %v4989
    %v6548 = vunpack.c.l.b16 %v4990
    %v6549 = vunpack.c.h.b16 %v4990
    %v6550 = vunpack.c.l.b16 %v4991
    %v6551 = vunpack.c.h.b16 %v4991
    %v6552 = vunpack.c.l.b16 %v4992
    %v6553 = vunpack.c.h.b16 %v4992
    %v6554 = vunpack.c.l.b16 %v4993
    %v6555 = vunpack.c.h.b16 %v4993
    %v6556 = vunpack.c.l.b16 %v4994
    %v6557 = vunpack.c.h.b16 %v4994
    %v6558 = vunpack.c.l.b16 %v4995
    %v6559 = vunpack.c.h.b16 %v4995
    %v6560 = vunpack.c.l.b16 %v4996
    %v6561 = vunpack.c.h.b16 %v4996
    %v6562 = vunpack.c.l.b16 %v4997
    %v6563 = vunpack.c.h.b16 %v4997
    %v6564 = vunpack.c.l.b16 %v4998
    %v6565 = vunpack.c.h.b16 %v4998
    %v6566 = vunpack.c.l.b16 %v4999
    %v6567 = vunpack.c.h.b16 %v4999
    %v6568 = vunpack.c.l.b16 %v5000
    %v6569 = vunpack.c.h.b16 %v5000
    %v6570 = vunpack.c.l.b16 %v5001
    %v6571 = vunpack.c.h.b16 %v5001
    %v6572 = vunpack.c.l.b16 %v5002
    %v6573 = vunpack.c.h.b16 %v5002
    %v6574 = vunpack.c.l.b16 %v5003
    %v6575 = vunpack.c.h.b16 %v5003
    %v6576 = vunpack.c.l.b16 %v5004
    %v6577 = vunpack.c.h.b16 %v5004
    %v6578 = vunpack.c.l.b16 %v5005
    %v6579 = vunpack.c.h.b16 %v5005
    %v6580 = vunpack.c.l.b16 %v5006
    %v6581 = vunpack.c.h.b16 %v5006
    %v6582 = vunpack.c.l.b16 %v5007
    %v6583 = vunpack.c.h.b16 %v5007
    %v6584 = vunpack.c.l.b16 %v5008
    %v6585 = vunpack.c.h.b16 %v5008
    %v6586 = vunpack.c.l.b16 %v5009
    %v6587 = vunpack.c.h.b16 %v5009
    %v6588 = vpack.c.b16 %v5572, %v5564
    %v6589 = vpack.c.b16 %v5573, %v5565
    %v6590 = vpack.c.b16 %v5574, %v5566
    %v6591 = vpack.c.b16 %v5575, %v5567
    %v6592 = vpack.c.b16 %v5576, %v5568
    %v6593 = vpack.c.b16 %v5577, %v5569
    %v6594 = vpack.c.b16 %v5578, %v5570
    %v6595 = vpack.c.b16 %v5579, %v5571
    %v6596 = vpack.c.b16 %v5588, %v5580
    %v6597 = vpack.c.b16 %v5589, %v5581
    %v6598 = vpack.c.b16 %v5590, %v5582
    %v6599 = vpack.c.b16 %v5591, %v5583
    %v6600 = vpack.c.b16 %v5592, %v5584
    %v6601 = vpack.c.b16 %v5593, %v5585
    %v6602 = vpack.c.b16 %v5594, %v5586
    %v6603 = vpack.c.b16 %v5595, %v5587
    %v6604 = vpack.c.b16 %v5604, %v5596
    %v6605 = vpack.c.b16 %v5605, %v5597
    %v6606 = vpack.c.b16 %v5606, %v5598
    %v6607 = vpack.c.b16 %v5607, %v5599
    %v6608 = vpack.c.b16 %v5608, %v5600
    %v6609 = vpack.c.b16 %v5609, %v5601
    %v6610 = vpack.c.b16 %v5610, %v5602
    %v6611 = vpack.c.b16 %v5611, %v5603
    %v6612 = vpack.c.b16 %v5620, %v5612
    %v6613 = vpack.c.b16 %v5621, %v5613
    %v6614 = vpack.c.b16 %v5622, %v5614
    %v6615 = vpack.c.b16 %v5623, %v5615
    %v6616 = vpack.c.b16 %v5624, %v5616
    %v6617 = vpack.c.b16 %v5625, %v5617
    %v6618 = vpack.c.b16 %v5626, %v5618
    %v6619 = vpack.c.b16 %v5627, %v5619
    %v6620 = vpack.c.b16 %v5636, %v5628
    %v6621 = vpack.c.b16 %v5637, %v5629
    %v6622 = vpack.c.b16 %v5638, %v5630
    %v6623 = vpack.c.b16 %v5639, %v5631
    %v6624 = vpack.c.b16 %v5640, %v5632
    %v6625 = vpack.c.b16 %v5641, %v5633
    %v6626 = vpack.c.b16 %v5642, %v5634
    %v6627 = vpack.c.b16 %v5643, %v5635
    %v6628 = vpack.c.b16 %v5652, %v5644
    %v6629 = vpack.c.b16 %v5653, %v5645
    %v6630 = vpack.c.b16 %v5654, %v5646
    %v6631 = vpack.c.b16 %v5655, %v5647
    %v6632 = vpack.c.b16 %v5656, %v5648
    %v6633 = vpack.c.b16 %v5657, %v5649
    %v6634 = vpack.c.b16 %v5658, %v5650
    %v6635 = vpack.c.b16 %v5659, %v5651
    %v6636 = vpack.c.b16 %v5668, %v5660
    %v6637 = vpack.c.b16 %v5669, %v5661
    %v6638 = vpack.c.b16 %v5670, %v5662
    %v6639 = vpack.c.b16 %v5671, %v5663
    %v6640 = vpack.c.b16 %v5672, %v5664
    %v6641 = vpack.c.b16 %v5673, %v5665
    %v6642 = vpack.c.b16 %v5674, %v5666
    %v6643 = vpack.c.b16 %v5675, %v5667
    %v6644 = vpack.c.b16 %v5684, %v5676
    %v6645 = vpack.c.b16 %v5685, %v5677
    %v6646 = vpack.c.b16 %v5686, %v5678
    %v6647 = vpack.c.b16 %v5687, %v5679
    %v6648 = vpack.c.b16 %v5688, %v5680
    %v6649 = vpack.c.b16 %v5689, %v5681
    %v6650 = vpack.c.b16 %v5690, %v5682
    %v6651 = vpack.c.b16 %v5691, %v5683
    %v6652 = vpack.c.b16 %v5700, %v5692
    %v6653 = vpack.c.b16 %v5701, %v5693
    %v6654 = vpack.c.b16 %v5702, %v5694
    %v6655 = vpack.c.b16 %v5703, %v5695
    %v6656 = vpack.c.b16 %v5704, %v5696
    %v6657 = vpack.c.b16 %v5705, %v5697
    %v6658 = vpack.c.b16 %v5706, %v5698
    %v6659 = vpack.c.b16 %v5707, %v5699
    %v6660 = vpack.c.b16 %v5716, %v5708
    %v6661 = vpack.c.b16 %v5717, %v5709
    %v6662 = vpack.c.b16 %v5718, %v5710
    %v6663 = vpack.c.b16 %v5719, %v5711
    %v6664 = vpack.c.b16 %v5720, %v5712
    %v6665 = vpack.c.b16 %v5721, %v5713
    %v6666 = vpack.c.b16 %v5722, %v5714
    %v6667 = vpack.c.b16 %v5723, %v5715
    %v6668 = vpack.c.b16 %v5732, %v5724
    %v6669 = vpack.c.b16 %v5733, %v5725
    %v6670 = vpack.c.b16 %v5734, %v5726
    %v6671 = vpack.c.b16 %v5735, %v5727
    %v6672 = vpack.c.b16 %v5736, %v5728
    %v6673 = vpack.c.b16 %v5737, %v5729
    %v6674 = vpack.c.b16 %v5738, %v5730
    %v6675 = vpack.c.b16 %v5739, %v5731
    %v6676 = vpack.c.b16 %v5748, %v5740
    %v6677 = vpack.c.b16 %v5749, %v5741
    %v6678 = vpack.c.b16 %v5750, %v5742
    %v6679 = vpack.c.b16 %v5751, %v5743
    %v6680 = vpack.c.b16 %v5752, %v5744
    %v6681 = vpack.c.b16 %v5753, %v5745
    %v6682 = vpack.c.b16 %v5754, %v5746
    %v6683 = vpack.c.b16 %v5755, %v5747
    %v6684 = vpack.c.b16 %v5764, %v5756
    %v6685 = vpack.c.b16 %v5765, %v5757
    %v6686 = vpack.c.b16 %v5766, %v5758
    %v6687 = vpack.c.b16 %v5767, %v5759
    %v6688 = vpack.c.b16 %v5768, %v5760
    %v6689 = vpack.c.b16 %v5769, %v5761
    %v6690 = vpack.c.b16 %v5770, %v5762
    %v6691 = vpack.c.b16 %v5771, %v5763
    %v6692 = vpack.c.b16 %v5780, %v5772
    %v6693 = vpack.c.b16 %v5781, %v5773
    %v6694 = vpack.c.b16 %v5782, %v5774
    %v6695 = vpack.c.b16 %v5783, %v5775
    %v6696 = vpack.c.b16 %v5784, %v5776
    %v6697 = vpack.c.b16 %v5785, %v5777
    %v6698 = vpack.c.b16 %v5786, %v5778
    %v6699 = vpack.c.b16 %v5787, %v5779
    %v6700 = vpack.c.b16 %v5796, %v5788
    %v6701 = vpack.c.b16 %v5797, %v5789
    %v6702 = vpack.c.b16 %v5798, %v5790
    %v6703 = vpack.c.b16 %v5799, %v5791
    %v6704 = vpack.c.b16 %v5800, %v5792
    %v6705 = vpack.c.b16 %v5801, %v5793
    %v6706 = vpack.c.b16 %v5802, %v5794
    %v6707 = vpack.c.b16 %v5803, %v5795
    %v6708 = vpack.c.b16 %v5812, %v5804
    %v6709 = vpack.c.b16 %v5813, %v5805
    %v6710 = vpack.c.b16 %v5814, %v5806
    %v6711 = vpack.c.b16 %v5815, %v5807
    %v6712 = vpack.c.b16 %v5816, %v5808
    %v6713 = vpack.c.b16 %v5817, %v5809
    %v6714 = vpack.c.b16 %v5818, %v5810
    %v6715 = vpack.c.b16 %v5819, %v5811
    %v6716 = vpack.c.b16 %v5828, %v5820
    %v6717 = vpack.c.b16 %v5829, %v5821
    %v6718 = vpack.c.b16 %v5830, %v5822
    %v6719 = vpack.c.b16 %v5831, %v5823
    %v6720 = vpack.c.b16 %v5832, %v5824
    %v6721 = vpack.c.b16 %v5833, %v5825
    %v6722 = vpack.c.b16 %v5834, %v5826
    %v6723 = vpack.c.b16 %v5835, %v5827
    %v6724 = vpack.c.b16 %v5844, %v5836
    %v6725 = vpack.c.b16 %v5845, %v5837
    %v6726 = vpack.c.b16 %v5846, %v5838
    %v6727 = vpack.c.b16 %v5847, %v5839
    %v6728 = vpack.c.b16 %v5848, %v5840
    %v6729 = vpack.c.b16 %v5849, %v5841
    %v6730 = vpack.c.b16 %v5850, %v5842
    %v6731 = vpack.c.b16 %v5851, %v5843
    %v6732 = vpack.c.b16 %v5860, %v5852
    %v6733 = vpack.c.b16 %v5861, %v5853
    %v6734 = vpack.c.b16 %v5862, %v5854
    %v6735 = vpack.c.b16 %v5863, %v5855
    %v6736 = vpack.c.b16 %v5864, %v5856
    %v6737 = vpack.c.b16 %v5865, %v5857
    %v6738 = vpack.c.b16 %v5866, %v5858
    %v6739 = vpack.c.b16 %v5867, %v5859
    %v6740 = vpack.c.b16 %v5876, %v5868
    %v6741 = vpack.c.b16 %v5877, %v5869
    %v6742 = vpack.c.b16 %v5878, %v5870
    %v6743 = vpack.c.b16 %v5879, %v5871
    %v6744 = vpack.c.b16 %v5880, %v5872
    %v6745 = vpack.c.b16 %v5881, %v5873
    %v6746 = vpack.c.b16 %v5882, %v5874
    %v6747 = vpack.c.b16 %v5883, %v5875
    %v6748 = vpack.c.b16 %v5892, %v5884
    %v6749 = vpack.c.b16 %v5893, %v5885
    %v6750 = vpack.c.b16 %v5894, %v5886
    %v6751 = vpack.c.b16 %v5895, %v5887
    %v6752 = vpack.c.b16 %v5896, %v5888
    %v6753 = vpack.c.b16 %v5897, %v5889
    %v6754 = vpack.c.b16 %v5898, %v5890
    %v6755 = vpack.c.b16 %v5899, %v5891
    %v6756 = vpack.c.b16 %v5908, %v5900
    %v6757 = vpack.c.b16 %v5909, %v5901
    %v6758 = vpack.c.b16 %v5910, %v5902
    %v6759 = vpack.c.b16 %v5911, %v5903
    %v6760 = vpack.c.b16 %v5912, %v5904
    %v6761 = vpack.c.b16 %v5913, %v5905
    %v6762 = vpack.c.b16 %v5914, %v5906
    %v6763 = vpack.c.b16 %v5915, %v5907
    %v6764 = vpack.c.b16 %v5924, %v5916
    %v6765 = vpack.c.b16 %v5925, %v5917
    %v6766 = vpack.c.b16 %v5926, %v5918
    %v6767 = vpack.c.b16 %v5927, %v5919
    %v6768 = vpack.c.b16 %v5928, %v5920
    %v6769 = vpack.c.b16 %v5929, %v5921
    %v6770 = vpack.c.b16 %v5930, %v5922
    %v6771 = vpack.c.b16 %v5931, %v5923
    %v6772 = vpack.c.b16 %v5940, %v5932
    %v6773 = vpack.c.b16 %v5941, %v5933
    %v6774 = vpack.c.b16 %v5942, %v5934
    %v6775 = vpack.c.b16 %v5943, %v5935
    %v6776 = vpack.c.b16 %v5944, %v5936
    %v6777 = vpack.c.b16 %v5945, %v5937
    %v6778 = vpack.c.b16 %v5946, %v5938
    %v6779 = vpack.c.b16 %v5947, %v5939
    %v6780 = vpack.c.b16 %v5956, %v5948
    %v6781 = vpack.c.b16 %v5957, %v5949
    %v6782 = vpack.c.b16 %v5958, %v5950
    %v6783 = vpack.c.b16 %v5959, %v5951
    %v6784 = vpack.c.b16 %v5960, %v5952
    %v6785 = vpack.c.b16 %v5961, %v5953
    %v6786 = vpack.c.b16 %v5962, %v5954
    %v6787 = vpack.c.b16 %v5963, %v5955
    %v6788 = vpack.c.b16 %v5972, %v5964
    %v6789 = vpack.c.b16 %v5973, %v5965
    %v6790 = vpack.c.b16 %v5974, %v5966
    %v6791 = vpack.c.b16 %v5975, %v5967
    %v6792 = vpack.c.b16 %v5976, %v5968
    %v6793 = vpack.c.b16 %v5977, %v5969
    %v6794 = vpack.c.b16 %v5978, %v5970
    %v6795 = vpack.c.b16 %v5979, %v5971
    %v6796 = vpack.c.b16 %v5988, %v5980
    %v6797 = vpack.c.b16 %v5989, %v5981
    %v6798 = vpack.c.b16 %v5990, %v5982
    %v6799 = vpack.c.b16 %v5991, %v5983
    %v6800 = vpack.c.b16 %v5992, %v5984
    %v6801 = vpack.c.b16 %v5993, %v5985
    %v6802 = vpack.c.b16 %v5994, %v5986
    %v6803 = vpack.c.b16 %v5995, %v5987
    %v6804 = vpack.c.b16 %v6004, %v5996
    %v6805 = vpack.c.b16 %v6005, %v5997
    %v6806 = vpack.c.b16 %v6006, %v5998
    %v6807 = vpack.c.b16 %v6007, %v5999
    %v6808 = vpack.c.b16 %v6008, %v6000
    %v6809 = vpack.c.b16 %v6009, %v6001
    %v6810 = vpack.c.b16 %v6010, %v6002
    %v6811 = vpack.c.b16 %v6011, %v6003
    %v6812 = vpack.c.b16 %v6020, %v6012
    %v6813 = vpack.c.b16 %v6021, %v6013
    %v6814 = vpack.c.b16 %v6022, %v6014
    %v6815 = vpack.c.b16 %v6023, %v6015
    %v6816 = vpack.c.b16 %v6024, %v6016
    %v6817 = vpack.c.b16 %v6025, %v6017
    %v6818 = vpack.c.b16 %v6026, %v6018
    %v6819 = vpack.c.b16 %v6027, %v6019
    %v6820 = vpack.c.b16 %v6036, %v6028
    %v6821 = vpack.c.b16 %v6037, %v6029
    %v6822 = vpack.c.b16 %v6038, %v6030
    %v6823 = vpack.c.b16 %v6039, %v6031
    %v6824 = vpack.c.b16 %v6040, %v6032
    %v6825 = vpack.c.b16 %v6041, %v6033
    %v6826 = vpack.c.b16 %v6042, %v6034
    %v6827 = vpack.c.b16 %v6043, %v6035
    %v6828 = vpack.c.b16 %v6052, %v6044
    %v6829 = vpack.c.b16 %v6053, %v6045
    %v6830 = vpack.c.b16 %v6054, %v6046
    %v6831 = vpack.c.b16 %v6055, %v6047
    %v6832 = vpack.c.b16 %v6056, %v6048
    %v6833 = vpack.c.b16 %v6057, %v6049
    %v6834 = vpack.c.b16 %v6058, %v6050
    %v6835 = vpack.c.b16 %v6059, %v6051
    %v6836 = vpack.c.b16 %v6068, %v6060
    %v6837 = vpack.c.b16 %v6069, %v6061
    %v6838 = vpack.c.b16 %v6070, %v6062
    %v6839 = vpack.c.b16 %v6071, %v6063
    %v6840 = vpack.c.b16 %v6072, %v6064
    %v6841 = vpack.c.b16 %v6073, %v6065
    %v6842 = vpack.c.b16 %v6074, %v6066
    %v6843 = vpack.c.b16 %v6075, %v6067
    %v6844 = vpack.c.b16 %v6084, %v6076
    %v6845 = vpack.c.b16 %v6085, %v6077
    %v6846 = vpack.c.b16 %v6086, %v6078
    %v6847 = vpack.c.b16 %v6087, %v6079
    %v6848 = vpack.c.b16 %v6088, %v6080
    %v6849 = vpack.c.b16 %v6089, %v6081
    %v6850 = vpack.c.b16 %v6090, %v6082
    %v6851 = vpack.c.b16 %v6091, %v6083
    %v6852 = vpack.c.b16 %v6100, %v6092
    %v6853 = vpack.c.b16 %v6101, %v6093
    %v6854 = vpack.c.b16 %v6102, %v6094
    %v6855 = vpack.c.b16 %v6103, %v6095
    %v6856 = vpack.c.b16 %v6104, %v6096
    %v6857 = vpack.c.b16 %v6105, %v6097
    %v6858 = vpack.c.b16 %v6106, %v6098
    %v6859 = vpack.c.b16 %v6107, %v6099
    %v6860 = vpack.c.b16 %v6116, %v6108
    %v6861 = vpack.c.b16 %v6117, %v6109
    %v6862 = vpack.c.b16 %v6118, %v6110
    %v6863 = vpack.c.b16 %v6119, %v6111
    %v6864 = vpack.c.b16 %v6120, %v6112
    %v6865 = vpack.c.b16 %v6121, %v6113
    %v6866 = vpack.c.b16 %v6122, %v6114
    %v6867 = vpack.c.b16 %v6123, %v6115
    %v6868 = vpack.c.b16 %v6132, %v6124
    %v6869 = vpack.c.b16 %v6133, %v6125
    %v6870 = vpack.c.b16 %v6134, %v6126
    %v6871 = vpack.c.b16 %v6135, %v6127
    %v6872 = vpack.c.b16 %v6136, %v6128
    %v6873 = vpack.c.b16 %v6137, %v6129
    %v6874 = vpack.c.b16 %v6138, %v6130
    %v6875 = vpack.c.b16 %v6139, %v6131
    %v6876 = vpack.c.b16 %v6148, %v6140
    %v6877 = vpack.c.b16 %v6149, %v6141
    %v6878 = vpack.c.b16 %v6150, %v6142
    %v6879 = vpack.c.b16 %v6151, %v6143
    %v6880 = vpack.c.b16 %v6152, %v6144
    %v6881 = vpack.c.b16 %v6153, %v6145
    %v6882 = vpack.c.b16 %v6154, %v6146
    %v6883 = vpack.c.b16 %v6155, %v6147
    %v6884 = vpack.c.b16 %v6164, %v6156
    %v6885 = vpack.c.b16 %v6165, %v6157
    %v6886 = vpack.c.b16 %v6166, %v6158
    %v6887 = vpack.c.b16 %v6167, %v6159
    %v6888 = vpack.c.b16 %v6168, %v6160
    %v6889 = vpack.c.b16 %v6169, %v6161
    %v6890 = vpack.c.b16 %v6170, %v6162
    %v6891 = vpack.c.b16 %v6171, %v6163
    %v6892 = vpack.c.b16 %v6180, %v6172
    %v6893 = vpack.c.b16 %v6181, %v6173
    %v6894 = vpack.c.b16 %v6182, %v6174
    %v6895 = vpack.c.b16 %v6183, %v6175
    %v6896 = vpack.c.b16 %v6184, %v6176
    %v6897 = vpack.c.b16 %v6185, %v6177
    %v6898 = vpack.c.b16 %v6186, %v6178
    %v6899 = vpack.c.b16 %v6187, %v6179
    %v6900 = vpack.c.b16 %v6196, %v6188
    %v6901 = vpack.c.b16 %v6197, %v6189
    %v6902 = vpack.c.b16 %v6198, %v6190
    %v6903 = vpack.c.b16 %v6199, %v6191
    %v6904 = vpack.c.b16 %v6200, %v6192
    %v6905 = vpack.c.b16 %v6201, %v6193
    %v6906 = vpack.c.b16 %v6202, %v6194
    %v6907 = vpack.c.b16 %v6203, %v6195
    %v6908 = vpack.c.b16 %v6212, %v6204
    %v6909 = vpack.c.b16 %v6213, %v6205
    %v6910 = vpack.c.b16 %v6214, %v6206
    %v6911 = vpack.c.b16 %v6215, %v6207
    %v6912 = vpack.c.b16 %v6216, %v6208
    %v6913 = vpack.c.b16 %v6217, %v6209
    %v6914 = vpack.c.b16 %v6218, %v6210
    %v6915 = vpack.c.b16 %v6219, %v6211
    %v6916 = vpack.c.b16 %v6228, %v6220
    %v6917 = vpack.c.b16 %v6229, %v6221
    %v6918 = vpack.c.b16 %v6230, %v6222
    %v6919 = vpack.c.b16 %v6231, %v6223
    %v6920 = vpack.c.b16 %v6232, %v6224
    %v6921 = vpack.c.b16 %v6233, %v6225
    %v6922 = vpack.c.b16 %v6234, %v6226
    %v6923 = vpack.c.b16 %v6235, %v6227
    %v6924 = vpack.c.b16 %v6244, %v6236
    %v6925 = vpack.c.b16 %v6245, %v6237
    %v6926 = vpack.c.b16 %v6246, %v6238
    %v6927 = vpack.c.b16 %v6247, %v6239
    %v6928 = vpack.c.b16 %v6248, %v6240
    %v6929 = vpack.c.b16 %v6249, %v6241
    %v6930 = vpack.c.b16 %v6250, %v6242
    %v6931 = vpack.c.b16 %v6251, %v6243
    %v6932 = vpack.c.b16 %v6260, %v6252
    %v6933 = vpack.c.b16 %v6261, %v6253
    %v6934 = vpack.c.b16 %v6262, %v6254
    %v6935 = vpack.c.b16 %v6263, %v6255
    %v6936 = vpack.c.b16 %v6264, %v6256
    %v6937 = vpack.c.b16 %v6265, %v6257
    %v6938 = vpack.c.b16 %v6266, %v6258
    %v6939 = vpack.c.b16 %v6267, %v6259
    %v6940 = vpack.c.b16 %v6276, %v6268
    %v6941 = vpack.c.b16 %v6277, %v6269
    %v6942 = vpack.c.b16 %v6278, %v6270
    %v6943 = vpack.c.b16 %v6279, %v6271
    %v6944 = vpack.c.b16 %v6280, %v6272
    %v6945 = vpack.c.b16 %v6281, %v6273
    %v6946 = vpack.c.b16 %v6282, %v6274
    %v6947 = vpack.c.b16 %v6283, %v6275
    %v6948 = vpack.c.b16 %v6292, %v6284
    %v6949 = vpack.c.b16 %v6293, %v6285
    %v6950 = vpack.c.b16 %v6294, %v6286
    %v6951 = vpack.c.b16 %v6295, %v6287
    %v6952 = vpack.c.b16 %v6296, %v6288
    %v6953 = vpack.c.b16 %v6297, %v6289
    %v6954 = vpack.c.b16 %v6298, %v6290
    %v6955 = vpack.c.b16 %v6299, %v6291
    %v6956 = vpack.c.b16 %v6308, %v6300
    %v6957 = vpack.c.b16 %v6309, %v6301
    %v6958 = vpack.c.b16 %v6310, %v6302
    %v6959 = vpack.c.b16 %v6311, %v6303
    %v6960 = vpack.c.b16 %v6312, %v6304
    %v6961 = vpack.c.b16 %v6313, %v6305
    %v6962 = vpack.c.b16 %v6314, %v6306
    %v6963 = vpack.c.b16 %v6315, %v6307
    %v6964 = vpack.c.b16 %v6324, %v6316
    %v6965 = vpack.c.b16 %v6325, %v6317
    %v6966 = vpack.c.b16 %v6326, %v6318
    %v6967 = vpack.c.b16 %v6327, %v6319
    %v6968 = vpack.c.b16 %v6328, %v6320
    %v6969 = vpack.c.b16 %v6329, %v6321
    %v6970 = vpack.c.b16 %v6330, %v6322
    %v6971 = vpack.c.b16 %v6331, %v6323
    %v6972 = vpack.c.b16 %v6340, %v6332
    %v6973 = vpack.c.b16 %v6341, %v6333
    %v6974 = vpack.c.b16 %v6342, %v6334
    %v6975 = vpack.c.b16 %v6343, %v6335
    %v6976 = vpack.c.b16 %v6344, %v6336
    %v6977 = vpack.c.b16 %v6345, %v6337
    %v6978 = vpack.c.b16 %v6346, %v6338
    %v6979 = vpack.c.b16 %v6347, %v6339
    %v6980 = vpack.c.b16 %v6356, %v6348
    %v6981 = vpack.c.b16 %v6357, %v6349
    %v6982 = vpack.c.b16 %v6358, %v6350
    %v6983 = vpack.c.b16 %v6359, %v6351
    %v6984 = vpack.c.b16 %v6360, %v6352
    %v6985 = vpack.c.b16 %v6361, %v6353
    %v6986 = vpack.c.b16 %v6362, %v6354
    %v6987 = vpack.c.b16 %v6363, %v6355
    %v6988 = vpack.c.b16 %v6372, %v6364
    %v6989 = vpack.c.b16 %v6373, %v6365
    %v6990 = vpack.c.b16 %v6374, %v6366
    %v6991 = vpack.c.b16 %v6375, %v6367
    %v6992 = vpack.c.b16 %v6376, %v6368
    %v6993 = vpack.c.b16 %v6377, %v6369
    %v6994 = vpack.c.b16 %v6378, %v6370
    %v6995 = vpack.c.b16 %v6379, %v6371
    %v6996 = vpack.c.b16 %v6388, %v6380
    %v6997 = vpack.c.b16 %v6389, %v6381
    %v6998 = vpack.c.b16 %v6390, %v6382
    %v6999 = vpack.c.b16 %v6391, %v6383
    %v7000 = vpack.c.b16 %v6392, %v6384
    %v7001 = vpack.c.b16 %v6393, %v6385
    %v7002 = vpack.c.b16 %v6394, %v6386
    %v7003 = vpack.c.b16 %v6395, %v6387
    %v7004 = vpack.c.b16 %v6404, %v6396
    %v7005 = vpack.c.b16 %v6405, %v6397
    %v7006 = vpack.c.b16 %v6406, %v6398
    %v7007 = vpack.c.b16 %v6407, %v6399
    %v7008 = vpack.c.b16 %v6408, %v6400
    %v7009 = vpack.c.b16 %v6409, %v6401
    %v7010 = vpack.c.b16 %v6410, %v6402
    %v7011 = vpack.c.b16 %v6411, %v6403
    %v7012 = vpack.c.b16 %v6420, %v6412
    %v7013 = vpack.c.b16 %v6421, %v6413
    %v7014 = vpack.c.b16 %v6422, %v6414
    %v7015 = vpack.c.b16 %v6423, %v6415
    %v7016 = vpack.c.b16 %v6424, %v6416
    %v7017 = vpack.c.b16 %v6425, %v6417
    %v7018 = vpack.c.b16 %v6426, %v6418
    %v7019 = vpack.c.b16 %v6427, %v6419
    %v7020 = vpack.c.b16 %v6436, %v6428
    %v7021 = vpack.c.b16 %v6437, %v6429
    %v7022 = vpack.c.b16 %v6438, %v6430
    %v7023 = vpack.c.b16 %v6439, %v6431
    %v7024 = vpack.c.b16 %v6440, %v6432
    %v7025 = vpack.c.b16 %v6441, %v6433
    %v7026 = vpack.c.b16 %v6442, %v6434
    %v7027 = vpack.c.b16 %v6443, %v6435
    %v7028 = vpack.c.b16 %v6452, %v6444
    %v7029 = vpack.c.b16 %v6453, %v6445
    %v7030 = vpack.c.b16 %v6454, %v6446
    %v7031 = vpack.c.b16 %v6455, %v6447
    %v7032 = vpack.c.b16 %v6456, %v6448
    %v7033 = vpack.c.b16 %v6457, %v6449
    %v7034 = vpack.c.b16 %v6458, %v6450
    %v7035 = vpack.c.b16 %v6459, %v6451
    %v7036 = vpack.c.b16 %v6468, %v6460
    %v7037 = vpack.c.b16 %v6469, %v6461
    %v7038 = vpack.c.b16 %v6470, %v6462
    %v7039 = vpack.c.b16 %v6471, %v6463
    %v7040 = vpack.c.b16 %v6472, %v6464
    %v7041 = vpack.c.b16 %v6473, %v6465
    %v7042 = vpack.c.b16 %v6474, %v6466
    %v7043 = vpack.c.b16 %v6475, %v6467
    %v7044 = vpack.c.b16 %v6484, %v6476
    %v7045 = vpack.c.b16 %v6485, %v6477
    %v7046 = vpack.c.b16 %v6486, %v6478
    %v7047 = vpack.c.b16 %v6487, %v6479
    %v7048 = vpack.c.b16 %v6488, %v6480
    %v7049 = vpack.c.b16 %v6489, %v6481
    %v7050 = vpack.c.b16 %v6490, %v6482
    %v7051 = vpack.c.b16 %v6491, %v6483
    %v7052 = vpack.c.b16 %v6500, %v6492
    %v7053 = vpack.c.b16 %v6501, %v6493
    %v7054 = vpack.c.b16 %v6502, %v6494
    %v7055 = vpack.c.b16 %v6503, %v6495
    %v7056 = vpack.c.b16 %v6504, %v6496
    %v7057 = vpack.c.b16 %v6505, %v6497
    %v7058 = vpack.c.b16 %v6506, %v6498
    %v7059 = vpack.c.b16 %v6507, %v6499
    %v7060 = vpack.c.b16 %v6516, %v6508
    %v7061 = vpack.c.b16 %v6517, %v6509
    %v7062 = vpack.c.b16 %v6518, %v6510
    %v7063 = vpack.c.b16 %v6519, %v6511
    %v7064 = vpack.c.b16 %v6520, %v6512
    %v7065 = vpack.c.b16 %v6521, %v6513
    %v7066 = vpack.c.b16 %v6522, %v6514
    %v7067 = vpack.c.b16 %v6523, %v6515
    %v7068 = vpack.c.b16 %v6532, %v6524
    %v7069 = vpack.c.b16 %v6533, %v6525
    %v7070 = vpack.c.b16 %v6534, %v6526
    %v7071 = vpack.c.b16 %v6535, %v6527
    %v7072 = vpack.c.b16 %v6536, %v6528
    %v7073 = vpack.c.b16 %v6537, %v6529
    %v7074 = vpack.c.b16 %v6538, %v6530
    %v7075 = vpack.c.b16 %v6539, %v6531
    %v7076 = vpack.c.b16 %v6548, %v6540
    %v7077 = vpack.c.b16 %v6549, %v6541
    %v7078 = vpack.c.b16 %v6550, %v6542
    %v7079 = vpack.c.b16 %v6551, %v6543
    %v7080 = vpack.c.b16 %v6552, %v6544
    %v7081 = vpack.c.b16 %v6553, %v6545
    %v7082 = vpack.c.b16 %v6554, %v6546
    %v7083 = vpack.c.b16 %v6555, %v6547
    %v7084 = vpack.c.b16 %v6564, %v6556
    %v7085 = vpack.c.b16 %v6565, %v6557
    %v7086 = vpack.c.b16 %v6566, %v6558
    %v7087 = vpack.c.b16 %v6567, %v6559
    %v7088 = vpack.c.b16 %v6568, %v6560
    %v7089 = vpack.c.b16 %v6569, %v6561
    %v7090 = vpack.c.b16 %v6570, %v6562
    %v7091 = vpack.c.b16 %v6571, %v6563
    %v7092 = vpack.c.b16 %v6580, %v6572
    %v7093 = vpack.c.b16 %v6581, %v6573
    %v7094 = vpack.c.b16 %v6582, %v6574
    %v7095 = vpack.c.b16 %v6583, %v6575
    %v7096 = vpack.c.b16 %v6584, %v6576
    %v7097 = vpack.c.b16 %v6585, %v6577
    %v7098 = vpack.c.b16 %v6586, %v6578
    %v7099 = vpack.c.b16 %v6587, %v6579
    %7612 = vmatprep.subr.bf16.mxu0 %v6589
    %7613 = vmatpush1.bf16.msra.mxu0 %v6588
    %7614 = vmatprep.subr.bf16.mxu0 %v6597
    %7615 = vmatpush1.bf16.msra.mxu0 %v6596
    %7616 = vmatprep.subr.bf16.mxu0 %v6605
    %7617 = vmatpush1.bf16.msra.mxu0 %v6604
    %7618 = vmatprep.subr.bf16.mxu0 %v6613
    %7619 = vmatpush1.bf16.msra.mxu0 %v6612
    %7620 = vmatprep.subr.bf16.mxu0 %v6621
    %7621 = vmatpush1.bf16.msra.mxu0 %v6620
    %7622 = vmatprep.subr.bf16.mxu0 %v6629
    %7623 = vmatpush1.bf16.msra.mxu0 %v6628
    %7624 = vmatprep.subr.bf16.mxu0 %v6637
    %7625 = vmatpush1.bf16.msra.mxu0 %v6636
    %7626 = vmatprep.subr.bf16.mxu0 %v6645
    %7627 = vmatpush1.bf16.msra.mxu0 %v6644
    %7628 = vmatprep.subr.bf16.mxu0 %v6653
    %7629 = vmatpush1.bf16.msra.mxu0 %v6652
    %7630 = vmatprep.subr.bf16.mxu0 %v6661
    %7631 = vmatpush1.bf16.msra.mxu0 %v6660
    %7632 = vmatprep.subr.bf16.mxu0 %v6669
    %7633 = vmatpush1.bf16.msra.mxu0 %v6668
    %7634 = vmatprep.subr.bf16.mxu0 %v6677
    %7635 = vmatpush1.bf16.msra.mxu0 %v6676
    %7636 = vmatprep.subr.bf16.mxu0 %v6685
    %7637 = vmatpush1.bf16.msra.mxu0 %v6684
    %7638 = vmatprep.subr.bf16.mxu0 %v6693
    %7639 = vmatpush1.bf16.msra.mxu0 %v6692
    %7640 = vmatprep.subr.bf16.mxu0 %v6701
    %7641 = vmatpush1.bf16.msra.mxu0 %v6700
    %7642 = vmatprep.subr.bf16.mxu0 %v6709
    %7643 = vmatpush1.bf16.msra.mxu0 %v6708
    %7644 = vmatprep.mubr.bf16.mxu0 %v4491
    %7645 = vmatmul.mubr.bf16.gmra.mrb[0].mxu0 %v4490
    %v7646 = vpop.f32.mrb[0].mxu0
    %v7647 = vadd.f32 %v5015, %v7646
    %v7648 = vpop.f32.mrb[0].mxu0
    %v7649 = vadd.f32 %v5019, %v7648
    %v7650 = vpop.f32.mrb[0].mxu0
    %v7651 = vpop.f32.mrb[0].mxu0
    %7652 = vdwg.mxu0
    %7653 = vmatprep.subr.bf16.mxu0 %v6717
    %7654 = vmatpush1.bf16.msra.mxu0 %v6716
    %7655 = vmatprep.subr.bf16.mxu0 %v6725
    %7656 = vmatpush1.bf16.msra.mxu0 %v6724
    %7657 = vmatprep.subr.bf16.mxu0 %v6733
    %7658 = vmatpush1.bf16.msra.mxu0 %v6732
    %7659 = vmatprep.subr.bf16.mxu0 %v6741
    %7660 = vmatpush1.bf16.msra.mxu0 %v6740
    %7661 = vmatprep.subr.bf16.mxu0 %v6749
    %7662 = vmatpush1.bf16.msra.mxu0 %v6748
    %7663 = vmatprep.subr.bf16.mxu0 %v6757
    %7664 = vmatpush1.bf16.msra.mxu0 %v6756
    %7665 = vmatprep.subr.bf16.mxu0 %v6765
    %7666 = vmatpush1.bf16.msra.mxu0 %v6764
    %7667 = vmatprep.subr.bf16.mxu0 %v6773
    %7668 = vmatpush1.bf16.msra.mxu0 %v6772
    %7669 = vmatprep.subr.bf16.mxu0 %v6781
    %7670 = vmatpush1.bf16.msra.mxu0 %v6780
    %7671 = vmatprep.subr.bf16.mxu0 %v6789
    %7672 = vmatpush1.bf16.msra.mxu0 %v6788
    %7673 = vmatprep.subr.bf16.mxu0 %v6797
    %7674 = vmatpush1.bf16.msra.mxu0 %v6796
    %7675 = vmatprep.subr.bf16.mxu0 %v6805
    %7676 = vmatpush1.bf16.msra.mxu0 %v6804
    %7677 = vmatprep.subr.bf16.mxu0 %v6813
    %7678 = vmatpush1.bf16.msra.mxu0 %v6812
    %7679 = vmatprep.subr.bf16.mxu0 %v6821
    %7680 = vmatpush1.bf16.msra.mxu0 %v6820
    %7681 = vmatprep.subr.bf16.mxu0 %v6829
    %7682 = vmatpush1.bf16.msra.mxu0 %v6828
    %7683 = vmatprep.subr.bf16.mxu0 %v6837
    %7684 = vmatpush1.bf16.msra.mxu0 %v6836
    %7685 = vmatprep.mubr.bf16.mxu0 %v4493
    %7686 = vmatmul.mubr.bf16.gmra.mrb[0].mxu0 %v4492
    %v7687 = vpop.f32.mrb[0].mxu0
    %v7688 = vadd.f32 %v7647, %v7687
    %v7689 = vpop.f32.mrb[0].mxu0
    %v7690 = vadd.f32 %v7649, %v7689
    %v7691 = vpop.f32.mrb[0].mxu0
    %v7692 = vpop.f32.mrb[0].mxu0
    %7693 = vdwg.mxu0
    %7694 = vmatprep.subr.bf16.mxu0 %v6845
    %7695 = vmatpush1.bf16.msra.mxu0 %v6844
    %7696 = vmatprep.subr.bf16.mxu0 %v6853
    %7697 = vmatpush1.bf16.msra.mxu0 %v6852
    %7698 = vmatprep.subr.bf16.mxu0 %v6861
    %7699 = vmatpush1.bf16.msra.mxu0 %v6860
    %7700 = vmatprep.subr.bf16.mxu0 %v6869
    %7701 = vmatpush1.bf16.msra.mxu0 %v6868
    %7702 = vmatprep.subr.bf16.mxu0 %v6877
    %7703 = vmatpush1.bf16.msra.mxu0 %v6876
    %7704 = vmatprep.subr.bf16.mxu0 %v6885
    %7705 = vmatpush1.bf16.msra.mxu0 %v6884
    %7706 = vmatprep.subr.bf16.mxu0 %v6893
    %7707 = vmatpush1.bf16.msra.mxu0 %v6892
    %7708 = vmatprep.subr.bf16.mxu0 %v6901
    %7709 = vmatpush1.bf16.msra.mxu0 %v6900
    %7710 = vmatprep.subr.bf16.mxu0 %v6909
    %7711 = vmatpush1.bf16.msra.mxu0 %v6908
    %7712 = vmatprep.subr.bf16.mxu0 %v6917
    %7713 = vmatpush1.bf16.msra.mxu0 %v6916
    %7714 = vmatprep.subr.bf16.mxu0 %v6925
    %7715 = vmatpush1.bf16.msra.mxu0 %v6924
    %7716 = vmatprep.subr.bf16.mxu0 %v6933
    %7717 = vmatpush1.bf16.msra.mxu0 %v6932
    %7718 = vmatprep.subr.bf16.mxu0 %v6941
    %7719 = vmatpush1.bf16.msra.mxu0 %v6940
    %7720 = vmatprep.subr.bf16.mxu0 %v6949
    %7721 = vmatpush1.bf16.msra.mxu0 %v6948
    %7722 = vmatprep.subr.bf16.mxu0 %v6957
    %7723 = vmatpush1.bf16.msra.mxu0 %v6956
    %7724 = vmatprep.subr.bf16.mxu0 %v6965
    %7725 = vmatpush1.bf16.msra.mxu0 %v6964
    %7726 = vmatprep.mubr.bf16.mxu0 %v4495
    %7727 = vmatmul.mubr.bf16.gmra.mrb[0].mxu0 %v4494
    %v7728 = vpop.f32.mrb[0].mxu0
    %v7729 = vadd.f32 %v7688, %v7728
    %v7730 = vpop.f32.mrb[0].mxu0
    %v7731 = vadd.f32 %v7690, %v7730
    %v7732 = vpop.f32.mrb[0].mxu0
    %v7733 = vpop.f32.mrb[0].mxu0
    %7734 = vdwg.mxu0
    %7735 = vmatprep.subr.bf16.mxu0 %v6973
    %7736 = vmatpush1.bf16.msra.mxu0 %v6972
    %7737 = vmatprep.subr.bf16.mxu0 %v6981
    %7738 = vmatpush1.bf16.msra.mxu0 %v6980
    %7739 = vmatprep.subr.bf16.mxu0 %v6989
    %7740 = vmatpush1.bf16.msra.mxu0 %v6988
    %7741 = vmatprep.subr.bf16.mxu0 %v6997
    %7742 = vmatpush1.bf16.msra.mxu0 %v6996
    %7743 = vmatprep.subr.bf16.mxu0 %v7005
    %7744 = vmatpush1.bf16.msra.mxu0 %v7004
    %7745 = vmatprep.subr.bf16.mxu0 %v7013
    %7746 = vmatpush1.bf16.msra.mxu0 %v7012
    %7747 = vmatprep.subr.bf16.mxu0 %v7021
    %7748 = vmatpush1.bf16.msra.mxu0 %v7020
    %7749 = vmatprep.subr.bf16.mxu0 %v7029
    %7750 = vmatpush1.bf16.msra.mxu0 %v7028
    %7751 = vmatprep.subr.bf16.mxu0 %v7037
    %7752 = vmatpush1.bf16.msra.mxu0 %v7036
    %7753 = vmatprep.subr.bf16.mxu0 %v7045
    %7754 = vmatpush1.bf16.msra.mxu0 %v7044
    %7755 = vmatprep.subr.bf16.mxu0 %v7053
    %7756 = vmatpush1.bf16.msra.mxu0 %v7052
    %7757 = vmatprep.subr.bf16.mxu0 %v7061
    %7758 = vmatpush1.bf16.msra.mxu0 %v7060
    %7759 = vmatprep.subr.bf16.mxu0 %v7069
    %7760 = vmatpush1.bf16.msra.mxu0 %v7068
    %7761 = vmatprep.subr.bf16.mxu0 %v7077
    %7762 = vmatpush1.bf16.msra.mxu0 %v7076
    %7763 = vmatprep.subr.bf16.mxu0 %v7085
    %7764 = vmatpush1.bf16.msra.mxu0 %v7084
    %7765 = vmatprep.subr.bf16.mxu0 %v7093
    %7766 = vmatpush1.bf16.msra.mxu0 %v7092
    %7767 = vmatprep.mubr.bf16.mxu0 %v4497
    %7768 = vmatmul.mubr.bf16.gmra.mrb[0].mxu0 %v4496
    %v7769 = vpop.f32.mrb[0].mxu0
    %v7770 = vadd.f32 %v7729, %v7769
    %v7771 = vpop.f32.mrb[0].mxu0
    %v7772 = vadd.f32 %v7731, %v7771
    %v7773 = vpop.f32.mrb[0].mxu0
    %v7774 = vpop.f32.mrb[0].mxu0
    %7775 = vdwg.mxu0
    %7776 = vmatprep.subr.bf16.mxu0 %v6591
    %7777 = vmatpush1.bf16.msra.mxu0 %v6590
    %7778 = vmatprep.subr.bf16.mxu0 %v6599
    %7779 = vmatpush1.bf16.msra.mxu0 %v6598
    %7780 = vmatprep.subr.bf16.mxu0 %v6607
    %7781 = vmatpush1.bf16.msra.mxu0 %v6606
    %7782 = vmatprep.subr.bf16.mxu0 %v6615
    %7783 = vmatpush1.bf16.msra.mxu0 %v6614
    %7784 = vmatprep.subr.bf16.mxu0 %v6623
    %7785 = vmatpush1.bf16.msra.mxu0 %v6622
    %7786 = vmatprep.subr.bf16.mxu0 %v6631
    %7787 = vmatpush1.bf16.msra.mxu0 %v6630
    %7788 = vmatprep.subr.bf16.mxu0 %v6639
    %7789 = vmatpush1.bf16.msra.mxu0 %v6638
    %7790 = vmatprep.subr.bf16.mxu0 %v6647
    %7791 = vmatpush1.bf16.msra.mxu0 %v6646
    %7792 = vmatprep.subr.bf16.mxu0 %v6655
    %7793 = vmatpush1.bf16.msra.mxu0 %v6654
    %7794 = vmatprep.subr.bf16.mxu0 %v6663
    %7795 = vmatpush1.bf16.msra.mxu0 %v6662
    %7796 = vmatprep.subr.bf16.mxu0 %v6671
    %7797 = vmatpush1.bf16.msra.mxu0 %v6670
    %7798 = vmatprep.subr.bf16.mxu0 %v6679
    %7799 = vmatpush1.bf16.msra.mxu0 %v6678
    %7800 = vmatprep.subr.bf16.mxu0 %v6687
    %7801 = vmatpush1.bf16.msra.mxu0 %v6686
    %7802 = vmatprep.subr.bf16.mxu0 %v6695
    %7803 = vmatpush1.bf16.msra.mxu0 %v6694
    %7804 = vmatprep.subr.bf16.mxu0 %v6703
    %7805 = vmatpush1.bf16.msra.mxu0 %v6702
    %7806 = vmatprep.subr.bf16.mxu0 %v6711
    %7807 = vmatpush1.bf16.msra.mxu0 %v6710
    %7808 = vmatprep.mubr.bf16.mxu0 %v4491
    %7809 = vmatmul.mubr.bf16.gmra.mrb[0].mxu0 %v4490
    %v7810 = vpop.f32.mrb[0].mxu0
    %v7811 = vadd.f32 %v5023, %v7810
    %v7812 = vpop.f32.mrb[0].mxu0
    %v7813 = vadd.f32 %v5027, %v7812
    %v7814 = vpop.f32.mrb[0].mxu0
    %v7815 = vpop.f32.mrb[0].mxu0
    %7816 = vdwg.mxu0
    %7817 = vmatprep.subr.bf16.mxu0 %v6719
    %7818 = vmatpush1.bf16.msra.mxu0 %v6718
    %7819 = vmatprep.subr.bf16.mxu0 %v6727
    %7820 = vmatpush1.bf16.msra.mxu0 %v6726
    %7821 = vmatprep.subr.bf16.mxu0 %v6735
    %7822 = vmatpush1.bf16.msra.mxu0 %v6734
    %7823 = vmatprep.subr.bf16.mxu0 %v6743
    %7824 = vmatpush1.bf16.msra.mxu0 %v6742
    %7825 = vmatprep.subr.bf16.mxu0 %v6751
    %7826 = vmatpush1.bf16.msra.mxu0 %v6750
    %7827 = vmatprep.subr.bf16.mxu0 %v6759
    %7828 = vmatpush1.bf16.msra.mxu0 %v6758
    %7829 = vmatprep.subr.bf16.mxu0 %v6767
    %7830 = vmatpush1.bf16.msra.mxu0 %v6766
    %7831 = vmatprep.subr.bf16.mxu0 %v6775
    %7832 = vmatpush1.bf16.msra.mxu0 %v6774
    %7833 = vmatprep.subr.bf16.mxu0 %v6783
    %7834 = vmatpush1.bf16.msra.mxu0 %v6782
    %7835 = vmatprep.subr.bf16.mxu0 %v6791
    %7836 = vmatpush1.bf16.msra.mxu0 %v6790
    %7837 = vmatprep.subr.bf16.mxu0 %v6799
    %7838 = vmatpush1.bf16.msra.mxu0 %v6798
    %7839 = vmatprep.subr.bf16.mxu0 %v6807
    %7840 = vmatpush1.bf16.msra.mxu0 %v6806
    %7841 = vmatprep.subr.bf16.mxu0 %v6815
    %7842 = vmatpush1.bf16.msra.mxu0 %v6814
    %7843 = vmatprep.subr.bf16.mxu0 %v6823
    %7844 = vmatpush1.bf16.msra.mxu0 %v6822
    %7845 = vmatprep.subr.bf16.mxu0 %v6831
    %7846 = vmatpush1.bf16.msra.mxu0 %v6830
    %7847 = vmatprep.subr.bf16.mxu0 %v6839
    %7848 = vmatpush1.bf16.msra.mxu0 %v6838
    %7849 = vmatprep.mubr.bf16.mxu0 %v4493
    %7850 = vmatmul.mubr.bf16.gmra.mrb[0].mxu0 %v4492
    %v7851 = vpop.f32.mrb[0].mxu0
    %v7852 = vadd.f32 %v7811, %v7851
    %v7853 = vpop.f32.mrb[0].mxu0
    %v7854 = vadd.f32 %v7813, %v7853
    %v7855 = vpop.f32.mrb[0].mxu0
    %v7856 = vpop.f32.mrb[0].mxu0
    %7857 = vdwg.mxu0
    %7858 = vmatprep.subr.bf16.mxu0 %v6847
    %7859 = vmatpush1.bf16.msra.mxu0 %v6846
    %7860 = vmatprep.subr.bf16.mxu0 %v6855
    %7861 = vmatpush1.bf16.msra.mxu0 %v6854
    %7862 = vmatprep.subr.bf16.mxu0 %v6863
    %7863 = vmatpush1.bf16.msra.mxu0 %v6862
    %7864 = vmatprep.subr.bf16.mxu0 %v6871
    %7865 = vmatpush1.bf16.msra.mxu0 %v6870
    %7866 = vmatprep.subr.bf16.mxu0 %v6879
    %7867 = vmatpush1.bf16.msra.mxu0 %v6878
    %7868 = vmatprep.subr.bf16.mxu0 %v6887
    %7869 = vmatpush1.bf16.msra.mxu0 %v6886
    %7870 = vmatprep.subr.bf16.mxu0 %v6895
    %7871 = vmatpush1.bf16.msra.mxu0 %v6894
    %7872 = vmatprep.subr.bf16.mxu0 %v6903
    %7873 = vmatpush1.bf16.msra.mxu0 %v6902
    %7874 = vmatprep.subr.bf16.mxu0 %v6911
    %7875 = vmatpush1.bf16.msra.mxu0 %v6910
    %7876 = vmatprep.subr.bf16.mxu0 %v6919
    %7877 = vmatpush1.bf16.msra.mxu0 %v6918
    %7878 = vmatprep.subr.bf16.mxu0 %v6927
    %7879 = vmatpush1.bf16.msra.mxu0 %v6926
    %7880 = vmatprep.subr.bf16.mxu0 %v6935
    %7881 = vmatpush1.bf16.msra.mxu0 %v6934
    %7882 = vmatprep.subr.bf16.mxu0 %v6943
    %7883 = vmatpush1.bf16.msra.mxu0 %v6942
    %7884 = vmatprep.subr.bf16.mxu0 %v6951
    %7885 = vmatpush1.bf16.msra.mxu0 %v6950
    %7886 = vmatprep.subr.bf16.mxu0 %v6959
    %7887 = vmatpush1.bf16.msra.mxu0 %v6958
    %7888 = vmatprep.subr.bf16.mxu0 %v6967
    %7889 = vmatpush1.bf16.msra.mxu0 %v6966
    %7890 = vmatprep.mubr.bf16.mxu0 %v4495
    %7891 = vmatmul.mubr.bf16.gmra.mrb[0].mxu0 %v4494
    %v7892 = vpop.f32.mrb[0].mxu0
    %v7893 = vadd.f32 %v7852, %v7892
    %v7894 = vpop.f32.mrb[0].mxu0
    %v7895 = vadd.f32 %v7854, %v7894
    %v7896 = vpop.f32.mrb[0].mxu0
    %v7897 = vpop.f32.mrb[0].mxu0
    %7898 = vdwg.mxu0
    %7899 = vmatprep.subr.bf16.mxu0 %v6975
    %7900 = vmatpush1.bf16.msra.mxu0 %v6974
    %7901 = vmatprep.subr.bf16.mxu0 %v6983
    %7902 = vmatpush1.bf16.msra.mxu0 %v6982
    %7903 = vmatprep.subr.bf16.mxu0 %v6991
    %7904 = vmatpush1.bf16.msra.mxu0 %v6990
    %7905 = vmatprep.subr.bf16.mxu0 %v6999
    %7906 = vmatpush1.bf16.msra.mxu0 %v6998
    %7907 = vmatprep.subr.bf16.mxu0 %v7007
    %7908 = vmatpush1.bf16.msra.mxu0 %v7006
    %7909 = vmatprep.subr.bf16.mxu0 %v7015
    %7910 = vmatpush1.bf16.msra.mxu0 %v7014
    %7911 = vmatprep.subr.bf16.mxu0 %v7023
    %7912 = vmatpush1.bf16.msra.mxu0 %v7022
    %7913 = vmatprep.subr.bf16.mxu0 %v7031
    %7914 = vmatpush1.bf16.msra.mxu0 %v7030
    %7915 = vmatprep.subr.bf16.mxu0 %v7039
    %7916 = vmatpush1.bf16.msra.mxu0 %v7038
    %7917 = vmatprep.subr.bf16.mxu0 %v7047
    %7918 = vmatpush1.bf16.msra.mxu0 %v7046
    %7919 = vmatprep.subr.bf16.mxu0 %v7055
    %7920 = vmatpush1.bf16.msra.mxu0 %v7054
    %7921 = vmatprep.subr.bf16.mxu0 %v7063
    %7922 = vmatpush1.bf16.msra.mxu0 %v7062
    %7923 = vmatprep.subr.bf16.mxu0 %v7071
    %7924 = vmatpush1.bf16.msra.mxu0 %v7070
    %7925 = vmatprep.subr.bf16.mxu0 %v7079
    %7926 = vmatpush1.bf16.msra.mxu0 %v7078
    %7927 = vmatprep.subr.bf16.mxu0 %v7087
    %7928 = vmatpush1.bf16.msra.mxu0 %v7086
    %7929 = vmatprep.subr.bf16.mxu0 %v7095
    %7930 = vmatpush1.bf16.msra.mxu0 %v7094
    %7931 = vmatprep.mubr.bf16.mxu0 %v4497
    %7932 = vmatmul.mubr.bf16.gmra.mrb[0].mxu0 %v4496
    %v7933 = vpop.f32.mrb[0].mxu0
    %v7934 = vadd.f32 %v7893, %v7933
    %v7935 = vpop.f32.mrb[0].mxu0
    %v7936 = vadd.f32 %v7895, %v7935
    %v7937 = vpop.f32.mrb[0].mxu0
    %v7938 = vpop.f32.mrb[0].mxu0
    %7939 = vdwg.mxu0
    %7940 = vmatprep.subr.bf16.mxu0 %v6593
    %7941 = vmatpush1.bf16.msra.mxu0 %v6592
    %7942 = vmatprep.subr.bf16.mxu0 %v6601
    %7943 = vmatpush1.bf16.msra.mxu0 %v6600
    %7944 = vmatprep.subr.bf16.mxu0 %v6609
    %7945 = vmatpush1.bf16.msra.mxu0 %v6608
    %7946 = vmatprep.subr.bf16.mxu0 %v6617
    %7947 = vmatpush1.bf16.msra.mxu0 %v6616
    %7948 = vmatprep.subr.bf16.mxu0 %v6625
    %7949 = vmatpush1.bf16.msra.mxu0 %v6624
    %7950 = vmatprep.subr.bf16.mxu0 %v6633
    %7951 = vmatpush1.bf16.msra.mxu0 %v6632
    %7952 = vmatprep.subr.bf16.mxu0 %v6641
    %7953 = vmatpush1.bf16.msra.mxu0 %v6640
    %7954 = vmatprep.subr.bf16.mxu0 %v6649
    %7955 = vmatpush1.bf16.msra.mxu0 %v6648
    %7956 = vmatprep.subr.bf16.mxu0 %v6657
    %7957 = vmatpush1.bf16.msra.mxu0 %v6656
    %7958 = vmatprep.subr.bf16.mxu0 %v6665
    %7959 = vmatpush1.bf16.msra.mxu0 %v6664
    %7960 = vmatprep.subr.bf16.mxu0 %v6673
    %7961 = vmatpush1.bf16.msra.mxu0 %v6672
    %7962 = vmatprep.subr.bf16.mxu0 %v6681
    %7963 = vmatpush1.bf16.msra.mxu0 %v6680
    %7964 = vmatprep.subr.bf16.mxu0 %v6689
    %7965 = vmatpush1.bf16.msra.mxu0 %v6688
    %7966 = vmatprep.subr.bf16.mxu0 %v6697
    %7967 = vmatpush1.bf16.msra.mxu0 %v6696
    %7968 = vmatprep.subr.bf16.mxu0 %v6705
    %7969 = vmatpush1.bf16.msra.mxu0 %v6704
    %7970 = vmatprep.subr.bf16.mxu0 %v6713
    %7971 = vmatpush1.bf16.msra.mxu0 %v6712
    %7972 = vmatprep.mubr.bf16.mxu0 %v4491
    %7973 = vmatmul.mubr.bf16.gmra.mrb[0].mxu0 %v4490
    %v7974 = vpop.f32.mrb[0].mxu0
    %v7975 = vadd.f32 %v5031, %v7974
    %v7976 = vpop.f32.mrb[0].mxu0
    %v7977 = vadd.f32 %v5035, %v7976
    %v7978 = vpop.f32.mrb[0].mxu0
    %v7979 = vpop.f32.mrb[0].mxu0
    %7980 = vdwg.mxu0
    %7981 = vmatprep.subr.bf16.mxu0 %v6721
    %7982 = vmatpush1.bf16.msra.mxu0 %v6720
    %7983 = vmatprep.subr.bf16.mxu0 %v6729
    %7984 = vmatpush1.bf16.msra.mxu0 %v6728
    %7985 = vmatprep.subr.bf16.mxu0 %v6737
    %7986 = vmatpush1.bf16.msra.mxu0 %v6736
    %7987 = vmatprep.subr.bf16.mxu0 %v6745
    %7988 = vmatpush1.bf16.msra.mxu0 %v6744
    %7989 = vmatprep.subr.bf16.mxu0 %v6753
    %7990 = vmatpush1.bf16.msra.mxu0 %v6752
    %7991 = vmatprep.subr.bf16.mxu0 %v6761
    %7992 = vmatpush1.bf16.msra.mxu0 %v6760
    %7993 = vmatprep.subr.bf16.mxu0 %v6769
    %7994 = vmatpush1.bf16.msra.mxu0 %v6768
    %7995 = vmatprep.subr.bf16.mxu0 %v6777
    %7996 = vmatpush1.bf16.msra.mxu0 %v6776
    %7997 = vmatprep.subr.bf16.mxu0 %v6785
    %7998 = vmatpush1.bf16.msra.mxu0 %v6784
    %7999 = vmatprep.subr.bf16.mxu0 %v6793
    %8000 = vmatpush1.bf16.msra.mxu0 %v6792
    %8001 = vmatprep.subr.bf16.mxu0 %v6801
    %8002 = vmatpush1.bf16.msra.mxu0 %v6800
    %8003 = vmatprep.subr.bf16.mxu0 %v6809
    %8004 = vmatpush1.bf16.msra.mxu0 %v6808
    %8005 = vmatprep.subr.bf16.mxu0 %v6817
    %8006 = vmatpush1.bf16.msra.mxu0 %v6816
    %8007 = vmatprep.subr.bf16.mxu0 %v6825
    %8008 = vmatpush1.bf16.msra.mxu0 %v6824
    %8009 = vmatprep.subr.bf16.mxu0 %v6833
    %8010 = vmatpush1.bf16.msra.mxu0 %v6832
    %8011 = vmatprep.subr.bf16.mxu0 %v6841
    %8012 = vmatpush1.bf16.msra.mxu0 %v6840
    %8013 = vmatprep.mubr.bf16.mxu0 %v4493
    %8014 = vmatmul.mubr.bf16.gmra.mrb[0].mxu0 %v4492
    %v8015 = vpop.f32.mrb[0].mxu0
    %v8016 = vadd.f32 %v7975, %v8015
    %v8017 = vpop.f32.mrb[0].mxu0
    %v8018 = vadd.f32 %v7977, %v8017
    %v8019 = vpop.f32.mrb[0].mxu0
    %v8020 = vpop.f32.mrb[0].mxu0
    %8021 = vdwg.mxu0
    %8022 = vmatprep.subr.bf16.mxu0 %v6849
    %8023 = vmatpush1.bf16.msra.mxu0 %v6848
    %8024 = vmatprep.subr.bf16.mxu0 %v6857
    %8025 = vmatpush1.bf16.msra.mxu0 %v6856
    %8026 = vmatprep.subr.bf16.mxu0 %v6865
    %8027 = vmatpush1.bf16.msra.mxu0 %v6864
    %8028 = vmatprep.subr.bf16.mxu0 %v6873
    %8029 = vmatpush1.bf16.msra.mxu0 %v6872
    %8030 = vmatprep.subr.bf16.mxu0 %v6881
    %8031 = vmatpush1.bf16.msra.mxu0 %v6880
    %8032 = vmatprep.subr.bf16.mxu0 %v6889
    %8033 = vmatpush1.bf16.msra.mxu0 %v6888
    %8034 = vmatprep.subr.bf16.mxu0 %v6897
    %8035 = vmatpush1.bf16.msra.mxu0 %v6896
    %8036 = vmatprep.subr.bf16.mxu0 %v6905
    %8037 = vmatpush1.bf16.msra.mxu0 %v6904
    %8038 = vmatprep.subr.bf16.mxu0 %v6913
    %8039 = vmatpush1.bf16.msra.mxu0 %v6912
    %8040 = vmatprep.subr.bf16.mxu0 %v6921
    %8041 = vmatpush1.bf16.msra.mxu0 %v6920
    %8042 = vmatprep.subr.bf16.mxu0 %v6929
    %8043 = vmatpush1.bf16.msra.mxu0 %v6928
    %8044 = vmatprep.subr.bf16.mxu0 %v6937
    %8045 = vmatpush1.bf16.msra.mxu0 %v6936
    %8046 = vmatprep.subr.bf16.mxu0 %v6945
    %8047 = vmatpush1.bf16.msra.mxu0 %v6944
    %8048 = vmatprep.subr.bf16.mxu0 %v6953
    %8049 = vmatpush1.bf16.msra.mxu0 %v6952
    %8050 = vmatprep.subr.bf16.mxu0 %v6961
    %8051 = vmatpush1.bf16.msra.mxu0 %v6960
    %8052 = vmatprep.subr.bf16.mxu0 %v6969
    %8053 = vmatpush1.bf16.msra.mxu0 %v6968
    %8054 = vmatprep.mubr.bf16.mxu0 %v4495
    %8055 = vmatmul.mubr.bf16.gmra.mrb[0].mxu0 %v4494
    %v8056 = vpop.f32.mrb[0].mxu0
    %v8057 = vadd.f32 %v8016, %v8056
    %v8058 = vpop.f32.mrb[0].mxu0
    %v8059 = vadd.f32 %v8018, %v8058
    %v8060 = vpop.f32.mrb[0].mxu0
    %v8061 = vpop.f32.mrb[0].mxu0
    %8062 = vdwg.mxu0
    %8063 = vmatprep.subr.bf16.mxu0 %v6977
    %8064 = vmatpush1.bf16.msra.mxu0 %v6976
    %8065 = vmatprep.subr.bf16.mxu0 %v6985
    %8066 = vmatpush1.bf16.msra.mxu0 %v6984
    %8067 = vmatprep.subr.bf16.mxu0 %v6993
    %8068 = vmatpush1.bf16.msra.mxu0 %v6992
    %8069 = vmatprep.subr.bf16.mxu0 %v7001
    %8070 = vmatpush1.bf16.msra.mxu0 %v7000
    %8071 = vmatprep.subr.bf16.mxu0 %v7009
    %8072 = vmatpush1.bf16.msra.mxu0 %v7008
    %8073 = vmatprep.subr.bf16.mxu0 %v7017
    %8074 = vmatpush1.bf16.msra.mxu0 %v7016
    %8075 = vmatprep.subr.bf16.mxu0 %v7025
    %8076 = vmatpush1.bf16.msra.mxu0 %v7024
    %8077 = vmatprep.subr.bf16.mxu0 %v7033
    %8078 = vmatpush1.bf16.msra.mxu0 %v7032
    %8079 = vmatprep.subr.bf16.mxu0 %v7041
    %8080 = vmatpush1.bf16.msra.mxu0 %v7040
    %8081 = vmatprep.subr.bf16.mxu0 %v7049
    %8082 = vmatpush1.bf16.msra.mxu0 %v7048
    %8083 = vmatprep.subr.bf16.mxu0 %v7057
    %8084 = vmatpush1.bf16.msra.mxu0 %v7056
    %8085 = vmatprep.subr.bf16.mxu0 %v7065
    %8086 = vmatpush1.bf16.msra.mxu0 %v7064
    %8087 = vmatprep.subr.bf16.mxu0 %v7073
    %8088 = vmatpush1.bf16.msra.mxu0 %v7072
    %8089 = vmatprep.subr.bf16.mxu0 %v7081
    %8090 = vmatpush1.bf16.msra.mxu0 %v7080
    %8091 = vmatprep.subr.bf16.mxu0 %v7089
    %8092 = vmatpush1.bf16.msra.mxu0 %v7088
    %8093 = vmatprep.subr.bf16.mxu0 %v7097
    %8094 = vmatpush1.bf16.msra.mxu0 %v7096
    %8095 = vmatprep.mubr.bf16.mxu0 %v4497
    %8096 = vmatmul.mubr.bf16.gmra.mrb[0].mxu0 %v4496
    %v8097 = vpop.f32.mrb[0].mxu0
    %v8098 = vadd.f32 %v8057, %v8097
    %v8099 = vpop.f32.mrb[0].mxu0
    %v8100 = vadd.f32 %v8059, %v8099
    %v8101 = vpop.f32.mrb[0].mxu0
    %v8102 = vpop.f32.mrb[0].mxu0
    %8103 = vdwg.mxu0
    %8104 = vmatprep.subr.bf16.mxu0 %v6595
    %8105 = vmatpush1.bf16.msra.mxu0 %v6594
    %8106 = vmatprep.subr.bf16.mxu0 %v6603
    %8107 = vmatpush1.bf16.msra.mxu0 %v6602
    %8108 = vmatprep.subr.bf16.mxu0 %v6611
    %8109 = vmatpush1.bf16.msra.mxu0 %v6610
    %8110 = vmatprep.subr.bf16.mxu0 %v6619
    %8111 = vmatpush1.bf16.msra.mxu0 %v6618
    %8112 = vmatprep.subr.bf16.mxu0 %v6627
    %8113 = vmatpush1.bf16.msra.mxu0 %v6626
    %8114 = vmatprep.subr.bf16.mxu0 %v6635
    %8115 = vmatpush1.bf16.msra.mxu0 %v6634
    %8116 = vmatprep.subr.bf16.mxu0 %v6643
    %8117 = vmatpush1.bf16.msra.mxu0 %v6642
    %8118 = vmatprep.subr.bf16.mxu0 %v6651
    %8119 = vmatpush1.bf16.msra.mxu0 %v6650
    %8120 = vmatprep.subr.bf16.mxu0 %v6659
    %8121 = vmatpush1.bf16.msra.mxu0 %v6658
    %8122 = vmatprep.subr.bf16.mxu0 %v6667
    %8123 = vmatpush1.bf16.msra.mxu0 %v6666
    %8124 = vmatprep.subr.bf16.mxu0 %v6675
    %8125 = vmatpush1.bf16.msra.mxu0 %v6674
    %8126 = vmatprep.subr.bf16.mxu0 %v6683
    %8127 = vmatpush1.bf16.msra.mxu0 %v6682
    %8128 = vmatprep.subr.bf16.mxu0 %v6691
    %8129 = vmatpush1.bf16.msra.mxu0 %v6690
    %8130 = vmatprep.subr.bf16.mxu0 %v6699
    %8131 = vmatpush1.bf16.msra.mxu0 %v6698
    %8132 = vmatprep.subr.bf16.mxu0 %v6707
    %8133 = vmatpush1.bf16.msra.mxu0 %v6706
    %8134 = vmatprep.subr.bf16.mxu0 %v6715
    %8135 = vmatpush1.bf16.msra.mxu0 %v6714
    %8136 = vmatprep.mubr.bf16.mxu0 %v4491
    %8137 = vmatmul.mubr.bf16.gmra.mrb[0].mxu0 %v4490
    %v8138 = vpop.f32.mrb[0].mxu0
    %v8139 = vadd.f32 %v5039, %v8138
    %v8140 = vpop.f32.mrb[0].mxu0
    %v8141 = vadd.f32 %v5043, %v8140
    %v8142 = vpop.f32.mrb[0].mxu0
    %v8143 = vpop.f32.mrb[0].mxu0
    %8144 = vdwg.mxu0
    %8145 = vmatprep.subr.bf16.mxu0 %v6723
    %8146 = vmatpush1.bf16.msra.mxu0 %v6722
    %8147 = vmatprep.subr.bf16.mxu0 %v6731
    %8148 = vmatpush1.bf16.msra.mxu0 %v6730
    %8149 = vmatprep.subr.bf16.mxu0 %v6739
    %8150 = vmatpush1.bf16.msra.mxu0 %v6738
    %8151 = vmatprep.subr.bf16.mxu0 %v6747
    %8152 = vmatpush1.bf16.msra.mxu0 %v6746
    %8153 = vmatprep.subr.bf16.mxu0 %v6755
    %8154 = vmatpush1.bf16.msra.mxu0 %v6754
    %8155 = vmatprep.subr.bf16.mxu0 %v6763
    %8156 = vmatpush1.bf16.msra.mxu0 %v6762
    %8157 = vmatprep.subr.bf16.mxu0 %v6771
    %8158 = vmatpush1.bf16.msra.mxu0 %v6770
    %8159 = vmatprep.subr.bf16.mxu0 %v6779
    %8160 = vmatpush1.bf16.msra.mxu0 %v6778
    %8161 = vmatprep.subr.bf16.mxu0 %v6787
    %8162 = vmatpush1.bf16.msra.mxu0 %v6786
    %8163 = vmatprep.subr.bf16.mxu0 %v6795
    %8164 = vmatpush1.bf16.msra.mxu0 %v6794
    %8165 = vmatprep.subr.bf16.mxu0 %v6803
    %8166 = vmatpush1.bf16.msra.mxu0 %v6802
    %8167 = vmatprep.subr.bf16.mxu0 %v6811
    %8168 = vmatpush1.bf16.msra.mxu0 %v6810
    %8169 = vmatprep.subr.bf16.mxu0 %v6819
    %8170 = vmatpush1.bf16.msra.mxu0 %v6818
    %8171 = vmatprep.subr.bf16.mxu0 %v6827
    %8172 = vmatpush1.bf16.msra.mxu0 %v6826
    %8173 = vmatprep.subr.bf16.mxu0 %v6835
    %8174 = vmatpush1.bf16.msra.mxu0 %v6834
    %8175 = vmatprep.subr.bf16.mxu0 %v6843
    %8176 = vmatpush1.bf16.msra.mxu0 %v6842
    %8177 = vmatprep.mubr.bf16.mxu0 %v4493
    %8178 = vmatmul.mubr.bf16.gmra.mrb[0].mxu0 %v4492
    %v8179 = vpop.f32.mrb[0].mxu0
    %v8180 = vadd.f32 %v8139, %v8179
    %v8181 = vpop.f32.mrb[0].mxu0
    %v8182 = vadd.f32 %v8141, %v8181
    %v8183 = vpop.f32.mrb[0].mxu0
    %v8184 = vpop.f32.mrb[0].mxu0
    %8185 = vdwg.mxu0
    %8186 = vmatprep.subr.bf16.mxu0 %v6851
    %8187 = vmatpush1.bf16.msra.mxu0 %v6850
    %8188 = vmatprep.subr.bf16.mxu0 %v6859
    %8189 = vmatpush1.bf16.msra.mxu0 %v6858
    %8190 = vmatprep.subr.bf16.mxu0 %v6867
    %8191 = vmatpush1.bf16.msra.mxu0 %v6866
    %8192 = vmatprep.subr.bf16.mxu0 %v6875
    %8193 = vmatpush1.bf16.msra.mxu0 %v6874
    %8194 = vmatprep.subr.bf16.mxu0 %v6883
    %8195 = vmatpush1.bf16.msra.mxu0 %v6882
    %8196 = vmatprep.subr.bf16.mxu0 %v6891
    %8197 = vmatpush1.bf16.msra.mxu0 %v6890
    %8198 = vmatprep.subr.bf16.mxu0 %v6899
    %8199 = vmatpush1.bf16.msra.mxu0 %v6898
    %8200 = vmatprep.subr.bf16.mxu0 %v6907
    %8201 = vmatpush1.bf16.msra.mxu0 %v6906
    %8202 = vmatprep.subr.bf16.mxu0 %v6915
    %8203 = vmatpush1.bf16.msra.mxu0 %v6914
    %8204 = vmatprep.subr.bf16.mxu0 %v6923
    %8205 = vmatpush1.bf16.msra.mxu0 %v6922
    %8206 = vmatprep.subr.bf16.mxu0 %v6931
    %8207 = vmatpush1.bf16.msra.mxu0 %v6930
    %8208 = vmatprep.subr.bf16.mxu0 %v6939
    %8209 = vmatpush1.bf16.msra.mxu0 %v6938
    %8210 = vmatprep.subr.bf16.mxu0 %v6947
    %8211 = vmatpush1.bf16.msra.mxu0 %v6946
    %8212 = vmatprep.subr.bf16.mxu0 %v6955
    %8213 = vmatpush1.bf16.msra.mxu0 %v6954
    %8214 = vmatprep.subr.bf16.mxu0 %v6963
    %8215 = vmatpush1.bf16.msra.mxu0 %v6962
    %8216 = vmatprep.subr.bf16.mxu0 %v6971
    %8217 = vmatpush1.bf16.msra.mxu0 %v6970
    %8218 = vmatprep.mubr.bf16.mxu0 %v4495
    %8219 = vmatmul.mubr.bf16.gmra.mrb[0].mxu0 %v4494
    %v8220 = vpop.f32.mrb[0].mxu0
    %v8221 = vadd.f32 %v8180, %v8220
    %v8222 = vpop.f32.mrb[0].mxu0
    %v8223 = vadd.f32 %v8182, %v8222
    %v8224 = vpop.f32.mrb[0].mxu0
    %v8225 = vpop.f32.mrb[0].mxu0
    %8226 = vdwg.mxu0
    %8227 = vmatprep.subr.bf16.mxu0 %v6979
    %8228 = vmatpush1.bf16.msra.mxu0 %v6978
    %8229 = vmatprep.subr.bf16.mxu0 %v6987
    %8230 = vmatpush1.bf16.msra.mxu0 %v6986
    %8231 = vmatprep.subr.bf16.mxu0 %v6995
    %8232 = vmatpush1.bf16.msra.mxu0 %v6994
    %8233 = vmatprep.subr.bf16.mxu0 %v7003
    %8234 = vmatpush1.bf16.msra.mxu0 %v7002
    %8235 = vmatprep.subr.bf16.mxu0 %v7011
    %8236 = vmatpush1.bf16.msra.mxu0 %v7010
    %8237 = vmatprep.subr.bf16.mxu0 %v7019
    %8238 = vmatpush1.bf16.msra.mxu0 %v7018
    %8239 = vmatprep.subr.bf16.mxu0 %v7027
    %8240 = vmatpush1.bf16.msra.mxu0 %v7026
    %8241 = vmatprep.subr.bf16.mxu0 %v7035
    %8242 = vmatpush1.bf16.msra.mxu0 %v7034
    %8243 = vmatprep.subr.bf16.mxu0 %v7043
    %8244 = vmatpush1.bf16.msra.mxu0 %v7042
    %8245 = vmatprep.subr.bf16.mxu0 %v7051
    %8246 = vmatpush1.bf16.msra.mxu0 %v7050
    %8247 = vmatprep.subr.bf16.mxu0 %v7059
    %8248 = vmatpush1.bf16.msra.mxu0 %v7058
    %8249 = vmatprep.subr.bf16.mxu0 %v7067
    %8250 = vmatpush1.bf16.msra.mxu0 %v7066
    %8251 = vmatprep.subr.bf16.mxu0 %v7075
    %8252 = vmatpush1.bf16.msra.mxu0 %v7074
    %8253 = vmatprep.subr.bf16.mxu0 %v7083
    %8254 = vmatpush1.bf16.msra.mxu0 %v7082
    %8255 = vmatprep.subr.bf16.mxu0 %v7091
    %8256 = vmatpush1.bf16.msra.mxu0 %v7090
    %8257 = vmatprep.subr.bf16.mxu0 %v7099
    %8258 = vmatpush1.bf16.msra.mxu0 %v7098
    %8259 = vmatprep.mubr.bf16.mxu0 %v4497
    %8260 = vmatmul.mubr.bf16.gmra.mrb[0].mxu0 %v4496
    %v8261 = vpop.f32.mrb[0].mxu0
    %v8262 = vadd.f32 %v8221, %v8261
    %v8263 = vpop.f32.mrb[0].mxu0
    %v8264 = vadd.f32 %v8223, %v8263
    %v8265 = vpop.f32.mrb[0].mxu0
    %v8266 = vpop.f32.mrb[0].mxu0
    %8267 = vdwg.mxu0
    %v8268 = vmax.f32 %v7770, 0.0
    %v8269 = vmax.f32 %v7772, 0.0
    %v8270 = vmax.f32 %v7934, 0.0
    %v8271 = vmax.f32 %v7936, 0.0
    %v8272 = vmax.f32 %v8098, 0.0
    %v8273 = vmax.f32 %v8100, 0.0
    %v8274 = vmax.f32 %v8262, 0.0
    %v8275 = vmax.f32 %v8264, 0.0
    %8276 = vst [vmem:[#allocation13] sm:$0xff] %v8268
    %8277 = vst [vmem:[#allocation13 + $0x8] sm:$0xff] %v8269
    %8278 = vst [vmem:[#allocation13 + $0x10] sm:$0xff] %v8270
    %8279 = vst [vmem:[#allocation13 + $0x18] sm:$0xff] %v8271
    %8280 = vst [vmem:[#allocation13 + $0x20] sm:$0xff] %v8272
    %8281 = vst [vmem:[#allocation13 + $0x28] sm:$0xff] %v8273
    %8282 = vst [vmem:[#allocation13 + $0x30] sm:$0xff] %v8274
    %8283 = vst [vmem:[#allocation13 + $0x38] sm:$0xff] %v8275
    // Predicated region
    $region54: #{pymedium_forward.1} parent=1 // pred_check
      _
    $region55: #{pymedium_forward.1} parent=1 // pred_check_branch
      %8285 = sbr.rel (0) target = $region57
    $region56: #{pymedium_forward.1} parent=1 // pred_region
      %s8287 = ssub.s32 1024, 1024
      %8288 = vsyncadd [#allocation4], %s8287
      %s8290 = sshll.u32 [#allocation13], 4
      %s8291 = int_to_ptr.vmem [resolvable:$true] %s8290
      %8293 = dma.vmem_to_hbm [thread:$0]  %s8291, 1024, %s7, [#allocation4]
    $region57: #{pymedium_forward.1} parent=1 // pred_fallthru
      _
    // Predicated region
    $region58: #{pymedium_forward.1} parent=1 // pred_check
      _
    $region59: #{pymedium_forward.1} parent=1 // pred_check_branch
      %8295 = sbr.rel (0) target = $region61
    $region60: #{pymedium_forward.1} parent=1 // pred_region
      %8296 = dma.done [#allocation4], 1024
    $region61: #{pymedium_forward.1} parent=1 // pred_fallthru
      _
    %8297 = vsyncpa [#allocation3], 1
    %8298 = vsyncpa [#allocation6], 1
    %8299 = vsyncpa [#allocation9], 1
    %8300 = vsyncpa [#allocation12], 1
    %8301 = vsyncpa [#allocation4], 1

</llo_original>
